<compile_context>
chip_gen: v7x
topology: tpu7x:2x2x1
jax: 0.10.0
libtpu: 0.0.40
codegen_flags: <defaults>
</compile_context>

<pallas_src>
from functools import partial

import jax
import jax.numpy as jnp
from jax.experimental import pallas as pl
from jax.experimental.pallas import tpu as pltpu


def _mha_kernel(xq_ref, xkv_ref, wq_ref, wk_ref, wv_ref, wo_ref, bproj_ref,
                o_ref, q_sc, k_sc, v_sc, *, num_heads):
    # xq_ref:   (1, tq, C)  bf16  query-tile rows of x
    # xkv_ref:  (1, N,  C)  bf16  full sequence (re-DMA'd only when the batch index changes)
    # wq_ref/wk_ref/wv_ref: (nh, C, hd) bf16   (scale folded into wq)
    # wo_ref:   (nh, hd, C) bf16
    # bproj_ref:(1, C)      f32
    # o_ref:    (1, tq, C)
    # q_sc: (nh, tq, hd) bf16   k_sc / v_sc: (nh, N, hd) bf16 (persist across query tiles)
    qi = pl.program_id(1)

    # ---- K/V projection: once per batch element, persists in VMEM scratch ----
    @pl.when(qi == 0)
    def _():
        xkv = xkv_ref[0]                                   # (N, C) bf16
        for h in range(num_heads):                         # trace-time loop, 2-D MXU matmuls
            k_sc[h] = jnp.dot(xkv, wk_ref[h],
                              preferred_element_type=jnp.float32).astype(k_sc.dtype)
            v_sc[h] = jnp.dot(xkv, wv_ref[h],
                              preferred_element_type=jnp.float32).astype(v_sc.dtype)

    # ---- Q projection for this query tile (scale already folded into wq) ----
    xq = xq_ref[0]                                         # (tq, C) bf16
    for h in range(num_heads):
        q_sc[h] = jnp.dot(xq, wq_ref[h],
                          preferred_element_type=jnp.float32).astype(q_sc.dtype)

    # ---- Attention, batched over heads (leading batch dim) ----
    q = q_sc[...]                                          # (nh, tq, hd) bf16
    k = k_sc[...]                                          # (nh, N,  hd) bf16
    v = v_sc[...]                                          # (nh, N,  hd) bf16
    s = jnp.einsum('hqd,hkd->hqk', q, k,
                   preferred_element_type=jnp.float32)     # (nh, tq, N) f32
    m = jnp.max(s, axis=-1, keepdims=True)
    p = jnp.exp(s - m)                                     # f32 softmax math (v5e-safe)
    l = jnp.sum(p, axis=-1, keepdims=True)
    attn = p * pl.reciprocal(l, approx=True)               # softmax(dim=-1), EUP reciprocal
    o3 = jnp.einsum('hqk,hkd->hqd', attn.astype(v.dtype), v,
                    preferred_element_type=jnp.float32)    # (nh, tq, hd) f32

    # ---- Output projection: per-head (hd, C) slab accumulation.
    # Mathematically identical to concat-heads + (tq,C)@(C,C); avoids the lane-dim concat
    # and the (nh, tq, C) intermediate a fully-batched projection would create.
    tq = xq.shape[0]
    C = wo_ref.shape[-1]
    y = jnp.zeros((tq, C), jnp.float32)
    for h in range(num_heads):
        y = y + jnp.dot(o3[h].astype(jnp.bfloat16), wo_ref[h],
                        preferred_element_type=jnp.float32)
    y = y + bproj_ref[...].astype(jnp.float32)             # (1, C) broadcast over rows
    o_ref[0] = y.astype(o_ref.dtype)


def mha_forward(x, w_qkv, w_proj, b_proj, *, head_dim=32):
    """x: (B, C, H, W) NCHW, w_qkv: (3C, C), w_proj: (C, C), b_proj: (C,)."""
    B, C, H, W = x.shape
    assert C % head_dim == 0, "dim should be divisible by head_dim"
    nh = C // head_dim
    N = H * W
    scale = head_dim ** -0.5

    # Query-tile size: lane/sublane friendly, bounds VMEM for the (nh, tq, N) score tile.
    # (128 is safe on all generations; with tq=128 and N=1024 the score tile is ~2 MiB f32.)
    tq = 128 if N % 128 == 0 else N
    NQ = N // tq

    # --- wrapper glue (layout only, no heavy compute) ---
    # NCHW -> (B, N, C); bf16 activations (f32 accumulation inside the kernel).
    x_seq = jnp.transpose(x.reshape(B, C, N), (0, 2, 1)).astype(jnp.bfloat16)

    # torch nn.Linear stores (out, in); qkv output feature f = which*C + head*hd + d.
    # Build per-head, leading-dim-indexable weight slabs (no in-kernel lane slicing):
    w_q, w_k, w_v = w_qkv[:C], w_qkv[C:2 * C], w_qkv[2 * C:]
    wq = (jnp.transpose(w_q.reshape(nh, head_dim, C), (0, 2, 1)) * scale)  # (nh, C, hd), scale folded
    wk = jnp.transpose(w_k.reshape(nh, head_dim, C), (0, 2, 1))            # (nh, C, hd)
    wv = jnp.transpose(w_v.reshape(nh, head_dim, C), (0, 2, 1))            # (nh, C, hd)
    wo = jnp.transpose(w_proj.reshape(C, nh, head_dim), (1, 2, 0))         # (nh, hd, C)
    wq, wk, wv, wo = (a.astype(jnp.bfloat16) for a in (wq, wk, wv, wo))
    bproj2 = b_proj.reshape(1, C).astype(jnp.float32)

    kernel = partial(_mha_kernel, num_heads=nh)

    # Weight/bias block indices are constant across the grid, so they are DMA'd once.
    # C should be a multiple of 128 so the output store is lane-dense (true for dim=128).
    out_seq = pl.pallas_call(
        kernel,
        out_shape=jax.ShapeDtypeStruct((B, N, C), x.dtype),
        grid_spec=pltpu.PrefetchScalarGridSpec(
            num_scalar_prefetch=0,
            grid=(B, NQ),
            in_specs=[
                pl.BlockSpec((1, tq, C), lambda b, q: (b, q, 0)),   # x (query tile)
                pl.BlockSpec((1, N, C), lambda b, q: (b, 0, 0)),    # x (full seq, for K/V)
                pl.BlockSpec((nh, C, head_dim), lambda b, q: (0, 0, 0)),   # wq (scaled)
                pl.BlockSpec((nh, C, head_dim), lambda b, q: (0, 0, 0)),   # wk
                pl.BlockSpec((nh, C, head_dim), lambda b, q: (0, 0, 0)),   # wv
                pl.BlockSpec((nh, head_dim, C), lambda b, q: (0, 0, 0)),   # wo
                pl.BlockSpec((1, C), lambda b, q: (0, 0)),                 # proj bias
            ],
            out_specs=pl.BlockSpec((1, tq, C), lambda b, q: (b, q, 0)),
            scratch_shapes=[
                pltpu.VMEM((nh, tq, head_dim), jnp.bfloat16),   # q tile
                pltpu.VMEM((nh, N, head_dim), jnp.bfloat16),    # K (persists across q tiles)
                pltpu.VMEM((nh, N, head_dim), jnp.bfloat16),    # V (persists across q tiles)
            ],
        ),
        compiler_params=pltpu.CompilerParams(
            # B is the megacore-parallel axis; the query-tile axis carries the K/V scratch
            # and must stay sequential ("arbitrary") per batch element.
            dimension_semantics=("parallel", "arbitrary"),
            vmem_limit_bytes=48 * 1024 * 1024,   # headroom under v7x's 64 MiB
        ),
    )(x_seq, x_seq, wq, wk, wv, wo, bproj2)

    # (B, N, C) -> NCHW
    return jnp.transpose(out_seq, (0, 2, 1)).reshape(B, C, H, W)


def mha_reference(x, w_qkv, w_proj, b_proj, *, head_dim=32):
    """Pure-JAX (f32) reference mirroring the PyTorch forward exactly."""
    B, C, H, W = x.shape
    num_heads = C // head_dim
    N = H * W
    scale = head_dim ** -0.5
    xs = jnp.transpose(x.reshape(B, C, N), (0, 2, 1))                    # (B, N, C)
    qkv = xs @ w_qkv.T                                                   # (B, N, 3C)
    qkv = qkv.reshape(B, N, 3, num_heads, head_dim).transpose(2, 0, 3, 1, 4)
    q, k, v = qkv[0], qkv[1], qkv[2]                                     # (B, nh, N, hd)
    attn = (q * scale) @ jnp.swapaxes(k, -2, -1)
    attn = jax.nn.softmax(attn, axis=-1)
    o = (attn @ v).transpose(0, 2, 1, 3).reshape(B, N, C)
    o = o @ w_proj.T + b_proj
    return jnp.transpose(o, (0, 2, 1)).reshape(B, C, H, W)


if __name__ == "__main__":
    # Small shapes consistent with the module (dim=128 -> 4 heads of 32, 16x16 spatial,
    # N=256 so the query-tile grid axis actually has 2 steps and K/V scratch is reused).
    B, C, H, W = 2, 128, 16, 16
    head_dim = 32

    key = jax.random.PRNGKey(0)
    kx, kqkv, kproj, kb = jax.random.split(key, 4)
    x = jax.random.normal(kx, (B, C, H, W), dtype=jnp.float32)
    w_qkv = 0.02 * jax.random.normal(kqkv, (3 * C, C), dtype=jnp.float32)   # nn.Linear(dim, 3*dim)
    w_proj = 0.02 * jax.random.normal(kproj, (C, C), dtype=jnp.float32)     # nn.Linear(dim, dim)
    b_proj = 0.02 * jax.random.normal(kb, (C,), dtype=jnp.float32)
    # NOTE: nn.LayerNorm(head_dim) params exist in __init__ but are unused (qk_norm=False).

    out = mha_forward(x, w_qkv, w_proj, b_proj, head_dim=head_dim)
    out = jax.block_until_ready(out)

    ref = mha_reference(x, w_qkv, w_proj, b_proj, head_dim=head_dim)
    assert out.shape == (B, C, H, W)
    # bf16 matmul operands (f32 accumulation) -> relaxed tolerance vs the all-f32 reference.
    assert jnp.allclose(out, ref, atol=2e-2, rtol=2e-2), "mismatch vs JAX reference"

    print("KERNEL_OK")
</pallas_src>

<mosaic_0001>
module attributes {stable_mosaic.version = 11 : i64} {
  func.func @_mha_kernel(%arg0: i32, %arg1: i32, %arg2: memref<1x128x128xbf16, #tpu.memory_space<vmem>>, %arg3: memref<1x256x128xbf16, #tpu.memory_space<vmem>>, %arg4: memref<4x128x32xbf16, #tpu.memory_space<vmem>>, %arg5: memref<4x128x32xbf16, #tpu.memory_space<vmem>>, %arg6: memref<4x128x32xbf16, #tpu.memory_space<vmem>>, %arg7: memref<4x32x128xbf16, #tpu.memory_space<vmem>>, %arg8: memref<1x128xf32, #tpu.memory_space<vmem>>, %arg9: memref<1x128x128xf32, #tpu.memory_space<vmem>>, %arg10: memref<4x128x32xbf16, #tpu.memory_space<vmem>>, %arg11: memref<4x256x32xbf16, #tpu.memory_space<vmem>>, %arg12: memref<4x256x32xbf16, #tpu.memory_space<vmem>>) attributes {dimension_semantics = [#tpu.dimension_semantics<parallel>, #tpu.dimension_semantics<arbitrary>], iteration_bounds = array<i64: 2, 2>, scalar_prefetch = 0 : i64, scratch_operands = 3 : i64, tpu.core_type = #tpu.core_type<tc>, window_params = [{transform_indices = @transform_0, window_bounds = array<i64: 1, 128, 128>}, {transform_indices = @transform_1, window_bounds = array<i64: 1, 256, 128>}, {pipeline_mode = #tpu.pipeline_mode<synchronous>, transform_indices = @transform_2, window_bounds = array<i64: 4, 128, 32>}, {pipeline_mode = #tpu.pipeline_mode<synchronous>, transform_indices = @transform_3, window_bounds = array<i64: 4, 128, 32>}, {pipeline_mode = #tpu.pipeline_mode<synchronous>, transform_indices = @transform_4, window_bounds = array<i64: 4, 128, 32>}, {pipeline_mode = #tpu.pipeline_mode<synchronous>, transform_indices = @transform_5, window_bounds = array<i64: 4, 32, 128>}, {pipeline_mode = #tpu.pipeline_mode<synchronous>, transform_indices = @transform_6, window_bounds = array<i64: 1, 128>}, {transform_indices = @transform_7, window_bounds = array<i64: 1, 128, 128>}]} {
    %c0_i32 = arith.constant 0 : i32
    %0 = arith.cmpi eq, %arg1, %c0_i32 : i32
    %1 = arith.extui %0 : i1 to i32
    %c0_i32_0 = arith.constant 0 : i32
    %2 = arith.cmpi ne, %1, %c0_i32_0 : i32
    scf.if %2 {
      %c0_62 = arith.constant 0 : index
      %c0_63 = arith.constant 0 : index
      %c0_64 = arith.constant 0 : index
      %84 = vector.load %arg3[%c0_62, %c0_63, %c0_64] : memref<1x256x128xbf16, #tpu.memory_space<vmem>>, vector<1x256x128xbf16>
      %85 = vector.shape_cast %84 : vector<1x256x128xbf16> to vector<256x128xbf16>
      %c0_65 = arith.constant 0 : index
      %c0_66 = arith.constant 0 : index
      %c0_67 = arith.constant 0 : index
      %86 = vector.load %arg5[%c0_65, %c0_66, %c0_67] : memref<4x128x32xbf16, #tpu.memory_space<vmem>>, vector<1x128x32xbf16>
      %87 = vector.shape_cast %86 : vector<1x128x32xbf16> to vector<128x32xbf16>
      %cst_68 = arith.constant dense<0.000000e+00> : vector<256x32xf32>
      %88 = tpu.matmul %85, %87, %cst_68 {dimension_numbers = #tpu.dot_dimension_numbers<[1], [0], [0], [1], [0, 0, 1, 1], [], []>} : vector<256x128xbf16>, vector<128x32xbf16>, vector<256x32xf32> -> vector<256x32xf32>
      %89 = arith.truncf %88 : vector<256x32xf32> to vector<256x32xbf16>
      %c0_69 = arith.constant 0 : index
      %c0_70 = arith.constant 0 : index
      %c0_71 = arith.constant 0 : index
      %90 = vector.load %arg11[%c0_69, %c0_70, %c0_71] : memref<4x256x32xbf16, #tpu.memory_space<vmem>>, vector<1x256x32xbf16>
      %91 = vector.shape_cast %90 : vector<1x256x32xbf16> to vector<256x32xbf16>
      %92 = vector.shape_cast %89 : vector<256x32xbf16> to vector<1x256x32xbf16>
      tpu.vector_store %arg11[%c0_69, %c0_70, %c0_71], %92 {strides = array<i32>} : memref<4x256x32xbf16, #tpu.memory_space<vmem>>, vector<1x256x32xbf16>,
      %c0_72 = arith.constant 0 : index
      %c0_73 = arith.constant 0 : index
      %c0_74 = arith.constant 0 : index
      %93 = vector.load %arg6[%c0_72, %c0_73, %c0_74] : memref<4x128x32xbf16, #tpu.memory_space<vmem>>, vector<1x128x32xbf16>
      %94 = vector.shape_cast %93 : vector<1x128x32xbf16> to vector<128x32xbf16>
      %cst_75 = arith.constant dense<0.000000e+00> : vector<256x32xf32>
      %95 = tpu.matmul %85, %94, %cst_75 {dimension_numbers = #tpu.dot_dimension_numbers<[1], [0], [0], [1], [0, 0, 1, 1], [], []>} : vector<256x128xbf16>, vector<128x32xbf16>, vector<256x32xf32> -> vector<256x32xf32>
      %96 = arith.truncf %95 : vector<256x32xf32> to vector<256x32xbf16>
      %c0_76 = arith.constant 0 : index
      %c0_77 = arith.constant 0 : index
      %c0_78 = arith.constant 0 : index
      %97 = vector.load %arg12[%c0_76, %c0_77, %c0_78] : memref<4x256x32xbf16, #tpu.memory_space<vmem>>, vector<1x256x32xbf16>
      %98 = vector.shape_cast %97 : vector<1x256x32xbf16> to vector<256x32xbf16>
      %99 = vector.shape_cast %96 : vector<256x32xbf16> to vector<1x256x32xbf16>
      tpu.vector_store %arg12[%c0_76, %c0_77, %c0_78], %99 {strides = array<i32>} : memref<4x256x32xbf16, #tpu.memory_space<vmem>>, vector<1x256x32xbf16>,
      %c1_79 = arith.constant 1 : index
      %c0_80 = arith.constant 0 : index
      %c0_81 = arith.constant 0 : index
      %100 = vector.load %arg5[%c1_79, %c0_80, %c0_81] : memref<4x128x32xbf16, #tpu.memory_space<vmem>>, vector<1x128x32xbf16>
      %101 = vector.shape_cast %100 : vector<1x128x32xbf16> to vector<128x32xbf16>
      %cst_82 = arith.constant dense<0.000000e+00> : vector<256x32xf32>
      %102 = tpu.matmul %85, %101, %cst_82 {dimension_numbers = #tpu.dot_dimension_numbers<[1], [0], [0], [1], [0, 0, 1, 1], [], []>} : vector<256x128xbf16>, vector<128x32xbf16>, vector<256x32xf32> -> vector<256x32xf32>
      %103 = arith.truncf %102 : vector<256x32xf32> to vector<256x32xbf16>
      %c1_83 = arith.constant 1 : index
      %c0_84 = arith.constant 0 : index
      %c0_85 = arith.constant 0 : index
      %104 = vector.load %arg11[%c1_83, %c0_84, %c0_85] : memref<4x256x32xbf16, #tpu.memory_space<vmem>>, vector<1x256x32xbf16>
      %105 = vector.shape_cast %104 : vector<1x256x32xbf16> to vector<256x32xbf16>
      %106 = vector.shape_cast %103 : vector<256x32xbf16> to vector<1x256x32xbf16>
      tpu.vector_store %arg11[%c1_83, %c0_84, %c0_85], %106 {strides = array<i32>} : memref<4x256x32xbf16, #tpu.memory_space<vmem>>, vector<1x256x32xbf16>,
      %c1_86 = arith.constant 1 : index
      %c0_87 = arith.constant 0 : index
      %c0_88 = arith.constant 0 : index
      %107 = vector.load %arg6[%c1_86, %c0_87, %c0_88] : memref<4x128x32xbf16, #tpu.memory_space<vmem>>, vector<1x128x32xbf16>
      %108 = vector.shape_cast %107 : vector<1x128x32xbf16> to vector<128x32xbf16>
      %cst_89 = arith.constant dense<0.000000e+00> : vector<256x32xf32>
      %109 = tpu.matmul %85, %108, %cst_89 {dimension_numbers = #tpu.dot_dimension_numbers<[1], [0], [0], [1], [0, 0, 1, 1], [], []>} : vector<256x128xbf16>, vector<128x32xbf16>, vector<256x32xf32> -> vector<256x32xf32>
      %110 = arith.truncf %109 : vector<256x32xf32> to vector<256x32xbf16>
      %c1_90 = arith.constant 1 : index
      %c0_91 = arith.constant 0 : index
      %c0_92 = arith.constant 0 : index
      %111 = vector.load %arg12[%c1_90, %c0_91, %c0_92] : memref<4x256x32xbf16, #tpu.memory_space<vmem>>, vector<1x256x32xbf16>
      %112 = vector.shape_cast %111 : vector<1x256x32xbf16> to vector<256x32xbf16>
      %113 = vector.shape_cast %110 : vector<256x32xbf16> to vector<1x256x32xbf16>
      tpu.vector_store %arg12[%c1_90, %c0_91, %c0_92], %113 {strides = array<i32>} : memref<4x256x32xbf16, #tpu.memory_space<vmem>>, vector<1x256x32xbf16>,
      %c2_93 = arith.constant 2 : index
      %c0_94 = arith.constant 0 : index
      %c0_95 = arith.constant 0 : index
      %114 = vector.load %arg5[%c2_93, %c0_94, %c0_95] : memref<4x128x32xbf16, #tpu.memory_space<vmem>>, vector<1x128x32xbf16>
      %115 = vector.shape_cast %114 : vector<1x128x32xbf16> to vector<128x32xbf16>
      %cst_96 = arith.constant dense<0.000000e+00> : vector<256x32xf32>
      %116 = tpu.matmul %85, %115, %cst_96 {dimension_numbers = #tpu.dot_dimension_numbers<[1], [0], [0], [1], [0, 0, 1, 1], [], []>} : vector<256x128xbf16>, vector<128x32xbf16>, vector<256x32xf32> -> vector<256x32xf32>
      %117 = arith.truncf %116 : vector<256x32xf32> to vector<256x32xbf16>
      %c2_97 = arith.constant 2 : index
      %c0_98 = arith.constant 0 : index
      %c0_99 = arith.constant 0 : index
      %118 = vector.load %arg11[%c2_97, %c0_98, %c0_99] : memref<4x256x32xbf16, #tpu.memory_space<vmem>>, vector<1x256x32xbf16>
      %119 = vector.shape_cast %118 : vector<1x256x32xbf16> to vector<256x32xbf16>
      %120 = vector.shape_cast %117 : vector<256x32xbf16> to vector<1x256x32xbf16>
      tpu.vector_store %arg11[%c2_97, %c0_98, %c0_99], %120 {strides = array<i32>} : memref<4x256x32xbf16, #tpu.memory_space<vmem>>, vector<1x256x32xbf16>,
      %c2_100 = arith.constant 2 : index
      %c0_101 = arith.constant 0 : index
      %c0_102 = arith.constant 0 : index
      %121 = vector.load %arg6[%c2_100, %c0_101, %c0_102] : memref<4x128x32xbf16, #tpu.memory_space<vmem>>, vector<1x128x32xbf16>
      %122 = vector.shape_cast %121 : vector<1x128x32xbf16> to vector<128x32xbf16>
      %cst_103 = arith.constant dense<0.000000e+00> : vector<256x32xf32>
      %123 = tpu.matmul %85, %122, %cst_103 {dimension_numbers = #tpu.dot_dimension_numbers<[1], [0], [0], [1], [0, 0, 1, 1], [], []>} : vector<256x128xbf16>, vector<128x32xbf16>, vector<256x32xf32> -> vector<256x32xf32>
      %124 = arith.truncf %123 : vector<256x32xf32> to vector<256x32xbf16>
      %c2_104 = arith.constant 2 : index
      %c0_105 = arith.constant 0 : index
      %c0_106 = arith.constant 0 : index
      %125 = vector.load %arg12[%c2_104, %c0_105, %c0_106] : memref<4x256x32xbf16, #tpu.memory_space<vmem>>, vector<1x256x32xbf16>
      %126 = vector.shape_cast %125 : vector<1x256x32xbf16> to vector<256x32xbf16>
      %127 = vector.shape_cast %124 : vector<256x32xbf16> to vector<1x256x32xbf16>
      tpu.vector_store %arg12[%c2_104, %c0_105, %c0_106], %127 {strides = array<i32>} : memref<4x256x32xbf16, #tpu.memory_space<vmem>>, vector<1x256x32xbf16>,
      %c3_107 = arith.constant 3 : index
      %c0_108 = arith.constant 0 : index
      %c0_109 = arith.constant 0 : index
      %128 = vector.load %arg5[%c3_107, %c0_108, %c0_109] : memref<4x128x32xbf16, #tpu.memory_space<vmem>>, vector<1x128x32xbf16>
      %129 = vector.shape_cast %128 : vector<1x128x32xbf16> to vector<128x32xbf16>
      %cst_110 = arith.constant dense<0.000000e+00> : vector<256x32xf32>
      %130 = tpu.matmul %85, %129, %cst_110 {dimension_numbers = #tpu.dot_dimension_numbers<[1], [0], [0], [1], [0, 0, 1, 1], [], []>} : vector<256x128xbf16>, vector<128x32xbf16>, vector<256x32xf32> -> vector<256x32xf32>
      %131 = arith.truncf %130 : vector<256x32xf32> to vector<256x32xbf16>
      %c3_111 = arith.constant 3 : index
      %c0_112 = arith.constant 0 : index
      %c0_113 = arith.constant 0 : index
      %132 = vector.load %arg11[%c3_111, %c0_112, %c0_113] : memref<4x256x32xbf16, #tpu.memory_space<vmem>>, vector<1x256x32xbf16>
      %133 = vector.shape_cast %132 : vector<1x256x32xbf16> to vector<256x32xbf16>
      %134 = vector.shape_cast %131 : vector<256x32xbf16> to vector<1x256x32xbf16>
      tpu.vector_store %arg11[%c3_111, %c0_112, %c0_113], %134 {strides = array<i32>} : memref<4x256x32xbf16, #tpu.memory_space<vmem>>, vector<1x256x32xbf16>,
      %c3_114 = arith.constant 3 : index
      %c0_115 = arith.constant 0 : index
      %c0_116 = arith.constant 0 : index
      %135 = vector.load %arg6[%c3_114, %c0_115, %c0_116] : memref<4x128x32xbf16, #tpu.memory_space<vmem>>, vector<1x128x32xbf16>
      %136 = vector.shape_cast %135 : vector<1x128x32xbf16> to vector<128x32xbf16>
      %cst_117 = arith.constant dense<0.000000e+00> : vector<256x32xf32>
      %137 = tpu.matmul %85, %136, %cst_117 {dimension_numbers = #tpu.dot_dimension_numbers<[1], [0], [0], [1], [0, 0, 1, 1], [], []>} : vector<256x128xbf16>, vector<128x32xbf16>, vector<256x32xf32> -> vector<256x32xf32>
      %138 = arith.truncf %137 : vector<256x32xf32> to vector<256x32xbf16>
      %c3_118 = arith.constant 3 : index
      %c0_119 = arith.constant 0 : index
      %c0_120 = arith.constant 0 : index
      %139 = vector.load %arg12[%c3_118, %c0_119, %c0_120] : memref<4x256x32xbf16, #tpu.memory_space<vmem>>, vector<1x256x32xbf16>
      %140 = vector.shape_cast %139 : vector<1x256x32xbf16> to vector<256x32xbf16>
      %141 = vector.shape_cast %138 : vector<256x32xbf16> to vector<1x256x32xbf16>
      tpu.vector_store %arg12[%c3_118, %c0_119, %c0_120], %141 {strides = array<i32>} : memref<4x256x32xbf16, #tpu.memory_space<vmem>>, vector<1x256x32xbf16>,
    } else {
    }
    %c0 = arith.constant 0 : index
    %c0_1 = arith.constant 0 : index
    %c0_2 = arith.constant 0 : index
    %3 = vector.load %arg2[%c0, %c0_1, %c0_2] : memref<1x128x128xbf16, #tpu.memory_space<vmem>>, vector<1x128x128xbf16>
    %4 = vector.shape_cast %3 : vector<1x128x128xbf16> to vector<128x128xbf16>
    %c0_3 = arith.constant 0 : index
    %c0_4 = arith.constant 0 : index
    %c0_5 = arith.constant 0 : index
    %5 = vector.load %arg4[%c0_3, %c0_4, %c0_5] : memref<4x128x32xbf16, #tpu.memory_space<vmem>>, vector<1x128x32xbf16>
    %6 = vector.shape_cast %5 : vector<1x128x32xbf16> to vector<128x32xbf16>
    %cst = arith.constant dense<0.000000e+00> : vector<128x32xf32>
    %7 = tpu.matmul %4, %6, %cst {dimension_numbers = #tpu.dot_dimension_numbers<[1], [0], [0], [1], [0, 0, 1, 1], [], []>} : vector<128x128xbf16>, vector<128x32xbf16>, vector<128x32xf32> -> vector<128x32xf32>
    %8 = arith.truncf %7 : vector<128x32xf32> to vector<128x32xbf16>
    %c0_6 = arith.constant 0 : index
    %c0_7 = arith.constant 0 : index
    %c0_8 = arith.constant 0 : index
    %9 = vector.load %arg10[%c0_6, %c0_7, %c0_8] : memref<4x128x32xbf16, #tpu.memory_space<vmem>>, vector<1x128x32xbf16>
    %10 = vector.shape_cast %9 : vector<1x128x32xbf16> to vector<128x32xbf16>
    %11 = vector.shape_cast %8 : vector<128x32xbf16> to vector<1x128x32xbf16>
    tpu.vector_store %arg10[%c0_6, %c0_7, %c0_8], %11 {strides = array<i32>} : memref<4x128x32xbf16, #tpu.memory_space<vmem>>, vector<1x128x32xbf16>,
    %c1 = arith.constant 1 : index
    %c0_9 = arith.constant 0 : index
    %c0_10 = arith.constant 0 : index
    %12 = vector.load %arg4[%c1, %c0_9, %c0_10] : memref<4x128x32xbf16, #tpu.memory_space<vmem>>, vector<1x128x32xbf16>
    %13 = vector.shape_cast %12 : vector<1x128x32xbf16> to vector<128x32xbf16>
    %cst_11 = arith.constant dense<0.000000e+00> : vector<128x32xf32>
    %14 = tpu.matmul %4, %13, %cst_11 {dimension_numbers = #tpu.dot_dimension_numbers<[1], [0], [0], [1], [0, 0, 1, 1], [], []>} : vector<128x128xbf16>, vector<128x32xbf16>, vector<128x32xf32> -> vector<128x32xf32>
    %15 = arith.truncf %14 : vector<128x32xf32> to vector<128x32xbf16>
    %c1_12 = arith.constant 1 : index
    %c0_13 = arith.constant 0 : index
    %c0_14 = arith.constant 0 : index
    %16 = vector.load %arg10[%c1_12, %c0_13, %c0_14] : memref<4x128x32xbf16, #tpu.memory_space<vmem>>, vector<1x128x32xbf16>
    %17 = vector.shape_cast %16 : vector<1x128x32xbf16> to vector<128x32xbf16>
    %18 = vector.shape_cast %15 : vector<128x32xbf16> to vector<1x128x32xbf16>
    tpu.vector_store %arg10[%c1_12, %c0_13, %c0_14], %18 {strides = array<i32>} : memref<4x128x32xbf16, #tpu.memory_space<vmem>>, vector<1x128x32xbf16>,
    %c2 = arith.constant 2 : index
    %c0_15 = arith.constant 0 : index
    %c0_16 = arith.constant 0 : index
    %19 = vector.load %arg4[%c2, %c0_15, %c0_16] : memref<4x128x32xbf16, #tpu.memory_space<vmem>>, vector<1x128x32xbf16>
    %20 = vector.shape_cast %19 : vector<1x128x32xbf16> to vector<128x32xbf16>
    %cst_17 = arith.constant dense<0.000000e+00> : vector<128x32xf32>
    %21 = tpu.matmul %4, %20, %cst_17 {dimension_numbers = #tpu.dot_dimension_numbers<[1], [0], [0], [1], [0, 0, 1, 1], [], []>} : vector<128x128xbf16>, vector<128x32xbf16>, vector<128x32xf32> -> vector<128x32xf32>
    %22 = arith.truncf %21 : vector<128x32xf32> to vector<128x32xbf16>
    %c2_18 = arith.constant 2 : index
    %c0_19 = arith.constant 0 : index
    %c0_20 = arith.constant 0 : index
    %23 = vector.load %arg10[%c2_18, %c0_19, %c0_20] : memref<4x128x32xbf16, #tpu.memory_space<vmem>>, vector<1x128x32xbf16>
    %24 = vector.shape_cast %23 : vector<1x128x32xbf16> to vector<128x32xbf16>
    %25 = vector.shape_cast %22 : vector<128x32xbf16> to vector<1x128x32xbf16>
    tpu.vector_store %arg10[%c2_18, %c0_19, %c0_20], %25 {strides = array<i32>} : memref<4x128x32xbf16, #tpu.memory_space<vmem>>, vector<1x128x32xbf16>,
    %c3 = arith.constant 3 : index
    %c0_21 = arith.constant 0 : index
    %c0_22 = arith.constant 0 : index
    %26 = vector.load %arg4[%c3, %c0_21, %c0_22] : memref<4x128x32xbf16, #tpu.memory_space<vmem>>, vector<1x128x32xbf16>
    %27 = vector.shape_cast %26 : vector<1x128x32xbf16> to vector<128x32xbf16>
    %cst_23 = arith.constant dense<0.000000e+00> : vector<128x32xf32>
    %28 = tpu.matmul %4, %27, %cst_23 {dimension_numbers = #tpu.dot_dimension_numbers<[1], [0], [0], [1], [0, 0, 1, 1], [], []>} : vector<128x128xbf16>, vector<128x32xbf16>, vector<128x32xf32> -> vector<128x32xf32>
    %29 = arith.truncf %28 : vector<128x32xf32> to vector<128x32xbf16>
    %c3_24 = arith.constant 3 : index
    %c0_25 = arith.constant 0 : index
    %c0_26 = arith.constant 0 : index
    %30 = vector.load %arg10[%c3_24, %c0_25, %c0_26] : memref<4x128x32xbf16, #tpu.memory_space<vmem>>, vector<1x128x32xbf16>
    %31 = vector.shape_cast %30 : vector<1x128x32xbf16> to vector<128x32xbf16>
    %32 = vector.shape_cast %29 : vector<128x32xbf16> to vector<1x128x32xbf16>
    tpu.vector_store %arg10[%c3_24, %c0_25, %c0_26], %32 {strides = array<i32>} : memref<4x128x32xbf16, #tpu.memory_space<vmem>>, vector<1x128x32xbf16>,
    %c0_27 = arith.constant 0 : index
    %c0_28 = arith.constant 0 : index
    %c0_29 = arith.constant 0 : index
    %33 = vector.load %arg10[%c0_27, %c0_28, %c0_29] : memref<4x128x32xbf16, #tpu.memory_space<vmem>>, vector<4x128x32xbf16>
    %c0_30 = arith.constant 0 : index
    %c0_31 = arith.constant 0 : index
    %c0_32 = arith.constant 0 : index
    %34 = vector.load %arg11[%c0_30, %c0_31, %c0_32] : memref<4x256x32xbf16, #tpu.memory_space<vmem>>, vector<4x256x32xbf16>
    %c0_33 = arith.constant 0 : index
    %c0_34 = arith.constant 0 : index
    %c0_35 = arith.constant 0 : index
    %35 = vector.load %arg12[%c0_33, %c0_34, %c0_35] : memref<4x256x32xbf16, #tpu.memory_space<vmem>>, vector<4x256x32xbf16>
    "tpu.trace_start"() <{level = 10 : i32, message = "hqd,hkd->hqk"}> : () -> ()
    %cst_36 = arith.constant dense<0.000000e+00> : vector<4x128x256xf32>
    %36 = tpu.matmul %33, %34, %cst_36 {dimension_numbers = #tpu.dot_dimension_numbers<[2], [2], [1], [1], [0, 0, 0, 1, 1, 1], [0], [0]>} : vector<4x128x32xbf16>, vector<4x256x32xbf16>, vector<4x128x256xf32> -> vector<4x128x256xf32>
    "tpu.trace_stop"() : () -> ()
    %cst_37 = arith.constant dense<0xFF800000> : vector<4x128xf32>
    %37 = vector.multi_reduction <maximumf>, %36, %cst_37 [2] : vector<4x128x256xf32> to vector<4x128xf32>
    %38 = vector.shape_cast %37 : vector<4x128xf32> to vector<4x128x1xf32>
    %39 = vector.broadcast %38 : vector<4x128x1xf32> to vector<4x128x256xf32>
    %40 = arith.subf %36, %39 : vector<4x128x256xf32>
    %41 = math.exp %40 : vector<4x128x256xf32>
    %cst_38 = arith.constant dense<0.000000e+00> : vector<4x128xf32>
    %42 = vector.multi_reduction <add>, %41, %cst_38 [2] : vector<4x128x256xf32> to vector<4x128xf32>
    %43 = vector.shape_cast %42 : vector<4x128xf32> to vector<4x128x1xf32>
    %44 = tpu.reciprocal %43 {approx = true} : vector<4x128x1xf32> -> vector<4x128x1xf32>
    %45 = vector.broadcast %44 : vector<4x128x1xf32> to vector<4x128x256xf32>
    %46 = arith.mulf %41, %45 : vector<4x128x256xf32>
    %47 = arith.truncf %46 : vector<4x128x256xf32> to vector<4x128x256xbf16>
    "tpu.trace_start"() <{level = 10 : i32, message = "hqk,hkd->hqd"}> : () -> ()
    %cst_39 = arith.constant dense<0.000000e+00> : vector<4x128x32xf32>
    %48 = tpu.matmul %47, %35, %cst_39 {dimension_numbers = #tpu.dot_dimension_numbers<[2], [1], [1], [2], [0, 0, 0, 1, 1, 2], [0], [0]>} : vector<4x128x256xbf16>, vector<4x256x32xbf16>, vector<4x128x32xf32> -> vector<4x128x32xf32>
    %cst_40 = arith.constant 0.000000e+00 : f32
    "tpu.trace_stop"() : () -> ()
    %49 = vector.broadcast %cst_40 : f32 to vector<128x128xf32>
    %50 = vector.extract_strided_slice %48 {offsets = [0, 0, 0], sizes = [1, 128, 32], strides = [1, 1, 1]} : vector<4x128x32xf32> to vector<1x128x32xf32>
    %51 = vector.shape_cast %50 : vector<1x128x32xf32> to vector<128x32xf32>
    %52 = arith.truncf %51 : vector<128x32xf32> to vector<128x32xbf16>
    %c0_41 = arith.constant 0 : index
    %c0_42 = arith.constant 0 : index
    %c0_43 = arith.constant 0 : index
    %53 = vector.load %arg7[%c0_41, %c0_42, %c0_43] : memref<4x32x128xbf16, #tpu.memory_space<vmem>>, vector<1x32x128xbf16>
    %54 = vector.shape_cast %53 : vector<1x32x128xbf16> to vector<32x128xbf16>
    %cst_44 = arith.constant dense<0.000000e+00> : vector<128x128xf32>
    %55 = tpu.matmul %52, %54, %cst_44 {dimension_numbers = #tpu.dot_dimension_numbers<[1], [0], [0], [1], [0, 0, 1, 1], [], []>} : vector<128x32xbf16>, vector<32x128xbf16>, vector<128x128xf32> -> vector<128x128xf32>
    %56 = arith.addf %49, %55 : vector<128x128xf32>
    %57 = vector.extract_strided_slice %48 {offsets = [1, 0, 0], sizes = [1, 128, 32], strides = [1, 1, 1]} : vector<4x128x32xf32> to vector<1x128x32xf32>
    %58 = vector.shape_cast %57 : vector<1x128x32xf32> to vector<128x32xf32>
    %59 = arith.truncf %58 : vector<128x32xf32> to vector<128x32xbf16>
    %c1_45 = arith.constant 1 : index
    %c0_46 = arith.constant 0 : index
    %c0_47 = arith.constant 0 : index
    %60 = vector.load %arg7[%c1_45, %c0_46, %c0_47] : memref<4x32x128xbf16, #tpu.memory_space<vmem>>, vector<1x32x128xbf16>
    %61 = vector.shape_cast %60 : vector<1x32x128xbf16> to vector<32x128xbf16>
    %cst_48 = arith.constant dense<0.000000e+00> : vector<128x128xf32>
    %62 = tpu.matmul %59, %61, %cst_48 {dimension_numbers = #tpu.dot_dimension_numbers<[1], [0], [0], [1], [0, 0, 1, 1], [], []>} : vector<128x32xbf16>, vector<32x128xbf16>, vector<128x128xf32> -> vector<128x128xf32>
    %63 = arith.addf %56, %62 : vector<128x128xf32>
    %64 = vector.extract_strided_slice %48 {offsets = [2, 0, 0], sizes = [1, 128, 32], strides = [1, 1, 1]} : vector<4x128x32xf32> to vector<1x128x32xf32>
    %65 = vector.shape_cast %64 : vector<1x128x32xf32> to vector<128x32xf32>
    %66 = arith.truncf %65 : vector<128x32xf32> to vector<128x32xbf16>
    %c2_49 = arith.constant 2 : index
    %c0_50 = arith.constant 0 : index
    %c0_51 = arith.constant 0 : index
    %67 = vector.load %arg7[%c2_49, %c0_50, %c0_51] : memref<4x32x128xbf16, #tpu.memory_space<vmem>>, vector<1x32x128xbf16>
    %68 = vector.shape_cast %67 : vector<1x32x128xbf16> to vector<32x128xbf16>
    %cst_52 = arith.constant dense<0.000000e+00> : vector<128x128xf32>
    %69 = tpu.matmul %66, %68, %cst_52 {dimension_numbers = #tpu.dot_dimension_numbers<[1], [0], [0], [1], [0, 0, 1, 1], [], []>} : vector<128x32xbf16>, vector<32x128xbf16>, vector<128x128xf32> -> vector<128x128xf32>
    %70 = arith.addf %63, %69 : vector<128x128xf32>
    %71 = vector.extract_strided_slice %48 {offsets = [3, 0, 0], sizes = [1, 128, 32], strides = [1, 1, 1]} : vector<4x128x32xf32> to vector<1x128x32xf32>
    %72 = vector.shape_cast %71 : vector<1x128x32xf32> to vector<128x32xf32>
    %73 = arith.truncf %72 : vector<128x32xf32> to vector<128x32xbf16>
    %c3_53 = arith.constant 3 : index
    %c0_54 = arith.constant 0 : index
    %c0_55 = arith.constant 0 : index
    %74 = vector.load %arg7[%c3_53, %c0_54, %c0_55] : memref<4x32x128xbf16, #tpu.memory_space<vmem>>, vector<1x32x128xbf16>
    %75 = vector.shape_cast %74 : vector<1x32x128xbf16> to vector<32x128xbf16>
    %cst_56 = arith.constant dense<0.000000e+00> : vector<128x128xf32>
    %76 = tpu.matmul %73, %75, %cst_56 {dimension_numbers = #tpu.dot_dimension_numbers<[1], [0], [0], [1], [0, 0, 1, 1], [], []>} : vector<128x32xbf16>, vector<32x128xbf16>, vector<128x128xf32> -> vector<128x128xf32>
    %77 = arith.addf %70, %76 : vector<128x128xf32>
    %c0_57 = arith.constant 0 : index
    %c0_58 = arith.constant 0 : index
    %78 = vector.load %arg8[%c0_57, %c0_58] : memref<1x128xf32, #tpu.memory_space<vmem>>, vector<1x128xf32>
    %79 = vector.broadcast %78 : vector<1x128xf32> to vector<128x128xf32>
    %80 = arith.addf %77, %79 : vector<128x128xf32>
    %c0_59 = arith.constant 0 : index
    %c0_60 = arith.constant 0 : index
    %c0_61 = arith.constant 0 : index
    %81 = vector.load %arg9[%c0_59, %c0_60, %c0_61] : memref<1x128x128xf32, #tpu.memory_space<vmem>>, vector<1x128x128xf32>
    %82 = vector.shape_cast %81 : vector<1x128x128xf32> to vector<128x128xf32>
    %83 = vector.shape_cast %80 : vector<128x128xf32> to vector<1x128x128xf32>
    tpu.vector_store %arg9[%c0_59, %c0_60, %c0_61], %83 {strides = array<i32>} : memref<1x128x128xf32, #tpu.memory_space<vmem>>, vector<1x128x128xf32>,
    return
  }
  func.func @transform_0(%arg0: i32, %arg1: i32) -> (i32, i32, i32) {
    %c0_i32 = arith.constant 0 : i32
    %c0_i32_0 = arith.constant 0 : i32
    return %arg0, %arg1, %c0_i32 : i32, i32, i32
  }
  func.func @transform_1(%arg0: i32, %arg1: i32) -> (i32, i32, i32) {
    %c0_i32 = arith.constant 0 : i32
    %c0_i32_0 = arith.constant 0 : i32
    %c0_i32_1 = arith.constant 0 : i32
    return %arg0, %c0_i32, %c0_i32_0 : i32, i32, i32
  }
  func.func @transform_2(%arg0: i32, %arg1: i32) -> (i32, i32, i32) {
    %c0_i32 = arith.constant 0 : i32
    %c0_i32_0 = arith.constant 0 : i32
    %c0_i32_1 = arith.constant 0 : i32
    %c0_i32_2 = arith.constant 0 : i32
    return %c0_i32, %c0_i32_0, %c0_i32_1 : i32, i32, i32
  }
  func.func @transform_3(%arg0: i32, %arg1: i32) -> (i32, i32, i32) {
    %c0_i32 = arith.constant 0 : i32
    %c0_i32_0 = arith.constant 0 : i32
    %c0_i32_1 = arith.constant 0 : i32
    %c0_i32_2 = arith.constant 0 : i32
    return %c0_i32, %c0_i32_0, %c0_i32_1 : i32, i32, i32
  }
  func.func @transform_4(%arg0: i32, %arg1: i32) -> (i32, i32, i32) {
    %c0_i32 = arith.constant 0 : i32
    %c0_i32_0 = arith.constant 0 : i32
    %c0_i32_1 = arith.constant 0 : i32
    %c0_i32_2 = arith.constant 0 : i32
    return %c0_i32, %c0_i32_0, %c0_i32_1 : i32, i32, i32
  }
  func.func @transform_5(%arg0: i32, %arg1: i32) -> (i32, i32, i32) {
    %c0_i32 = arith.constant 0 : i32
    %c0_i32_0 = arith.constant 0 : i32
    %c0_i32_1 = arith.constant 0 : i32
    %c0_i32_2 = arith.constant 0 : i32
    return %c0_i32, %c0_i32_0, %c0_i32_1 : i32, i32, i32
  }
  func.func @transform_6(%arg0: i32, %arg1: i32) -> (i32, i32) {
    %c0_i32 = arith.constant 0 : i32
    %c0_i32_0 = arith.constant 0 : i32
    %c0_i32_1 = arith.constant 0 : i32
    return %c0_i32, %c0_i32_0 : i32, i32
  }
  func.func @transform_7(%arg0: i32, %arg1: i32) -> (i32, i32, i32) {
    %c0_i32 = arith.constant 0 : i32
    %c0_i32_0 = arith.constant 0 : i32
    return %arg0, %arg1, %c0_i32 : i32, i32, i32
  }
}

</mosaic_0001>

<llo_original>
// kernel: tpu_custom_call.1
$region0: #{tpu_custom_call.1}
  #allocation0 [shape = 'u32[]', space=smem, size = 0x4, offset = 0x4, fixed_abs, tag = 'smem constant byte address 0x4 - core index']
  #allocation1 [shape = 'u32[144,128]{1,0:T(1,128)}', space=vmem, size = 0x12000, scoped, tag = 'internal scratch']
  #allocation2 [shape = 'bf16[4,128,32]{2,1,0:T(16,128)(2,1)}', space=vmem, size = 0x20000, scoped, tag = 'scratch operand']
  #allocation3 [shape = 'bf16[4,256,32]{2,1,0:T(16,128)(2,1)}', space=vmem, size = 0x40000, scoped, tag = 'scratch operand']
  #allocation4 [shape = 'bf16[4,256,32]{2,1,0:T(16,128)(2,1)}', space=vmem, size = 0x40000, scoped, tag = 'scratch operand']
  %s0 = inlined_call_operand.vmem [shape: bf16[2,256,128], index: 0, kind: input, shape index: {}]
  %s1 = inlined_call_operand.vmem [shape: bf16[2,256,128], index: 1, kind: input, shape index: {}]
  %s2 = inlined_call_operand.vmem [shape: bf16[4,128,32], index: 2, kind: input, shape index: {}]
  %s3 = inlined_call_operand.vmem [shape: bf16[4,128,32], index: 3, kind: input, shape index: {}]
  %s4 = inlined_call_operand.vmem [shape: bf16[4,128,32], index: 4, kind: input, shape index: {}]
  %s5 = inlined_call_operand.vmem [shape: bf16[4,32,128], index: 5, kind: input, shape index: {}]
  %s6 = inlined_call_operand.vmem [shape: f32[1,128], index: 6, kind: input, shape index: {}]
  %s7 = inlined_call_operand.hbm [shape: f32[2,256,128], index: 7, kind: output, shape index: {}]
  %s8 = sld [smem:[#allocation0]]
  $region65: #{tpu_custom_call.1} parent=0
    _
  %s10 = ssub.s32 1, %s8
  %s11 = scalar_select 0, %s10, %s8
  $region1: #{tpu_custom_call.1} parent=0
    #allocation5 [shape = 'u8[131072]{0}', space=vmem, size = 0x20000, scoped, tag = 'output window, operand 0']
    #allocation6 [shape = 's32[2]{0}', space=sflag, size = 0x8, scoped, tag = 'scoped memory for tpu_custom_call.1']
    %12 = vsyncpa [#allocation6], 0
    %s13 = scalar_lea.sflag [#allocation6], 1
    %14 = vsyncpa %s13, 0
    loop: start=0, step=1, limit=6
    $region2: #{tpu_custom_call.1} parent=1 // loop_pre_header
      _
    $region3: #{tpu_custom_call.1} parent=1 // loop_header
      %s16 = sphi 0, %s20
      %p17 = scmp.ge.s32.totalorder %s16, 6
      %s23 = sphi 0, %s35
      %s24 = sphi 0, %s31
      %s25 = sphi 0, %s23
      %s26 = sphi 0, %s24
      %s27 = sphi 0, %s25
      %s28 = sphi 0, %s26
      %s40 = sphi 0, %s42
      %s43 = sphi 0, %s40
      %s44 = sphi 0, %s43
      %s60 = sphi 0, %s44
      %s66 = sphi 0, %s68
      %s69 = sphi 0, %s66
      %s70 = sphi 0, %s69
      %s86 = sphi 0, %s70
      %s90 = sphi 0, %s90
      %s92 = sphi 0, %s90
      %s93 = sphi 0, %s92
      %s107 = sphi 0, %s93
      %s111 = sphi 0, %s111
      %s113 = sphi 0, %s111
      %s114 = sphi 0, %s113
      %s128 = sphi 0, %s114
      %s132 = sphi 0, %s132
      %s134 = sphi 0, %s132
      %s135 = sphi 0, %s134
      %s149 = sphi 0, %s135
      %s153 = sphi 0, %s153
      %s155 = sphi 0, %s153
      %s156 = sphi 0, %s155
      %s170 = sphi 0, %s156
      %s174 = sphi 0, %s174
      %s176 = sphi 0, %s174
      %s177 = sphi 0, %s176
      %s191 = sphi 0, %s177
      %s199 = sphi 0, %s201
      %s202 = sphi 0, %s199
      %s203 = sphi 0, %s202
      %s219 = sphi 0, %s203
    $region4: #{tpu_custom_call.1} parent=1 // loop_header_branch
      %19 = sbr.rel (%p17) target = $region8
    $region5: #{tpu_custom_call.1} parent=1 // loop_body
      %s21 = ssub.s32 %s16, 1
      %s22 = ssub.s32 %s16, 2
      %s29 = sadd.s32 1, %s24
      %p30 = scmp.ge.s32.totalorder %s29, 2
      %s31 = scalar_select %p30, 0, %s29
      %s32 = sadd.s32 1, %s23
      %s33 = scalar_select %p30, %s32, %s23
      %p34 = scmp.ge.s32.totalorder %s33, 2
      %s35 = scalar_select %p34, 0, %s33
      %s36 = ssub.s32 %s23, %s35
      %s37 = ssub.s32 %s24, %s31
      %s38 = sor.u32 %s36, %s37
      %p39 = scmp.eq.s32.totalorder %s38, 0
      %s41 = sadd.s32 %s40, 1
      %s42 = scalar_select %p39, %s40, %s41
      %p45 = pneg %p39
      %p46 = scmp.eq.s32.totalorder %s16, 3
      %p47 = por %p45, %p46
      %p48 = scmp.ne.s32.totalorder %s40, %s43
      %p49 = scmp.eq.s32.totalorder %s16, 0
      %p50 = por %p48, %p49
      %p51 = scmp.ne.s32.totalorder %s40, %s43
      %p52 = scmp.eq.s32.totalorder %s21, 3
      %p53 = por %p51, %p52
      %p54 = scmp.ne.s32.totalorder %s43, %s44
      %p55 = scmp.eq.s32.totalorder %s21, 0
      %p56 = por %p54, %p55
      %p57 = scmp.ne.s32.totalorder %s43, %s44
      %p58 = scmp.eq.s32.totalorder %s22, 3
      %p59 = por %p57, %p58
      %p61 = scmp.ne.s32.totalorder %s44, %s60
      %p62 = scmp.eq.s32.totalorder %s22, 0
      %p63 = por %p61, %p62
      %s64 = ssub.s32 %s23, %s35
      %p65 = scmp.eq.s32.totalorder %s64, 0
      %s67 = sadd.s32 %s66, 1
      %s68 = scalar_select %p65, %s66, %s67
      %p71 = pneg %p65
      %p72 = scmp.eq.s32.totalorder %s16, 3
      %p73 = por %p71, %p72
      %p74 = scmp.ne.s32.totalorder %s66, %s69
      %p75 = scmp.eq.s32.totalorder %s16, 0
      %p76 = por %p74, %p75
      %p77 = scmp.ne.s32.totalorder %s66, %s69
      %p78 = scmp.eq.s32.totalorder %s21, 3
      %p79 = por %p77, %p78
      %p80 = scmp.ne.s32.totalorder %s69, %s70
      %p81 = scmp.eq.s32.totalorder %s21, 0
      %p82 = por %p80, %p81
      %p83 = scmp.ne.s32.totalorder %s69, %s70
      %p84 = scmp.eq.s32.totalorder %s22, 3
      %p85 = por %p83, %p84
      %p87 = scmp.ne.s32.totalorder %s70, %s86
      %p88 = scmp.eq.s32.totalorder %s22, 0
      %p89 = por %p87, %p88
      %s91 = sadd.s32 %s90, 1
      %p94 = scmp.eq.s32.totalorder %s16, 3
      %p95 = scmp.ne.s32.totalorder %s90, %s92
      %p96 = scmp.eq.s32.totalorder %s16, 0
      %p97 = por %p95, %p96
      %p98 = scmp.ne.s32.totalorder %s90, %s92
      %p99 = scmp.eq.s32.totalorder %s21, 3
      %p100 = por %p98, %p99
      %p101 = scmp.ne.s32.totalorder %s92, %s93
      %p102 = scmp.eq.s32.totalorder %s21, 0
      %p103 = por %p101, %p102
      %p104 = scmp.ne.s32.totalorder %s92, %s93
      %p105 = scmp.eq.s32.totalorder %s22, 3
      %p106 = por %p104, %p105
      %p108 = scmp.ne.s32.totalorder %s93, %s107
      %p109 = scmp.eq.s32.totalorder %s22, 0
      %p110 = por %p108, %p109
      %s112 = sadd.s32 %s111, 1
      %p115 = scmp.eq.s32.totalorder %s16, 3
      %p116 = scmp.ne.s32.totalorder %s111, %s113
      %p117 = scmp.eq.s32.totalorder %s16, 0
      %p118 = por %p116, %p117
      %p119 = scmp.ne.s32.totalorder %s111, %s113
      %p120 = scmp.eq.s32.totalorder %s21, 3
      %p121 = por %p119, %p120
      %p122 = scmp.ne.s32.totalorder %s113, %s114
      %p123 = scmp.eq.s32.totalorder %s21, 0
      %p124 = por %p122, %p123
      %p125 = scmp.ne.s32.totalorder %s113, %s114
      %p126 = scmp.eq.s32.totalorder %s22, 3
      %p127 = por %p125, %p126
      %p129 = scmp.ne.s32.totalorder %s114, %s128
      %p130 = scmp.eq.s32.totalorder %s22, 0
      %p131 = por %p129, %p130
      %s133 = sadd.s32 %s132, 1
      %p136 = scmp.eq.s32.totalorder %s16, 3
      %p137 = scmp.ne.s32.totalorder %s132, %s134
      %p138 = scmp.eq.s32.totalorder %s16, 0
      %p139 = por %p137, %p138
      %p140 = scmp.ne.s32.totalorder %s132, %s134
      %p141 = scmp.eq.s32.totalorder %s21, 3
      %p142 = por %p140, %p141
      %p143 = scmp.ne.s32.totalorder %s134, %s135
      %p144 = scmp.eq.s32.totalorder %s21, 0
      %p145 = por %p143, %p144
      %p146 = scmp.ne.s32.totalorder %s134, %s135
      %p147 = scmp.eq.s32.totalorder %s22, 3
      %p148 = por %p146, %p147
      %p150 = scmp.ne.s32.totalorder %s135, %s149
      %p151 = scmp.eq.s32.totalorder %s22, 0
      %p152 = por %p150, %p151
      %s154 = sadd.s32 %s153, 1
      %p157 = scmp.eq.s32.totalorder %s16, 3
      %p158 = scmp.ne.s32.totalorder %s153, %s155
      %p159 = scmp.eq.s32.totalorder %s16, 0
      %p160 = por %p158, %p159
      %p161 = scmp.ne.s32.totalorder %s153, %s155
      %p162 = scmp.eq.s32.totalorder %s21, 3
      %p163 = por %p161, %p162
      %p164 = scmp.ne.s32.totalorder %s155, %s156
      %p165 = scmp.eq.s32.totalorder %s21, 0
      %p166 = por %p164, %p165
      %p167 = scmp.ne.s32.totalorder %s155, %s156
      %p168 = scmp.eq.s32.totalorder %s22, 3
      %p169 = por %p167, %p168
      %p171 = scmp.ne.s32.totalorder %s156, %s170
      %p172 = scmp.eq.s32.totalorder %s22, 0
      %p173 = por %p171, %p172
      %s175 = sadd.s32 %s174, 1
      %p178 = scmp.eq.s32.totalorder %s16, 3
      %p179 = scmp.ne.s32.totalorder %s174, %s176
      %p180 = scmp.eq.s32.totalorder %s16, 0
      %p181 = por %p179, %p180
      %p182 = scmp.ne.s32.totalorder %s174, %s176
      %p183 = scmp.eq.s32.totalorder %s21, 3
      %p184 = por %p182, %p183
      %p185 = scmp.ne.s32.totalorder %s176, %s177
      %p186 = scmp.eq.s32.totalorder %s21, 0
      %p187 = por %p185, %p186
      %p188 = scmp.ne.s32.totalorder %s176, %s177
      %p189 = scmp.eq.s32.totalorder %s22, 3
      %p190 = por %p188, %p189
      %p192 = scmp.ne.s32.totalorder %s177, %s191
      %p193 = scmp.eq.s32.totalorder %s22, 0
      %p194 = por %p192, %p193
      %s195 = ssub.s32 %s23, %s35
      %s196 = ssub.s32 %s24, %s31
      %s197 = sor.u32 %s195, %s196
      %p198 = scmp.eq.s32.totalorder %s197, 0
      %s200 = sadd.s32 %s199, 1
      %s201 = scalar_select %p198, %s199, %s200
      %p204 = pneg %p198
      %p205 = scmp.eq.s32.totalorder %s16, 3
      %p206 = por %p204, %p205
      %p207 = scmp.ne.s32.totalorder %s199, %s202
      %p208 = scmp.eq.s32.totalorder %s16, 0
      %p209 = por %p207, %p208
      %p210 = scmp.ne.s32.totalorder %s199, %s202
      %p211 = scmp.eq.s32.totalorder %s21, 3
      %p212 = por %p210, %p211
      %p213 = scmp.ne.s32.totalorder %s202, %s203
      %p214 = scmp.eq.s32.totalorder %s21, 0
      %p215 = por %p213, %p214
      %p216 = scmp.ne.s32.totalorder %s202, %s203
      %p217 = scmp.eq.s32.totalorder %s22, 3
      %p218 = por %p216, %p217
      %p220 = scmp.ne.s32.totalorder %s203, %s219
      %p221 = scmp.eq.s32.totalorder %s22, 0
      %p222 = por %p220, %p221
      %p223 = scmp.le.s32.totalorder 1, %s16
      %p224 = scmp.lt.s32.totalorder %s16, 5
      %p225 = pnand %p223, %p224
      %p226 = pneg %p225
      // Predicated region
      $region9: #{tpu_custom_call.1} parent=5 // pred_check
        _
      $region10: #{tpu_custom_call.1} parent=5 // pred_check_branch
        %228 = sbr.rel (%p225) target = $region12
      $region11: #{tpu_custom_call.1} parent=5 // pred_region
        %s229 = ssub.s32 %s16, 1
        // Predicated region
        $region13: #{tpu_custom_call.1} parent=11 // pred_check
          %p230 = pneg %p103
        $region14: #{tpu_custom_call.1} parent=11 // pred_check_branch
          %232 = sbr.rel (%p230) target = $region16
        $region15: #{tpu_custom_call.1} parent=11 // pred_region
          _
        $region16: #{tpu_custom_call.1} parent=11 // pred_fallthru
          _
        // Predicated region
        $region17: #{tpu_custom_call.1} parent=11 // pred_check
          %p233 = pneg %p124
        $region18: #{tpu_custom_call.1} parent=11 // pred_check_branch
          %235 = sbr.rel (%p233) target = $region20
        $region19: #{tpu_custom_call.1} parent=11 // pred_region
          _
        $region20: #{tpu_custom_call.1} parent=11 // pred_fallthru
          _
        // Predicated region
        $region21: #{tpu_custom_call.1} parent=11 // pred_check
          %p236 = pneg %p145
        $region22: #{tpu_custom_call.1} parent=11 // pred_check_branch
          %238 = sbr.rel (%p236) target = $region24
        $region23: #{tpu_custom_call.1} parent=11 // pred_region
          _
        $region24: #{tpu_custom_call.1} parent=11 // pred_fallthru
          _
        // Predicated region
        $region25: #{tpu_custom_call.1} parent=11 // pred_check
          %p239 = pneg %p166
        $region26: #{tpu_custom_call.1} parent=11 // pred_check_branch
          %241 = sbr.rel (%p239) target = $region28
        $region27: #{tpu_custom_call.1} parent=11 // pred_region
          _
        $region28: #{tpu_custom_call.1} parent=11 // pred_fallthru
          _
        // Predicated region
        $region29: #{tpu_custom_call.1} parent=11 // pred_check
          %p242 = pneg %p187
        $region30: #{tpu_custom_call.1} parent=11 // pred_check_branch
          %244 = sbr.rel (%p242) target = $region32
        $region31: #{tpu_custom_call.1} parent=11 // pred_region
          _
        $region32: #{tpu_custom_call.1} parent=11 // pred_fallthru
          _
      $region12: #{tpu_custom_call.1} parent=5 // pred_fallthru
        _
      %p245 = scmp.lt.s32.totalorder %s16, 4
      // Predicated region
      $region33: #{tpu_custom_call.1} parent=5 // pred_check
        %p246 = pneg %p245
      $region34: #{tpu_custom_call.1} parent=5 // pred_check_branch
        %248 = sbr.rel (%p246) target = $region36
      $region35: #{tpu_custom_call.1} parent=5 // pred_region
        // Predicated region
        $region37: #{tpu_custom_call.1} parent=35 // pred_check
          %p249 = pneg %p50
        $region38: #{tpu_custom_call.1} parent=35 // pred_check_branch
          %251 = sbr.rel (%p249) target = $region40
        $region39: #{tpu_custom_call.1} parent=35 // pred_region
          %s252 = smul.u32 16, %s24
          %p253 = scmp.lt.s32.totalorder %s23, 1
          %s254 = scalar_select %p253, %s23, 1
          %p255 = scmp.lt.s32.totalorder %s252, 31
          %s256 = scalar_select %p255, %s252, 31
          %s257 = smul.addr %s254, 32
          %s258 = sadd.s32 %s256, %s257
          %s259 = smul.addr %s258, 4
          %s260 = scalar_lea.vmem %s0, %s259
          %s261 = smul.u32 16, %s24
        $region40: #{tpu_custom_call.1} parent=35 // pred_fallthru
          _
        // Predicated region
        $region41: #{tpu_custom_call.1} parent=35 // pred_check
          %p262 = pneg %p76
        $region42: #{tpu_custom_call.1} parent=35 // pred_check_branch
          %264 = sbr.rel (%p262) target = $region44
        $region43: #{tpu_custom_call.1} parent=35 // pred_region
          %p265 = scmp.lt.s32.totalorder %s23, 1
          %s266 = scalar_select %p265, %s23, 1
          %s267 = smul.addr %s266, 32
          %s268 = smul.addr %s267, 4
          %s269 = scalar_lea.vmem %s1, %s268
        $region44: #{tpu_custom_call.1} parent=35 // pred_fallthru
          _
      $region36: #{tpu_custom_call.1} parent=5 // pred_fallthru
        _
      %p270 = scmp.le.s32.totalorder 1, %s16
      %p271 = scmp.lt.s32.totalorder %s16, 5
      %p272 = pnand %p270, %p271
      %p273 = pneg %p272
      // Predicated region
      $region45: #{tpu_custom_call.1} parent=5 // pred_check
        _
      $region46: #{tpu_custom_call.1} parent=5 // pred_check_branch
        %275 = sbr.rel (%p272) target = $region48
      $region47: #{tpu_custom_call.1} parent=5 // pred_region
        %s276 = ssub.s32 %s16, 1
        %s277 = smul.u32 16, %s26
        %p278 = scmp.lt.s32.totalorder %s25, 1
        %s279 = scalar_select %p278, %s25, 1
        %p280 = scmp.lt.s32.totalorder %s277, 31
        %s281 = scalar_select %p280, %s277, 31
        %s282 = smul.addr %s279, 32
        %s283 = sadd.s32 %s281, %s282
        %s284 = smul.addr %s283, 4
        %s285 = scalar_lea.vmem %s0, %s284
        %p286 = pneg %p56
        %p287 = pneg %p53
        %p288 = scmp.lt.s32.totalorder %s25, 1
        %s289 = scalar_select %p288, %s25, 1
        %s290 = smul.addr %s289, 32
        %s291 = smul.addr %s290, 4
        %s292 = scalar_lea.vmem %s1, %s291
        %p293 = pneg %p82
        %p294 = pneg %p79
        %p295 = pneg %p103
        %p296 = pneg %p100
        %p297 = pneg %p124
        %p298 = pneg %p121
        %p299 = pneg %p145
        %p300 = pneg %p142
        %p301 = pneg %p166
        %p302 = pneg %p163
        %p303 = pneg %p187
        %p304 = pneg %p184
        %p305 = pneg %p215
        %p306 = pneg %p212
        %s307 = sand.u32 %s202, 1
        %s308 = scalar_lea.sflag [#allocation6], %s307
        %s309 = sand.u32 %s202, 1
        %s310 = smul.addr %s309, 128
        %s311 = scalar_lea.vmem [#allocation5], %s310
        %s312 = smul.u32 16, %s26
        %p313 = scmp.lt.s32.totalorder %s25, 1
        %s314 = scalar_select %p313, %s25, 1
        %p315 = scmp.lt.s32.totalorder %s312, 31
        %s316 = scalar_select %p315, %s312, 31
        %s317 = smul.addr %s314, 32
        %s318 = sadd.s32 %s316, %s317
        %s319 = smul.addr %s318, 4
        %s320 = scalar_lea.vmem %s0, %s319
        %s321 = smul.u32 16, %s26
        %p322 = scmp.lt.s32.totalorder %s25, 1
        %s323 = scalar_select %p322, %s25, 1
        %s324 = smul.addr %s323, 32
        %s325 = smul.addr %s324, 4
        %s326 = scalar_lea.vmem %s1, %s325
        %s327 = smul.u32 16, %s26
        %p329 = scmp.eq.s32.totalorder %s26, 0
        // Predicated region
        $region49: #{tpu_custom_call.1} parent=47 // pred_check
          %p330 = pneg %p329
        $region50: #{tpu_custom_call.1} parent=47 // pred_check_branch
          %332 = sbr.rel (%p330) target = $region52
        $region51: #{tpu_custom_call.1} parent=47 // pred_region
          %v333 = vld [vmem:[%s326] sm:$0xf]
          %v334 = vld [vmem:[%s326 + $0x4] sm:$0xf]
          %v335 = vld [vmem:[%s326 + $0x8] sm:$0xf]
          %v336 = vld [vmem:[%s326 + $0xc] sm:$0xf]
          %v337 = vld [vmem:[%s326 + $0x10] sm:$0xf]
          %v338 = vld [vmem:[%s326 + $0x14] sm:$0xf]
          %v339 = vld [vmem:[%s326 + $0x18] sm:$0xf]
          %v340 = vld [vmem:[%s326 + $0x1c] sm:$0xf]
          %v341 = vld [vmem:[%s326 + $0x20] sm:$0xf]
          %v342 = vld [vmem:[%s326 + $0x24] sm:$0xf]
          %v343 = vld [vmem:[%s326 + $0x28] sm:$0xf]
          %v344 = vld [vmem:[%s326 + $0x2c] sm:$0xf]
          %v345 = vld [vmem:[%s326 + $0x30] sm:$0xf]
          %v346 = vld [vmem:[%s326 + $0x34] sm:$0xf]
          %v347 = vld [vmem:[%s326 + $0x38] sm:$0xf]
          %v348 = vld [vmem:[%s326 + $0x3c] sm:$0xf]
          %v349 = vld [vmem:[%s326 + $0x40] sm:$0xf]
          %v350 = vld [vmem:[%s326 + $0x44] sm:$0xf]
          %v351 = vld [vmem:[%s326 + $0x48] sm:$0xf]
          %v352 = vld [vmem:[%s326 + $0x4c] sm:$0xf]
          %v353 = vld [vmem:[%s326 + $0x50] sm:$0xf]
          %v354 = vld [vmem:[%s326 + $0x54] sm:$0xf]
          %v355 = vld [vmem:[%s326 + $0x58] sm:$0xf]
          %v356 = vld [vmem:[%s326 + $0x5c] sm:$0xf]
          %v357 = vld [vmem:[%s326 + $0x60] sm:$0xf]
          %v358 = vld [vmem:[%s326 + $0x64] sm:$0xf]
          %v359 = vld [vmem:[%s326 + $0x68] sm:$0xf]
          %v360 = vld [vmem:[%s326 + $0x6c] sm:$0xf]
          %v361 = vld [vmem:[%s326 + $0x70] sm:$0xf]
          %v362 = vld [vmem:[%s326 + $0x74] sm:$0xf]
          %v363 = vld [vmem:[%s326 + $0x78] sm:$0xf]
          %v364 = vld [vmem:[%s326 + $0x7c] sm:$0xf]
          %v365 = vld [vmem:[%s3] sm:$0xf]
          %v366 = vld [vmem:[%s3 + $0x4] sm:$0xf]
          %v367 = vld [vmem:[%s3 + $0x8] sm:$0xf]
          %v368 = vld [vmem:[%s3 + $0xc] sm:$0xf]
          %v369 = vld [vmem:[%s3 + $0x10] sm:$0xf]
          %v370 = vld [vmem:[%s3 + $0x14] sm:$0xf]
          %v371 = vld [vmem:[%s3 + $0x18] sm:$0xf]
          %v372 = vld [vmem:[%s3 + $0x1c] sm:$0xf]
          %v373 = vld [vmem:[%s3 + $0x20] sm:$0xf]
          %v374 = vld [vmem:[%s3 + $0x24] sm:$0xf]
          %v375 = vld [vmem:[%s3 + $0x28] sm:$0xf]
          %v376 = vld [vmem:[%s3 + $0x2c] sm:$0xf]
          %v377 = vld [vmem:[%s3 + $0x30] sm:$0xf]
          %v378 = vld [vmem:[%s3 + $0x34] sm:$0xf]
          %v379 = vld [vmem:[%s3 + $0x38] sm:$0xf]
          %v380 = vld [vmem:[%s3 + $0x3c] sm:$0xf]
          %v413 = vunpack.c.l.b16 %v333
          %v414 = vunpack.c.l.b16 %v334
          %v415 = vunpack.c.l.b16 %v335
          %v416 = vunpack.c.l.b16 %v336
          %v417 = vunpack.c.l.b16 %v337
          %v418 = vunpack.c.l.b16 %v338
          %v419 = vunpack.c.l.b16 %v339
          %v420 = vunpack.c.l.b16 %v340
          %v421 = vunpack.c.l.b16 %v341
          %v422 = vunpack.c.l.b16 %v342
          %v423 = vunpack.c.l.b16 %v343
          %v424 = vunpack.c.l.b16 %v344
          %v425 = vunpack.c.l.b16 %v345
          %v426 = vunpack.c.l.b16 %v346
          %v427 = vunpack.c.l.b16 %v347
          %v428 = vunpack.c.l.b16 %v348
          %v429 = vunpack.c.l.b16 %v349
          %v430 = vunpack.c.l.b16 %v350
          %v431 = vunpack.c.l.b16 %v351
          %v432 = vunpack.c.l.b16 %v352
          %v433 = vunpack.c.l.b16 %v353
          %v434 = vunpack.c.l.b16 %v354
          %v435 = vunpack.c.l.b16 %v355
          %v436 = vunpack.c.l.b16 %v356
          %v437 = vunpack.c.l.b16 %v357
          %v438 = vunpack.c.l.b16 %v358
          %v439 = vunpack.c.l.b16 %v359
          %v440 = vunpack.c.l.b16 %v360
          %v441 = vunpack.c.l.b16 %v361
          %v442 = vunpack.c.l.b16 %v362
          %v443 = vunpack.c.l.b16 %v363
          %v444 = vunpack.c.l.b16 %v364
          %v445 = vpack.c.b16 %v414, %v413
          %v446 = vpack.c.b16 %v416, %v415
          %v447 = vpack.c.b16 %v418, %v417
          %v448 = vpack.c.b16 %v420, %v419
          %v449 = vpack.c.b16 %v422, %v421
          %v450 = vpack.c.b16 %v424, %v423
          %v451 = vpack.c.b16 %v426, %v425
          %v452 = vpack.c.b16 %v428, %v427
          %v453 = vpack.c.b16 %v430, %v429
          %v454 = vpack.c.b16 %v432, %v431
          %v455 = vpack.c.b16 %v434, %v433
          %v456 = vpack.c.b16 %v436, %v435
          %v457 = vpack.c.b16 %v438, %v437
          %v458 = vpack.c.b16 %v440, %v439
          %v459 = vpack.c.b16 %v442, %v441
          %v460 = vpack.c.b16 %v444, %v443
          %v493 = vunpack.c.l.b16 %v365
          %v494 = vunpack.c.l.b16 %v366
          %v495 = vunpack.c.l.b16 %v367
          %v496 = vunpack.c.l.b16 %v368
          %v497 = vunpack.c.l.b16 %v369
          %v498 = vunpack.c.l.b16 %v370
          %v499 = vunpack.c.l.b16 %v371
          %v500 = vunpack.c.l.b16 %v372
          %v501 = vunpack.c.l.b16 %v373
          %v502 = vunpack.c.l.b16 %v374
          %v503 = vunpack.c.l.b16 %v375
          %v504 = vunpack.c.l.b16 %v376
          %v505 = vunpack.c.l.b16 %v377
          %v506 = vunpack.c.l.b16 %v378
          %v507 = vunpack.c.l.b16 %v379
          %v508 = vunpack.c.l.b16 %v380
          %v509 = vpack.c.b16 %v494, %v493
          %v510 = vpack.c.b16 %v496, %v495
          %v511 = vpack.c.b16 %v498, %v497
          %v512 = vpack.c.b16 %v500, %v499
          %v513 = vpack.c.b16 %v502, %v501
          %v514 = vpack.c.b16 %v504, %v503
          %v515 = vpack.c.b16 %v506, %v505
          %v516 = vpack.c.b16 %v508, %v507
          %525 = vmatprep.subr.bf16.mxu0 0
          %526 = vmatpush1.bf16.msra.mxu0 %v509
          %527 = vmatprep.subr.bf16.mxu0 0
          %528 = vmatpush1.bf16.msra.mxu0 %v510
          %529 = vmatprep.subr.bf16.mxu0 0
          %530 = vmatpush1.bf16.msra.mxu0 %v511
          %531 = vmatprep.subr.bf16.mxu0 0
          %532 = vmatpush1.bf16.msra.mxu0 %v512
          %533 = vmatprep.subr.bf16.mxu0 0
          %534 = vmatpush1.bf16.msra.mxu0 %v513
          %535 = vmatprep.subr.bf16.mxu0 0
          %536 = vmatpush1.bf16.msra.mxu0 %v514
          %537 = vmatprep.subr.bf16.mxu0 0
          %538 = vmatpush1.bf16.msra.mxu0 %v515
          %539 = vmatprep.subr.bf16.mxu0 0
          %540 = vmatpush1.bf16.msra.mxu0 %v516
          %541 = vmatprep.subr.bf16.mxu0 0
          %542 = vmatpush1.bf16.msra.mxu0 0
          %543 = vmatprep.subr.bf16.mxu0 0
          %544 = vmatpush1.bf16.msra.mxu0 0
          %545 = vmatprep.subr.bf16.mxu0 0
          %546 = vmatpush1.bf16.msra.mxu0 0
          %547 = vmatprep.subr.bf16.mxu0 0
          %548 = vmatpush1.bf16.msra.mxu0 0
          %549 = vmatprep.subr.bf16.mxu0 0
          %550 = vmatpush1.bf16.msra.mxu0 0
          %551 = vmatprep.subr.bf16.mxu0 0
          %552 = vmatpush1.bf16.msra.mxu0 0
          %553 = vmatprep.subr.bf16.mxu0 0
          %554 = vmatpush1.bf16.msra.mxu0 0
          %555 = vmatprep.subr.bf16.mxu0 0
          %556 = vmatpush1.bf16.msra.mxu0 0
          %557 = vmatprep.mubr.bf16.mxu0 0
          %558 = vmatmul.mubr.bf16.gmra.mrb[0].mxu0 %v445
          %v559 = vpop.f32.mrb[0].mxu0
          %v560 = vadd.f32 0.0, %v559
          %v561 = vpop.f32.mrb[0].mxu0
          %v562 = vpop.f32.mrb[0].mxu0
          %v563 = vadd.f32 0.0, %v562
          %v564 = vpop.f32.mrb[0].mxu0
          %565 = vmatprep.mubr.bf16.mxu0 0
          %566 = vmatmul.mubr.bf16.gmra.mrb[0].mxu0 %v446
          %v567 = vpop.f32.mrb[0].mxu0
          %v568 = vadd.f32 0.0, %v567
          %v569 = vpop.f32.mrb[0].mxu0
          %v570 = vpop.f32.mrb[0].mxu0
          %v571 = vadd.f32 0.0, %v570
          %v572 = vpop.f32.mrb[0].mxu0
          %573 = vmatprep.mubr.bf16.mxu0 0
          %574 = vmatmul.mubr.bf16.gmra.mrb[0].mxu0 %v447
          %v575 = vpop.f32.mrb[0].mxu0
          %v576 = vadd.f32 0.0, %v575
          %v577 = vpop.f32.mrb[0].mxu0
          %v578 = vpop.f32.mrb[0].mxu0
          %v579 = vadd.f32 0.0, %v578
          %v580 = vpop.f32.mrb[0].mxu0
          %581 = vmatprep.mubr.bf16.mxu0 0
          %582 = vmatmul.mubr.bf16.gmra.mrb[0].mxu0 %v448
          %v583 = vpop.f32.mrb[0].mxu0
          %v584 = vadd.f32 0.0, %v583
          %v585 = vpop.f32.mrb[0].mxu0
          %v586 = vpop.f32.mrb[0].mxu0
          %v587 = vadd.f32 0.0, %v586
          %v588 = vpop.f32.mrb[0].mxu0
          %589 = vmatprep.mubr.bf16.mxu0 0
          %590 = vmatmul.mubr.bf16.gmra.mrb[0].mxu0 %v449
          %v591 = vpop.f32.mrb[0].mxu0
          %v592 = vadd.f32 0.0, %v591
          %v593 = vpop.f32.mrb[0].mxu0
          %v594 = vpop.f32.mrb[0].mxu0
          %v595 = vadd.f32 0.0, %v594
          %v596 = vpop.f32.mrb[0].mxu0
          %597 = vmatprep.mubr.bf16.mxu0 0
          %598 = vmatmul.mubr.bf16.gmra.mrb[0].mxu0 %v450
          %v599 = vpop.f32.mrb[0].mxu0
          %v600 = vadd.f32 0.0, %v599
          %v601 = vpop.f32.mrb[0].mxu0
          %v602 = vpop.f32.mrb[0].mxu0
          %v603 = vadd.f32 0.0, %v602
          %v604 = vpop.f32.mrb[0].mxu0
          %605 = vmatprep.mubr.bf16.mxu0 0
          %606 = vmatmul.mubr.bf16.gmra.mrb[0].mxu0 %v451
          %v607 = vpop.f32.mrb[0].mxu0
          %v608 = vadd.f32 0.0, %v607
          %v609 = vpop.f32.mrb[0].mxu0
          %v610 = vpop.f32.mrb[0].mxu0
          %v611 = vadd.f32 0.0, %v610
          %v612 = vpop.f32.mrb[0].mxu0
          %613 = vmatprep.mubr.bf16.mxu0 0
          %614 = vmatmul.mubr.bf16.gmra.mrb[0].mxu0 %v452
          %v615 = vpop.f32.mrb[0].mxu0
          %v616 = vadd.f32 0.0, %v615
          %v617 = vpop.f32.mrb[0].mxu0
          %v618 = vpop.f32.mrb[0].mxu0
          %v619 = vadd.f32 0.0, %v618
          %v620 = vpop.f32.mrb[0].mxu0
          %621 = vmatprep.mubr.bf16.mxu0 0
          %622 = vmatmul.mubr.bf16.gmra.mrb[0].mxu0 %v453
          %v623 = vpop.f32.mrb[0].mxu0
          %v624 = vadd.f32 0.0, %v623
          %v625 = vpop.f32.mrb[0].mxu0
          %v626 = vpop.f32.mrb[0].mxu0
          %v627 = vadd.f32 0.0, %v626
          %v628 = vpop.f32.mrb[0].mxu0
          %629 = vmatprep.mubr.bf16.mxu0 0
          %630 = vmatmul.mubr.bf16.gmra.mrb[0].mxu0 %v454
          %v631 = vpop.f32.mrb[0].mxu0
          %v632 = vadd.f32 0.0, %v631
          %v633 = vpop.f32.mrb[0].mxu0
          %v634 = vpop.f32.mrb[0].mxu0
          %v635 = vadd.f32 0.0, %v634
          %v636 = vpop.f32.mrb[0].mxu0
          %637 = vmatprep.mubr.bf16.mxu0 0
          %638 = vmatmul.mubr.bf16.gmra.mrb[0].mxu0 %v455
          %v639 = vpop.f32.mrb[0].mxu0
          %v640 = vadd.f32 0.0, %v639
          %v641 = vpop.f32.mrb[0].mxu0
          %v642 = vpop.f32.mrb[0].mxu0
          %v643 = vadd.f32 0.0, %v642
          %v644 = vpop.f32.mrb[0].mxu0
          %645 = vmatprep.mubr.bf16.mxu0 0
          %646 = vmatmul.mubr.bf16.gmra.mrb[0].mxu0 %v456
          %v647 = vpop.f32.mrb[0].mxu0
          %v648 = vadd.f32 0.0, %v647
          %v649 = vpop.f32.mrb[0].mxu0
          %v650 = vpop.f32.mrb[0].mxu0
          %v651 = vadd.f32 0.0, %v650
          %v652 = vpop.f32.mrb[0].mxu0
          %653 = vmatprep.mubr.bf16.mxu0 0
          %654 = vmatmul.mubr.bf16.gmra.mrb[0].mxu0 %v457
          %v655 = vpop.f32.mrb[0].mxu0
          %v656 = vadd.f32 0.0, %v655
          %v657 = vpop.f32.mrb[0].mxu0
          %v658 = vpop.f32.mrb[0].mxu0
          %v659 = vadd.f32 0.0, %v658
          %v660 = vpop.f32.mrb[0].mxu0
          %661 = vmatprep.mubr.bf16.mxu0 0
          %662 = vmatmul.mubr.bf16.gmra.mrb[0].mxu0 %v458
          %v663 = vpop.f32.mrb[0].mxu0
          %v664 = vadd.f32 0.0, %v663
          %v665 = vpop.f32.mrb[0].mxu0
          %v666 = vpop.f32.mrb[0].mxu0
          %v667 = vadd.f32 0.0, %v666
          %v668 = vpop.f32.mrb[0].mxu0
          %669 = vmatprep.mubr.bf16.mxu0 0
          %670 = vmatmul.mubr.bf16.gmra.mrb[0].mxu0 %v459
          %v671 = vpop.f32.mrb[0].mxu0
          %v672 = vadd.f32 0.0, %v671
          %v673 = vpop.f32.mrb[0].mxu0
          %v674 = vpop.f32.mrb[0].mxu0
          %v675 = vadd.f32 0.0, %v674
          %v676 = vpop.f32.mrb[0].mxu0
          %677 = vmatprep.mubr.bf16.mxu0 0
          %678 = vmatmul.mubr.bf16.gmra.mrb[0].mxu0 %v460
          %v679 = vpop.f32.mrb[0].mxu0
          %v680 = vadd.f32 0.0, %v679
          %v681 = vpop.f32.mrb[0].mxu0
          %v682 = vpop.f32.mrb[0].mxu0
          %v683 = vadd.f32 0.0, %v682
          %v684 = vpop.f32.mrb[0].mxu0
          %685 = vdwg.mxu0
          %v686 = vpack.c.bf16 %v563, %v560
          %v687 = vpack.c.bf16 %v571, %v568
          %v688 = vpack.c.bf16 %v579, %v576
          %v689 = vpack.c.bf16 %v587, %v584
          %v690 = vpack.c.bf16 %v595, %v592
          %v691 = vpack.c.bf16 %v603, %v600
          %v692 = vpack.c.bf16 %v611, %v608
          %v693 = vpack.c.bf16 %v619, %v616
          %v694 = vpack.c.bf16 %v627, %v624
          %v695 = vpack.c.bf16 %v635, %v632
          %v696 = vpack.c.bf16 %v643, %v640
          %v697 = vpack.c.bf16 %v651, %v648
          %v698 = vpack.c.bf16 %v659, %v656
          %v699 = vpack.c.bf16 %v667, %v664
          %v700 = vpack.c.bf16 %v675, %v672
          %v701 = vpack.c.bf16 %v683, %v680
          %vm702 = vcmask 261120
          %703 = vst.msk [vmem:[#allocation3] sm:$0xff] %vm702, %v686
          %704 = vst.msk [vmem:[#allocation3 + $0x8] sm:$0xff] %vm702, %v687
          %705 = vst.msk [vmem:[#allocation3 + $0x10] sm:$0xff] %vm702, %v688
          %706 = vst.msk [vmem:[#allocation3 + $0x18] sm:$0xff] %vm702, %v689
          %707 = vst.msk [vmem:[#allocation3 + $0x20] sm:$0xff] %vm702, %v690
          %708 = vst.msk [vmem:[#allocation3 + $0x28] sm:$0xff] %vm702, %v691
          %709 = vst.msk [vmem:[#allocation3 + $0x30] sm:$0xff] %vm702, %v692
          %710 = vst.msk [vmem:[#allocation3 + $0x38] sm:$0xff] %vm702, %v693
          %711 = vst.msk [vmem:[#allocation3 + $0x40] sm:$0xff] %vm702, %v694
          %712 = vst.msk [vmem:[#allocation3 + $0x48] sm:$0xff] %vm702, %v695
          %713 = vst.msk [vmem:[#allocation3 + $0x50] sm:$0xff] %vm702, %v696
          %714 = vst.msk [vmem:[#allocation3 + $0x58] sm:$0xff] %vm702, %v697
          %715 = vst.msk [vmem:[#allocation3 + $0x60] sm:$0xff] %vm702, %v698
          %716 = vst.msk [vmem:[#allocation3 + $0x68] sm:$0xff] %vm702, %v699
          %717 = vst.msk [vmem:[#allocation3 + $0x70] sm:$0xff] %vm702, %v700
          %718 = vst.msk [vmem:[#allocation3 + $0x78] sm:$0xff] %vm702, %v701
          %v719 = vld [vmem:[%s4] sm:$0xf]
          %v720 = vld [vmem:[%s4 + $0x4] sm:$0xf]
          %v721 = vld [vmem:[%s4 + $0x8] sm:$0xf]
          %v722 = vld [vmem:[%s4 + $0xc] sm:$0xf]
          %v723 = vld [vmem:[%s4 + $0x10] sm:$0xf]
          %v724 = vld [vmem:[%s4 + $0x14] sm:$0xf]
          %v725 = vld [vmem:[%s4 + $0x18] sm:$0xf]
          %v726 = vld [vmem:[%s4 + $0x1c] sm:$0xf]
          %v727 = vld [vmem:[%s4 + $0x20] sm:$0xf]
          %v728 = vld [vmem:[%s4 + $0x24] sm:$0xf]
          %v729 = vld [vmem:[%s4 + $0x28] sm:$0xf]
          %v730 = vld [vmem:[%s4 + $0x2c] sm:$0xf]
          %v731 = vld [vmem:[%s4 + $0x30] sm:$0xf]
          %v732 = vld [vmem:[%s4 + $0x34] sm:$0xf]
          %v733 = vld [vmem:[%s4 + $0x38] sm:$0xf]
          %v734 = vld [vmem:[%s4 + $0x3c] sm:$0xf]
          %v751 = vunpack.c.l.b16 %v719
          %v752 = vunpack.c.l.b16 %v720
          %v753 = vunpack.c.l.b16 %v721
          %v754 = vunpack.c.l.b16 %v722
          %v755 = vunpack.c.l.b16 %v723
          %v756 = vunpack.c.l.b16 %v724
          %v757 = vunpack.c.l.b16 %v725
          %v758 = vunpack.c.l.b16 %v726
          %v759 = vunpack.c.l.b16 %v727
          %v760 = vunpack.c.l.b16 %v728
          %v761 = vunpack.c.l.b16 %v729
          %v762 = vunpack.c.l.b16 %v730
          %v763 = vunpack.c.l.b16 %v731
          %v764 = vunpack.c.l.b16 %v732
          %v765 = vunpack.c.l.b16 %v733
          %v766 = vunpack.c.l.b16 %v734
          %v767 = vpack.c.b16 %v752, %v751
          %v768 = vpack.c.b16 %v754, %v753
          %v769 = vpack.c.b16 %v756, %v755
          %v770 = vpack.c.b16 %v758, %v757
          %v771 = vpack.c.b16 %v760, %v759
          %v772 = vpack.c.b16 %v762, %v761
          %v773 = vpack.c.b16 %v764, %v763
          %v774 = vpack.c.b16 %v766, %v765
          %783 = vmatprep.subr.bf16.mxu0 0
          %784 = vmatpush1.bf16.msra.mxu0 %v767
          %785 = vmatprep.subr.bf16.mxu0 0
          %786 = vmatpush1.bf16.msra.mxu0 %v768
          %787 = vmatprep.subr.bf16.mxu0 0
          %788 = vmatpush1.bf16.msra.mxu0 %v769
          %789 = vmatprep.subr.bf16.mxu0 0
          %790 = vmatpush1.bf16.msra.mxu0 %v770
          %791 = vmatprep.subr.bf16.mxu0 0
          %792 = vmatpush1.bf16.msra.mxu0 %v771
          %793 = vmatprep.subr.bf16.mxu0 0
          %794 = vmatpush1.bf16.msra.mxu0 %v772
          %795 = vmatprep.subr.bf16.mxu0 0
          %796 = vmatpush1.bf16.msra.mxu0 %v773
          %797 = vmatprep.subr.bf16.mxu0 0
          %798 = vmatpush1.bf16.msra.mxu0 %v774
          %799 = vmatprep.subr.bf16.mxu0 0
          %800 = vmatpush1.bf16.msra.mxu0 0
          %801 = vmatprep.subr.bf16.mxu0 0
          %802 = vmatpush1.bf16.msra.mxu0 0
          %803 = vmatprep.subr.bf16.mxu0 0
          %804 = vmatpush1.bf16.msra.mxu0 0
          %805 = vmatprep.subr.bf16.mxu0 0
          %806 = vmatpush1.bf16.msra.mxu0 0
          %807 = vmatprep.subr.bf16.mxu0 0
          %808 = vmatpush1.bf16.msra.mxu0 0
          %809 = vmatprep.subr.bf16.mxu0 0
          %810 = vmatpush1.bf16.msra.mxu0 0
          %811 = vmatprep.subr.bf16.mxu0 0
          %812 = vmatpush1.bf16.msra.mxu0 0
          %813 = vmatprep.subr.bf16.mxu0 0
          %814 = vmatpush1.bf16.msra.mxu0 0
          %815 = vmatprep.mubr.bf16.mxu0 0
          %816 = vmatmul.mubr.bf16.gmra.mrb[0].mxu0 %v445
          %v817 = vpop.f32.mrb[0].mxu0
          %v818 = vadd.f32 0.0, %v817
          %v819 = vpop.f32.mrb[0].mxu0
          %v820 = vpop.f32.mrb[0].mxu0
          %v821 = vadd.f32 0.0, %v820
          %v822 = vpop.f32.mrb[0].mxu0
          %823 = vmatprep.mubr.bf16.mxu0 0
          %824 = vmatmul.mubr.bf16.gmra.mrb[0].mxu0 %v446
          %v825 = vpop.f32.mrb[0].mxu0
          %v826 = vadd.f32 0.0, %v825
          %v827 = vpop.f32.mrb[0].mxu0
          %v828 = vpop.f32.mrb[0].mxu0
          %v829 = vadd.f32 0.0, %v828
          %v830 = vpop.f32.mrb[0].mxu0
          %831 = vmatprep.mubr.bf16.mxu0 0
          %832 = vmatmul.mubr.bf16.gmra.mrb[0].mxu0 %v447
          %v833 = vpop.f32.mrb[0].mxu0
          %v834 = vadd.f32 0.0, %v833
          %v835 = vpop.f32.mrb[0].mxu0
          %v836 = vpop.f32.mrb[0].mxu0
          %v837 = vadd.f32 0.0, %v836
          %v838 = vpop.f32.mrb[0].mxu0
          %839 = vmatprep.mubr.bf16.mxu0 0
          %840 = vmatmul.mubr.bf16.gmra.mrb[0].mxu0 %v448
          %v841 = vpop.f32.mrb[0].mxu0
          %v842 = vadd.f32 0.0, %v841
          %v843 = vpop.f32.mrb[0].mxu0
          %v844 = vpop.f32.mrb[0].mxu0
          %v845 = vadd.f32 0.0, %v844
          %v846 = vpop.f32.mrb[0].mxu0
          %847 = vmatprep.mubr.bf16.mxu0 0
          %848 = vmatmul.mubr.bf16.gmra.mrb[0].mxu0 %v449
          %v849 = vpop.f32.mrb[0].mxu0
          %v850 = vadd.f32 0.0, %v849
          %v851 = vpop.f32.mrb[0].mxu0
          %v852 = vpop.f32.mrb[0].mxu0
          %v853 = vadd.f32 0.0, %v852
          %v854 = vpop.f32.mrb[0].mxu0
          %855 = vmatprep.mubr.bf16.mxu0 0
          %856 = vmatmul.mubr.bf16.gmra.mrb[0].mxu0 %v450
          %v857 = vpop.f32.mrb[0].mxu0
          %v858 = vadd.f32 0.0, %v857
          %v859 = vpop.f32.mrb[0].mxu0
          %v860 = vpop.f32.mrb[0].mxu0
          %v861 = vadd.f32 0.0, %v860
          %v862 = vpop.f32.mrb[0].mxu0
          %863 = vmatprep.mubr.bf16.mxu0 0
          %864 = vmatmul.mubr.bf16.gmra.mrb[0].mxu0 %v451
          %v865 = vpop.f32.mrb[0].mxu0
          %v866 = vadd.f32 0.0, %v865
          %v867 = vpop.f32.mrb[0].mxu0
          %v868 = vpop.f32.mrb[0].mxu0
          %v869 = vadd.f32 0.0, %v868
          %v870 = vpop.f32.mrb[0].mxu0
          %871 = vmatprep.mubr.bf16.mxu0 0
          %872 = vmatmul.mubr.bf16.gmra.mrb[0].mxu0 %v452
          %v873 = vpop.f32.mrb[0].mxu0
          %v874 = vadd.f32 0.0, %v873
          %v875 = vpop.f32.mrb[0].mxu0
          %v876 = vpop.f32.mrb[0].mxu0
          %v877 = vadd.f32 0.0, %v876
          %v878 = vpop.f32.mrb[0].mxu0
          %879 = vmatprep.mubr.bf16.mxu0 0
          %880 = vmatmul.mubr.bf16.gmra.mrb[0].mxu0 %v453
          %v881 = vpop.f32.mrb[0].mxu0
          %v882 = vadd.f32 0.0, %v881
          %v883 = vpop.f32.mrb[0].mxu0
          %v884 = vpop.f32.mrb[0].mxu0
          %v885 = vadd.f32 0.0, %v884
          %v886 = vpop.f32.mrb[0].mxu0
          %887 = vmatprep.mubr.bf16.mxu0 0
          %888 = vmatmul.mubr.bf16.gmra.mrb[0].mxu0 %v454
          %v889 = vpop.f32.mrb[0].mxu0
          %v890 = vadd.f32 0.0, %v889
          %v891 = vpop.f32.mrb[0].mxu0
          %v892 = vpop.f32.mrb[0].mxu0
          %v893 = vadd.f32 0.0, %v892
          %v894 = vpop.f32.mrb[0].mxu0
          %895 = vmatprep.mubr.bf16.mxu0 0
          %896 = vmatmul.mubr.bf16.gmra.mrb[0].mxu0 %v455
          %v897 = vpop.f32.mrb[0].mxu0
          %v898 = vadd.f32 0.0, %v897
          %v899 = vpop.f32.mrb[0].mxu0
          %v900 = vpop.f32.mrb[0].mxu0
          %v901 = vadd.f32 0.0, %v900
          %v902 = vpop.f32.mrb[0].mxu0
          %903 = vmatprep.mubr.bf16.mxu0 0
          %904 = vmatmul.mubr.bf16.gmra.mrb[0].mxu0 %v456
          %v905 = vpop.f32.mrb[0].mxu0
          %v906 = vadd.f32 0.0, %v905
          %v907 = vpop.f32.mrb[0].mxu0
          %v908 = vpop.f32.mrb[0].mxu0
          %v909 = vadd.f32 0.0, %v908
          %v910 = vpop.f32.mrb[0].mxu0
          %911 = vmatprep.mubr.bf16.mxu0 0
          %912 = vmatmul.mubr.bf16.gmra.mrb[0].mxu0 %v457
          %v913 = vpop.f32.mrb[0].mxu0
          %v914 = vadd.f32 0.0, %v913
          %v915 = vpop.f32.mrb[0].mxu0
          %v916 = vpop.f32.mrb[0].mxu0
          %v917 = vadd.f32 0.0, %v916
          %v918 = vpop.f32.mrb[0].mxu0
          %919 = vmatprep.mubr.bf16.mxu0 0
          %920 = vmatmul.mubr.bf16.gmra.mrb[0].mxu0 %v458
          %v921 = vpop.f32.mrb[0].mxu0
          %v922 = vadd.f32 0.0, %v921
          %v923 = vpop.f32.mrb[0].mxu0
          %v924 = vpop.f32.mrb[0].mxu0
          %v925 = vadd.f32 0.0, %v924
          %v926 = vpop.f32.mrb[0].mxu0
          %927 = vmatprep.mubr.bf16.mxu0 0
          %928 = vmatmul.mubr.bf16.gmra.mrb[0].mxu0 %v459
          %v929 = vpop.f32.mrb[0].mxu0
          %v930 = vadd.f32 0.0, %v929
          %v931 = vpop.f32.mrb[0].mxu0
          %v932 = vpop.f32.mrb[0].mxu0
          %v933 = vadd.f32 0.0, %v932
          %v934 = vpop.f32.mrb[0].mxu0
          %935 = vmatprep.mubr.bf16.mxu0 0
          %936 = vmatmul.mubr.bf16.gmra.mrb[0].mxu0 %v460
          %v937 = vpop.f32.mrb[0].mxu0
          %v938 = vadd.f32 0.0, %v937
          %v939 = vpop.f32.mrb[0].mxu0
          %v940 = vpop.f32.mrb[0].mxu0
          %v941 = vadd.f32 0.0, %v940
          %v942 = vpop.f32.mrb[0].mxu0
          %943 = vdwg.mxu0
          %v944 = vpack.c.bf16 %v821, %v818
          %v945 = vpack.c.bf16 %v829, %v826
          %v946 = vpack.c.bf16 %v837, %v834
          %v947 = vpack.c.bf16 %v845, %v842
          %v948 = vpack.c.bf16 %v853, %v850
          %v949 = vpack.c.bf16 %v861, %v858
          %v950 = vpack.c.bf16 %v869, %v866
          %v951 = vpack.c.bf16 %v877, %v874
          %v952 = vpack.c.bf16 %v885, %v882
          %v953 = vpack.c.bf16 %v893, %v890
          %v954 = vpack.c.bf16 %v901, %v898
          %v955 = vpack.c.bf16 %v909, %v906
          %v956 = vpack.c.bf16 %v917, %v914
          %v957 = vpack.c.bf16 %v925, %v922
          %v958 = vpack.c.bf16 %v933, %v930
          %v959 = vpack.c.bf16 %v941, %v938
          %960 = vst.msk [vmem:[#allocation4] sm:$0xff] %vm702, %v944
          %961 = vst.msk [vmem:[#allocation4 + $0x8] sm:$0xff] %vm702, %v945
          %962 = vst.msk [vmem:[#allocation4 + $0x10] sm:$0xff] %vm702, %v946
          %963 = vst.msk [vmem:[#allocation4 + $0x18] sm:$0xff] %vm702, %v947
          %964 = vst.msk [vmem:[#allocation4 + $0x20] sm:$0xff] %vm702, %v948
          %965 = vst.msk [vmem:[#allocation4 + $0x28] sm:$0xff] %vm702, %v949
          %966 = vst.msk [vmem:[#allocation4 + $0x30] sm:$0xff] %vm702, %v950
          %967 = vst.msk [vmem:[#allocation4 + $0x38] sm:$0xff] %vm702, %v951
          %968 = vst.msk [vmem:[#allocation4 + $0x40] sm:$0xff] %vm702, %v952
          %969 = vst.msk [vmem:[#allocation4 + $0x48] sm:$0xff] %vm702, %v953
          %970 = vst.msk [vmem:[#allocation4 + $0x50] sm:$0xff] %vm702, %v954
          %971 = vst.msk [vmem:[#allocation4 + $0x58] sm:$0xff] %vm702, %v955
          %972 = vst.msk [vmem:[#allocation4 + $0x60] sm:$0xff] %vm702, %v956
          %973 = vst.msk [vmem:[#allocation4 + $0x68] sm:$0xff] %vm702, %v957
          %974 = vst.msk [vmem:[#allocation4 + $0x70] sm:$0xff] %vm702, %v958
          %975 = vst.msk [vmem:[#allocation4 + $0x78] sm:$0xff] %vm702, %v959
          %s976 = scalar_lea.vmem %s3, 64
          %v977 = vld [vmem:[%s976] sm:$0xf]
          %v978 = vld [vmem:[%s976 + $0x4] sm:$0xf]
          %v979 = vld [vmem:[%s976 + $0x8] sm:$0xf]
          %v980 = vld [vmem:[%s976 + $0xc] sm:$0xf]
          %v981 = vld [vmem:[%s976 + $0x10] sm:$0xf]
          %v982 = vld [vmem:[%s976 + $0x14] sm:$0xf]
          %v983 = vld [vmem:[%s976 + $0x18] sm:$0xf]
          %v984 = vld [vmem:[%s976 + $0x1c] sm:$0xf]
          %v985 = vld [vmem:[%s976 + $0x20] sm:$0xf]
          %v986 = vld [vmem:[%s976 + $0x24] sm:$0xf]
          %v987 = vld [vmem:[%s976 + $0x28] sm:$0xf]
          %v988 = vld [vmem:[%s976 + $0x2c] sm:$0xf]
          %v989 = vld [vmem:[%s976 + $0x30] sm:$0xf]
          %v990 = vld [vmem:[%s976 + $0x34] sm:$0xf]
          %v991 = vld [vmem:[%s976 + $0x38] sm:$0xf]
          %v992 = vld [vmem:[%s976 + $0x3c] sm:$0xf]
          %v1009 = vunpack.c.l.b16 %v977
          %v1010 = vunpack.c.l.b16 %v978
          %v1011 = vunpack.c.l.b16 %v979
          %v1012 = vunpack.c.l.b16 %v980
          %v1013 = vunpack.c.l.b16 %v981
          %v1014 = vunpack.c.l.b16 %v982
          %v1015 = vunpack.c.l.b16 %v983
          %v1016 = vunpack.c.l.b16 %v984
          %v1017 = vunpack.c.l.b16 %v985
          %v1018 = vunpack.c.l.b16 %v986
          %v1019 = vunpack.c.l.b16 %v987
          %v1020 = vunpack.c.l.b16 %v988
          %v1021 = vunpack.c.l.b16 %v989
          %v1022 = vunpack.c.l.b16 %v990
          %v1023 = vunpack.c.l.b16 %v991
          %v1024 = vunpack.c.l.b16 %v992
          %v1025 = vpack.c.b16 %v1010, %v1009
          %v1026 = vpack.c.b16 %v1012, %v1011
          %v1027 = vpack.c.b16 %v1014, %v1013
          %v1028 = vpack.c.b16 %v1016, %v1015
          %v1029 = vpack.c.b16 %v1018, %v1017
          %v1030 = vpack.c.b16 %v1020, %v1019
          %v1031 = vpack.c.b16 %v1022, %v1021
          %v1032 = vpack.c.b16 %v1024, %v1023
          %1041 = vmatprep.subr.bf16.mxu0 0
          %1042 = vmatpush1.bf16.msra.mxu0 %v1025
          %1043 = vmatprep.subr.bf16.mxu0 0
          %1044 = vmatpush1.bf16.msra.mxu0 %v1026
          %1045 = vmatprep.subr.bf16.mxu0 0
          %1046 = vmatpush1.bf16.msra.mxu0 %v1027
          %1047 = vmatprep.subr.bf16.mxu0 0
          %1048 = vmatpush1.bf16.msra.mxu0 %v1028
          %1049 = vmatprep.subr.bf16.mxu0 0
          %1050 = vmatpush1.bf16.msra.mxu0 %v1029
          %1051 = vmatprep.subr.bf16.mxu0 0
          %1052 = vmatpush1.bf16.msra.mxu0 %v1030
          %1053 = vmatprep.subr.bf16.mxu0 0
          %1054 = vmatpush1.bf16.msra.mxu0 %v1031
          %1055 = vmatprep.subr.bf16.mxu0 0
          %1056 = vmatpush1.bf16.msra.mxu0 %v1032
          %1057 = vmatprep.subr.bf16.mxu0 0
          %1058 = vmatpush1.bf16.msra.mxu0 0
          %1059 = vmatprep.subr.bf16.mxu0 0
          %1060 = vmatpush1.bf16.msra.mxu0 0
          %1061 = vmatprep.subr.bf16.mxu0 0
          %1062 = vmatpush1.bf16.msra.mxu0 0
          %1063 = vmatprep.subr.bf16.mxu0 0
          %1064 = vmatpush1.bf16.msra.mxu0 0
          %1065 = vmatprep.subr.bf16.mxu0 0
          %1066 = vmatpush1.bf16.msra.mxu0 0
          %1067 = vmatprep.subr.bf16.mxu0 0
          %1068 = vmatpush1.bf16.msra.mxu0 0
          %1069 = vmatprep.subr.bf16.mxu0 0
          %1070 = vmatpush1.bf16.msra.mxu0 0
          %1071 = vmatprep.subr.bf16.mxu0 0
          %1072 = vmatpush1.bf16.msra.mxu0 0
          %1073 = vmatprep.mubr.bf16.mxu0 0
          %1074 = vmatmul.mubr.bf16.gmra.mrb[0].mxu0 %v445
          %v1075 = vpop.f32.mrb[0].mxu0
          %v1076 = vadd.f32 0.0, %v1075
          %v1077 = vpop.f32.mrb[0].mxu0
          %v1078 = vpop.f32.mrb[0].mxu0
          %v1079 = vadd.f32 0.0, %v1078
          %v1080 = vpop.f32.mrb[0].mxu0
          %1081 = vmatprep.mubr.bf16.mxu0 0
          %1082 = vmatmul.mubr.bf16.gmra.mrb[0].mxu0 %v446
          %v1083 = vpop.f32.mrb[0].mxu0
          %v1084 = vadd.f32 0.0, %v1083
          %v1085 = vpop.f32.mrb[0].mxu0
          %v1086 = vpop.f32.mrb[0].mxu0
          %v1087 = vadd.f32 0.0, %v1086
          %v1088 = vpop.f32.mrb[0].mxu0
          %1089 = vmatprep.mubr.bf16.mxu0 0
          %1090 = vmatmul.mubr.bf16.gmra.mrb[0].mxu0 %v447
          %v1091 = vpop.f32.mrb[0].mxu0
          %v1092 = vadd.f32 0.0, %v1091
          %v1093 = vpop.f32.mrb[0].mxu0
          %v1094 = vpop.f32.mrb[0].mxu0
          %v1095 = vadd.f32 0.0, %v1094
          %v1096 = vpop.f32.mrb[0].mxu0
          %1097 = vmatprep.mubr.bf16.mxu0 0
          %1098 = vmatmul.mubr.bf16.gmra.mrb[0].mxu0 %v448
          %v1099 = vpop.f32.mrb[0].mxu0
          %v1100 = vadd.f32 0.0, %v1099
          %v1101 = vpop.f32.mrb[0].mxu0
          %v1102 = vpop.f32.mrb[0].mxu0
          %v1103 = vadd.f32 0.0, %v1102
          %v1104 = vpop.f32.mrb[0].mxu0
          %1105 = vmatprep.mubr.bf16.mxu0 0
          %1106 = vmatmul.mubr.bf16.gmra.mrb[0].mxu0 %v449
          %v1107 = vpop.f32.mrb[0].mxu0
          %v1108 = vadd.f32 0.0, %v1107
          %v1109 = vpop.f32.mrb[0].mxu0
          %v1110 = vpop.f32.mrb[0].mxu0
          %v1111 = vadd.f32 0.0, %v1110
          %v1112 = vpop.f32.mrb[0].mxu0
          %1113 = vmatprep.mubr.bf16.mxu0 0
          %1114 = vmatmul.mubr.bf16.gmra.mrb[0].mxu0 %v450
          %v1115 = vpop.f32.mrb[0].mxu0
          %v1116 = vadd.f32 0.0, %v1115
          %v1117 = vpop.f32.mrb[0].mxu0
          %v1118 = vpop.f32.mrb[0].mxu0
          %v1119 = vadd.f32 0.0, %v1118
          %v1120 = vpop.f32.mrb[0].mxu0
          %1121 = vmatprep.mubr.bf16.mxu0 0
          %1122 = vmatmul.mubr.bf16.gmra.mrb[0].mxu0 %v451
          %v1123 = vpop.f32.mrb[0].mxu0
          %v1124 = vadd.f32 0.0, %v1123
          %v1125 = vpop.f32.mrb[0].mxu0
          %v1126 = vpop.f32.mrb[0].mxu0
          %v1127 = vadd.f32 0.0, %v1126
          %v1128 = vpop.f32.mrb[0].mxu0
          %1129 = vmatprep.mubr.bf16.mxu0 0
          %1130 = vmatmul.mubr.bf16.gmra.mrb[0].mxu0 %v452
          %v1131 = vpop.f32.mrb[0].mxu0
          %v1132 = vadd.f32 0.0, %v1131
          %v1133 = vpop.f32.mrb[0].mxu0
          %v1134 = vpop.f32.mrb[0].mxu0
          %v1135 = vadd.f32 0.0, %v1134
          %v1136 = vpop.f32.mrb[0].mxu0
          %1137 = vmatprep.mubr.bf16.mxu0 0
          %1138 = vmatmul.mubr.bf16.gmra.mrb[0].mxu0 %v453
          %v1139 = vpop.f32.mrb[0].mxu0
          %v1140 = vadd.f32 0.0, %v1139
          %v1141 = vpop.f32.mrb[0].mxu0
          %v1142 = vpop.f32.mrb[0].mxu0
          %v1143 = vadd.f32 0.0, %v1142
          %v1144 = vpop.f32.mrb[0].mxu0
          %1145 = vmatprep.mubr.bf16.mxu0 0
          %1146 = vmatmul.mubr.bf16.gmra.mrb[0].mxu0 %v454
          %v1147 = vpop.f32.mrb[0].mxu0
          %v1148 = vadd.f32 0.0, %v1147
          %v1149 = vpop.f32.mrb[0].mxu0
          %v1150 = vpop.f32.mrb[0].mxu0
          %v1151 = vadd.f32 0.0, %v1150
          %v1152 = vpop.f32.mrb[0].mxu0
          %1153 = vmatprep.mubr.bf16.mxu0 0
          %1154 = vmatmul.mubr.bf16.gmra.mrb[0].mxu0 %v455
          %v1155 = vpop.f32.mrb[0].mxu0
          %v1156 = vadd.f32 0.0, %v1155
          %v1157 = vpop.f32.mrb[0].mxu0
          %v1158 = vpop.f32.mrb[0].mxu0
          %v1159 = vadd.f32 0.0, %v1158
          %v1160 = vpop.f32.mrb[0].mxu0
          %1161 = vmatprep.mubr.bf16.mxu0 0
          %1162 = vmatmul.mubr.bf16.gmra.mrb[0].mxu0 %v456
          %v1163 = vpop.f32.mrb[0].mxu0
          %v1164 = vadd.f32 0.0, %v1163
          %v1165 = vpop.f32.mrb[0].mxu0
          %v1166 = vpop.f32.mrb[0].mxu0
          %v1167 = vadd.f32 0.0, %v1166
          %v1168 = vpop.f32.mrb[0].mxu0
          %1169 = vmatprep.mubr.bf16.mxu0 0
          %1170 = vmatmul.mubr.bf16.gmra.mrb[0].mxu0 %v457
          %v1171 = vpop.f32.mrb[0].mxu0
          %v1172 = vadd.f32 0.0, %v1171
          %v1173 = vpop.f32.mrb[0].mxu0
          %v1174 = vpop.f32.mrb[0].mxu0
          %v1175 = vadd.f32 0.0, %v1174
          %v1176 = vpop.f32.mrb[0].mxu0
          %1177 = vmatprep.mubr.bf16.mxu0 0
          %1178 = vmatmul.mubr.bf16.gmra.mrb[0].mxu0 %v458
          %v1179 = vpop.f32.mrb[0].mxu0
          %v1180 = vadd.f32 0.0, %v1179
          %v1181 = vpop.f32.mrb[0].mxu0
          %v1182 = vpop.f32.mrb[0].mxu0
          %v1183 = vadd.f32 0.0, %v1182
          %v1184 = vpop.f32.mrb[0].mxu0
          %1185 = vmatprep.mubr.bf16.mxu0 0
          %1186 = vmatmul.mubr.bf16.gmra.mrb[0].mxu0 %v459
          %v1187 = vpop.f32.mrb[0].mxu0
          %v1188 = vadd.f32 0.0, %v1187
          %v1189 = vpop.f32.mrb[0].mxu0
          %v1190 = vpop.f32.mrb[0].mxu0
          %v1191 = vadd.f32 0.0, %v1190
          %v1192 = vpop.f32.mrb[0].mxu0
          %1193 = vmatprep.mubr.bf16.mxu0 0
          %1194 = vmatmul.mubr.bf16.gmra.mrb[0].mxu0 %v460
          %v1195 = vpop.f32.mrb[0].mxu0
          %v1196 = vadd.f32 0.0, %v1195
          %v1197 = vpop.f32.mrb[0].mxu0
          %v1198 = vpop.f32.mrb[0].mxu0
          %v1199 = vadd.f32 0.0, %v1198
          %v1200 = vpop.f32.mrb[0].mxu0
          %1201 = vdwg.mxu0
          %v1202 = vpack.c.bf16 %v1079, %v1076
          %v1203 = vpack.c.bf16 %v1087, %v1084
          %v1204 = vpack.c.bf16 %v1095, %v1092
          %v1205 = vpack.c.bf16 %v1103, %v1100
          %v1206 = vpack.c.bf16 %v1111, %v1108
          %v1207 = vpack.c.bf16 %v1119, %v1116
          %v1208 = vpack.c.bf16 %v1127, %v1124
          %v1209 = vpack.c.bf16 %v1135, %v1132
          %v1210 = vpack.c.bf16 %v1143, %v1140
          %v1211 = vpack.c.bf16 %v1151, %v1148
          %v1212 = vpack.c.bf16 %v1159, %v1156
          %v1213 = vpack.c.bf16 %v1167, %v1164
          %v1214 = vpack.c.bf16 %v1175, %v1172
          %v1215 = vpack.c.bf16 %v1183, %v1180
          %v1216 = vpack.c.bf16 %v1191, %v1188
          %v1217 = vpack.c.bf16 %v1199, %v1196
          %s1218 = scalar_lea.vmem [#allocation3], 128
          %1219 = vst.msk [vmem:[%s1218] sm:$0xff] %vm702, %v1202
          %1220 = vst.msk [vmem:[%s1218 + $0x8] sm:$0xff] %vm702, %v1203
          %1221 = vst.msk [vmem:[%s1218 + $0x10] sm:$0xff] %vm702, %v1204
          %1222 = vst.msk [vmem:[%s1218 + $0x18] sm:$0xff] %vm702, %v1205
          %1223 = vst.msk [vmem:[%s1218 + $0x20] sm:$0xff] %vm702, %v1206
          %1224 = vst.msk [vmem:[%s1218 + $0x28] sm:$0xff] %vm702, %v1207
          %1225 = vst.msk [vmem:[%s1218 + $0x30] sm:$0xff] %vm702, %v1208
          %1226 = vst.msk [vmem:[%s1218 + $0x38] sm:$0xff] %vm702, %v1209
          %1227 = vst.msk [vmem:[%s1218 + $0x40] sm:$0xff] %vm702, %v1210
          %1228 = vst.msk [vmem:[%s1218 + $0x48] sm:$0xff] %vm702, %v1211
          %1229 = vst.msk [vmem:[%s1218 + $0x50] sm:$0xff] %vm702, %v1212
          %1230 = vst.msk [vmem:[%s1218 + $0x58] sm:$0xff] %vm702, %v1213
          %1231 = vst.msk [vmem:[%s1218 + $0x60] sm:$0xff] %vm702, %v1214
          %1232 = vst.msk [vmem:[%s1218 + $0x68] sm:$0xff] %vm702, %v1215
          %1233 = vst.msk [vmem:[%s1218 + $0x70] sm:$0xff] %vm702, %v1216
          %1234 = vst.msk [vmem:[%s1218 + $0x78] sm:$0xff] %vm702, %v1217
          %s1235 = scalar_lea.vmem %s4, 64
          %v1236 = vld [vmem:[%s1235] sm:$0xf]
          %v1237 = vld [vmem:[%s1235 + $0x4] sm:$0xf]
          %v1238 = vld [vmem:[%s1235 + $0x8] sm:$0xf]
          %v1239 = vld [vmem:[%s1235 + $0xc] sm:$0xf]
          %v1240 = vld [vmem:[%s1235 + $0x10] sm:$0xf]
          %v1241 = vld [vmem:[%s1235 + $0x14] sm:$0xf]
          %v1242 = vld [vmem:[%s1235 + $0x18] sm:$0xf]
          %v1243 = vld [vmem:[%s1235 + $0x1c] sm:$0xf]
          %v1244 = vld [vmem:[%s1235 + $0x20] sm:$0xf]
          %v1245 = vld [vmem:[%s1235 + $0x24] sm:$0xf]
          %v1246 = vld [vmem:[%s1235 + $0x28] sm:$0xf]
          %v1247 = vld [vmem:[%s1235 + $0x2c] sm:$0xf]
          %v1248 = vld [vmem:[%s1235 + $0x30] sm:$0xf]
          %v1249 = vld [vmem:[%s1235 + $0x34] sm:$0xf]
          %v1250 = vld [vmem:[%s1235 + $0x38] sm:$0xf]
          %v1251 = vld [vmem:[%s1235 + $0x3c] sm:$0xf]
          %v1268 = vunpack.c.l.b16 %v1236
          %v1269 = vunpack.c.l.b16 %v1237
          %v1270 = vunpack.c.l.b16 %v1238
          %v1271 = vunpack.c.l.b16 %v1239
          %v1272 = vunpack.c.l.b16 %v1240
          %v1273 = vunpack.c.l.b16 %v1241
          %v1274 = vunpack.c.l.b16 %v1242
          %v1275 = vunpack.c.l.b16 %v1243
          %v1276 = vunpack.c.l.b16 %v1244
          %v1277 = vunpack.c.l.b16 %v1245
          %v1278 = vunpack.c.l.b16 %v1246
          %v1279 = vunpack.c.l.b16 %v1247
          %v1280 = vunpack.c.l.b16 %v1248
          %v1281 = vunpack.c.l.b16 %v1249
          %v1282 = vunpack.c.l.b16 %v1250
          %v1283 = vunpack.c.l.b16 %v1251
          %v1284 = vpack.c.b16 %v1269, %v1268
          %v1285 = vpack.c.b16 %v1271, %v1270
          %v1286 = vpack.c.b16 %v1273, %v1272
          %v1287 = vpack.c.b16 %v1275, %v1274
          %v1288 = vpack.c.b16 %v1277, %v1276
          %v1289 = vpack.c.b16 %v1279, %v1278
          %v1290 = vpack.c.b16 %v1281, %v1280
          %v1291 = vpack.c.b16 %v1283, %v1282
          %1300 = vmatprep.subr.bf16.mxu0 0
          %1301 = vmatpush1.bf16.msra.mxu0 %v1284
          %1302 = vmatprep.subr.bf16.mxu0 0
          %1303 = vmatpush1.bf16.msra.mxu0 %v1285
          %1304 = vmatprep.subr.bf16.mxu0 0
          %1305 = vmatpush1.bf16.msra.mxu0 %v1286
          %1306 = vmatprep.subr.bf16.mxu0 0
          %1307 = vmatpush1.bf16.msra.mxu0 %v1287
          %1308 = vmatprep.subr.bf16.mxu0 0
          %1309 = vmatpush1.bf16.msra.mxu0 %v1288
          %1310 = vmatprep.subr.bf16.mxu0 0
          %1311 = vmatpush1.bf16.msra.mxu0 %v1289
          %1312 = vmatprep.subr.bf16.mxu0 0
          %1313 = vmatpush1.bf16.msra.mxu0 %v1290
          %1314 = vmatprep.subr.bf16.mxu0 0
          %1315 = vmatpush1.bf16.msra.mxu0 %v1291
          %1316 = vmatprep.subr.bf16.mxu0 0
          %1317 = vmatpush1.bf16.msra.mxu0 0
          %1318 = vmatprep.subr.bf16.mxu0 0
          %1319 = vmatpush1.bf16.msra.mxu0 0
          %1320 = vmatprep.subr.bf16.mxu0 0
          %1321 = vmatpush1.bf16.msra.mxu0 0
          %1322 = vmatprep.subr.bf16.mxu0 0
          %1323 = vmatpush1.bf16.msra.mxu0 0
          %1324 = vmatprep.subr.bf16.mxu0 0
          %1325 = vmatpush1.bf16.msra.mxu0 0
          %1326 = vmatprep.subr.bf16.mxu0 0
          %1327 = vmatpush1.bf16.msra.mxu0 0
          %1328 = vmatprep.subr.bf16.mxu0 0
          %1329 = vmatpush1.bf16.msra.mxu0 0
          %1330 = vmatprep.subr.bf16.mxu0 0
          %1331 = vmatpush1.bf16.msra.mxu0 0
          %1332 = vmatprep.mubr.bf16.mxu0 0
          %1333 = vmatmul.mubr.bf16.gmra.mrb[0].mxu0 %v445
          %v1334 = vpop.f32.mrb[0].mxu0
          %v1335 = vadd.f32 0.0, %v1334
          %v1336 = vpop.f32.mrb[0].mxu0
          %v1337 = vpop.f32.mrb[0].mxu0
          %v1338 = vadd.f32 0.0, %v1337
          %v1339 = vpop.f32.mrb[0].mxu0
          %1340 = vmatprep.mubr.bf16.mxu0 0
          %1341 = vmatmul.mubr.bf16.gmra.mrb[0].mxu0 %v446
          %v1342 = vpop.f32.mrb[0].mxu0
          %v1343 = vadd.f32 0.0, %v1342
          %v1344 = vpop.f32.mrb[0].mxu0
          %v1345 = vpop.f32.mrb[0].mxu0
          %v1346 = vadd.f32 0.0, %v1345
          %v1347 = vpop.f32.mrb[0].mxu0
          %1348 = vmatprep.mubr.bf16.mxu0 0
          %1349 = vmatmul.mubr.bf16.gmra.mrb[0].mxu0 %v447
          %v1350 = vpop.f32.mrb[0].mxu0
          %v1351 = vadd.f32 0.0, %v1350
          %v1352 = vpop.f32.mrb[0].mxu0
          %v1353 = vpop.f32.mrb[0].mxu0
          %v1354 = vadd.f32 0.0, %v1353
          %v1355 = vpop.f32.mrb[0].mxu0
          %1356 = vmatprep.mubr.bf16.mxu0 0
          %1357 = vmatmul.mubr.bf16.gmra.mrb[0].mxu0 %v448
          %v1358 = vpop.f32.mrb[0].mxu0
          %v1359 = vadd.f32 0.0, %v1358
          %v1360 = vpop.f32.mrb[0].mxu0
          %v1361 = vpop.f32.mrb[0].mxu0
          %v1362 = vadd.f32 0.0, %v1361
          %v1363 = vpop.f32.mrb[0].mxu0
          %1364 = vmatprep.mubr.bf16.mxu0 0
          %1365 = vmatmul.mubr.bf16.gmra.mrb[0].mxu0 %v449
          %v1366 = vpop.f32.mrb[0].mxu0
          %v1367 = vadd.f32 0.0, %v1366
          %v1368 = vpop.f32.mrb[0].mxu0
          %v1369 = vpop.f32.mrb[0].mxu0
          %v1370 = vadd.f32 0.0, %v1369
          %v1371 = vpop.f32.mrb[0].mxu0
          %1372 = vmatprep.mubr.bf16.mxu0 0
          %1373 = vmatmul.mubr.bf16.gmra.mrb[0].mxu0 %v450
          %v1374 = vpop.f32.mrb[0].mxu0
          %v1375 = vadd.f32 0.0, %v1374
          %v1376 = vpop.f32.mrb[0].mxu0
          %v1377 = vpop.f32.mrb[0].mxu0
          %v1378 = vadd.f32 0.0, %v1377
          %v1379 = vpop.f32.mrb[0].mxu0
          %1380 = vmatprep.mubr.bf16.mxu0 0
          %1381 = vmatmul.mubr.bf16.gmra.mrb[0].mxu0 %v451
          %v1382 = vpop.f32.mrb[0].mxu0
          %v1383 = vadd.f32 0.0, %v1382
          %v1384 = vpop.f32.mrb[0].mxu0
          %v1385 = vpop.f32.mrb[0].mxu0
          %v1386 = vadd.f32 0.0, %v1385
          %v1387 = vpop.f32.mrb[0].mxu0
          %1388 = vmatprep.mubr.bf16.mxu0 0
          %1389 = vmatmul.mubr.bf16.gmra.mrb[0].mxu0 %v452
          %v1390 = vpop.f32.mrb[0].mxu0
          %v1391 = vadd.f32 0.0, %v1390
          %v1392 = vpop.f32.mrb[0].mxu0
          %v1393 = vpop.f32.mrb[0].mxu0
          %v1394 = vadd.f32 0.0, %v1393
          %v1395 = vpop.f32.mrb[0].mxu0
          %1396 = vmatprep.mubr.bf16.mxu0 0
          %1397 = vmatmul.mubr.bf16.gmra.mrb[0].mxu0 %v453
          %v1398 = vpop.f32.mrb[0].mxu0
          %v1399 = vadd.f32 0.0, %v1398
          %v1400 = vpop.f32.mrb[0].mxu0
          %v1401 = vpop.f32.mrb[0].mxu0
          %v1402 = vadd.f32 0.0, %v1401
          %v1403 = vpop.f32.mrb[0].mxu0
          %1404 = vmatprep.mubr.bf16.mxu0 0
          %1405 = vmatmul.mubr.bf16.gmra.mrb[0].mxu0 %v454
          %v1406 = vpop.f32.mrb[0].mxu0
          %v1407 = vadd.f32 0.0, %v1406
          %v1408 = vpop.f32.mrb[0].mxu0
          %v1409 = vpop.f32.mrb[0].mxu0
          %v1410 = vadd.f32 0.0, %v1409
          %v1411 = vpop.f32.mrb[0].mxu0
          %1412 = vmatprep.mubr.bf16.mxu0 0
          %1413 = vmatmul.mubr.bf16.gmra.mrb[0].mxu0 %v455
          %v1414 = vpop.f32.mrb[0].mxu0
          %v1415 = vadd.f32 0.0, %v1414
          %v1416 = vpop.f32.mrb[0].mxu0
          %v1417 = vpop.f32.mrb[0].mxu0
          %v1418 = vadd.f32 0.0, %v1417
          %v1419 = vpop.f32.mrb[0].mxu0
          %1420 = vmatprep.mubr.bf16.mxu0 0
          %1421 = vmatmul.mubr.bf16.gmra.mrb[0].mxu0 %v456
          %v1422 = vpop.f32.mrb[0].mxu0
          %v1423 = vadd.f32 0.0, %v1422
          %v1424 = vpop.f32.mrb[0].mxu0
          %v1425 = vpop.f32.mrb[0].mxu0
          %v1426 = vadd.f32 0.0, %v1425
          %v1427 = vpop.f32.mrb[0].mxu0
          %1428 = vmatprep.mubr.bf16.mxu0 0
          %1429 = vmatmul.mubr.bf16.gmra.mrb[0].mxu0 %v457
          %v1430 = vpop.f32.mrb[0].mxu0
          %v1431 = vadd.f32 0.0, %v1430
          %v1432 = vpop.f32.mrb[0].mxu0
          %v1433 = vpop.f32.mrb[0].mxu0
          %v1434 = vadd.f32 0.0, %v1433
          %v1435 = vpop.f32.mrb[0].mxu0
          %1436 = vmatprep.mubr.bf16.mxu0 0
          %1437 = vmatmul.mubr.bf16.gmra.mrb[0].mxu0 %v458
          %v1438 = vpop.f32.mrb[0].mxu0
          %v1439 = vadd.f32 0.0, %v1438
          %v1440 = vpop.f32.mrb[0].mxu0
          %v1441 = vpop.f32.mrb[0].mxu0
          %v1442 = vadd.f32 0.0, %v1441
          %v1443 = vpop.f32.mrb[0].mxu0
          %1444 = vmatprep.mubr.bf16.mxu0 0
          %1445 = vmatmul.mubr.bf16.gmra.mrb[0].mxu0 %v459
          %v1446 = vpop.f32.mrb[0].mxu0
          %v1447 = vadd.f32 0.0, %v1446
          %v1448 = vpop.f32.mrb[0].mxu0
          %v1449 = vpop.f32.mrb[0].mxu0
          %v1450 = vadd.f32 0.0, %v1449
          %v1451 = vpop.f32.mrb[0].mxu0
          %1452 = vmatprep.mubr.bf16.mxu0 0
          %1453 = vmatmul.mubr.bf16.gmra.mrb[0].mxu0 %v460
          %v1454 = vpop.f32.mrb[0].mxu0
          %v1455 = vadd.f32 0.0, %v1454
          %v1456 = vpop.f32.mrb[0].mxu0
          %v1457 = vpop.f32.mrb[0].mxu0
          %v1458 = vadd.f32 0.0, %v1457
          %v1459 = vpop.f32.mrb[0].mxu0
          %1460 = vdwg.mxu0
          %v1461 = vpack.c.bf16 %v1338, %v1335
          %v1462 = vpack.c.bf16 %v1346, %v1343
          %v1463 = vpack.c.bf16 %v1354, %v1351
          %v1464 = vpack.c.bf16 %v1362, %v1359
          %v1465 = vpack.c.bf16 %v1370, %v1367
          %v1466 = vpack.c.bf16 %v1378, %v1375
          %v1467 = vpack.c.bf16 %v1386, %v1383
          %v1468 = vpack.c.bf16 %v1394, %v1391
          %v1469 = vpack.c.bf16 %v1402, %v1399
          %v1470 = vpack.c.bf16 %v1410, %v1407
          %v1471 = vpack.c.bf16 %v1418, %v1415
          %v1472 = vpack.c.bf16 %v1426, %v1423
          %v1473 = vpack.c.bf16 %v1434, %v1431
          %v1474 = vpack.c.bf16 %v1442, %v1439
          %v1475 = vpack.c.bf16 %v1450, %v1447
          %v1476 = vpack.c.bf16 %v1458, %v1455
          %s1477 = scalar_lea.vmem [#allocation4], 128
          %1478 = vst.msk [vmem:[%s1477] sm:$0xff] %vm702, %v1461
          %1479 = vst.msk [vmem:[%s1477 + $0x8] sm:$0xff] %vm702, %v1462
          %1480 = vst.msk [vmem:[%s1477 + $0x10] sm:$0xff] %vm702, %v1463
          %1481 = vst.msk [vmem:[%s1477 + $0x18] sm:$0xff] %vm702, %v1464
          %1482 = vst.msk [vmem:[%s1477 + $0x20] sm:$0xff] %vm702, %v1465
          %1483 = vst.msk [vmem:[%s1477 + $0x28] sm:$0xff] %vm702, %v1466
          %1484 = vst.msk [vmem:[%s1477 + $0x30] sm:$0xff] %vm702, %v1467
          %1485 = vst.msk [vmem:[%s1477 + $0x38] sm:$0xff] %vm702, %v1468
          %1486 = vst.msk [vmem:[%s1477 + $0x40] sm:$0xff] %vm702, %v1469
          %1487 = vst.msk [vmem:[%s1477 + $0x48] sm:$0xff] %vm702, %v1470
          %1488 = vst.msk [vmem:[%s1477 + $0x50] sm:$0xff] %vm702, %v1471
          %1489 = vst.msk [vmem:[%s1477 + $0x58] sm:$0xff] %vm702, %v1472
          %1490 = vst.msk [vmem:[%s1477 + $0x60] sm:$0xff] %vm702, %v1473
          %1491 = vst.msk [vmem:[%s1477 + $0x68] sm:$0xff] %vm702, %v1474
          %1492 = vst.msk [vmem:[%s1477 + $0x70] sm:$0xff] %vm702, %v1475
          %1493 = vst.msk [vmem:[%s1477 + $0x78] sm:$0xff] %vm702, %v1476
          %s1494 = scalar_lea.vmem %s3, 128
          %v1495 = vld [vmem:[%s1494] sm:$0xf]
          %v1496 = vld [vmem:[%s1494 + $0x4] sm:$0xf]
          %v1497 = vld [vmem:[%s1494 + $0x8] sm:$0xf]
          %v1498 = vld [vmem:[%s1494 + $0xc] sm:$0xf]
          %v1499 = vld [vmem:[%s1494 + $0x10] sm:$0xf]
          %v1500 = vld [vmem:[%s1494 + $0x14] sm:$0xf]
          %v1501 = vld [vmem:[%s1494 + $0x18] sm:$0xf]
          %v1502 = vld [vmem:[%s1494 + $0x1c] sm:$0xf]
          %v1503 = vld [vmem:[%s1494 + $0x20] sm:$0xf]
          %v1504 = vld [vmem:[%s1494 + $0x24] sm:$0xf]
          %v1505 = vld [vmem:[%s1494 + $0x28] sm:$0xf]
          %v1506 = vld [vmem:[%s1494 + $0x2c] sm:$0xf]
          %v1507 = vld [vmem:[%s1494 + $0x30] sm:$0xf]
          %v1508 = vld [vmem:[%s1494 + $0x34] sm:$0xf]
          %v1509 = vld [vmem:[%s1494 + $0x38] sm:$0xf]
          %v1510 = vld [vmem:[%s1494 + $0x3c] sm:$0xf]
          %v1527 = vunpack.c.l.b16 %v1495
          %v1528 = vunpack.c.l.b16 %v1496
          %v1529 = vunpack.c.l.b16 %v1497
          %v1530 = vunpack.c.l.b16 %v1498
          %v1531 = vunpack.c.l.b16 %v1499
          %v1532 = vunpack.c.l.b16 %v1500
          %v1533 = vunpack.c.l.b16 %v1501
          %v1534 = vunpack.c.l.b16 %v1502
          %v1535 = vunpack.c.l.b16 %v1503
          %v1536 = vunpack.c.l.b16 %v1504
          %v1537 = vunpack.c.l.b16 %v1505
          %v1538 = vunpack.c.l.b16 %v1506
          %v1539 = vunpack.c.l.b16 %v1507
          %v1540 = vunpack.c.l.b16 %v1508
          %v1541 = vunpack.c.l.b16 %v1509
          %v1542 = vunpack.c.l.b16 %v1510
          %v1543 = vpack.c.b16 %v1528, %v1527
          %v1544 = vpack.c.b16 %v1530, %v1529
          %v1545 = vpack.c.b16 %v1532, %v1531
          %v1546 = vpack.c.b16 %v1534, %v1533
          %v1547 = vpack.c.b16 %v1536, %v1535
          %v1548 = vpack.c.b16 %v1538, %v1537
          %v1549 = vpack.c.b16 %v1540, %v1539
          %v1550 = vpack.c.b16 %v1542, %v1541
          %1559 = vmatprep.subr.bf16.mxu0 0
          %1560 = vmatpush1.bf16.msra.mxu0 %v1543
          %1561 = vmatprep.subr.bf16.mxu0 0
          %1562 = vmatpush1.bf16.msra.mxu0 %v1544
          %1563 = vmatprep.subr.bf16.mxu0 0
          %1564 = vmatpush1.bf16.msra.mxu0 %v1545
          %1565 = vmatprep.subr.bf16.mxu0 0
          %1566 = vmatpush1.bf16.msra.mxu0 %v1546
          %1567 = vmatprep.subr.bf16.mxu0 0
          %1568 = vmatpush1.bf16.msra.mxu0 %v1547
          %1569 = vmatprep.subr.bf16.mxu0 0
          %1570 = vmatpush1.bf16.msra.mxu0 %v1548
          %1571 = vmatprep.subr.bf16.mxu0 0
          %1572 = vmatpush1.bf16.msra.mxu0 %v1549
          %1573 = vmatprep.subr.bf16.mxu0 0
          %1574 = vmatpush1.bf16.msra.mxu0 %v1550
          %1575 = vmatprep.subr.bf16.mxu0 0
          %1576 = vmatpush1.bf16.msra.mxu0 0
          %1577 = vmatprep.subr.bf16.mxu0 0
          %1578 = vmatpush1.bf16.msra.mxu0 0
          %1579 = vmatprep.subr.bf16.mxu0 0
          %1580 = vmatpush1.bf16.msra.mxu0 0
          %1581 = vmatprep.subr.bf16.mxu0 0
          %1582 = vmatpush1.bf16.msra.mxu0 0
          %1583 = vmatprep.subr.bf16.mxu0 0
          %1584 = vmatpush1.bf16.msra.mxu0 0
          %1585 = vmatprep.subr.bf16.mxu0 0
          %1586 = vmatpush1.bf16.msra.mxu0 0
          %1587 = vmatprep.subr.bf16.mxu0 0
          %1588 = vmatpush1.bf16.msra.mxu0 0
          %1589 = vmatprep.subr.bf16.mxu0 0
          %1590 = vmatpush1.bf16.msra.mxu0 0
          %1591 = vmatprep.mubr.bf16.mxu0 0
          %1592 = vmatmul.mubr.bf16.gmra.mrb[0].mxu0 %v445
          %v1593 = vpop.f32.mrb[0].mxu0
          %v1594 = vadd.f32 0.0, %v1593
          %v1595 = vpop.f32.mrb[0].mxu0
          %v1596 = vpop.f32.mrb[0].mxu0
          %v1597 = vadd.f32 0.0, %v1596
          %v1598 = vpop.f32.mrb[0].mxu0
          %1599 = vmatprep.mubr.bf16.mxu0 0
          %1600 = vmatmul.mubr.bf16.gmra.mrb[0].mxu0 %v446
          %v1601 = vpop.f32.mrb[0].mxu0
          %v1602 = vadd.f32 0.0, %v1601
          %v1603 = vpop.f32.mrb[0].mxu0
          %v1604 = vpop.f32.mrb[0].mxu0
          %v1605 = vadd.f32 0.0, %v1604
          %v1606 = vpop.f32.mrb[0].mxu0
          %1607 = vmatprep.mubr.bf16.mxu0 0
          %1608 = vmatmul.mubr.bf16.gmra.mrb[0].mxu0 %v447
          %v1609 = vpop.f32.mrb[0].mxu0
          %v1610 = vadd.f32 0.0, %v1609
          %v1611 = vpop.f32.mrb[0].mxu0
          %v1612 = vpop.f32.mrb[0].mxu0
          %v1613 = vadd.f32 0.0, %v1612
          %v1614 = vpop.f32.mrb[0].mxu0
          %1615 = vmatprep.mubr.bf16.mxu0 0
          %1616 = vmatmul.mubr.bf16.gmra.mrb[0].mxu0 %v448
          %v1617 = vpop.f32.mrb[0].mxu0
          %v1618 = vadd.f32 0.0, %v1617
          %v1619 = vpop.f32.mrb[0].mxu0
          %v1620 = vpop.f32.mrb[0].mxu0
          %v1621 = vadd.f32 0.0, %v1620
          %v1622 = vpop.f32.mrb[0].mxu0
          %1623 = vmatprep.mubr.bf16.mxu0 0
          %1624 = vmatmul.mubr.bf16.gmra.mrb[0].mxu0 %v449
          %v1625 = vpop.f32.mrb[0].mxu0
          %v1626 = vadd.f32 0.0, %v1625
          %v1627 = vpop.f32.mrb[0].mxu0
          %v1628 = vpop.f32.mrb[0].mxu0
          %v1629 = vadd.f32 0.0, %v1628
          %v1630 = vpop.f32.mrb[0].mxu0
          %1631 = vmatprep.mubr.bf16.mxu0 0
          %1632 = vmatmul.mubr.bf16.gmra.mrb[0].mxu0 %v450
          %v1633 = vpop.f32.mrb[0].mxu0
          %v1634 = vadd.f32 0.0, %v1633
          %v1635 = vpop.f32.mrb[0].mxu0
          %v1636 = vpop.f32.mrb[0].mxu0
          %v1637 = vadd.f32 0.0, %v1636
          %v1638 = vpop.f32.mrb[0].mxu0
          %1639 = vmatprep.mubr.bf16.mxu0 0
          %1640 = vmatmul.mubr.bf16.gmra.mrb[0].mxu0 %v451
          %v1641 = vpop.f32.mrb[0].mxu0
          %v1642 = vadd.f32 0.0, %v1641
          %v1643 = vpop.f32.mrb[0].mxu0
          %v1644 = vpop.f32.mrb[0].mxu0
          %v1645 = vadd.f32 0.0, %v1644
          %v1646 = vpop.f32.mrb[0].mxu0
          %1647 = vmatprep.mubr.bf16.mxu0 0
          %1648 = vmatmul.mubr.bf16.gmra.mrb[0].mxu0 %v452
          %v1649 = vpop.f32.mrb[0].mxu0
          %v1650 = vadd.f32 0.0, %v1649
          %v1651 = vpop.f32.mrb[0].mxu0
          %v1652 = vpop.f32.mrb[0].mxu0
          %v1653 = vadd.f32 0.0, %v1652
          %v1654 = vpop.f32.mrb[0].mxu0
          %1655 = vmatprep.mubr.bf16.mxu0 0
          %1656 = vmatmul.mubr.bf16.gmra.mrb[0].mxu0 %v453
          %v1657 = vpop.f32.mrb[0].mxu0
          %v1658 = vadd.f32 0.0, %v1657
          %v1659 = vpop.f32.mrb[0].mxu0
          %v1660 = vpop.f32.mrb[0].mxu0
          %v1661 = vadd.f32 0.0, %v1660
          %v1662 = vpop.f32.mrb[0].mxu0
          %1663 = vmatprep.mubr.bf16.mxu0 0
          %1664 = vmatmul.mubr.bf16.gmra.mrb[0].mxu0 %v454
          %v1665 = vpop.f32.mrb[0].mxu0
          %v1666 = vadd.f32 0.0, %v1665
          %v1667 = vpop.f32.mrb[0].mxu0
          %v1668 = vpop.f32.mrb[0].mxu0
          %v1669 = vadd.f32 0.0, %v1668
          %v1670 = vpop.f32.mrb[0].mxu0
          %1671 = vmatprep.mubr.bf16.mxu0 0
          %1672 = vmatmul.mubr.bf16.gmra.mrb[0].mxu0 %v455
          %v1673 = vpop.f32.mrb[0].mxu0
          %v1674 = vadd.f32 0.0, %v1673
          %v1675 = vpop.f32.mrb[0].mxu0
          %v1676 = vpop.f32.mrb[0].mxu0
          %v1677 = vadd.f32 0.0, %v1676
          %v1678 = vpop.f32.mrb[0].mxu0
          %1679 = vmatprep.mubr.bf16.mxu0 0
          %1680 = vmatmul.mubr.bf16.gmra.mrb[0].mxu0 %v456
          %v1681 = vpop.f32.mrb[0].mxu0
          %v1682 = vadd.f32 0.0, %v1681
          %v1683 = vpop.f32.mrb[0].mxu0
          %v1684 = vpop.f32.mrb[0].mxu0
          %v1685 = vadd.f32 0.0, %v1684
          %v1686 = vpop.f32.mrb[0].mxu0
          %1687 = vmatprep.mubr.bf16.mxu0 0
          %1688 = vmatmul.mubr.bf16.gmra.mrb[0].mxu0 %v457
          %v1689 = vpop.f32.mrb[0].mxu0
          %v1690 = vadd.f32 0.0, %v1689
          %v1691 = vpop.f32.mrb[0].mxu0
          %v1692 = vpop.f32.mrb[0].mxu0
          %v1693 = vadd.f32 0.0, %v1692
          %v1694 = vpop.f32.mrb[0].mxu0
          %1695 = vmatprep.mubr.bf16.mxu0 0
          %1696 = vmatmul.mubr.bf16.gmra.mrb[0].mxu0 %v458
          %v1697 = vpop.f32.mrb[0].mxu0
          %v1698 = vadd.f32 0.0, %v1697
          %v1699 = vpop.f32.mrb[0].mxu0
          %v1700 = vpop.f32.mrb[0].mxu0
          %v1701 = vadd.f32 0.0, %v1700
          %v1702 = vpop.f32.mrb[0].mxu0
          %1703 = vmatprep.mubr.bf16.mxu0 0
          %1704 = vmatmul.mubr.bf16.gmra.mrb[0].mxu0 %v459
          %v1705 = vpop.f32.mrb[0].mxu0
          %v1706 = vadd.f32 0.0, %v1705
          %v1707 = vpop.f32.mrb[0].mxu0
          %v1708 = vpop.f32.mrb[0].mxu0
          %v1709 = vadd.f32 0.0, %v1708
          %v1710 = vpop.f32.mrb[0].mxu0
          %1711 = vmatprep.mubr.bf16.mxu0 0
          %1712 = vmatmul.mubr.bf16.gmra.mrb[0].mxu0 %v460
          %v1713 = vpop.f32.mrb[0].mxu0
          %v1714 = vadd.f32 0.0, %v1713
          %v1715 = vpop.f32.mrb[0].mxu0
          %v1716 = vpop.f32.mrb[0].mxu0
          %v1717 = vadd.f32 0.0, %v1716
          %v1718 = vpop.f32.mrb[0].mxu0
          %1719 = vdwg.mxu0
          %v1720 = vpack.c.bf16 %v1597, %v1594
          %v1721 = vpack.c.bf16 %v1605, %v1602
          %v1722 = vpack.c.bf16 %v1613, %v1610
          %v1723 = vpack.c.bf16 %v1621, %v1618
          %v1724 = vpack.c.bf16 %v1629, %v1626
          %v1725 = vpack.c.bf16 %v1637, %v1634
          %v1726 = vpack.c.bf16 %v1645, %v1642
          %v1727 = vpack.c.bf16 %v1653, %v1650
          %v1728 = vpack.c.bf16 %v1661, %v1658
          %v1729 = vpack.c.bf16 %v1669, %v1666
          %v1730 = vpack.c.bf16 %v1677, %v1674
          %v1731 = vpack.c.bf16 %v1685, %v1682
          %v1732 = vpack.c.bf16 %v1693, %v1690
          %v1733 = vpack.c.bf16 %v1701, %v1698
          %v1734 = vpack.c.bf16 %v1709, %v1706
          %v1735 = vpack.c.bf16 %v1717, %v1714
          %s1736 = scalar_lea.vmem [#allocation3], 256
          %1737 = vst.msk [vmem:[%s1736] sm:$0xff] %vm702, %v1720
          %1738 = vst.msk [vmem:[%s1736 + $0x8] sm:$0xff] %vm702, %v1721
          %1739 = vst.msk [vmem:[%s1736 + $0x10] sm:$0xff] %vm702, %v1722
          %1740 = vst.msk [vmem:[%s1736 + $0x18] sm:$0xff] %vm702, %v1723
          %1741 = vst.msk [vmem:[%s1736 + $0x20] sm:$0xff] %vm702, %v1724
          %1742 = vst.msk [vmem:[%s1736 + $0x28] sm:$0xff] %vm702, %v1725
          %1743 = vst.msk [vmem:[%s1736 + $0x30] sm:$0xff] %vm702, %v1726
          %1744 = vst.msk [vmem:[%s1736 + $0x38] sm:$0xff] %vm702, %v1727
          %1745 = vst.msk [vmem:[%s1736 + $0x40] sm:$0xff] %vm702, %v1728
          %1746 = vst.msk [vmem:[%s1736 + $0x48] sm:$0xff] %vm702, %v1729
          %1747 = vst.msk [vmem:[%s1736 + $0x50] sm:$0xff] %vm702, %v1730
          %1748 = vst.msk [vmem:[%s1736 + $0x58] sm:$0xff] %vm702, %v1731
          %1749 = vst.msk [vmem:[%s1736 + $0x60] sm:$0xff] %vm702, %v1732
          %1750 = vst.msk [vmem:[%s1736 + $0x68] sm:$0xff] %vm702, %v1733
          %1751 = vst.msk [vmem:[%s1736 + $0x70] sm:$0xff] %vm702, %v1734
          %1752 = vst.msk [vmem:[%s1736 + $0x78] sm:$0xff] %vm702, %v1735
          %s1753 = scalar_lea.vmem %s4, 128
          %v1754 = vld [vmem:[%s1753] sm:$0xf]
          %v1755 = vld [vmem:[%s1753 + $0x4] sm:$0xf]
          %v1756 = vld [vmem:[%s1753 + $0x8] sm:$0xf]
          %v1757 = vld [vmem:[%s1753 + $0xc] sm:$0xf]
          %v1758 = vld [vmem:[%s1753 + $0x10] sm:$0xf]
          %v1759 = vld [vmem:[%s1753 + $0x14] sm:$0xf]
          %v1760 = vld [vmem:[%s1753 + $0x18] sm:$0xf]
          %v1761 = vld [vmem:[%s1753 + $0x1c] sm:$0xf]
          %v1762 = vld [vmem:[%s1753 + $0x20] sm:$0xf]
          %v1763 = vld [vmem:[%s1753 + $0x24] sm:$0xf]
          %v1764 = vld [vmem:[%s1753 + $0x28] sm:$0xf]
          %v1765 = vld [vmem:[%s1753 + $0x2c] sm:$0xf]
          %v1766 = vld [vmem:[%s1753 + $0x30] sm:$0xf]
          %v1767 = vld [vmem:[%s1753 + $0x34] sm:$0xf]
          %v1768 = vld [vmem:[%s1753 + $0x38] sm:$0xf]
          %v1769 = vld [vmem:[%s1753 + $0x3c] sm:$0xf]
          %v1786 = vunpack.c.l.b16 %v1754
          %v1787 = vunpack.c.l.b16 %v1755
          %v1788 = vunpack.c.l.b16 %v1756
          %v1789 = vunpack.c.l.b16 %v1757
          %v1790 = vunpack.c.l.b16 %v1758
          %v1791 = vunpack.c.l.b16 %v1759
          %v1792 = vunpack.c.l.b16 %v1760
          %v1793 = vunpack.c.l.b16 %v1761
          %v1794 = vunpack.c.l.b16 %v1762
          %v1795 = vunpack.c.l.b16 %v1763
          %v1796 = vunpack.c.l.b16 %v1764
          %v1797 = vunpack.c.l.b16 %v1765
          %v1798 = vunpack.c.l.b16 %v1766
          %v1799 = vunpack.c.l.b16 %v1767
          %v1800 = vunpack.c.l.b16 %v1768
          %v1801 = vunpack.c.l.b16 %v1769
          %v1802 = vpack.c.b16 %v1787, %v1786
          %v1803 = vpack.c.b16 %v1789, %v1788
          %v1804 = vpack.c.b16 %v1791, %v1790
          %v1805 = vpack.c.b16 %v1793, %v1792
          %v1806 = vpack.c.b16 %v1795, %v1794
          %v1807 = vpack.c.b16 %v1797, %v1796
          %v1808 = vpack.c.b16 %v1799, %v1798
          %v1809 = vpack.c.b16 %v1801, %v1800
          %1818 = vmatprep.subr.bf16.mxu0 0
          %1819 = vmatpush1.bf16.msra.mxu0 %v1802
          %1820 = vmatprep.subr.bf16.mxu0 0
          %1821 = vmatpush1.bf16.msra.mxu0 %v1803
          %1822 = vmatprep.subr.bf16.mxu0 0
          %1823 = vmatpush1.bf16.msra.mxu0 %v1804
          %1824 = vmatprep.subr.bf16.mxu0 0
          %1825 = vmatpush1.bf16.msra.mxu0 %v1805
          %1826 = vmatprep.subr.bf16.mxu0 0
          %1827 = vmatpush1.bf16.msra.mxu0 %v1806
          %1828 = vmatprep.subr.bf16.mxu0 0
          %1829 = vmatpush1.bf16.msra.mxu0 %v1807
          %1830 = vmatprep.subr.bf16.mxu0 0
          %1831 = vmatpush1.bf16.msra.mxu0 %v1808
          %1832 = vmatprep.subr.bf16.mxu0 0
          %1833 = vmatpush1.bf16.msra.mxu0 %v1809
          %1834 = vmatprep.subr.bf16.mxu0 0
          %1835 = vmatpush1.bf16.msra.mxu0 0
          %1836 = vmatprep.subr.bf16.mxu0 0
          %1837 = vmatpush1.bf16.msra.mxu0 0
          %1838 = vmatprep.subr.bf16.mxu0 0
          %1839 = vmatpush1.bf16.msra.mxu0 0
          %1840 = vmatprep.subr.bf16.mxu0 0
          %1841 = vmatpush1.bf16.msra.mxu0 0
          %1842 = vmatprep.subr.bf16.mxu0 0
          %1843 = vmatpush1.bf16.msra.mxu0 0
          %1844 = vmatprep.subr.bf16.mxu0 0
          %1845 = vmatpush1.bf16.msra.mxu0 0
          %1846 = vmatprep.subr.bf16.mxu0 0
          %1847 = vmatpush1.bf16.msra.mxu0 0
          %1848 = vmatprep.subr.bf16.mxu0 0
          %1849 = vmatpush1.bf16.msra.mxu0 0
          %1850 = vmatprep.mubr.bf16.mxu0 0
          %1851 = vmatmul.mubr.bf16.gmra.mrb[0].mxu0 %v445
          %v1852 = vpop.f32.mrb[0].mxu0
          %v1853 = vadd.f32 0.0, %v1852
          %v1854 = vpop.f32.mrb[0].mxu0
          %v1855 = vpop.f32.mrb[0].mxu0
          %v1856 = vadd.f32 0.0, %v1855
          %v1857 = vpop.f32.mrb[0].mxu0
          %1858 = vmatprep.mubr.bf16.mxu0 0
          %1859 = vmatmul.mubr.bf16.gmra.mrb[0].mxu0 %v446
          %v1860 = vpop.f32.mrb[0].mxu0
          %v1861 = vadd.f32 0.0, %v1860
          %v1862 = vpop.f32.mrb[0].mxu0
          %v1863 = vpop.f32.mrb[0].mxu0
          %v1864 = vadd.f32 0.0, %v1863
          %v1865 = vpop.f32.mrb[0].mxu0
          %1866 = vmatprep.mubr.bf16.mxu0 0
          %1867 = vmatmul.mubr.bf16.gmra.mrb[0].mxu0 %v447
          %v1868 = vpop.f32.mrb[0].mxu0
          %v1869 = vadd.f32 0.0, %v1868
          %v1870 = vpop.f32.mrb[0].mxu0
          %v1871 = vpop.f32.mrb[0].mxu0
          %v1872 = vadd.f32 0.0, %v1871
          %v1873 = vpop.f32.mrb[0].mxu0
          %1874 = vmatprep.mubr.bf16.mxu0 0
          %1875 = vmatmul.mubr.bf16.gmra.mrb[0].mxu0 %v448
          %v1876 = vpop.f32.mrb[0].mxu0
          %v1877 = vadd.f32 0.0, %v1876
          %v1878 = vpop.f32.mrb[0].mxu0
          %v1879 = vpop.f32.mrb[0].mxu0
          %v1880 = vadd.f32 0.0, %v1879
          %v1881 = vpop.f32.mrb[0].mxu0
          %1882 = vmatprep.mubr.bf16.mxu0 0
          %1883 = vmatmul.mubr.bf16.gmra.mrb[0].mxu0 %v449
          %v1884 = vpop.f32.mrb[0].mxu0
          %v1885 = vadd.f32 0.0, %v1884
          %v1886 = vpop.f32.mrb[0].mxu0
          %v1887 = vpop.f32.mrb[0].mxu0
          %v1888 = vadd.f32 0.0, %v1887
          %v1889 = vpop.f32.mrb[0].mxu0
          %1890 = vmatprep.mubr.bf16.mxu0 0
          %1891 = vmatmul.mubr.bf16.gmra.mrb[0].mxu0 %v450
          %v1892 = vpop.f32.mrb[0].mxu0
          %v1893 = vadd.f32 0.0, %v1892
          %v1894 = vpop.f32.mrb[0].mxu0
          %v1895 = vpop.f32.mrb[0].mxu0
          %v1896 = vadd.f32 0.0, %v1895
          %v1897 = vpop.f32.mrb[0].mxu0
          %1898 = vmatprep.mubr.bf16.mxu0 0
          %1899 = vmatmul.mubr.bf16.gmra.mrb[0].mxu0 %v451
          %v1900 = vpop.f32.mrb[0].mxu0
          %v1901 = vadd.f32 0.0, %v1900
          %v1902 = vpop.f32.mrb[0].mxu0
          %v1903 = vpop.f32.mrb[0].mxu0
          %v1904 = vadd.f32 0.0, %v1903
          %v1905 = vpop.f32.mrb[0].mxu0
          %1906 = vmatprep.mubr.bf16.mxu0 0
          %1907 = vmatmul.mubr.bf16.gmra.mrb[0].mxu0 %v452
          %v1908 = vpop.f32.mrb[0].mxu0
          %v1909 = vadd.f32 0.0, %v1908
          %v1910 = vpop.f32.mrb[0].mxu0
          %v1911 = vpop.f32.mrb[0].mxu0
          %v1912 = vadd.f32 0.0, %v1911
          %v1913 = vpop.f32.mrb[0].mxu0
          %1914 = vmatprep.mubr.bf16.mxu0 0
          %1915 = vmatmul.mubr.bf16.gmra.mrb[0].mxu0 %v453
          %v1916 = vpop.f32.mrb[0].mxu0
          %v1917 = vadd.f32 0.0, %v1916
          %v1918 = vpop.f32.mrb[0].mxu0
          %v1919 = vpop.f32.mrb[0].mxu0
          %v1920 = vadd.f32 0.0, %v1919
          %v1921 = vpop.f32.mrb[0].mxu0
          %1922 = vmatprep.mubr.bf16.mxu0 0
          %1923 = vmatmul.mubr.bf16.gmra.mrb[0].mxu0 %v454
          %v1924 = vpop.f32.mrb[0].mxu0
          %v1925 = vadd.f32 0.0, %v1924
          %v1926 = vpop.f32.mrb[0].mxu0
          %v1927 = vpop.f32.mrb[0].mxu0
          %v1928 = vadd.f32 0.0, %v1927
          %v1929 = vpop.f32.mrb[0].mxu0
          %1930 = vmatprep.mubr.bf16.mxu0 0
          %1931 = vmatmul.mubr.bf16.gmra.mrb[0].mxu0 %v455
          %v1932 = vpop.f32.mrb[0].mxu0
          %v1933 = vadd.f32 0.0, %v1932
          %v1934 = vpop.f32.mrb[0].mxu0
          %v1935 = vpop.f32.mrb[0].mxu0
          %v1936 = vadd.f32 0.0, %v1935
          %v1937 = vpop.f32.mrb[0].mxu0
          %1938 = vmatprep.mubr.bf16.mxu0 0
          %1939 = vmatmul.mubr.bf16.gmra.mrb[0].mxu0 %v456
          %v1940 = vpop.f32.mrb[0].mxu0
          %v1941 = vadd.f32 0.0, %v1940
          %v1942 = vpop.f32.mrb[0].mxu0
          %v1943 = vpop.f32.mrb[0].mxu0
          %v1944 = vadd.f32 0.0, %v1943
          %v1945 = vpop.f32.mrb[0].mxu0
          %1946 = vmatprep.mubr.bf16.mxu0 0
          %1947 = vmatmul.mubr.bf16.gmra.mrb[0].mxu0 %v457
          %v1948 = vpop.f32.mrb[0].mxu0
          %v1949 = vadd.f32 0.0, %v1948
          %v1950 = vpop.f32.mrb[0].mxu0
          %v1951 = vpop.f32.mrb[0].mxu0
          %v1952 = vadd.f32 0.0, %v1951
          %v1953 = vpop.f32.mrb[0].mxu0
          %1954 = vmatprep.mubr.bf16.mxu0 0
          %1955 = vmatmul.mubr.bf16.gmra.mrb[0].mxu0 %v458
          %v1956 = vpop.f32.mrb[0].mxu0
          %v1957 = vadd.f32 0.0, %v1956
          %v1958 = vpop.f32.mrb[0].mxu0
          %v1959 = vpop.f32.mrb[0].mxu0
          %v1960 = vadd.f32 0.0, %v1959
          %v1961 = vpop.f32.mrb[0].mxu0
          %1962 = vmatprep.mubr.bf16.mxu0 0
          %1963 = vmatmul.mubr.bf16.gmra.mrb[0].mxu0 %v459
          %v1964 = vpop.f32.mrb[0].mxu0
          %v1965 = vadd.f32 0.0, %v1964
          %v1966 = vpop.f32.mrb[0].mxu0
          %v1967 = vpop.f32.mrb[0].mxu0
          %v1968 = vadd.f32 0.0, %v1967
          %v1969 = vpop.f32.mrb[0].mxu0
          %1970 = vmatprep.mubr.bf16.mxu0 0
          %1971 = vmatmul.mubr.bf16.gmra.mrb[0].mxu0 %v460
          %v1972 = vpop.f32.mrb[0].mxu0
          %v1973 = vadd.f32 0.0, %v1972
          %v1974 = vpop.f32.mrb[0].mxu0
          %v1975 = vpop.f32.mrb[0].mxu0
          %v1976 = vadd.f32 0.0, %v1975
          %v1977 = vpop.f32.mrb[0].mxu0
          %1978 = vdwg.mxu0
          %v1979 = vpack.c.bf16 %v1856, %v1853
          %v1980 = vpack.c.bf16 %v1864, %v1861
          %v1981 = vpack.c.bf16 %v1872, %v1869
          %v1982 = vpack.c.bf16 %v1880, %v1877
          %v1983 = vpack.c.bf16 %v1888, %v1885
          %v1984 = vpack.c.bf16 %v1896, %v1893
          %v1985 = vpack.c.bf16 %v1904, %v1901
          %v1986 = vpack.c.bf16 %v1912, %v1909
          %v1987 = vpack.c.bf16 %v1920, %v1917
          %v1988 = vpack.c.bf16 %v1928, %v1925
          %v1989 = vpack.c.bf16 %v1936, %v1933
          %v1990 = vpack.c.bf16 %v1944, %v1941
          %v1991 = vpack.c.bf16 %v1952, %v1949
          %v1992 = vpack.c.bf16 %v1960, %v1957
          %v1993 = vpack.c.bf16 %v1968, %v1965
          %v1994 = vpack.c.bf16 %v1976, %v1973
          %s1995 = scalar_lea.vmem [#allocation4], 256
          %1996 = vst.msk [vmem:[%s1995] sm:$0xff] %vm702, %v1979
          %1997 = vst.msk [vmem:[%s1995 + $0x8] sm:$0xff] %vm702, %v1980
          %1998 = vst.msk [vmem:[%s1995 + $0x10] sm:$0xff] %vm702, %v1981
          %1999 = vst.msk [vmem:[%s1995 + $0x18] sm:$0xff] %vm702, %v1982
          %2000 = vst.msk [vmem:[%s1995 + $0x20] sm:$0xff] %vm702, %v1983
          %2001 = vst.msk [vmem:[%s1995 + $0x28] sm:$0xff] %vm702, %v1984
          %2002 = vst.msk [vmem:[%s1995 + $0x30] sm:$0xff] %vm702, %v1985
          %2003 = vst.msk [vmem:[%s1995 + $0x38] sm:$0xff] %vm702, %v1986
          %2004 = vst.msk [vmem:[%s1995 + $0x40] sm:$0xff] %vm702, %v1987
          %2005 = vst.msk [vmem:[%s1995 + $0x48] sm:$0xff] %vm702, %v1988
          %2006 = vst.msk [vmem:[%s1995 + $0x50] sm:$0xff] %vm702, %v1989
          %2007 = vst.msk [vmem:[%s1995 + $0x58] sm:$0xff] %vm702, %v1990
          %2008 = vst.msk [vmem:[%s1995 + $0x60] sm:$0xff] %vm702, %v1991
          %2009 = vst.msk [vmem:[%s1995 + $0x68] sm:$0xff] %vm702, %v1992
          %2010 = vst.msk [vmem:[%s1995 + $0x70] sm:$0xff] %vm702, %v1993
          %2011 = vst.msk [vmem:[%s1995 + $0x78] sm:$0xff] %vm702, %v1994
          %s2012 = scalar_lea.vmem %s3, 192
          %v2013 = vld [vmem:[%s2012] sm:$0xf]
          %v2014 = vld [vmem:[%s2012 + $0x4] sm:$0xf]
          %v2015 = vld [vmem:[%s2012 + $0x8] sm:$0xf]
          %v2016 = vld [vmem:[%s2012 + $0xc] sm:$0xf]
          %v2017 = vld [vmem:[%s2012 + $0x10] sm:$0xf]
          %v2018 = vld [vmem:[%s2012 + $0x14] sm:$0xf]
          %v2019 = vld [vmem:[%s2012 + $0x18] sm:$0xf]
          %v2020 = vld [vmem:[%s2012 + $0x1c] sm:$0xf]
          %v2021 = vld [vmem:[%s2012 + $0x20] sm:$0xf]
          %v2022 = vld [vmem:[%s2012 + $0x24] sm:$0xf]
          %v2023 = vld [vmem:[%s2012 + $0x28] sm:$0xf]
          %v2024 = vld [vmem:[%s2012 + $0x2c] sm:$0xf]
          %v2025 = vld [vmem:[%s2012 + $0x30] sm:$0xf]
          %v2026 = vld [vmem:[%s2012 + $0x34] sm:$0xf]
          %v2027 = vld [vmem:[%s2012 + $0x38] sm:$0xf]
          %v2028 = vld [vmem:[%s2012 + $0x3c] sm:$0xf]
          %v2045 = vunpack.c.l.b16 %v2013
          %v2046 = vunpack.c.l.b16 %v2014
          %v2047 = vunpack.c.l.b16 %v2015
          %v2048 = vunpack.c.l.b16 %v2016
          %v2049 = vunpack.c.l.b16 %v2017
          %v2050 = vunpack.c.l.b16 %v2018
          %v2051 = vunpack.c.l.b16 %v2019
          %v2052 = vunpack.c.l.b16 %v2020
          %v2053 = vunpack.c.l.b16 %v2021
          %v2054 = vunpack.c.l.b16 %v2022
          %v2055 = vunpack.c.l.b16 %v2023
          %v2056 = vunpack.c.l.b16 %v2024
          %v2057 = vunpack.c.l.b16 %v2025
          %v2058 = vunpack.c.l.b16 %v2026
          %v2059 = vunpack.c.l.b16 %v2027
          %v2060 = vunpack.c.l.b16 %v2028
          %v2061 = vpack.c.b16 %v2046, %v2045
          %v2062 = vpack.c.b16 %v2048, %v2047
          %v2063 = vpack.c.b16 %v2050, %v2049
          %v2064 = vpack.c.b16 %v2052, %v2051
          %v2065 = vpack.c.b16 %v2054, %v2053
          %v2066 = vpack.c.b16 %v2056, %v2055
          %v2067 = vpack.c.b16 %v2058, %v2057
          %v2068 = vpack.c.b16 %v2060, %v2059
          %2077 = vmatprep.subr.bf16.mxu0 0
          %2078 = vmatpush1.bf16.msra.mxu0 %v2061
          %2079 = vmatprep.subr.bf16.mxu0 0
          %2080 = vmatpush1.bf16.msra.mxu0 %v2062
          %2081 = vmatprep.subr.bf16.mxu0 0
          %2082 = vmatpush1.bf16.msra.mxu0 %v2063
          %2083 = vmatprep.subr.bf16.mxu0 0
          %2084 = vmatpush1.bf16.msra.mxu0 %v2064
          %2085 = vmatprep.subr.bf16.mxu0 0
          %2086 = vmatpush1.bf16.msra.mxu0 %v2065
          %2087 = vmatprep.subr.bf16.mxu0 0
          %2088 = vmatpush1.bf16.msra.mxu0 %v2066
          %2089 = vmatprep.subr.bf16.mxu0 0
          %2090 = vmatpush1.bf16.msra.mxu0 %v2067
          %2091 = vmatprep.subr.bf16.mxu0 0
          %2092 = vmatpush1.bf16.msra.mxu0 %v2068
          %2093 = vmatprep.subr.bf16.mxu0 0
          %2094 = vmatpush1.bf16.msra.mxu0 0
          %2095 = vmatprep.subr.bf16.mxu0 0
          %2096 = vmatpush1.bf16.msra.mxu0 0
          %2097 = vmatprep.subr.bf16.mxu0 0
          %2098 = vmatpush1.bf16.msra.mxu0 0
          %2099 = vmatprep.subr.bf16.mxu0 0
          %2100 = vmatpush1.bf16.msra.mxu0 0
          %2101 = vmatprep.subr.bf16.mxu0 0
          %2102 = vmatpush1.bf16.msra.mxu0 0
          %2103 = vmatprep.subr.bf16.mxu0 0
          %2104 = vmatpush1.bf16.msra.mxu0 0
          %2105 = vmatprep.subr.bf16.mxu0 0
          %2106 = vmatpush1.bf16.msra.mxu0 0
          %2107 = vmatprep.subr.bf16.mxu0 0
          %2108 = vmatpush1.bf16.msra.mxu0 0
          %2109 = vmatprep.mubr.bf16.mxu0 0
          %2110 = vmatmul.mubr.bf16.gmra.mrb[0].mxu0 %v445
          %v2111 = vpop.f32.mrb[0].mxu0
          %v2112 = vadd.f32 0.0, %v2111
          %v2113 = vpop.f32.mrb[0].mxu0
          %v2114 = vpop.f32.mrb[0].mxu0
          %v2115 = vadd.f32 0.0, %v2114
          %v2116 = vpop.f32.mrb[0].mxu0
          %2117 = vmatprep.mubr.bf16.mxu0 0
          %2118 = vmatmul.mubr.bf16.gmra.mrb[0].mxu0 %v446
          %v2119 = vpop.f32.mrb[0].mxu0
          %v2120 = vadd.f32 0.0, %v2119
          %v2121 = vpop.f32.mrb[0].mxu0
          %v2122 = vpop.f32.mrb[0].mxu0
          %v2123 = vadd.f32 0.0, %v2122
          %v2124 = vpop.f32.mrb[0].mxu0
          %2125 = vmatprep.mubr.bf16.mxu0 0
          %2126 = vmatmul.mubr.bf16.gmra.mrb[0].mxu0 %v447
          %v2127 = vpop.f32.mrb[0].mxu0
          %v2128 = vadd.f32 0.0, %v2127
          %v2129 = vpop.f32.mrb[0].mxu0
          %v2130 = vpop.f32.mrb[0].mxu0
          %v2131 = vadd.f32 0.0, %v2130
          %v2132 = vpop.f32.mrb[0].mxu0
          %2133 = vmatprep.mubr.bf16.mxu0 0
          %2134 = vmatmul.mubr.bf16.gmra.mrb[0].mxu0 %v448
          %v2135 = vpop.f32.mrb[0].mxu0
          %v2136 = vadd.f32 0.0, %v2135
          %v2137 = vpop.f32.mrb[0].mxu0
          %v2138 = vpop.f32.mrb[0].mxu0
          %v2139 = vadd.f32 0.0, %v2138
          %v2140 = vpop.f32.mrb[0].mxu0
          %2141 = vmatprep.mubr.bf16.mxu0 0
          %2142 = vmatmul.mubr.bf16.gmra.mrb[0].mxu0 %v449
          %v2143 = vpop.f32.mrb[0].mxu0
          %v2144 = vadd.f32 0.0, %v2143
          %v2145 = vpop.f32.mrb[0].mxu0
          %v2146 = vpop.f32.mrb[0].mxu0
          %v2147 = vadd.f32 0.0, %v2146
          %v2148 = vpop.f32.mrb[0].mxu0
          %2149 = vmatprep.mubr.bf16.mxu0 0
          %2150 = vmatmul.mubr.bf16.gmra.mrb[0].mxu0 %v450
          %v2151 = vpop.f32.mrb[0].mxu0
          %v2152 = vadd.f32 0.0, %v2151
          %v2153 = vpop.f32.mrb[0].mxu0
          %v2154 = vpop.f32.mrb[0].mxu0
          %v2155 = vadd.f32 0.0, %v2154
          %v2156 = vpop.f32.mrb[0].mxu0
          %2157 = vmatprep.mubr.bf16.mxu0 0
          %2158 = vmatmul.mubr.bf16.gmra.mrb[0].mxu0 %v451
          %v2159 = vpop.f32.mrb[0].mxu0
          %v2160 = vadd.f32 0.0, %v2159
          %v2161 = vpop.f32.mrb[0].mxu0
          %v2162 = vpop.f32.mrb[0].mxu0
          %v2163 = vadd.f32 0.0, %v2162
          %v2164 = vpop.f32.mrb[0].mxu0
          %2165 = vmatprep.mubr.bf16.mxu0 0
          %2166 = vmatmul.mubr.bf16.gmra.mrb[0].mxu0 %v452
          %v2167 = vpop.f32.mrb[0].mxu0
          %v2168 = vadd.f32 0.0, %v2167
          %v2169 = vpop.f32.mrb[0].mxu0
          %v2170 = vpop.f32.mrb[0].mxu0
          %v2171 = vadd.f32 0.0, %v2170
          %v2172 = vpop.f32.mrb[0].mxu0
          %2173 = vmatprep.mubr.bf16.mxu0 0
          %2174 = vmatmul.mubr.bf16.gmra.mrb[0].mxu0 %v453
          %v2175 = vpop.f32.mrb[0].mxu0
          %v2176 = vadd.f32 0.0, %v2175
          %v2177 = vpop.f32.mrb[0].mxu0
          %v2178 = vpop.f32.mrb[0].mxu0
          %v2179 = vadd.f32 0.0, %v2178
          %v2180 = vpop.f32.mrb[0].mxu0
          %2181 = vmatprep.mubr.bf16.mxu0 0
          %2182 = vmatmul.mubr.bf16.gmra.mrb[0].mxu0 %v454
          %v2183 = vpop.f32.mrb[0].mxu0
          %v2184 = vadd.f32 0.0, %v2183
          %v2185 = vpop.f32.mrb[0].mxu0
          %v2186 = vpop.f32.mrb[0].mxu0
          %v2187 = vadd.f32 0.0, %v2186
          %v2188 = vpop.f32.mrb[0].mxu0
          %2189 = vmatprep.mubr.bf16.mxu0 0
          %2190 = vmatmul.mubr.bf16.gmra.mrb[0].mxu0 %v455
          %v2191 = vpop.f32.mrb[0].mxu0
          %v2192 = vadd.f32 0.0, %v2191
          %v2193 = vpop.f32.mrb[0].mxu0
          %v2194 = vpop.f32.mrb[0].mxu0
          %v2195 = vadd.f32 0.0, %v2194
          %v2196 = vpop.f32.mrb[0].mxu0
          %2197 = vmatprep.mubr.bf16.mxu0 0
          %2198 = vmatmul.mubr.bf16.gmra.mrb[0].mxu0 %v456
          %v2199 = vpop.f32.mrb[0].mxu0
          %v2200 = vadd.f32 0.0, %v2199
          %v2201 = vpop.f32.mrb[0].mxu0
          %v2202 = vpop.f32.mrb[0].mxu0
          %v2203 = vadd.f32 0.0, %v2202
          %v2204 = vpop.f32.mrb[0].mxu0
          %2205 = vmatprep.mubr.bf16.mxu0 0
          %2206 = vmatmul.mubr.bf16.gmra.mrb[0].mxu0 %v457
          %v2207 = vpop.f32.mrb[0].mxu0
          %v2208 = vadd.f32 0.0, %v2207
          %v2209 = vpop.f32.mrb[0].mxu0
          %v2210 = vpop.f32.mrb[0].mxu0
          %v2211 = vadd.f32 0.0, %v2210
          %v2212 = vpop.f32.mrb[0].mxu0
          %2213 = vmatprep.mubr.bf16.mxu0 0
          %2214 = vmatmul.mubr.bf16.gmra.mrb[0].mxu0 %v458
          %v2215 = vpop.f32.mrb[0].mxu0
          %v2216 = vadd.f32 0.0, %v2215
          %v2217 = vpop.f32.mrb[0].mxu0
          %v2218 = vpop.f32.mrb[0].mxu0
          %v2219 = vadd.f32 0.0, %v2218
          %v2220 = vpop.f32.mrb[0].mxu0
          %2221 = vmatprep.mubr.bf16.mxu0 0
          %2222 = vmatmul.mubr.bf16.gmra.mrb[0].mxu0 %v459
          %v2223 = vpop.f32.mrb[0].mxu0
          %v2224 = vadd.f32 0.0, %v2223
          %v2225 = vpop.f32.mrb[0].mxu0
          %v2226 = vpop.f32.mrb[0].mxu0
          %v2227 = vadd.f32 0.0, %v2226
          %v2228 = vpop.f32.mrb[0].mxu0
          %2229 = vmatprep.mubr.bf16.mxu0 0
          %2230 = vmatmul.mubr.bf16.gmra.mrb[0].mxu0 %v460
          %v2231 = vpop.f32.mrb[0].mxu0
          %v2232 = vadd.f32 0.0, %v2231
          %v2233 = vpop.f32.mrb[0].mxu0
          %v2234 = vpop.f32.mrb[0].mxu0
          %v2235 = vadd.f32 0.0, %v2234
          %v2236 = vpop.f32.mrb[0].mxu0
          %2237 = vdwg.mxu0
          %v2238 = vpack.c.bf16 %v2115, %v2112
          %v2239 = vpack.c.bf16 %v2123, %v2120
          %v2240 = vpack.c.bf16 %v2131, %v2128
          %v2241 = vpack.c.bf16 %v2139, %v2136
          %v2242 = vpack.c.bf16 %v2147, %v2144
          %v2243 = vpack.c.bf16 %v2155, %v2152
          %v2244 = vpack.c.bf16 %v2163, %v2160
          %v2245 = vpack.c.bf16 %v2171, %v2168
          %v2246 = vpack.c.bf16 %v2179, %v2176
          %v2247 = vpack.c.bf16 %v2187, %v2184
          %v2248 = vpack.c.bf16 %v2195, %v2192
          %v2249 = vpack.c.bf16 %v2203, %v2200
          %v2250 = vpack.c.bf16 %v2211, %v2208
          %v2251 = vpack.c.bf16 %v2219, %v2216
          %v2252 = vpack.c.bf16 %v2227, %v2224
          %v2253 = vpack.c.bf16 %v2235, %v2232
          %s2254 = scalar_lea.vmem [#allocation3], 384
          %2255 = vst.msk [vmem:[%s2254] sm:$0xff] %vm702, %v2238
          %2256 = vst.msk [vmem:[%s2254 + $0x8] sm:$0xff] %vm702, %v2239
          %2257 = vst.msk [vmem:[%s2254 + $0x10] sm:$0xff] %vm702, %v2240
          %2258 = vst.msk [vmem:[%s2254 + $0x18] sm:$0xff] %vm702, %v2241
          %2259 = vst.msk [vmem:[%s2254 + $0x20] sm:$0xff] %vm702, %v2242
          %2260 = vst.msk [vmem:[%s2254 + $0x28] sm:$0xff] %vm702, %v2243
          %2261 = vst.msk [vmem:[%s2254 + $0x30] sm:$0xff] %vm702, %v2244
          %2262 = vst.msk [vmem:[%s2254 + $0x38] sm:$0xff] %vm702, %v2245
          %2263 = vst.msk [vmem:[%s2254 + $0x40] sm:$0xff] %vm702, %v2246
          %2264 = vst.msk [vmem:[%s2254 + $0x48] sm:$0xff] %vm702, %v2247
          %2265 = vst.msk [vmem:[%s2254 + $0x50] sm:$0xff] %vm702, %v2248
          %2266 = vst.msk [vmem:[%s2254 + $0x58] sm:$0xff] %vm702, %v2249
          %2267 = vst.msk [vmem:[%s2254 + $0x60] sm:$0xff] %vm702, %v2250
          %2268 = vst.msk [vmem:[%s2254 + $0x68] sm:$0xff] %vm702, %v2251
          %2269 = vst.msk [vmem:[%s2254 + $0x70] sm:$0xff] %vm702, %v2252
          %2270 = vst.msk [vmem:[%s2254 + $0x78] sm:$0xff] %vm702, %v2253
          %s2271 = scalar_lea.vmem %s4, 192
          %v2272 = vld [vmem:[%s2271] sm:$0xf]
          %v2273 = vld [vmem:[%s2271 + $0x4] sm:$0xf]
          %v2274 = vld [vmem:[%s2271 + $0x8] sm:$0xf]
          %v2275 = vld [vmem:[%s2271 + $0xc] sm:$0xf]
          %v2276 = vld [vmem:[%s2271 + $0x10] sm:$0xf]
          %v2277 = vld [vmem:[%s2271 + $0x14] sm:$0xf]
          %v2278 = vld [vmem:[%s2271 + $0x18] sm:$0xf]
          %v2279 = vld [vmem:[%s2271 + $0x1c] sm:$0xf]
          %v2280 = vld [vmem:[%s2271 + $0x20] sm:$0xf]
          %v2281 = vld [vmem:[%s2271 + $0x24] sm:$0xf]
          %v2282 = vld [vmem:[%s2271 + $0x28] sm:$0xf]
          %v2283 = vld [vmem:[%s2271 + $0x2c] sm:$0xf]
          %v2284 = vld [vmem:[%s2271 + $0x30] sm:$0xf]
          %v2285 = vld [vmem:[%s2271 + $0x34] sm:$0xf]
          %v2286 = vld [vmem:[%s2271 + $0x38] sm:$0xf]
          %v2287 = vld [vmem:[%s2271 + $0x3c] sm:$0xf]
          %v2304 = vunpack.c.l.b16 %v2272
          %v2305 = vunpack.c.l.b16 %v2273
          %v2306 = vunpack.c.l.b16 %v2274
          %v2307 = vunpack.c.l.b16 %v2275
          %v2308 = vunpack.c.l.b16 %v2276
          %v2309 = vunpack.c.l.b16 %v2277
          %v2310 = vunpack.c.l.b16 %v2278
          %v2311 = vunpack.c.l.b16 %v2279
          %v2312 = vunpack.c.l.b16 %v2280
          %v2313 = vunpack.c.l.b16 %v2281
          %v2314 = vunpack.c.l.b16 %v2282
          %v2315 = vunpack.c.l.b16 %v2283
          %v2316 = vunpack.c.l.b16 %v2284
          %v2317 = vunpack.c.l.b16 %v2285
          %v2318 = vunpack.c.l.b16 %v2286
          %v2319 = vunpack.c.l.b16 %v2287
          %v2320 = vpack.c.b16 %v2305, %v2304
          %v2321 = vpack.c.b16 %v2307, %v2306
          %v2322 = vpack.c.b16 %v2309, %v2308
          %v2323 = vpack.c.b16 %v2311, %v2310
          %v2324 = vpack.c.b16 %v2313, %v2312
          %v2325 = vpack.c.b16 %v2315, %v2314
          %v2326 = vpack.c.b16 %v2317, %v2316
          %v2327 = vpack.c.b16 %v2319, %v2318
          %2336 = vmatprep.subr.bf16.mxu0 0
          %2337 = vmatpush1.bf16.msra.mxu0 %v2320
          %2338 = vmatprep.subr.bf16.mxu0 0
          %2339 = vmatpush1.bf16.msra.mxu0 %v2321
          %2340 = vmatprep.subr.bf16.mxu0 0
          %2341 = vmatpush1.bf16.msra.mxu0 %v2322
          %2342 = vmatprep.subr.bf16.mxu0 0
          %2343 = vmatpush1.bf16.msra.mxu0 %v2323
          %2344 = vmatprep.subr.bf16.mxu0 0
          %2345 = vmatpush1.bf16.msra.mxu0 %v2324
          %2346 = vmatprep.subr.bf16.mxu0 0
          %2347 = vmatpush1.bf16.msra.mxu0 %v2325
          %2348 = vmatprep.subr.bf16.mxu0 0
          %2349 = vmatpush1.bf16.msra.mxu0 %v2326
          %2350 = vmatprep.subr.bf16.mxu0 0
          %2351 = vmatpush1.bf16.msra.mxu0 %v2327
          %2352 = vmatprep.subr.bf16.mxu0 0
          %2353 = vmatpush1.bf16.msra.mxu0 0
          %2354 = vmatprep.subr.bf16.mxu0 0
          %2355 = vmatpush1.bf16.msra.mxu0 0
          %2356 = vmatprep.subr.bf16.mxu0 0
          %2357 = vmatpush1.bf16.msra.mxu0 0
          %2358 = vmatprep.subr.bf16.mxu0 0
          %2359 = vmatpush1.bf16.msra.mxu0 0
          %2360 = vmatprep.subr.bf16.mxu0 0
          %2361 = vmatpush1.bf16.msra.mxu0 0
          %2362 = vmatprep.subr.bf16.mxu0 0
          %2363 = vmatpush1.bf16.msra.mxu0 0
          %2364 = vmatprep.subr.bf16.mxu0 0
          %2365 = vmatpush1.bf16.msra.mxu0 0
          %2366 = vmatprep.subr.bf16.mxu0 0
          %2367 = vmatpush1.bf16.msra.mxu0 0
          %2368 = vmatprep.mubr.bf16.mxu0 0
          %2369 = vmatmul.mubr.bf16.gmra.mrb[0].mxu0 %v445
          %v2370 = vpop.f32.mrb[0].mxu0
          %v2371 = vadd.f32 0.0, %v2370
          %v2372 = vpop.f32.mrb[0].mxu0
          %v2373 = vpop.f32.mrb[0].mxu0
          %v2374 = vadd.f32 0.0, %v2373
          %v2375 = vpop.f32.mrb[0].mxu0
          %2376 = vmatprep.mubr.bf16.mxu0 0
          %2377 = vmatmul.mubr.bf16.gmra.mrb[0].mxu0 %v446
          %v2378 = vpop.f32.mrb[0].mxu0
          %v2379 = vadd.f32 0.0, %v2378
          %v2380 = vpop.f32.mrb[0].mxu0
          %v2381 = vpop.f32.mrb[0].mxu0
          %v2382 = vadd.f32 0.0, %v2381
          %v2383 = vpop.f32.mrb[0].mxu0
          %2384 = vmatprep.mubr.bf16.mxu0 0
          %2385 = vmatmul.mubr.bf16.gmra.mrb[0].mxu0 %v447
          %v2386 = vpop.f32.mrb[0].mxu0
          %v2387 = vadd.f32 0.0, %v2386
          %v2388 = vpop.f32.mrb[0].mxu0
          %v2389 = vpop.f32.mrb[0].mxu0
          %v2390 = vadd.f32 0.0, %v2389
          %v2391 = vpop.f32.mrb[0].mxu0
          %2392 = vmatprep.mubr.bf16.mxu0 0
          %2393 = vmatmul.mubr.bf16.gmra.mrb[0].mxu0 %v448
          %v2394 = vpop.f32.mrb[0].mxu0
          %v2395 = vadd.f32 0.0, %v2394
          %v2396 = vpop.f32.mrb[0].mxu0
          %v2397 = vpop.f32.mrb[0].mxu0
          %v2398 = vadd.f32 0.0, %v2397
          %v2399 = vpop.f32.mrb[0].mxu0
          %2400 = vmatprep.mubr.bf16.mxu0 0
          %2401 = vmatmul.mubr.bf16.gmra.mrb[0].mxu0 %v449
          %v2402 = vpop.f32.mrb[0].mxu0
          %v2403 = vadd.f32 0.0, %v2402
          %v2404 = vpop.f32.mrb[0].mxu0
          %v2405 = vpop.f32.mrb[0].mxu0
          %v2406 = vadd.f32 0.0, %v2405
          %v2407 = vpop.f32.mrb[0].mxu0
          %2408 = vmatprep.mubr.bf16.mxu0 0
          %2409 = vmatmul.mubr.bf16.gmra.mrb[0].mxu0 %v450
          %v2410 = vpop.f32.mrb[0].mxu0
          %v2411 = vadd.f32 0.0, %v2410
          %v2412 = vpop.f32.mrb[0].mxu0
          %v2413 = vpop.f32.mrb[0].mxu0
          %v2414 = vadd.f32 0.0, %v2413
          %v2415 = vpop.f32.mrb[0].mxu0
          %2416 = vmatprep.mubr.bf16.mxu0 0
          %2417 = vmatmul.mubr.bf16.gmra.mrb[0].mxu0 %v451
          %v2418 = vpop.f32.mrb[0].mxu0
          %v2419 = vadd.f32 0.0, %v2418
          %v2420 = vpop.f32.mrb[0].mxu0
          %v2421 = vpop.f32.mrb[0].mxu0
          %v2422 = vadd.f32 0.0, %v2421
          %v2423 = vpop.f32.mrb[0].mxu0
          %2424 = vmatprep.mubr.bf16.mxu0 0
          %2425 = vmatmul.mubr.bf16.gmra.mrb[0].mxu0 %v452
          %v2426 = vpop.f32.mrb[0].mxu0
          %v2427 = vadd.f32 0.0, %v2426
          %v2428 = vpop.f32.mrb[0].mxu0
          %v2429 = vpop.f32.mrb[0].mxu0
          %v2430 = vadd.f32 0.0, %v2429
          %v2431 = vpop.f32.mrb[0].mxu0
          %2432 = vmatprep.mubr.bf16.mxu0 0
          %2433 = vmatmul.mubr.bf16.gmra.mrb[0].mxu0 %v453
          %v2434 = vpop.f32.mrb[0].mxu0
          %v2435 = vadd.f32 0.0, %v2434
          %v2436 = vpop.f32.mrb[0].mxu0
          %v2437 = vpop.f32.mrb[0].mxu0
          %v2438 = vadd.f32 0.0, %v2437
          %v2439 = vpop.f32.mrb[0].mxu0
          %2440 = vmatprep.mubr.bf16.mxu0 0
          %2441 = vmatmul.mubr.bf16.gmra.mrb[0].mxu0 %v454
          %v2442 = vpop.f32.mrb[0].mxu0
          %v2443 = vadd.f32 0.0, %v2442
          %v2444 = vpop.f32.mrb[0].mxu0
          %v2445 = vpop.f32.mrb[0].mxu0
          %v2446 = vadd.f32 0.0, %v2445
          %v2447 = vpop.f32.mrb[0].mxu0
          %2448 = vmatprep.mubr.bf16.mxu0 0
          %2449 = vmatmul.mubr.bf16.gmra.mrb[0].mxu0 %v455
          %v2450 = vpop.f32.mrb[0].mxu0
          %v2451 = vadd.f32 0.0, %v2450
          %v2452 = vpop.f32.mrb[0].mxu0
          %v2453 = vpop.f32.mrb[0].mxu0
          %v2454 = vadd.f32 0.0, %v2453
          %v2455 = vpop.f32.mrb[0].mxu0
          %2456 = vmatprep.mubr.bf16.mxu0 0
          %2457 = vmatmul.mubr.bf16.gmra.mrb[0].mxu0 %v456
          %v2458 = vpop.f32.mrb[0].mxu0
          %v2459 = vadd.f32 0.0, %v2458
          %v2460 = vpop.f32.mrb[0].mxu0
          %v2461 = vpop.f32.mrb[0].mxu0
          %v2462 = vadd.f32 0.0, %v2461
          %v2463 = vpop.f32.mrb[0].mxu0
          %2464 = vmatprep.mubr.bf16.mxu0 0
          %2465 = vmatmul.mubr.bf16.gmra.mrb[0].mxu0 %v457
          %v2466 = vpop.f32.mrb[0].mxu0
          %v2467 = vadd.f32 0.0, %v2466
          %v2468 = vpop.f32.mrb[0].mxu0
          %v2469 = vpop.f32.mrb[0].mxu0
          %v2470 = vadd.f32 0.0, %v2469
          %v2471 = vpop.f32.mrb[0].mxu0
          %2472 = vmatprep.mubr.bf16.mxu0 0
          %2473 = vmatmul.mubr.bf16.gmra.mrb[0].mxu0 %v458
          %v2474 = vpop.f32.mrb[0].mxu0
          %v2475 = vadd.f32 0.0, %v2474
          %v2476 = vpop.f32.mrb[0].mxu0
          %v2477 = vpop.f32.mrb[0].mxu0
          %v2478 = vadd.f32 0.0, %v2477
          %v2479 = vpop.f32.mrb[0].mxu0
          %2480 = vmatprep.mubr.bf16.mxu0 0
          %2481 = vmatmul.mubr.bf16.gmra.mrb[0].mxu0 %v459
          %v2482 = vpop.f32.mrb[0].mxu0
          %v2483 = vadd.f32 0.0, %v2482
          %v2484 = vpop.f32.mrb[0].mxu0
          %v2485 = vpop.f32.mrb[0].mxu0
          %v2486 = vadd.f32 0.0, %v2485
          %v2487 = vpop.f32.mrb[0].mxu0
          %2488 = vmatprep.mubr.bf16.mxu0 0
          %2489 = vmatmul.mubr.bf16.gmra.mrb[0].mxu0 %v460
          %v2490 = vpop.f32.mrb[0].mxu0
          %v2491 = vadd.f32 0.0, %v2490
          %v2492 = vpop.f32.mrb[0].mxu0
          %v2493 = vpop.f32.mrb[0].mxu0
          %v2494 = vadd.f32 0.0, %v2493
          %v2495 = vpop.f32.mrb[0].mxu0
          %2496 = vdwg.mxu0
          %v2497 = vpack.c.bf16 %v2374, %v2371
          %v2498 = vpack.c.bf16 %v2382, %v2379
          %v2499 = vpack.c.bf16 %v2390, %v2387
          %v2500 = vpack.c.bf16 %v2398, %v2395
          %v2501 = vpack.c.bf16 %v2406, %v2403
          %v2502 = vpack.c.bf16 %v2414, %v2411
          %v2503 = vpack.c.bf16 %v2422, %v2419
          %v2504 = vpack.c.bf16 %v2430, %v2427
          %v2505 = vpack.c.bf16 %v2438, %v2435
          %v2506 = vpack.c.bf16 %v2446, %v2443
          %v2507 = vpack.c.bf16 %v2454, %v2451
          %v2508 = vpack.c.bf16 %v2462, %v2459
          %v2509 = vpack.c.bf16 %v2470, %v2467
          %v2510 = vpack.c.bf16 %v2478, %v2475
          %v2511 = vpack.c.bf16 %v2486, %v2483
          %v2512 = vpack.c.bf16 %v2494, %v2491
          %s2513 = scalar_lea.vmem [#allocation4], 384
          %2514 = vst.msk [vmem:[%s2513] sm:$0xff] %vm702, %v2497
          %2515 = vst.msk [vmem:[%s2513 + $0x8] sm:$0xff] %vm702, %v2498
          %2516 = vst.msk [vmem:[%s2513 + $0x10] sm:$0xff] %vm702, %v2499
          %2517 = vst.msk [vmem:[%s2513 + $0x18] sm:$0xff] %vm702, %v2500
          %2518 = vst.msk [vmem:[%s2513 + $0x20] sm:$0xff] %vm702, %v2501
          %2519 = vst.msk [vmem:[%s2513 + $0x28] sm:$0xff] %vm702, %v2502
          %2520 = vst.msk [vmem:[%s2513 + $0x30] sm:$0xff] %vm702, %v2503
          %2521 = vst.msk [vmem:[%s2513 + $0x38] sm:$0xff] %vm702, %v2504
          %2522 = vst.msk [vmem:[%s2513 + $0x40] sm:$0xff] %vm702, %v2505
          %2523 = vst.msk [vmem:[%s2513 + $0x48] sm:$0xff] %vm702, %v2506
          %2524 = vst.msk [vmem:[%s2513 + $0x50] sm:$0xff] %vm702, %v2507
          %2525 = vst.msk [vmem:[%s2513 + $0x58] sm:$0xff] %vm702, %v2508
          %2526 = vst.msk [vmem:[%s2513 + $0x60] sm:$0xff] %vm702, %v2509
          %2527 = vst.msk [vmem:[%s2513 + $0x68] sm:$0xff] %vm702, %v2510
          %2528 = vst.msk [vmem:[%s2513 + $0x70] sm:$0xff] %vm702, %v2511
          %2529 = vst.msk [vmem:[%s2513 + $0x78] sm:$0xff] %vm702, %v2512
        $region52: #{tpu_custom_call.1} parent=47 // pred_fallthru
          _
        %v2530 = vld [vmem:[%s320] sm:$0xf]
        %v2531 = vld [vmem:[%s320 + $0x4] sm:$0xf]
        %v2532 = vld [vmem:[%s320 + $0x8] sm:$0xf]
        %v2533 = vld [vmem:[%s320 + $0xc] sm:$0xf]
        %v2534 = vld [vmem:[%s320 + $0x10] sm:$0xf]
        %v2535 = vld [vmem:[%s320 + $0x14] sm:$0xf]
        %v2536 = vld [vmem:[%s320 + $0x18] sm:$0xf]
        %v2537 = vld [vmem:[%s320 + $0x1c] sm:$0xf]
        %v2538 = vld [vmem:[%s320 + $0x20] sm:$0xf]
        %v2539 = vld [vmem:[%s320 + $0x24] sm:$0xf]
        %v2540 = vld [vmem:[%s320 + $0x28] sm:$0xf]
        %v2541 = vld [vmem:[%s320 + $0x2c] sm:$0xf]
        %v2542 = vld [vmem:[%s320 + $0x30] sm:$0xf]
        %v2543 = vld [vmem:[%s320 + $0x34] sm:$0xf]
        %v2544 = vld [vmem:[%s320 + $0x38] sm:$0xf]
        %v2545 = vld [vmem:[%s320 + $0x3c] sm:$0xf]
        %v2546 = vld [vmem:[%s2] sm:$0xf]
        %v2547 = vld [vmem:[%s2 + $0x4] sm:$0xf]
        %v2548 = vld [vmem:[%s2 + $0x8] sm:$0xf]
        %v2549 = vld [vmem:[%s2 + $0xc] sm:$0xf]
        %v2550 = vld [vmem:[%s2 + $0x10] sm:$0xf]
        %v2551 = vld [vmem:[%s2 + $0x14] sm:$0xf]
        %v2552 = vld [vmem:[%s2 + $0x18] sm:$0xf]
        %v2553 = vld [vmem:[%s2 + $0x1c] sm:$0xf]
        %v2554 = vld [vmem:[%s2 + $0x20] sm:$0xf]
        %v2555 = vld [vmem:[%s2 + $0x24] sm:$0xf]
        %v2556 = vld [vmem:[%s2 + $0x28] sm:$0xf]
        %v2557 = vld [vmem:[%s2 + $0x2c] sm:$0xf]
        %v2558 = vld [vmem:[%s2 + $0x30] sm:$0xf]
        %v2559 = vld [vmem:[%s2 + $0x34] sm:$0xf]
        %v2560 = vld [vmem:[%s2 + $0x38] sm:$0xf]
        %v2561 = vld [vmem:[%s2 + $0x3c] sm:$0xf]
        %v2578 = vunpack.c.l.b16 %v2530
        %v2579 = vunpack.c.l.b16 %v2531
        %v2580 = vunpack.c.l.b16 %v2532
        %v2581 = vunpack.c.l.b16 %v2533
        %v2582 = vunpack.c.l.b16 %v2534
        %v2583 = vunpack.c.l.b16 %v2535
        %v2584 = vunpack.c.l.b16 %v2536
        %v2585 = vunpack.c.l.b16 %v2537
        %v2586 = vunpack.c.l.b16 %v2538
        %v2587 = vunpack.c.l.b16 %v2539
        %v2588 = vunpack.c.l.b16 %v2540
        %v2589 = vunpack.c.l.b16 %v2541
        %v2590 = vunpack.c.l.b16 %v2542
        %v2591 = vunpack.c.l.b16 %v2543
        %v2592 = vunpack.c.l.b16 %v2544
        %v2593 = vunpack.c.l.b16 %v2545
        %v2594 = vpack.c.b16 %v2579, %v2578
        %v2595 = vpack.c.b16 %v2581, %v2580
        %v2596 = vpack.c.b16 %v2583, %v2582
        %v2597 = vpack.c.b16 %v2585, %v2584
        %v2598 = vpack.c.b16 %v2587, %v2586
        %v2599 = vpack.c.b16 %v2589, %v2588
        %v2600 = vpack.c.b16 %v2591, %v2590
        %v2601 = vpack.c.b16 %v2593, %v2592
        %v2626 = vunpack.c.l.b16 %v2546
        %v2627 = vunpack.c.l.b16 %v2547
        %v2628 = vunpack.c.l.b16 %v2548
        %v2629 = vunpack.c.l.b16 %v2549
        %v2630 = vunpack.c.l.b16 %v2550
        %v2631 = vunpack.c.l.b16 %v2551
        %v2632 = vunpack.c.l.b16 %v2552
        %v2633 = vunpack.c.l.b16 %v2553
        %v2634 = vunpack.c.l.b16 %v2554
        %v2635 = vunpack.c.l.b16 %v2555
        %v2636 = vunpack.c.l.b16 %v2556
        %v2637 = vunpack.c.l.b16 %v2557
        %v2638 = vunpack.c.l.b16 %v2558
        %v2639 = vunpack.c.l.b16 %v2559
        %v2640 = vunpack.c.l.b16 %v2560
        %v2641 = vunpack.c.l.b16 %v2561
        %v2642 = vpack.c.b16 %v2627, %v2626
        %v2643 = vpack.c.b16 %v2629, %v2628
        %v2644 = vpack.c.b16 %v2631, %v2630
        %v2645 = vpack.c.b16 %v2633, %v2632
        %v2646 = vpack.c.b16 %v2635, %v2634
        %v2647 = vpack.c.b16 %v2637, %v2636
        %v2648 = vpack.c.b16 %v2639, %v2638
        %v2649 = vpack.c.b16 %v2641, %v2640
        %2658 = vmatprep.subr.bf16.mxu0 0
        %2659 = vmatpush1.bf16.msra.mxu0 %v2642
        %2660 = vmatprep.subr.bf16.mxu0 0
        %2661 = vmatpush1.bf16.msra.mxu0 %v2643
        %2662 = vmatprep.subr.bf16.mxu0 0
        %2663 = vmatpush1.bf16.msra.mxu0 %v2644
        %2664 = vmatprep.subr.bf16.mxu0 0
        %2665 = vmatpush1.bf16.msra.mxu0 %v2645
        %2666 = vmatprep.subr.bf16.mxu0 0
        %2667 = vmatpush1.bf16.msra.mxu0 %v2646
        %2668 = vmatprep.subr.bf16.mxu0 0
        %2669 = vmatpush1.bf16.msra.mxu0 %v2647
        %2670 = vmatprep.subr.bf16.mxu0 0
        %2671 = vmatpush1.bf16.msra.mxu0 %v2648
        %2672 = vmatprep.subr.bf16.mxu0 0
        %2673 = vmatpush1.bf16.msra.mxu0 %v2649
        %2674 = vmatprep.subr.bf16.mxu0 0
        %2675 = vmatpush1.bf16.msra.mxu0 0
        %2676 = vmatprep.subr.bf16.mxu0 0
        %2677 = vmatpush1.bf16.msra.mxu0 0
        %2678 = vmatprep.subr.bf16.mxu0 0
        %2679 = vmatpush1.bf16.msra.mxu0 0
        %2680 = vmatprep.subr.bf16.mxu0 0
        %2681 = vmatpush1.bf16.msra.mxu0 0
        %2682 = vmatprep.subr.bf16.mxu0 0
        %2683 = vmatpush1.bf16.msra.mxu0 0
        %2684 = vmatprep.subr.bf16.mxu0 0
        %2685 = vmatpush1.bf16.msra.mxu0 0
        %2686 = vmatprep.subr.bf16.mxu0 0
        %2687 = vmatpush1.bf16.msra.mxu0 0
        %2688 = vmatprep.subr.bf16.mxu0 0
        %2689 = vmatpush1.bf16.msra.mxu0 0
        %2690 = vmatprep.mubr.bf16.mxu0 0
        %2691 = vmatmul.mubr.bf16.gmra.mrb[0].mxu0 %v2594
        %v2692 = vpop.f32.mrb[0].mxu0
        %v2693 = vadd.f32 0.0, %v2692
        %v2694 = vpop.f32.mrb[0].mxu0
        %v2695 = vpop.f32.mrb[0].mxu0
        %v2696 = vadd.f32 0.0, %v2695
        %v2697 = vpop.f32.mrb[0].mxu0
        %2698 = vmatprep.mubr.bf16.mxu0 0
        %2699 = vmatmul.mubr.bf16.gmra.mrb[0].mxu0 %v2595
        %v2700 = vpop.f32.mrb[0].mxu0
        %v2701 = vadd.f32 0.0, %v2700
        %v2702 = vpop.f32.mrb[0].mxu0
        %v2703 = vpop.f32.mrb[0].mxu0
        %v2704 = vadd.f32 0.0, %v2703
        %v2705 = vpop.f32.mrb[0].mxu0
        %2706 = vmatprep.mubr.bf16.mxu0 0
        %2707 = vmatmul.mubr.bf16.gmra.mrb[0].mxu0 %v2596
        %v2708 = vpop.f32.mrb[0].mxu0
        %v2709 = vadd.f32 0.0, %v2708
        %v2710 = vpop.f32.mrb[0].mxu0
        %v2711 = vpop.f32.mrb[0].mxu0
        %v2712 = vadd.f32 0.0, %v2711
        %v2713 = vpop.f32.mrb[0].mxu0
        %2714 = vmatprep.mubr.bf16.mxu0 0
        %2715 = vmatmul.mubr.bf16.gmra.mrb[0].mxu0 %v2597
        %v2716 = vpop.f32.mrb[0].mxu0
        %v2717 = vadd.f32 0.0, %v2716
        %v2718 = vpop.f32.mrb[0].mxu0
        %v2719 = vpop.f32.mrb[0].mxu0
        %v2720 = vadd.f32 0.0, %v2719
        %v2721 = vpop.f32.mrb[0].mxu0
        %2722 = vmatprep.mubr.bf16.mxu0 0
        %2723 = vmatmul.mubr.bf16.gmra.mrb[0].mxu0 %v2598
        %v2724 = vpop.f32.mrb[0].mxu0
        %v2725 = vadd.f32 0.0, %v2724
        %v2726 = vpop.f32.mrb[0].mxu0
        %v2727 = vpop.f32.mrb[0].mxu0
        %v2728 = vadd.f32 0.0, %v2727
        %v2729 = vpop.f32.mrb[0].mxu0
        %2730 = vmatprep.mubr.bf16.mxu0 0
        %2731 = vmatmul.mubr.bf16.gmra.mrb[0].mxu0 %v2599
        %v2732 = vpop.f32.mrb[0].mxu0
        %v2733 = vadd.f32 0.0, %v2732
        %v2734 = vpop.f32.mrb[0].mxu0
        %v2735 = vpop.f32.mrb[0].mxu0
        %v2736 = vadd.f32 0.0, %v2735
        %v2737 = vpop.f32.mrb[0].mxu0
        %2738 = vmatprep.mubr.bf16.mxu0 0
        %2739 = vmatmul.mubr.bf16.gmra.mrb[0].mxu0 %v2600
        %v2740 = vpop.f32.mrb[0].mxu0
        %v2741 = vadd.f32 0.0, %v2740
        %v2742 = vpop.f32.mrb[0].mxu0
        %v2743 = vpop.f32.mrb[0].mxu0
        %v2744 = vadd.f32 0.0, %v2743
        %v2745 = vpop.f32.mrb[0].mxu0
        %2746 = vmatprep.mubr.bf16.mxu0 0
        %2747 = vmatmul.mubr.bf16.gmra.mrb[0].mxu0 %v2601
        %v2748 = vpop.f32.mrb[0].mxu0
        %v2749 = vadd.f32 0.0, %v2748
        %v2750 = vpop.f32.mrb[0].mxu0
        %v2751 = vpop.f32.mrb[0].mxu0
        %v2752 = vadd.f32 0.0, %v2751
        %v2753 = vpop.f32.mrb[0].mxu0
        %2754 = vdwg.mxu0
        %v2755 = vpack.c.bf16 %v2696, %v2693
        %v2756 = vpack.c.bf16 %v2704, %v2701
        %v2757 = vpack.c.bf16 %v2712, %v2709
        %v2758 = vpack.c.bf16 %v2720, %v2717
        %v2759 = vpack.c.bf16 %v2728, %v2725
        %v2760 = vpack.c.bf16 %v2736, %v2733
        %v2761 = vpack.c.bf16 %v2744, %v2741
        %v2762 = vpack.c.bf16 %v2752, %v2749
        %vm2763 = vcmask 261120
        %2764 = vst.msk [vmem:[#allocation2] sm:$0xff] %vm2763, %v2755
        %2765 = vst.msk [vmem:[#allocation2 + $0x8] sm:$0xff] %vm2763, %v2756
        %2766 = vst.msk [vmem:[#allocation2 + $0x10] sm:$0xff] %vm2763, %v2757
        %2767 = vst.msk [vmem:[#allocation2 + $0x18] sm:$0xff] %vm2763, %v2758
        %2768 = vst.msk [vmem:[#allocation2 + $0x20] sm:$0xff] %vm2763, %v2759
        %2769 = vst.msk [vmem:[#allocation2 + $0x28] sm:$0xff] %vm2763, %v2760
        %2770 = vst.msk [vmem:[#allocation2 + $0x30] sm:$0xff] %vm2763, %v2761
        %2771 = vst.msk [vmem:[#allocation2 + $0x38] sm:$0xff] %vm2763, %v2762
        %s2772 = scalar_lea.vmem %s2, 64
        %v2773 = vld [vmem:[%s2772] sm:$0xf]
        %v2774 = vld [vmem:[%s2772 + $0x4] sm:$0xf]
        %v2775 = vld [vmem:[%s2772 + $0x8] sm:$0xf]
        %v2776 = vld [vmem:[%s2772 + $0xc] sm:$0xf]
        %v2777 = vld [vmem:[%s2772 + $0x10] sm:$0xf]
        %v2778 = vld [vmem:[%s2772 + $0x14] sm:$0xf]
        %v2779 = vld [vmem:[%s2772 + $0x18] sm:$0xf]
        %v2780 = vld [vmem:[%s2772 + $0x1c] sm:$0xf]
        %v2781 = vld [vmem:[%s2772 + $0x20] sm:$0xf]
        %v2782 = vld [vmem:[%s2772 + $0x24] sm:$0xf]
        %v2783 = vld [vmem:[%s2772 + $0x28] sm:$0xf]
        %v2784 = vld [vmem:[%s2772 + $0x2c] sm:$0xf]
        %v2785 = vld [vmem:[%s2772 + $0x30] sm:$0xf]
        %v2786 = vld [vmem:[%s2772 + $0x34] sm:$0xf]
        %v2787 = vld [vmem:[%s2772 + $0x38] sm:$0xf]
        %v2788 = vld [vmem:[%s2772 + $0x3c] sm:$0xf]
        %v2805 = vunpack.c.l.b16 %v2773
        %v2806 = vunpack.c.l.b16 %v2774
        %v2807 = vunpack.c.l.b16 %v2775
        %v2808 = vunpack.c.l.b16 %v2776
        %v2809 = vunpack.c.l.b16 %v2777
        %v2810 = vunpack.c.l.b16 %v2778
        %v2811 = vunpack.c.l.b16 %v2779
        %v2812 = vunpack.c.l.b16 %v2780
        %v2813 = vunpack.c.l.b16 %v2781
        %v2814 = vunpack.c.l.b16 %v2782
        %v2815 = vunpack.c.l.b16 %v2783
        %v2816 = vunpack.c.l.b16 %v2784
        %v2817 = vunpack.c.l.b16 %v2785
        %v2818 = vunpack.c.l.b16 %v2786
        %v2819 = vunpack.c.l.b16 %v2787
        %v2820 = vunpack.c.l.b16 %v2788
        %v2821 = vpack.c.b16 %v2806, %v2805
        %v2822 = vpack.c.b16 %v2808, %v2807
        %v2823 = vpack.c.b16 %v2810, %v2809
        %v2824 = vpack.c.b16 %v2812, %v2811
        %v2825 = vpack.c.b16 %v2814, %v2813
        %v2826 = vpack.c.b16 %v2816, %v2815
        %v2827 = vpack.c.b16 %v2818, %v2817
        %v2828 = vpack.c.b16 %v2820, %v2819
        %2837 = vmatprep.subr.bf16.mxu0 0
        %2838 = vmatpush1.bf16.msra.mxu0 %v2821
        %2839 = vmatprep.subr.bf16.mxu0 0
        %2840 = vmatpush1.bf16.msra.mxu0 %v2822
        %2841 = vmatprep.subr.bf16.mxu0 0
        %2842 = vmatpush1.bf16.msra.mxu0 %v2823
        %2843 = vmatprep.subr.bf16.mxu0 0
        %2844 = vmatpush1.bf16.msra.mxu0 %v2824
        %2845 = vmatprep.subr.bf16.mxu0 0
        %2846 = vmatpush1.bf16.msra.mxu0 %v2825
        %2847 = vmatprep.subr.bf16.mxu0 0
        %2848 = vmatpush1.bf16.msra.mxu0 %v2826
        %2849 = vmatprep.subr.bf16.mxu0 0
        %2850 = vmatpush1.bf16.msra.mxu0 %v2827
        %2851 = vmatprep.subr.bf16.mxu0 0
        %2852 = vmatpush1.bf16.msra.mxu0 %v2828
        %2853 = vmatprep.subr.bf16.mxu0 0
        %2854 = vmatpush1.bf16.msra.mxu0 0
        %2855 = vmatprep.subr.bf16.mxu0 0
        %2856 = vmatpush1.bf16.msra.mxu0 0
        %2857 = vmatprep.subr.bf16.mxu0 0
        %2858 = vmatpush1.bf16.msra.mxu0 0
        %2859 = vmatprep.subr.bf16.mxu0 0
        %2860 = vmatpush1.bf16.msra.mxu0 0
        %2861 = vmatprep.subr.bf16.mxu0 0
        %2862 = vmatpush1.bf16.msra.mxu0 0
        %2863 = vmatprep.subr.bf16.mxu0 0
        %2864 = vmatpush1.bf16.msra.mxu0 0
        %2865 = vmatprep.subr.bf16.mxu0 0
        %2866 = vmatpush1.bf16.msra.mxu0 0
        %2867 = vmatprep.subr.bf16.mxu0 0
        %2868 = vmatpush1.bf16.msra.mxu0 0
        %2869 = vmatprep.mubr.bf16.mxu0 0
        %2870 = vmatmul.mubr.bf16.gmra.mrb[0].mxu0 %v2594
        %v2871 = vpop.f32.mrb[0].mxu0
        %v2872 = vadd.f32 0.0, %v2871
        %v2873 = vpop.f32.mrb[0].mxu0
        %v2874 = vpop.f32.mrb[0].mxu0
        %v2875 = vadd.f32 0.0, %v2874
        %v2876 = vpop.f32.mrb[0].mxu0
        %2877 = vmatprep.mubr.bf16.mxu0 0
        %2878 = vmatmul.mubr.bf16.gmra.mrb[0].mxu0 %v2595
        %v2879 = vpop.f32.mrb[0].mxu0
        %v2880 = vadd.f32 0.0, %v2879
        %v2881 = vpop.f32.mrb[0].mxu0
        %v2882 = vpop.f32.mrb[0].mxu0
        %v2883 = vadd.f32 0.0, %v2882
        %v2884 = vpop.f32.mrb[0].mxu0
        %2885 = vmatprep.mubr.bf16.mxu0 0
        %2886 = vmatmul.mubr.bf16.gmra.mrb[0].mxu0 %v2596
        %v2887 = vpop.f32.mrb[0].mxu0
        %v2888 = vadd.f32 0.0, %v2887
        %v2889 = vpop.f32.mrb[0].mxu0
        %v2890 = vpop.f32.mrb[0].mxu0
        %v2891 = vadd.f32 0.0, %v2890
        %v2892 = vpop.f32.mrb[0].mxu0
        %2893 = vmatprep.mubr.bf16.mxu0 0
        %2894 = vmatmul.mubr.bf16.gmra.mrb[0].mxu0 %v2597
        %v2895 = vpop.f32.mrb[0].mxu0
        %v2896 = vadd.f32 0.0, %v2895
        %v2897 = vpop.f32.mrb[0].mxu0
        %v2898 = vpop.f32.mrb[0].mxu0
        %v2899 = vadd.f32 0.0, %v2898
        %v2900 = vpop.f32.mrb[0].mxu0
        %2901 = vmatprep.mubr.bf16.mxu0 0
        %2902 = vmatmul.mubr.bf16.gmra.mrb[0].mxu0 %v2598
        %v2903 = vpop.f32.mrb[0].mxu0
        %v2904 = vadd.f32 0.0, %v2903
        %v2905 = vpop.f32.mrb[0].mxu0
        %v2906 = vpop.f32.mrb[0].mxu0
        %v2907 = vadd.f32 0.0, %v2906
        %v2908 = vpop.f32.mrb[0].mxu0
        %2909 = vmatprep.mubr.bf16.mxu0 0
        %2910 = vmatmul.mubr.bf16.gmra.mrb[0].mxu0 %v2599
        %v2911 = vpop.f32.mrb[0].mxu0
        %v2912 = vadd.f32 0.0, %v2911
        %v2913 = vpop.f32.mrb[0].mxu0
        %v2914 = vpop.f32.mrb[0].mxu0
        %v2915 = vadd.f32 0.0, %v2914
        %v2916 = vpop.f32.mrb[0].mxu0
        %2917 = vmatprep.mubr.bf16.mxu0 0
        %2918 = vmatmul.mubr.bf16.gmra.mrb[0].mxu0 %v2600
        %v2919 = vpop.f32.mrb[0].mxu0
        %v2920 = vadd.f32 0.0, %v2919
        %v2921 = vpop.f32.mrb[0].mxu0
        %v2922 = vpop.f32.mrb[0].mxu0
        %v2923 = vadd.f32 0.0, %v2922
        %v2924 = vpop.f32.mrb[0].mxu0
        %2925 = vmatprep.mubr.bf16.mxu0 0
        %2926 = vmatmul.mubr.bf16.gmra.mrb[0].mxu0 %v2601
        %v2927 = vpop.f32.mrb[0].mxu0
        %v2928 = vadd.f32 0.0, %v2927
        %v2929 = vpop.f32.mrb[0].mxu0
        %v2930 = vpop.f32.mrb[0].mxu0
        %v2931 = vadd.f32 0.0, %v2930
        %v2932 = vpop.f32.mrb[0].mxu0
        %2933 = vdwg.mxu0
        %v2934 = vpack.c.bf16 %v2875, %v2872
        %v2935 = vpack.c.bf16 %v2883, %v2880
        %v2936 = vpack.c.bf16 %v2891, %v2888
        %v2937 = vpack.c.bf16 %v2899, %v2896
        %v2938 = vpack.c.bf16 %v2907, %v2904
        %v2939 = vpack.c.bf16 %v2915, %v2912
        %v2940 = vpack.c.bf16 %v2923, %v2920
        %v2941 = vpack.c.bf16 %v2931, %v2928
        %s2942 = scalar_lea.vmem [#allocation2], 64
        %2943 = vst.msk [vmem:[%s2942] sm:$0xff] %vm2763, %v2934
        %2944 = vst.msk [vmem:[%s2942 + $0x8] sm:$0xff] %vm2763, %v2935
        %2945 = vst.msk [vmem:[%s2942 + $0x10] sm:$0xff] %vm2763, %v2936
        %2946 = vst.msk [vmem:[%s2942 + $0x18] sm:$0xff] %vm2763, %v2937
        %2947 = vst.msk [vmem:[%s2942 + $0x20] sm:$0xff] %vm2763, %v2938
        %2948 = vst.msk [vmem:[%s2942 + $0x28] sm:$0xff] %vm2763, %v2939
        %2949 = vst.msk [vmem:[%s2942 + $0x30] sm:$0xff] %vm2763, %v2940
        %2950 = vst.msk [vmem:[%s2942 + $0x38] sm:$0xff] %vm2763, %v2941
        %s2951 = scalar_lea.vmem %s2, 128
        %v2952 = vld [vmem:[%s2951] sm:$0xf]
        %v2953 = vld [vmem:[%s2951 + $0x4] sm:$0xf]
        %v2954 = vld [vmem:[%s2951 + $0x8] sm:$0xf]
        %v2955 = vld [vmem:[%s2951 + $0xc] sm:$0xf]
        %v2956 = vld [vmem:[%s2951 + $0x10] sm:$0xf]
        %v2957 = vld [vmem:[%s2951 + $0x14] sm:$0xf]
        %v2958 = vld [vmem:[%s2951 + $0x18] sm:$0xf]
        %v2959 = vld [vmem:[%s2951 + $0x1c] sm:$0xf]
        %v2960 = vld [vmem:[%s2951 + $0x20] sm:$0xf]
        %v2961 = vld [vmem:[%s2951 + $0x24] sm:$0xf]
        %v2962 = vld [vmem:[%s2951 + $0x28] sm:$0xf]
        %v2963 = vld [vmem:[%s2951 + $0x2c] sm:$0xf]
        %v2964 = vld [vmem:[%s2951 + $0x30] sm:$0xf]
        %v2965 = vld [vmem:[%s2951 + $0x34] sm:$0xf]
        %v2966 = vld [vmem:[%s2951 + $0x38] sm:$0xf]
        %v2967 = vld [vmem:[%s2951 + $0x3c] sm:$0xf]
        %v2984 = vunpack.c.l.b16 %v2952
        %v2985 = vunpack.c.l.b16 %v2953
        %v2986 = vunpack.c.l.b16 %v2954
        %v2987 = vunpack.c.l.b16 %v2955
        %v2988 = vunpack.c.l.b16 %v2956
        %v2989 = vunpack.c.l.b16 %v2957
        %v2990 = vunpack.c.l.b16 %v2958
        %v2991 = vunpack.c.l.b16 %v2959
        %v2992 = vunpack.c.l.b16 %v2960
        %v2993 = vunpack.c.l.b16 %v2961
        %v2994 = vunpack.c.l.b16 %v2962
        %v2995 = vunpack.c.l.b16 %v2963
        %v2996 = vunpack.c.l.b16 %v2964
        %v2997 = vunpack.c.l.b16 %v2965
        %v2998 = vunpack.c.l.b16 %v2966
        %v2999 = vunpack.c.l.b16 %v2967
        %v3000 = vpack.c.b16 %v2985, %v2984
        %v3001 = vpack.c.b16 %v2987, %v2986
        %v3002 = vpack.c.b16 %v2989, %v2988
        %v3003 = vpack.c.b16 %v2991, %v2990
        %v3004 = vpack.c.b16 %v2993, %v2992
        %v3005 = vpack.c.b16 %v2995, %v2994
        %v3006 = vpack.c.b16 %v2997, %v2996
        %v3007 = vpack.c.b16 %v2999, %v2998
        %3016 = vmatprep.subr.bf16.mxu0 0
        %3017 = vmatpush1.bf16.msra.mxu0 %v3000
        %3018 = vmatprep.subr.bf16.mxu0 0
        %3019 = vmatpush1.bf16.msra.mxu0 %v3001
        %3020 = vmatprep.subr.bf16.mxu0 0
        %3021 = vmatpush1.bf16.msra.mxu0 %v3002
        %3022 = vmatprep.subr.bf16.mxu0 0
        %3023 = vmatpush1.bf16.msra.mxu0 %v3003
        %3024 = vmatprep.subr.bf16.mxu0 0
        %3025 = vmatpush1.bf16.msra.mxu0 %v3004
        %3026 = vmatprep.subr.bf16.mxu0 0
        %3027 = vmatpush1.bf16.msra.mxu0 %v3005
        %3028 = vmatprep.subr.bf16.mxu0 0
        %3029 = vmatpush1.bf16.msra.mxu0 %v3006
        %3030 = vmatprep.subr.bf16.mxu0 0
        %3031 = vmatpush1.bf16.msra.mxu0 %v3007
        %3032 = vmatprep.subr.bf16.mxu0 0
        %3033 = vmatpush1.bf16.msra.mxu0 0
        %3034 = vmatprep.subr.bf16.mxu0 0
        %3035 = vmatpush1.bf16.msra.mxu0 0
        %3036 = vmatprep.subr.bf16.mxu0 0
        %3037 = vmatpush1.bf16.msra.mxu0 0
        %3038 = vmatprep.subr.bf16.mxu0 0
        %3039 = vmatpush1.bf16.msra.mxu0 0
        %3040 = vmatprep.subr.bf16.mxu0 0
        %3041 = vmatpush1.bf16.msra.mxu0 0
        %3042 = vmatprep.subr.bf16.mxu0 0
        %3043 = vmatpush1.bf16.msra.mxu0 0
        %3044 = vmatprep.subr.bf16.mxu0 0
        %3045 = vmatpush1.bf16.msra.mxu0 0
        %3046 = vmatprep.subr.bf16.mxu0 0
        %3047 = vmatpush1.bf16.msra.mxu0 0
        %3048 = vmatprep.mubr.bf16.mxu0 0
        %3049 = vmatmul.mubr.bf16.gmra.mrb[0].mxu0 %v2594
        %v3050 = vpop.f32.mrb[0].mxu0
        %v3051 = vadd.f32 0.0, %v3050
        %v3052 = vpop.f32.mrb[0].mxu0
        %v3053 = vpop.f32.mrb[0].mxu0
        %v3054 = vadd.f32 0.0, %v3053
        %v3055 = vpop.f32.mrb[0].mxu0
        %3056 = vmatprep.mubr.bf16.mxu0 0
        %3057 = vmatmul.mubr.bf16.gmra.mrb[0].mxu0 %v2595
        %v3058 = vpop.f32.mrb[0].mxu0
        %v3059 = vadd.f32 0.0, %v3058
        %v3060 = vpop.f32.mrb[0].mxu0
        %v3061 = vpop.f32.mrb[0].mxu0
        %v3062 = vadd.f32 0.0, %v3061
        %v3063 = vpop.f32.mrb[0].mxu0
        %3064 = vmatprep.mubr.bf16.mxu0 0
        %3065 = vmatmul.mubr.bf16.gmra.mrb[0].mxu0 %v2596
        %v3066 = vpop.f32.mrb[0].mxu0
        %v3067 = vadd.f32 0.0, %v3066
        %v3068 = vpop.f32.mrb[0].mxu0
        %v3069 = vpop.f32.mrb[0].mxu0
        %v3070 = vadd.f32 0.0, %v3069
        %v3071 = vpop.f32.mrb[0].mxu0
        %3072 = vmatprep.mubr.bf16.mxu0 0
        %3073 = vmatmul.mubr.bf16.gmra.mrb[0].mxu0 %v2597
        %v3074 = vpop.f32.mrb[0].mxu0
        %v3075 = vadd.f32 0.0, %v3074
        %v3076 = vpop.f32.mrb[0].mxu0
        %v3077 = vpop.f32.mrb[0].mxu0
        %v3078 = vadd.f32 0.0, %v3077
        %v3079 = vpop.f32.mrb[0].mxu0
        %3080 = vmatprep.mubr.bf16.mxu0 0
        %3081 = vmatmul.mubr.bf16.gmra.mrb[0].mxu0 %v2598
        %v3082 = vpop.f32.mrb[0].mxu0
        %v3083 = vadd.f32 0.0, %v3082
        %v3084 = vpop.f32.mrb[0].mxu0
        %v3085 = vpop.f32.mrb[0].mxu0
        %v3086 = vadd.f32 0.0, %v3085
        %v3087 = vpop.f32.mrb[0].mxu0
        %3088 = vmatprep.mubr.bf16.mxu0 0
        %3089 = vmatmul.mubr.bf16.gmra.mrb[0].mxu0 %v2599
        %v3090 = vpop.f32.mrb[0].mxu0
        %v3091 = vadd.f32 0.0, %v3090
        %v3092 = vpop.f32.mrb[0].mxu0
        %v3093 = vpop.f32.mrb[0].mxu0
        %v3094 = vadd.f32 0.0, %v3093
        %v3095 = vpop.f32.mrb[0].mxu0
        %3096 = vmatprep.mubr.bf16.mxu0 0
        %3097 = vmatmul.mubr.bf16.gmra.mrb[0].mxu0 %v2600
        %v3098 = vpop.f32.mrb[0].mxu0
        %v3099 = vadd.f32 0.0, %v3098
        %v3100 = vpop.f32.mrb[0].mxu0
        %v3101 = vpop.f32.mrb[0].mxu0
        %v3102 = vadd.f32 0.0, %v3101
        %v3103 = vpop.f32.mrb[0].mxu0
        %3104 = vmatprep.mubr.bf16.mxu0 0
        %3105 = vmatmul.mubr.bf16.gmra.mrb[0].mxu0 %v2601
        %v3106 = vpop.f32.mrb[0].mxu0
        %v3107 = vadd.f32 0.0, %v3106
        %v3108 = vpop.f32.mrb[0].mxu0
        %v3109 = vpop.f32.mrb[0].mxu0
        %v3110 = vadd.f32 0.0, %v3109
        %v3111 = vpop.f32.mrb[0].mxu0
        %3112 = vdwg.mxu0
        %v3113 = vpack.c.bf16 %v3054, %v3051
        %v3114 = vpack.c.bf16 %v3062, %v3059
        %v3115 = vpack.c.bf16 %v3070, %v3067
        %v3116 = vpack.c.bf16 %v3078, %v3075
        %v3117 = vpack.c.bf16 %v3086, %v3083
        %v3118 = vpack.c.bf16 %v3094, %v3091
        %v3119 = vpack.c.bf16 %v3102, %v3099
        %v3120 = vpack.c.bf16 %v3110, %v3107
        %s3121 = scalar_lea.vmem [#allocation2], 128
        %3122 = vst.msk [vmem:[%s3121] sm:$0xff] %vm2763, %v3113
        %3123 = vst.msk [vmem:[%s3121 + $0x8] sm:$0xff] %vm2763, %v3114
        %3124 = vst.msk [vmem:[%s3121 + $0x10] sm:$0xff] %vm2763, %v3115
        %3125 = vst.msk [vmem:[%s3121 + $0x18] sm:$0xff] %vm2763, %v3116
        %3126 = vst.msk [vmem:[%s3121 + $0x20] sm:$0xff] %vm2763, %v3117
        %3127 = vst.msk [vmem:[%s3121 + $0x28] sm:$0xff] %vm2763, %v3118
        %3128 = vst.msk [vmem:[%s3121 + $0x30] sm:$0xff] %vm2763, %v3119
        %3129 = vst.msk [vmem:[%s3121 + $0x38] sm:$0xff] %vm2763, %v3120
        %s3130 = scalar_lea.vmem %s2, 192
        %v3131 = vld [vmem:[%s3130] sm:$0xf]
        %v3132 = vld [vmem:[%s3130 + $0x4] sm:$0xf]
        %v3133 = vld [vmem:[%s3130 + $0x8] sm:$0xf]
        %v3134 = vld [vmem:[%s3130 + $0xc] sm:$0xf]
        %v3135 = vld [vmem:[%s3130 + $0x10] sm:$0xf]
        %v3136 = vld [vmem:[%s3130 + $0x14] sm:$0xf]
        %v3137 = vld [vmem:[%s3130 + $0x18] sm:$0xf]
        %v3138 = vld [vmem:[%s3130 + $0x1c] sm:$0xf]
        %v3139 = vld [vmem:[%s3130 + $0x20] sm:$0xf]
        %v3140 = vld [vmem:[%s3130 + $0x24] sm:$0xf]
        %v3141 = vld [vmem:[%s3130 + $0x28] sm:$0xf]
        %v3142 = vld [vmem:[%s3130 + $0x2c] sm:$0xf]
        %v3143 = vld [vmem:[%s3130 + $0x30] sm:$0xf]
        %v3144 = vld [vmem:[%s3130 + $0x34] sm:$0xf]
        %v3145 = vld [vmem:[%s3130 + $0x38] sm:$0xf]
        %v3146 = vld [vmem:[%s3130 + $0x3c] sm:$0xf]
        %v3163 = vunpack.c.l.b16 %v3131
        %v3164 = vunpack.c.l.b16 %v3132
        %v3165 = vunpack.c.l.b16 %v3133
        %v3166 = vunpack.c.l.b16 %v3134
        %v3167 = vunpack.c.l.b16 %v3135
        %v3168 = vunpack.c.l.b16 %v3136
        %v3169 = vunpack.c.l.b16 %v3137
        %v3170 = vunpack.c.l.b16 %v3138
        %v3171 = vunpack.c.l.b16 %v3139
        %v3172 = vunpack.c.l.b16 %v3140
        %v3173 = vunpack.c.l.b16 %v3141
        %v3174 = vunpack.c.l.b16 %v3142
        %v3175 = vunpack.c.l.b16 %v3143
        %v3176 = vunpack.c.l.b16 %v3144
        %v3177 = vunpack.c.l.b16 %v3145
        %v3178 = vunpack.c.l.b16 %v3146
        %v3179 = vpack.c.b16 %v3164, %v3163
        %v3180 = vpack.c.b16 %v3166, %v3165
        %v3181 = vpack.c.b16 %v3168, %v3167
        %v3182 = vpack.c.b16 %v3170, %v3169
        %v3183 = vpack.c.b16 %v3172, %v3171
        %v3184 = vpack.c.b16 %v3174, %v3173
        %v3185 = vpack.c.b16 %v3176, %v3175
        %v3186 = vpack.c.b16 %v3178, %v3177
        %3195 = vmatprep.subr.bf16.mxu0 0
        %3196 = vmatpush1.bf16.msra.mxu0 %v3179
        %3197 = vmatprep.subr.bf16.mxu0 0
        %3198 = vmatpush1.bf16.msra.mxu0 %v3180
        %3199 = vmatprep.subr.bf16.mxu0 0
        %3200 = vmatpush1.bf16.msra.mxu0 %v3181
        %3201 = vmatprep.subr.bf16.mxu0 0
        %3202 = vmatpush1.bf16.msra.mxu0 %v3182
        %3203 = vmatprep.subr.bf16.mxu0 0
        %3204 = vmatpush1.bf16.msra.mxu0 %v3183
        %3205 = vmatprep.subr.bf16.mxu0 0
        %3206 = vmatpush1.bf16.msra.mxu0 %v3184
        %3207 = vmatprep.subr.bf16.mxu0 0
        %3208 = vmatpush1.bf16.msra.mxu0 %v3185
        %3209 = vmatprep.subr.bf16.mxu0 0
        %3210 = vmatpush1.bf16.msra.mxu0 %v3186
        %3211 = vmatprep.subr.bf16.mxu0 0
        %3212 = vmatpush1.bf16.msra.mxu0 0
        %3213 = vmatprep.subr.bf16.mxu0 0
        %3214 = vmatpush1.bf16.msra.mxu0 0
        %3215 = vmatprep.subr.bf16.mxu0 0
        %3216 = vmatpush1.bf16.msra.mxu0 0
        %3217 = vmatprep.subr.bf16.mxu0 0
        %3218 = vmatpush1.bf16.msra.mxu0 0
        %3219 = vmatprep.subr.bf16.mxu0 0
        %3220 = vmatpush1.bf16.msra.mxu0 0
        %3221 = vmatprep.subr.bf16.mxu0 0
        %3222 = vmatpush1.bf16.msra.mxu0 0
        %3223 = vmatprep.subr.bf16.mxu0 0
        %3224 = vmatpush1.bf16.msra.mxu0 0
        %3225 = vmatprep.subr.bf16.mxu0 0
        %3226 = vmatpush1.bf16.msra.mxu0 0
        %3227 = vmatprep.mubr.bf16.mxu0 0
        %3228 = vmatmul.mubr.bf16.gmra.mrb[0].mxu0 %v2594
        %v3229 = vpop.f32.mrb[0].mxu0
        %v3230 = vadd.f32 0.0, %v3229
        %v3231 = vpop.f32.mrb[0].mxu0
        %v3232 = vpop.f32.mrb[0].mxu0
        %v3233 = vadd.f32 0.0, %v3232
        %v3234 = vpop.f32.mrb[0].mxu0
        %3235 = vmatprep.mubr.bf16.mxu0 0
        %3236 = vmatmul.mubr.bf16.gmra.mrb[0].mxu0 %v2595
        %v3237 = vpop.f32.mrb[0].mxu0
        %v3238 = vadd.f32 0.0, %v3237
        %v3239 = vpop.f32.mrb[0].mxu0
        %v3240 = vpop.f32.mrb[0].mxu0
        %v3241 = vadd.f32 0.0, %v3240
        %v3242 = vpop.f32.mrb[0].mxu0
        %3243 = vmatprep.mubr.bf16.mxu0 0
        %3244 = vmatmul.mubr.bf16.gmra.mrb[0].mxu0 %v2596
        %v3245 = vpop.f32.mrb[0].mxu0
        %v3246 = vadd.f32 0.0, %v3245
        %v3247 = vpop.f32.mrb[0].mxu0
        %v3248 = vpop.f32.mrb[0].mxu0
        %v3249 = vadd.f32 0.0, %v3248
        %v3250 = vpop.f32.mrb[0].mxu0
        %3251 = vmatprep.mubr.bf16.mxu0 0
        %3252 = vmatmul.mubr.bf16.gmra.mrb[0].mxu0 %v2597
        %v3253 = vpop.f32.mrb[0].mxu0
        %v3254 = vadd.f32 0.0, %v3253
        %v3255 = vpop.f32.mrb[0].mxu0
        %v3256 = vpop.f32.mrb[0].mxu0
        %v3257 = vadd.f32 0.0, %v3256
        %v3258 = vpop.f32.mrb[0].mxu0
        %3259 = vmatprep.mubr.bf16.mxu0 0
        %3260 = vmatmul.mubr.bf16.gmra.mrb[0].mxu0 %v2598
        %v3261 = vpop.f32.mrb[0].mxu0
        %v3262 = vadd.f32 0.0, %v3261
        %v3263 = vpop.f32.mrb[0].mxu0
        %v3264 = vpop.f32.mrb[0].mxu0
        %v3265 = vadd.f32 0.0, %v3264
        %v3266 = vpop.f32.mrb[0].mxu0
        %3267 = vmatprep.mubr.bf16.mxu0 0
        %3268 = vmatmul.mubr.bf16.gmra.mrb[0].mxu0 %v2599
        %v3269 = vpop.f32.mrb[0].mxu0
        %v3270 = vadd.f32 0.0, %v3269
        %v3271 = vpop.f32.mrb[0].mxu0
        %v3272 = vpop.f32.mrb[0].mxu0
        %v3273 = vadd.f32 0.0, %v3272
        %v3274 = vpop.f32.mrb[0].mxu0
        %3275 = vmatprep.mubr.bf16.mxu0 0
        %3276 = vmatmul.mubr.bf16.gmra.mrb[0].mxu0 %v2600
        %v3277 = vpop.f32.mrb[0].mxu0
        %v3278 = vadd.f32 0.0, %v3277
        %v3279 = vpop.f32.mrb[0].mxu0
        %v3280 = vpop.f32.mrb[0].mxu0
        %v3281 = vadd.f32 0.0, %v3280
        %v3282 = vpop.f32.mrb[0].mxu0
        %3283 = vmatprep.mubr.bf16.mxu0 0
        %3284 = vmatmul.mubr.bf16.gmra.mrb[0].mxu0 %v2601
        %v3285 = vpop.f32.mrb[0].mxu0
        %v3286 = vadd.f32 0.0, %v3285
        %v3287 = vpop.f32.mrb[0].mxu0
        %v3288 = vpop.f32.mrb[0].mxu0
        %v3289 = vadd.f32 0.0, %v3288
        %v3290 = vpop.f32.mrb[0].mxu0
        %3291 = vdwg.mxu0
        %v3292 = vpack.c.bf16 %v3233, %v3230
        %v3293 = vpack.c.bf16 %v3241, %v3238
        %v3294 = vpack.c.bf16 %v3249, %v3246
        %v3295 = vpack.c.bf16 %v3257, %v3254
        %v3296 = vpack.c.bf16 %v3265, %v3262
        %v3297 = vpack.c.bf16 %v3273, %v3270
        %v3298 = vpack.c.bf16 %v3281, %v3278
        %v3299 = vpack.c.bf16 %v3289, %v3286
        %s3300 = scalar_lea.vmem [#allocation2], 192
        %3301 = vst.msk [vmem:[%s3300] sm:$0xff] %vm2763, %v3292
        %3302 = vst.msk [vmem:[%s3300 + $0x8] sm:$0xff] %vm2763, %v3293
        %3303 = vst.msk [vmem:[%s3300 + $0x10] sm:$0xff] %vm2763, %v3294
        %3304 = vst.msk [vmem:[%s3300 + $0x18] sm:$0xff] %vm2763, %v3295
        %3305 = vst.msk [vmem:[%s3300 + $0x20] sm:$0xff] %vm2763, %v3296
        %3306 = vst.msk [vmem:[%s3300 + $0x28] sm:$0xff] %vm2763, %v3297
        %3307 = vst.msk [vmem:[%s3300 + $0x30] sm:$0xff] %vm2763, %v3298
        %3308 = vst.msk [vmem:[%s3300 + $0x38] sm:$0xff] %vm2763, %v3299
        %v3309 = vld [vmem:[#allocation2] sm:$0xff]
        %v3310 = vld [vmem:[#allocation2 + $0x8] sm:$0xff]
        %v3311 = vld [vmem:[#allocation2 + $0x10] sm:$0xff]
        %v3312 = vld [vmem:[#allocation2 + $0x18] sm:$0xff]
        %v3313 = vld [vmem:[#allocation2 + $0x20] sm:$0xff]
        %v3314 = vld [vmem:[#allocation2 + $0x28] sm:$0xff]
        %v3315 = vld [vmem:[#allocation2 + $0x30] sm:$0xff]
        %v3316 = vld [vmem:[#allocation2 + $0x38] sm:$0xff]
        %v3317 = vld [vmem:[#allocation2 + $0x40] sm:$0xff]
        %v3318 = vld [vmem:[#allocation2 + $0x48] sm:$0xff]
        %v3319 = vld [vmem:[#allocation2 + $0x50] sm:$0xff]
        %v3320 = vld [vmem:[#allocation2 + $0x58] sm:$0xff]
        %v3321 = vld [vmem:[#allocation2 + $0x60] sm:$0xff]
        %v3322 = vld [vmem:[#allocation2 + $0x68] sm:$0xff]
        %v3323 = vld [vmem:[#allocation2 + $0x70] sm:$0xff]
        %v3324 = vld [vmem:[#allocation2 + $0x78] sm:$0xff]
        %v3325 = vld [vmem:[#allocation2 + $0x80] sm:$0xff]
        %v3326 = vld [vmem:[#allocation2 + $0x88] sm:$0xff]
        %v3327 = vld [vmem:[#allocation2 + $0x90] sm:$0xff]
        %v3328 = vld [vmem:[#allocation2 + $0x98] sm:$0xff]
        %v3329 = vld [vmem:[#allocation2 + $0xa0] sm:$0xff]
        %v3330 = vld [vmem:[#allocation2 + $0xa8] sm:$0xff]
        %v3331 = vld [vmem:[#allocation2 + $0xb0] sm:$0xff]
        %v3332 = vld [vmem:[#allocation2 + $0xb8] sm:$0xff]
        %v3333 = vld [vmem:[#allocation2 + $0xc0] sm:$0xff]
        %v3334 = vld [vmem:[#allocation2 + $0xc8] sm:$0xff]
        %v3335 = vld [vmem:[#allocation2 + $0xd0] sm:$0xff]
        %v3336 = vld [vmem:[#allocation2 + $0xd8] sm:$0xff]
        %v3337 = vld [vmem:[#allocation2 + $0xe0] sm:$0xff]
        %v3338 = vld [vmem:[#allocation2 + $0xe8] sm:$0xff]
        %v3339 = vld [vmem:[#allocation2 + $0xf0] sm:$0xff]
        %v3340 = vld [vmem:[#allocation2 + $0xf8] sm:$0xff]
        %v3341 = vld [vmem:[#allocation3] sm:$0xff]
        %v3342 = vld [vmem:[#allocation3 + $0x8] sm:$0xff]
        %v3343 = vld [vmem:[#allocation3 + $0x10] sm:$0xff]
        %v3344 = vld [vmem:[#allocation3 + $0x18] sm:$0xff]
        %v3345 = vld [vmem:[#allocation3 + $0x20] sm:$0xff]
        %v3346 = vld [vmem:[#allocation3 + $0x28] sm:$0xff]
        %v3347 = vld [vmem:[#allocation3 + $0x30] sm:$0xff]
        %v3348 = vld [vmem:[#allocation3 + $0x38] sm:$0xff]
        %v3349 = vld [vmem:[#allocation3 + $0x40] sm:$0xff]
        %v3350 = vld [vmem:[#allocation3 + $0x48] sm:$0xff]
        %v3351 = vld [vmem:[#allocation3 + $0x50] sm:$0xff]
        %v3352 = vld [vmem:[#allocation3 + $0x58] sm:$0xff]
        %v3353 = vld [vmem:[#allocation3 + $0x60] sm:$0xff]
        %v3354 = vld [vmem:[#allocation3 + $0x68] sm:$0xff]
        %v3355 = vld [vmem:[#allocation3 + $0x70] sm:$0xff]
        %v3356 = vld [vmem:[#allocation3 + $0x78] sm:$0xff]
        %v3357 = vld [vmem:[#allocation3 + $0x80] sm:$0xff]
        %v3358 = vld [vmem:[#allocation3 + $0x88] sm:$0xff]
        %v3359 = vld [vmem:[#allocation3 + $0x90] sm:$0xff]
        %v3360 = vld [vmem:[#allocation3 + $0x98] sm:$0xff]
        %v3361 = vld [vmem:[#allocation3 + $0xa0] sm:$0xff]
        %v3362 = vld [vmem:[#allocation3 + $0xa8] sm:$0xff]
        %v3363 = vld [vmem:[#allocation3 + $0xb0] sm:$0xff]
        %v3364 = vld [vmem:[#allocation3 + $0xb8] sm:$0xff]
        %v3365 = vld [vmem:[#allocation3 + $0xc0] sm:$0xff]
        %v3366 = vld [vmem:[#allocation3 + $0xc8] sm:$0xff]
        %v3367 = vld [vmem:[#allocation3 + $0xd0] sm:$0xff]
        %v3368 = vld [vmem:[#allocation3 + $0xd8] sm:$0xff]
        %v3369 = vld [vmem:[#allocation3 + $0xe0] sm:$0xff]
        %v3370 = vld [vmem:[#allocation3 + $0xe8] sm:$0xff]
        %v3371 = vld [vmem:[#allocation3 + $0xf0] sm:$0xff]
        %v3372 = vld [vmem:[#allocation3 + $0xf8] sm:$0xff]
        %v3373 = vld [vmem:[#allocation3 + $0x100] sm:$0xff]
        %v3374 = vld [vmem:[#allocation3 + $0x108] sm:$0xff]
        %v3375 = vld [vmem:[#allocation3 + $0x110] sm:$0xff]
        %v3376 = vld [vmem:[#allocation3 + $0x118] sm:$0xff]
        %v3377 = vld [vmem:[#allocation3 + $0x120] sm:$0xff]
        %v3378 = vld [vmem:[#allocation3 + $0x128] sm:$0xff]
        %v3379 = vld [vmem:[#allocation3 + $0x130] sm:$0xff]
        %v3380 = vld [vmem:[#allocation3 + $0x138] sm:$0xff]
        %v3381 = vld [vmem:[#allocation3 + $0x140] sm:$0xff]
        %v3382 = vld [vmem:[#allocation3 + $0x148] sm:$0xff]
        %v3383 = vld [vmem:[#allocation3 + $0x150] sm:$0xff]
        %v3384 = vld [vmem:[#allocation3 + $0x158] sm:$0xff]
        %v3385 = vld [vmem:[#allocation3 + $0x160] sm:$0xff]
        %v3386 = vld [vmem:[#allocation3 + $0x168] sm:$0xff]
        %v3387 = vld [vmem:[#allocation3 + $0x170] sm:$0xff]
        %v3388 = vld [vmem:[#allocation3 + $0x178] sm:$0xff]
        %v3389 = vld [vmem:[#allocation3 + $0x180] sm:$0xff]
        %v3390 = vld [vmem:[#allocation3 + $0x188] sm:$0xff]
        %v3391 = vld [vmem:[#allocation3 + $0x190] sm:$0xff]
        %v3392 = vld [vmem:[#allocation3 + $0x198] sm:$0xff]
        %v3393 = vld [vmem:[#allocation3 + $0x1a0] sm:$0xff]
        %v3394 = vld [vmem:[#allocation3 + $0x1a8] sm:$0xff]
        %v3395 = vld [vmem:[#allocation3 + $0x1b0] sm:$0xff]
        %v3396 = vld [vmem:[#allocation3 + $0x1b8] sm:$0xff]
        %v3397 = vld [vmem:[#allocation3 + $0x1c0] sm:$0xff]
        %v3398 = vld [vmem:[#allocation3 + $0x1c8] sm:$0xff]
        %v3399 = vld [vmem:[#allocation3 + $0x1d0] sm:$0xff]
        %v3400 = vld [vmem:[#allocation3 + $0x1d8] sm:$0xff]
        %v3401 = vld [vmem:[#allocation3 + $0x1e0] sm:$0xff]
        %v3402 = vld [vmem:[#allocation3 + $0x1e8] sm:$0xff]
        %v3403 = vld [vmem:[#allocation3 + $0x1f0] sm:$0xff]
        %v3404 = vld [vmem:[#allocation3 + $0x1f8] sm:$0xff]
        %v3405 = vld [vmem:[#allocation4] sm:$0xff]
        %v3406 = vld [vmem:[#allocation4 + $0x8] sm:$0xff]
        %v3407 = vld [vmem:[#allocation4 + $0x10] sm:$0xff]
        %v3408 = vld [vmem:[#allocation4 + $0x18] sm:$0xff]
        %v3409 = vld [vmem:[#allocation4 + $0x20] sm:$0xff]
        %v3410 = vld [vmem:[#allocation4 + $0x28] sm:$0xff]
        %v3411 = vld [vmem:[#allocation4 + $0x30] sm:$0xff]
        %v3412 = vld [vmem:[#allocation4 + $0x38] sm:$0xff]
        %v3413 = vld [vmem:[#allocation4 + $0x40] sm:$0xff]
        %v3414 = vld [vmem:[#allocation4 + $0x48] sm:$0xff]
        %v3415 = vld [vmem:[#allocation4 + $0x50] sm:$0xff]
        %v3416 = vld [vmem:[#allocation4 + $0x58] sm:$0xff]
        %v3417 = vld [vmem:[#allocation4 + $0x60] sm:$0xff]
        %v3418 = vld [vmem:[#allocation4 + $0x68] sm:$0xff]
        %v3419 = vld [vmem:[#allocation4 + $0x70] sm:$0xff]
        %v3420 = vld [vmem:[#allocation4 + $0x78] sm:$0xff]
        %v3421 = vld [vmem:[#allocation4 + $0x80] sm:$0xff]
        %v3422 = vld [vmem:[#allocation4 + $0x88] sm:$0xff]
        %v3423 = vld [vmem:[#allocation4 + $0x90] sm:$0xff]
        %v3424 = vld [vmem:[#allocation4 + $0x98] sm:$0xff]
        %v3425 = vld [vmem:[#allocation4 + $0xa0] sm:$0xff]
        %v3426 = vld [vmem:[#allocation4 + $0xa8] sm:$0xff]
        %v3427 = vld [vmem:[#allocation4 + $0xb0] sm:$0xff]
        %v3428 = vld [vmem:[#allocation4 + $0xb8] sm:$0xff]
        %v3429 = vld [vmem:[#allocation4 + $0xc0] sm:$0xff]
        %v3430 = vld [vmem:[#allocation4 + $0xc8] sm:$0xff]
        %v3431 = vld [vmem:[#allocation4 + $0xd0] sm:$0xff]
        %v3432 = vld [vmem:[#allocation4 + $0xd8] sm:$0xff]
        %v3433 = vld [vmem:[#allocation4 + $0xe0] sm:$0xff]
        %v3434 = vld [vmem:[#allocation4 + $0xe8] sm:$0xff]
        %v3435 = vld [vmem:[#allocation4 + $0xf0] sm:$0xff]
        %v3436 = vld [vmem:[#allocation4 + $0xf8] sm:$0xff]
        %v3437 = vld [vmem:[#allocation4 + $0x100] sm:$0xff]
        %v3438 = vld [vmem:[#allocation4 + $0x108] sm:$0xff]
        %v3439 = vld [vmem:[#allocation4 + $0x110] sm:$0xff]
        %v3440 = vld [vmem:[#allocation4 + $0x118] sm:$0xff]
        %v3441 = vld [vmem:[#allocation4 + $0x120] sm:$0xff]
        %v3442 = vld [vmem:[#allocation4 + $0x128] sm:$0xff]
        %v3443 = vld [vmem:[#allocation4 + $0x130] sm:$0xff]
        %v3444 = vld [vmem:[#allocation4 + $0x138] sm:$0xff]
        %v3445 = vld [vmem:[#allocation4 + $0x140] sm:$0xff]
        %v3446 = vld [vmem:[#allocation4 + $0x148] sm:$0xff]
        %v3447 = vld [vmem:[#allocation4 + $0x150] sm:$0xff]
        %v3448 = vld [vmem:[#allocation4 + $0x158] sm:$0xff]
        %v3449 = vld [vmem:[#allocation4 + $0x160] sm:$0xff]
        %v3450 = vld [vmem:[#allocation4 + $0x168] sm:$0xff]
        %v3451 = vld [vmem:[#allocation4 + $0x170] sm:$0xff]
        %v3452 = vld [vmem:[#allocation4 + $0x178] sm:$0xff]
        %v3453 = vld [vmem:[#allocation4 + $0x180] sm:$0xff]
        %v3454 = vld [vmem:[#allocation4 + $0x188] sm:$0xff]
        %v3455 = vld [vmem:[#allocation4 + $0x190] sm:$0xff]
        %v3456 = vld [vmem:[#allocation4 + $0x198] sm:$0xff]
        %v3457 = vld [vmem:[#allocation4 + $0x1a0] sm:$0xff]
        %v3458 = vld [vmem:[#allocation4 + $0x1a8] sm:$0xff]
        %v3459 = vld [vmem:[#allocation4 + $0x1b0] sm:$0xff]
        %v3460 = vld [vmem:[#allocation4 + $0x1b8] sm:$0xff]
        %v3461 = vld [vmem:[#allocation4 + $0x1c0] sm:$0xff]
        %v3462 = vld [vmem:[#allocation4 + $0x1c8] sm:$0xff]
        %v3463 = vld [vmem:[#allocation4 + $0x1d0] sm:$0xff]
        %v3464 = vld [vmem:[#allocation4 + $0x1d8] sm:$0xff]
        %v3465 = vld [vmem:[#allocation4 + $0x1e0] sm:$0xff]
        %v3466 = vld [vmem:[#allocation4 + $0x1e8] sm:$0xff]
        %v3467 = vld [vmem:[#allocation4 + $0x1f0] sm:$0xff]
        %v3468 = vld [vmem:[#allocation4 + $0x1f8] sm:$0xff]
        %v3470 = vsel %vm2763, %v3309, 0
        %v3473 = vsel %vm2763, %v3310, 0
        %v3476 = vsel %vm2763, %v3311, 0
        %v3479 = vsel %vm2763, %v3312, 0
        %v3482 = vsel %vm2763, %v3313, 0
        %v3485 = vsel %vm2763, %v3314, 0
        %v3488 = vsel %vm2763, %v3315, 0
        %v3491 = vsel %vm2763, %v3316, 0
        %v3494 = vsel %vm2763, %v3341, 0
        %v3497 = vsel %vm2763, %v3342, 0
        %v3500 = vsel %vm2763, %v3343, 0
        %v3503 = vsel %vm2763, %v3344, 0
        %v3506 = vsel %vm2763, %v3345, 0
        %v3509 = vsel %vm2763, %v3346, 0
        %v3512 = vsel %vm2763, %v3347, 0
        %v3515 = vsel %vm2763, %v3348, 0
        %v3518 = vsel %vm2763, %v3349, 0
        %v3521 = vsel %vm2763, %v3350, 0
        %v3524 = vsel %vm2763, %v3351, 0
        %v3527 = vsel %vm2763, %v3352, 0
        %v3530 = vsel %vm2763, %v3353, 0
        %v3533 = vsel %vm2763, %v3354, 0
        %v3536 = vsel %vm2763, %v3355, 0
        %v3539 = vsel %vm2763, %v3356, 0
        %3541 = vmatprep.subr.bf16.mxu0 0
        %3542 = vmatpush1.bf16.xpose.msra.mxu0 %v3494
        %3543 = vmatprep.subr.bf16.mxu0 0
        %3544 = vmatpush1.bf16.xpose.msra.mxu0 %v3497
        %3545 = vmatprep.subr.bf16.mxu0 0
        %3546 = vmatpush1.bf16.xpose.msra.mxu0 %v3500
        %3547 = vmatprep.subr.bf16.mxu0 0
        %3548 = vmatpush1.bf16.xpose.msra.mxu0 %v3503
        %3549 = vmatprep.subr.bf16.mxu0 0
        %3550 = vmatpush1.bf16.xpose.msra.mxu0 %v3506
        %3551 = vmatprep.subr.bf16.mxu0 0
        %3552 = vmatpush1.bf16.xpose.msra.mxu0 %v3509
        %3553 = vmatprep.subr.bf16.mxu0 0
        %3554 = vmatpush1.bf16.xpose.msra.mxu0 %v3512
        %3555 = vmatprep.subr.bf16.mxu0 0
        %3556 = vmatpush1.bf16.xpose.msra.mxu0 %v3515
        %3557 = vmatprep.subr.bf16.mxu0 0
        %3558 = vmatpush1.bf16.xpose.msra.mxu0 %v3518
        %3559 = vmatprep.subr.bf16.mxu0 0
        %3560 = vmatpush1.bf16.xpose.msra.mxu0 %v3521
        %3561 = vmatprep.subr.bf16.mxu0 0
        %3562 = vmatpush1.bf16.xpose.msra.mxu0 %v3524
        %3563 = vmatprep.subr.bf16.mxu0 0
        %3564 = vmatpush1.bf16.xpose.msra.mxu0 %v3527
        %3565 = vmatprep.subr.bf16.mxu0 0
        %3566 = vmatpush1.bf16.xpose.msra.mxu0 %v3530
        %3567 = vmatprep.subr.bf16.mxu0 0
        %3568 = vmatpush1.bf16.xpose.msra.mxu0 %v3533
        %3569 = vmatprep.subr.bf16.mxu0 0
        %3570 = vmatpush1.bf16.xpose.msra.mxu0 %v3536
        %3571 = vmatprep.subr.bf16.mxu0 0
        %3572 = vmatpush1.bf16.xpose.msra.mxu0 %v3539
        %3573 = vmatprep.mubr.bf16.mxu0 0
        %3574 = vmatmul.mubr.bf16.gmra.mrb[0].mxu0 %v3470
        %v3575 = vpop.f32.mrb[0].mxu0
        %v3576 = vadd.f32 0.0, %v3575
        %v3577 = vpop.f32.mrb[0].mxu0
        %v3578 = vadd.f32 0.0, %v3577
        %v3579 = vpop.f32.mrb[0].mxu0
        %v3580 = vadd.f32 0.0, %v3579
        %v3581 = vpop.f32.mrb[0].mxu0
        %v3582 = vadd.f32 0.0, %v3581
        %3583 = vmatprep.mubr.bf16.mxu0 0
        %3584 = vmatmul.mubr.bf16.gmra.mrb[0].mxu0 %v3473
        %v3585 = vpop.f32.mrb[0].mxu0
        %v3586 = vadd.f32 0.0, %v3585
        %v3587 = vpop.f32.mrb[0].mxu0
        %v3588 = vadd.f32 0.0, %v3587
        %v3589 = vpop.f32.mrb[0].mxu0
        %v3590 = vadd.f32 0.0, %v3589
        %v3591 = vpop.f32.mrb[0].mxu0
        %v3592 = vadd.f32 0.0, %v3591
        %3593 = vmatprep.mubr.bf16.mxu0 0
        %3594 = vmatmul.mubr.bf16.gmra.mrb[0].mxu0 %v3476
        %v3595 = vpop.f32.mrb[0].mxu0
        %v3596 = vadd.f32 0.0, %v3595
        %v3597 = vpop.f32.mrb[0].mxu0
        %v3598 = vadd.f32 0.0, %v3597
        %v3599 = vpop.f32.mrb[0].mxu0
        %v3600 = vadd.f32 0.0, %v3599
        %v3601 = vpop.f32.mrb[0].mxu0
        %v3602 = vadd.f32 0.0, %v3601
        %3603 = vmatprep.mubr.bf16.mxu0 0
        %3604 = vmatmul.mubr.bf16.gmra.mrb[0].mxu0 %v3479
        %v3605 = vpop.f32.mrb[0].mxu0
        %v3606 = vadd.f32 0.0, %v3605
        %v3607 = vpop.f32.mrb[0].mxu0
        %v3608 = vadd.f32 0.0, %v3607
        %v3609 = vpop.f32.mrb[0].mxu0
        %v3610 = vadd.f32 0.0, %v3609
        %v3611 = vpop.f32.mrb[0].mxu0
        %v3612 = vadd.f32 0.0, %v3611
        %3613 = vmatprep.mubr.bf16.mxu0 0
        %3614 = vmatmul.mubr.bf16.gmra.mrb[0].mxu0 %v3482
        %v3615 = vpop.f32.mrb[0].mxu0
        %v3616 = vadd.f32 0.0, %v3615
        %v3617 = vpop.f32.mrb[0].mxu0
        %v3618 = vadd.f32 0.0, %v3617
        %v3619 = vpop.f32.mrb[0].mxu0
        %v3620 = vadd.f32 0.0, %v3619
        %v3621 = vpop.f32.mrb[0].mxu0
        %v3622 = vadd.f32 0.0, %v3621
        %3623 = vmatprep.mubr.bf16.mxu0 0
        %3624 = vmatmul.mubr.bf16.gmra.mrb[0].mxu0 %v3485
        %v3625 = vpop.f32.mrb[0].mxu0
        %v3626 = vadd.f32 0.0, %v3625
        %v3627 = vpop.f32.mrb[0].mxu0
        %v3628 = vadd.f32 0.0, %v3627
        %v3629 = vpop.f32.mrb[0].mxu0
        %v3630 = vadd.f32 0.0, %v3629
        %v3631 = vpop.f32.mrb[0].mxu0
        %v3632 = vadd.f32 0.0, %v3631
        %3633 = vmatprep.mubr.bf16.mxu0 0
        %3634 = vmatmul.mubr.bf16.gmra.mrb[0].mxu0 %v3488
        %v3635 = vpop.f32.mrb[0].mxu0
        %v3636 = vadd.f32 0.0, %v3635
        %v3637 = vpop.f32.mrb[0].mxu0
        %v3638 = vadd.f32 0.0, %v3637
        %v3639 = vpop.f32.mrb[0].mxu0
        %v3640 = vadd.f32 0.0, %v3639
        %v3641 = vpop.f32.mrb[0].mxu0
        %v3642 = vadd.f32 0.0, %v3641
        %3643 = vmatprep.mubr.bf16.mxu0 0
        %3644 = vmatmul.mubr.bf16.gmra.mrb[0].mxu0 %v3491
        %v3645 = vpop.f32.mrb[0].mxu0
        %v3646 = vadd.f32 0.0, %v3645
        %v3647 = vpop.f32.mrb[0].mxu0
        %v3648 = vadd.f32 0.0, %v3647
        %v3649 = vpop.f32.mrb[0].mxu0
        %v3650 = vadd.f32 0.0, %v3649
        %v3651 = vpop.f32.mrb[0].mxu0
        %v3652 = vadd.f32 0.0, %v3651
        %3653 = vdwg.mxu0
        %v3655 = vsel %vm2763, %v3317, 0
        %v3658 = vsel %vm2763, %v3318, 0
        %v3661 = vsel %vm2763, %v3319, 0
        %v3664 = vsel %vm2763, %v3320, 0
        %v3667 = vsel %vm2763, %v3321, 0
        %v3670 = vsel %vm2763, %v3322, 0
        %v3673 = vsel %vm2763, %v3323, 0
        %v3676 = vsel %vm2763, %v3324, 0
        %v3679 = vsel %vm2763, %v3357, 0
        %v3682 = vsel %vm2763, %v3358, 0
        %v3685 = vsel %vm2763, %v3359, 0
        %v3688 = vsel %vm2763, %v3360, 0
        %v3691 = vsel %vm2763, %v3361, 0
        %v3694 = vsel %vm2763, %v3362, 0
        %v3697 = vsel %vm2763, %v3363, 0
        %v3700 = vsel %vm2763, %v3364, 0
        %v3703 = vsel %vm2763, %v3365, 0
        %v3706 = vsel %vm2763, %v3366, 0
        %v3709 = vsel %vm2763, %v3367, 0
        %v3712 = vsel %vm2763, %v3368, 0
        %v3715 = vsel %vm2763, %v3369, 0
        %v3718 = vsel %vm2763, %v3370, 0
        %v3721 = vsel %vm2763, %v3371, 0
        %v3724 = vsel %vm2763, %v3372, 0
        %3726 = vmatprep.subr.bf16.mxu0 0
        %3727 = vmatpush1.bf16.xpose.msra.mxu0 %v3679
        %3728 = vmatprep.subr.bf16.mxu0 0
        %3729 = vmatpush1.bf16.xpose.msra.mxu0 %v3682
        %3730 = vmatprep.subr.bf16.mxu0 0
        %3731 = vmatpush1.bf16.xpose.msra.mxu0 %v3685
        %3732 = vmatprep.subr.bf16.mxu0 0
        %3733 = vmatpush1.bf16.xpose.msra.mxu0 %v3688
        %3734 = vmatprep.subr.bf16.mxu0 0
        %3735 = vmatpush1.bf16.xpose.msra.mxu0 %v3691
        %3736 = vmatprep.subr.bf16.mxu0 0
        %3737 = vmatpush1.bf16.xpose.msra.mxu0 %v3694
        %3738 = vmatprep.subr.bf16.mxu0 0
        %3739 = vmatpush1.bf16.xpose.msra.mxu0 %v3697
        %3740 = vmatprep.subr.bf16.mxu0 0
        %3741 = vmatpush1.bf16.xpose.msra.mxu0 %v3700
        %3742 = vmatprep.subr.bf16.mxu0 0
        %3743 = vmatpush1.bf16.xpose.msra.mxu0 %v3703
        %3744 = vmatprep.subr.bf16.mxu0 0
        %3745 = vmatpush1.bf16.xpose.msra.mxu0 %v3706
        %3746 = vmatprep.subr.bf16.mxu0 0
        %3747 = vmatpush1.bf16.xpose.msra.mxu0 %v3709
        %3748 = vmatprep.subr.bf16.mxu0 0
        %3749 = vmatpush1.bf16.xpose.msra.mxu0 %v3712
        %3750 = vmatprep.subr.bf16.mxu0 0
        %3751 = vmatpush1.bf16.xpose.msra.mxu0 %v3715
        %3752 = vmatprep.subr.bf16.mxu0 0
        %3753 = vmatpush1.bf16.xpose.msra.mxu0 %v3718
        %3754 = vmatprep.subr.bf16.mxu0 0
        %3755 = vmatpush1.bf16.xpose.msra.mxu0 %v3721
        %3756 = vmatprep.subr.bf16.mxu0 0
        %3757 = vmatpush1.bf16.xpose.msra.mxu0 %v3724
        %3758 = vmatprep.mubr.bf16.mxu0 0
        %3759 = vmatmul.mubr.bf16.gmra.mrb[0].mxu0 %v3655
        %v3760 = vpop.f32.mrb[0].mxu0
        %v3761 = vadd.f32 0.0, %v3760
        %v3762 = vpop.f32.mrb[0].mxu0
        %v3763 = vadd.f32 0.0, %v3762
        %v3764 = vpop.f32.mrb[0].mxu0
        %v3765 = vadd.f32 0.0, %v3764
        %v3766 = vpop.f32.mrb[0].mxu0
        %v3767 = vadd.f32 0.0, %v3766
        %3768 = vmatprep.mubr.bf16.mxu0 0
        %3769 = vmatmul.mubr.bf16.gmra.mrb[0].mxu0 %v3658
        %v3770 = vpop.f32.mrb[0].mxu0
        %v3771 = vadd.f32 0.0, %v3770
        %v3772 = vpop.f32.mrb[0].mxu0
        %v3773 = vadd.f32 0.0, %v3772
        %v3774 = vpop.f32.mrb[0].mxu0
        %v3775 = vadd.f32 0.0, %v3774
        %v3776 = vpop.f32.mrb[0].mxu0
        %v3777 = vadd.f32 0.0, %v3776
        %3778 = vmatprep.mubr.bf16.mxu0 0
        %3779 = vmatmul.mubr.bf16.gmra.mrb[0].mxu0 %v3661
        %v3780 = vpop.f32.mrb[0].mxu0
        %v3781 = vadd.f32 0.0, %v3780
        %v3782 = vpop.f32.mrb[0].mxu0
        %v3783 = vadd.f32 0.0, %v3782
        %v3784 = vpop.f32.mrb[0].mxu0
        %v3785 = vadd.f32 0.0, %v3784
        %v3786 = vpop.f32.mrb[0].mxu0
        %v3787 = vadd.f32 0.0, %v3786
        %3788 = vmatprep.mubr.bf16.mxu0 0
        %3789 = vmatmul.mubr.bf16.gmra.mrb[0].mxu0 %v3664
        %v3790 = vpop.f32.mrb[0].mxu0
        %v3791 = vadd.f32 0.0, %v3790
        %v3792 = vpop.f32.mrb[0].mxu0
        %v3793 = vadd.f32 0.0, %v3792
        %v3794 = vpop.f32.mrb[0].mxu0
        %v3795 = vadd.f32 0.0, %v3794
        %v3796 = vpop.f32.mrb[0].mxu0
        %v3797 = vadd.f32 0.0, %v3796
        %3798 = vmatprep.mubr.bf16.mxu0 0
        %3799 = vmatmul.mubr.bf16.gmra.mrb[0].mxu0 %v3667
        %v3800 = vpop.f32.mrb[0].mxu0
        %v3801 = vadd.f32 0.0, %v3800
        %v3802 = vpop.f32.mrb[0].mxu0
        %v3803 = vadd.f32 0.0, %v3802
        %v3804 = vpop.f32.mrb[0].mxu0
        %v3805 = vadd.f32 0.0, %v3804
        %v3806 = vpop.f32.mrb[0].mxu0
        %v3807 = vadd.f32 0.0, %v3806
        %3808 = vmatprep.mubr.bf16.mxu0 0
        %3809 = vmatmul.mubr.bf16.gmra.mrb[0].mxu0 %v3670
        %v3810 = vpop.f32.mrb[0].mxu0
        %v3811 = vadd.f32 0.0, %v3810
        %v3812 = vpop.f32.mrb[0].mxu0
        %v3813 = vadd.f32 0.0, %v3812
        %v3814 = vpop.f32.mrb[0].mxu0
        %v3815 = vadd.f32 0.0, %v3814
        %v3816 = vpop.f32.mrb[0].mxu0
        %v3817 = vadd.f32 0.0, %v3816
        %3818 = vmatprep.mubr.bf16.mxu0 0
        %3819 = vmatmul.mubr.bf16.gmra.mrb[0].mxu0 %v3673
        %v3820 = vpop.f32.mrb[0].mxu0
        %v3821 = vadd.f32 0.0, %v3820
        %v3822 = vpop.f32.mrb[0].mxu0
        %v3823 = vadd.f32 0.0, %v3822
        %v3824 = vpop.f32.mrb[0].mxu0
        %v3825 = vadd.f32 0.0, %v3824
        %v3826 = vpop.f32.mrb[0].mxu0
        %v3827 = vadd.f32 0.0, %v3826
        %3828 = vmatprep.mubr.bf16.mxu0 0
        %3829 = vmatmul.mubr.bf16.gmra.mrb[0].mxu0 %v3676
        %v3830 = vpop.f32.mrb[0].mxu0
        %v3831 = vadd.f32 0.0, %v3830
        %v3832 = vpop.f32.mrb[0].mxu0
        %v3833 = vadd.f32 0.0, %v3832
        %v3834 = vpop.f32.mrb[0].mxu0
        %v3835 = vadd.f32 0.0, %v3834
        %v3836 = vpop.f32.mrb[0].mxu0
        %v3837 = vadd.f32 0.0, %v3836
        %3838 = vdwg.mxu0
        %v3840 = vsel %vm2763, %v3325, 0
        %v3843 = vsel %vm2763, %v3326, 0
        %v3846 = vsel %vm2763, %v3327, 0
        %v3849 = vsel %vm2763, %v3328, 0
        %v3852 = vsel %vm2763, %v3329, 0
        %v3855 = vsel %vm2763, %v3330, 0
        %v3858 = vsel %vm2763, %v3331, 0
        %v3861 = vsel %vm2763, %v3332, 0
        %v3864 = vsel %vm2763, %v3373, 0
        %v3867 = vsel %vm2763, %v3374, 0
        %v3870 = vsel %vm2763, %v3375, 0
        %v3873 = vsel %vm2763, %v3376, 0
        %v3876 = vsel %vm2763, %v3377, 0
        %v3879 = vsel %vm2763, %v3378, 0
        %v3882 = vsel %vm2763, %v3379, 0
        %v3885 = vsel %vm2763, %v3380, 0
        %v3888 = vsel %vm2763, %v3381, 0
        %v3891 = vsel %vm2763, %v3382, 0
        %v3894 = vsel %vm2763, %v3383, 0
        %v3897 = vsel %vm2763, %v3384, 0
        %v3900 = vsel %vm2763, %v3385, 0
        %v3903 = vsel %vm2763, %v3386, 0
        %v3906 = vsel %vm2763, %v3387, 0
        %v3909 = vsel %vm2763, %v3388, 0
        %3911 = vmatprep.subr.bf16.mxu0 0
        %3912 = vmatpush1.bf16.xpose.msra.mxu0 %v3864
        %3913 = vmatprep.subr.bf16.mxu0 0
        %3914 = vmatpush1.bf16.xpose.msra.mxu0 %v3867
        %3915 = vmatprep.subr.bf16.mxu0 0
        %3916 = vmatpush1.bf16.xpose.msra.mxu0 %v3870
        %3917 = vmatprep.subr.bf16.mxu0 0
        %3918 = vmatpush1.bf16.xpose.msra.mxu0 %v3873
        %3919 = vmatprep.subr.bf16.mxu0 0
        %3920 = vmatpush1.bf16.xpose.msra.mxu0 %v3876
        %3921 = vmatprep.subr.bf16.mxu0 0
        %3922 = vmatpush1.bf16.xpose.msra.mxu0 %v3879
        %3923 = vmatprep.subr.bf16.mxu0 0
        %3924 = vmatpush1.bf16.xpose.msra.mxu0 %v3882
        %3925 = vmatprep.subr.bf16.mxu0 0
        %3926 = vmatpush1.bf16.xpose.msra.mxu0 %v3885
        %3927 = vmatprep.subr.bf16.mxu0 0
        %3928 = vmatpush1.bf16.xpose.msra.mxu0 %v3888
        %3929 = vmatprep.subr.bf16.mxu0 0
        %3930 = vmatpush1.bf16.xpose.msra.mxu0 %v3891
        %3931 = vmatprep.subr.bf16.mxu0 0
        %3932 = vmatpush1.bf16.xpose.msra.mxu0 %v3894
        %3933 = vmatprep.subr.bf16.mxu0 0
        %3934 = vmatpush1.bf16.xpose.msra.mxu0 %v3897
        %3935 = vmatprep.subr.bf16.mxu0 0
        %3936 = vmatpush1.bf16.xpose.msra.mxu0 %v3900
        %3937 = vmatprep.subr.bf16.mxu0 0
        %3938 = vmatpush1.bf16.xpose.msra.mxu0 %v3903
        %3939 = vmatprep.subr.bf16.mxu0 0
        %3940 = vmatpush1.bf16.xpose.msra.mxu0 %v3906
        %3941 = vmatprep.subr.bf16.mxu0 0
        %3942 = vmatpush1.bf16.xpose.msra.mxu0 %v3909
        %3943 = vmatprep.mubr.bf16.mxu0 0
        %3944 = vmatmul.mubr.bf16.gmra.mrb[0].mxu0 %v3840
        %v3945 = vpop.f32.mrb[0].mxu0
        %v3946 = vadd.f32 0.0, %v3945
        %v3947 = vpop.f32.mrb[0].mxu0
        %v3948 = vadd.f32 0.0, %v3947
        %v3949 = vpop.f32.mrb[0].mxu0
        %v3950 = vadd.f32 0.0, %v3949
        %v3951 = vpop.f32.mrb[0].mxu0
        %v3952 = vadd.f32 0.0, %v3951
        %3953 = vmatprep.mubr.bf16.mxu0 0
        %3954 = vmatmul.mubr.bf16.gmra.mrb[0].mxu0 %v3843
        %v3955 = vpop.f32.mrb[0].mxu0
        %v3956 = vadd.f32 0.0, %v3955
        %v3957 = vpop.f32.mrb[0].mxu0
        %v3958 = vadd.f32 0.0, %v3957
        %v3959 = vpop.f32.mrb[0].mxu0
        %v3960 = vadd.f32 0.0, %v3959
        %v3961 = vpop.f32.mrb[0].mxu0
        %v3962 = vadd.f32 0.0, %v3961
        %3963 = vmatprep.mubr.bf16.mxu0 0
        %3964 = vmatmul.mubr.bf16.gmra.mrb[0].mxu0 %v3846
        %v3965 = vpop.f32.mrb[0].mxu0
        %v3966 = vadd.f32 0.0, %v3965
        %v3967 = vpop.f32.mrb[0].mxu0
        %v3968 = vadd.f32 0.0, %v3967
        %v3969 = vpop.f32.mrb[0].mxu0
        %v3970 = vadd.f32 0.0, %v3969
        %v3971 = vpop.f32.mrb[0].mxu0
        %v3972 = vadd.f32 0.0, %v3971
        %3973 = vmatprep.mubr.bf16.mxu0 0
        %3974 = vmatmul.mubr.bf16.gmra.mrb[0].mxu0 %v3849
        %v3975 = vpop.f32.mrb[0].mxu0
        %v3976 = vadd.f32 0.0, %v3975
        %v3977 = vpop.f32.mrb[0].mxu0
        %v3978 = vadd.f32 0.0, %v3977
        %v3979 = vpop.f32.mrb[0].mxu0
        %v3980 = vadd.f32 0.0, %v3979
        %v3981 = vpop.f32.mrb[0].mxu0
        %v3982 = vadd.f32 0.0, %v3981
        %3983 = vmatprep.mubr.bf16.mxu0 0
        %3984 = vmatmul.mubr.bf16.gmra.mrb[0].mxu0 %v3852
        %v3985 = vpop.f32.mrb[0].mxu0
        %v3986 = vadd.f32 0.0, %v3985
        %v3987 = vpop.f32.mrb[0].mxu0
        %v3988 = vadd.f32 0.0, %v3987
        %v3989 = vpop.f32.mrb[0].mxu0
        %v3990 = vadd.f32 0.0, %v3989
        %v3991 = vpop.f32.mrb[0].mxu0
        %v3992 = vadd.f32 0.0, %v3991
        %3993 = vmatprep.mubr.bf16.mxu0 0
        %3994 = vmatmul.mubr.bf16.gmra.mrb[0].mxu0 %v3855
        %v3995 = vpop.f32.mrb[0].mxu0
        %v3996 = vadd.f32 0.0, %v3995
        %v3997 = vpop.f32.mrb[0].mxu0
        %v3998 = vadd.f32 0.0, %v3997
        %v3999 = vpop.f32.mrb[0].mxu0
        %v4000 = vadd.f32 0.0, %v3999
        %v4001 = vpop.f32.mrb[0].mxu0
        %v4002 = vadd.f32 0.0, %v4001
        %4003 = vmatprep.mubr.bf16.mxu0 0
        %4004 = vmatmul.mubr.bf16.gmra.mrb[0].mxu0 %v3858
        %v4005 = vpop.f32.mrb[0].mxu0
        %v4006 = vadd.f32 0.0, %v4005
        %v4007 = vpop.f32.mrb[0].mxu0
        %v4008 = vadd.f32 0.0, %v4007
        %v4009 = vpop.f32.mrb[0].mxu0
        %v4010 = vadd.f32 0.0, %v4009
        %v4011 = vpop.f32.mrb[0].mxu0
        %v4012 = vadd.f32 0.0, %v4011
        %4013 = vmatprep.mubr.bf16.mxu0 0
        %4014 = vmatmul.mubr.bf16.gmra.mrb[0].mxu0 %v3861
        %v4015 = vpop.f32.mrb[0].mxu0
        %v4016 = vadd.f32 0.0, %v4015
        %v4017 = vpop.f32.mrb[0].mxu0
        %v4018 = vadd.f32 0.0, %v4017
        %v4019 = vpop.f32.mrb[0].mxu0
        %v4020 = vadd.f32 0.0, %v4019
        %v4021 = vpop.f32.mrb[0].mxu0
        %v4022 = vadd.f32 0.0, %v4021
        %4023 = vdwg.mxu0
        %v4025 = vsel %vm2763, %v3333, 0
        %v4028 = vsel %vm2763, %v3334, 0
        %v4031 = vsel %vm2763, %v3335, 0
        %v4034 = vsel %vm2763, %v3336, 0
        %v4037 = vsel %vm2763, %v3337, 0
        %v4040 = vsel %vm2763, %v3338, 0
        %v4043 = vsel %vm2763, %v3339, 0
        %v4046 = vsel %vm2763, %v3340, 0
        %v4049 = vsel %vm2763, %v3389, 0
        %v4052 = vsel %vm2763, %v3390, 0
        %v4055 = vsel %vm2763, %v3391, 0
        %v4058 = vsel %vm2763, %v3392, 0
        %v4061 = vsel %vm2763, %v3393, 0
        %v4064 = vsel %vm2763, %v3394, 0
        %v4067 = vsel %vm2763, %v3395, 0
        %v4070 = vsel %vm2763, %v3396, 0
        %v4073 = vsel %vm2763, %v3397, 0
        %v4076 = vsel %vm2763, %v3398, 0
        %v4079 = vsel %vm2763, %v3399, 0
        %v4082 = vsel %vm2763, %v3400, 0
        %v4085 = vsel %vm2763, %v3401, 0
        %v4088 = vsel %vm2763, %v3402, 0
        %v4091 = vsel %vm2763, %v3403, 0
        %v4094 = vsel %vm2763, %v3404, 0
        %4096 = vmatprep.subr.bf16.mxu0 0
        %4097 = vmatpush1.bf16.xpose.msra.mxu0 %v4049
        %4098 = vmatprep.subr.bf16.mxu0 0
        %4099 = vmatpush1.bf16.xpose.msra.mxu0 %v4052
        %4100 = vmatprep.subr.bf16.mxu0 0
        %4101 = vmatpush1.bf16.xpose.msra.mxu0 %v4055
        %4102 = vmatprep.subr.bf16.mxu0 0
        %4103 = vmatpush1.bf16.xpose.msra.mxu0 %v4058
        %4104 = vmatprep.subr.bf16.mxu0 0
        %4105 = vmatpush1.bf16.xpose.msra.mxu0 %v4061
        %4106 = vmatprep.subr.bf16.mxu0 0
        %4107 = vmatpush1.bf16.xpose.msra.mxu0 %v4064
        %4108 = vmatprep.subr.bf16.mxu0 0
        %4109 = vmatpush1.bf16.xpose.msra.mxu0 %v4067
        %4110 = vmatprep.subr.bf16.mxu0 0
        %4111 = vmatpush1.bf16.xpose.msra.mxu0 %v4070
        %4112 = vmatprep.subr.bf16.mxu0 0
        %4113 = vmatpush1.bf16.xpose.msra.mxu0 %v4073
        %4114 = vmatprep.subr.bf16.mxu0 0
        %4115 = vmatpush1.bf16.xpose.msra.mxu0 %v4076
        %4116 = vmatprep.subr.bf16.mxu0 0
        %4117 = vmatpush1.bf16.xpose.msra.mxu0 %v4079
        %4118 = vmatprep.subr.bf16.mxu0 0
        %4119 = vmatpush1.bf16.xpose.msra.mxu0 %v4082
        %4120 = vmatprep.subr.bf16.mxu0 0
        %4121 = vmatpush1.bf16.xpose.msra.mxu0 %v4085
        %4122 = vmatprep.subr.bf16.mxu0 0
        %4123 = vmatpush1.bf16.xpose.msra.mxu0 %v4088
        %4124 = vmatprep.subr.bf16.mxu0 0
        %4125 = vmatpush1.bf16.xpose.msra.mxu0 %v4091
        %4126 = vmatprep.subr.bf16.mxu0 0
        %4127 = vmatpush1.bf16.xpose.msra.mxu0 %v4094
        %4128 = vmatprep.mubr.bf16.mxu0 0
        %4129 = vmatmul.mubr.bf16.gmra.mrb[0].mxu0 %v4025
        %v4130 = vpop.f32.mrb[0].mxu0
        %v4131 = vadd.f32 0.0, %v4130
        %v4132 = vpop.f32.mrb[0].mxu0
        %v4133 = vadd.f32 0.0, %v4132
        %v4134 = vpop.f32.mrb[0].mxu0
        %v4135 = vadd.f32 0.0, %v4134
        %v4136 = vpop.f32.mrb[0].mxu0
        %v4137 = vadd.f32 0.0, %v4136
        %4138 = vmatprep.mubr.bf16.mxu0 0
        %4139 = vmatmul.mubr.bf16.gmra.mrb[0].mxu0 %v4028
        %v4140 = vpop.f32.mrb[0].mxu0
        %v4141 = vadd.f32 0.0, %v4140
        %v4142 = vpop.f32.mrb[0].mxu0
        %v4143 = vadd.f32 0.0, %v4142
        %v4144 = vpop.f32.mrb[0].mxu0
        %v4145 = vadd.f32 0.0, %v4144
        %v4146 = vpop.f32.mrb[0].mxu0
        %v4147 = vadd.f32 0.0, %v4146
        %4148 = vmatprep.mubr.bf16.mxu0 0
        %4149 = vmatmul.mubr.bf16.gmra.mrb[0].mxu0 %v4031
        %v4150 = vpop.f32.mrb[0].mxu0
        %v4151 = vadd.f32 0.0, %v4150
        %v4152 = vpop.f32.mrb[0].mxu0
        %v4153 = vadd.f32 0.0, %v4152
        %v4154 = vpop.f32.mrb[0].mxu0
        %v4155 = vadd.f32 0.0, %v4154
        %v4156 = vpop.f32.mrb[0].mxu0
        %v4157 = vadd.f32 0.0, %v4156
        %4158 = vmatprep.mubr.bf16.mxu0 0
        %4159 = vmatmul.mubr.bf16.gmra.mrb[0].mxu0 %v4034
        %v4160 = vpop.f32.mrb[0].mxu0
        %v4161 = vadd.f32 0.0, %v4160
        %v4162 = vpop.f32.mrb[0].mxu0
        %v4163 = vadd.f32 0.0, %v4162
        %v4164 = vpop.f32.mrb[0].mxu0
        %v4165 = vadd.f32 0.0, %v4164
        %v4166 = vpop.f32.mrb[0].mxu0
        %v4167 = vadd.f32 0.0, %v4166
        %4168 = vmatprep.mubr.bf16.mxu0 0
        %4169 = vmatmul.mubr.bf16.gmra.mrb[0].mxu0 %v4037
        %v4170 = vpop.f32.mrb[0].mxu0
        %v4171 = vadd.f32 0.0, %v4170
        %v4172 = vpop.f32.mrb[0].mxu0
        %v4173 = vadd.f32 0.0, %v4172
        %v4174 = vpop.f32.mrb[0].mxu0
        %v4175 = vadd.f32 0.0, %v4174
        %v4176 = vpop.f32.mrb[0].mxu0
        %v4177 = vadd.f32 0.0, %v4176
        %4178 = vmatprep.mubr.bf16.mxu0 0
        %4179 = vmatmul.mubr.bf16.gmra.mrb[0].mxu0 %v4040
        %v4180 = vpop.f32.mrb[0].mxu0
        %v4181 = vadd.f32 0.0, %v4180
        %v4182 = vpop.f32.mrb[0].mxu0
        %v4183 = vadd.f32 0.0, %v4182
        %v4184 = vpop.f32.mrb[0].mxu0
        %v4185 = vadd.f32 0.0, %v4184
        %v4186 = vpop.f32.mrb[0].mxu0
        %v4187 = vadd.f32 0.0, %v4186
        %4188 = vmatprep.mubr.bf16.mxu0 0
        %4189 = vmatmul.mubr.bf16.gmra.mrb[0].mxu0 %v4043
        %v4190 = vpop.f32.mrb[0].mxu0
        %v4191 = vadd.f32 0.0, %v4190
        %v4192 = vpop.f32.mrb[0].mxu0
        %v4193 = vadd.f32 0.0, %v4192
        %v4194 = vpop.f32.mrb[0].mxu0
        %v4195 = vadd.f32 0.0, %v4194
        %v4196 = vpop.f32.mrb[0].mxu0
        %v4197 = vadd.f32 0.0, %v4196
        %4198 = vmatprep.mubr.bf16.mxu0 0
        %4199 = vmatmul.mubr.bf16.gmra.mrb[0].mxu0 %v4046
        %v4200 = vpop.f32.mrb[0].mxu0
        %v4201 = vadd.f32 0.0, %v4200
        %v4202 = vpop.f32.mrb[0].mxu0
        %v4203 = vadd.f32 0.0, %v4202
        %v4204 = vpop.f32.mrb[0].mxu0
        %v4205 = vadd.f32 0.0, %v4204
        %v4206 = vpop.f32.mrb[0].mxu0
        %v4207 = vadd.f32 0.0, %v4206
        %4208 = vdwg.mxu0
        %v4209 = vmax.f32 %v3576, %v3578
        %4210 = vmax.xlane.f32.xlu0 %v4209
        %v4211 = vpop.xlane.xlu0 %4210
        %v4212 = vmax.f32 %v3580, %v3582
        %4213 = vmax.xlane.f32.xlu0 %v4212
        %v4214 = vpop.xlane.xlu0 %4213
        %v4215 = vmax.f32 %v3586, %v3588
        %4216 = vmax.xlane.f32.xlu0 %v4215
        %v4217 = vpop.xlane.xlu0 %4216
        %v4218 = vmax.f32 %v3590, %v3592
        %4219 = vmax.xlane.f32.xlu0 %v4218
        %v4220 = vpop.xlane.xlu0 %4219
        %v4221 = vmax.f32 %v3596, %v3598
        %4222 = vmax.xlane.f32.xlu0 %v4221
        %v4223 = vpop.xlane.xlu0 %4222
        %v4224 = vmax.f32 %v3600, %v3602
        %4225 = vmax.xlane.f32.xlu0 %v4224
        %v4226 = vpop.xlane.xlu0 %4225
        %v4227 = vmax.f32 %v3606, %v3608
        %4228 = vmax.xlane.f32.xlu0 %v4227
        %v4229 = vpop.xlane.xlu0 %4228
        %v4230 = vmax.f32 %v3610, %v3612
        %4231 = vmax.xlane.f32.xlu0 %v4230
        %v4232 = vpop.xlane.xlu0 %4231
        %v4233 = vmax.f32 %v3616, %v3618
        %4234 = vmax.xlane.f32.xlu0 %v4233
        %v4235 = vpop.xlane.xlu0 %4234
        %v4236 = vmax.f32 %v3620, %v3622
        %4237 = vmax.xlane.f32.xlu0 %v4236
        %v4238 = vpop.xlane.xlu0 %4237
        %v4239 = vmax.f32 %v3626, %v3628
        %4240 = vmax.xlane.f32.xlu0 %v4239
        %v4241 = vpop.xlane.xlu0 %4240
        %v4242 = vmax.f32 %v3630, %v3632
        %4243 = vmax.xlane.f32.xlu0 %v4242
        %v4244 = vpop.xlane.xlu0 %4243
        %v4245 = vmax.f32 %v3636, %v3638
        %4246 = vmax.xlane.f32.xlu0 %v4245
        %v4247 = vpop.xlane.xlu0 %4246
        %v4248 = vmax.f32 %v3640, %v3642
        %4249 = vmax.xlane.f32.xlu0 %v4248
        %v4250 = vpop.xlane.xlu0 %4249
        %v4251 = vmax.f32 %v3646, %v3648
        %4252 = vmax.xlane.f32.xlu0 %v4251
        %v4253 = vpop.xlane.xlu0 %4252
        %v4254 = vmax.f32 %v3650, %v3652
        %4255 = vmax.xlane.f32.xlu0 %v4254
        %v4256 = vpop.xlane.xlu0 %4255
        %v4257 = vmax.f32 %v3761, %v3763
        %4258 = vmax.xlane.f32.xlu0 %v4257
        %v4259 = vpop.xlane.xlu0 %4258
        %v4260 = vmax.f32 %v3765, %v3767
        %4261 = vmax.xlane.f32.xlu0 %v4260
        %v4262 = vpop.xlane.xlu0 %4261
        %v4263 = vmax.f32 %v3771, %v3773
        %4264 = vmax.xlane.f32.xlu0 %v4263
        %v4265 = vpop.xlane.xlu0 %4264
        %v4266 = vmax.f32 %v3775, %v3777
        %4267 = vmax.xlane.f32.xlu0 %v4266
        %v4268 = vpop.xlane.xlu0 %4267
        %v4269 = vmax.f32 %v3781, %v3783
        %4270 = vmax.xlane.f32.xlu0 %v4269
        %v4271 = vpop.xlane.xlu0 %4270
        %v4272 = vmax.f32 %v3785, %v3787
        %4273 = vmax.xlane.f32.xlu0 %v4272
        %v4274 = vpop.xlane.xlu0 %4273
        %v4275 = vmax.f32 %v3791, %v3793
        %4276 = vmax.xlane.f32.xlu0 %v4275
        %v4277 = vpop.xlane.xlu0 %4276
        %v4278 = vmax.f32 %v3795, %v3797
        %4279 = vmax.xlane.f32.xlu0 %v4278
        %v4280 = vpop.xlane.xlu0 %4279
        %v4281 = vmax.f32 %v3801, %v3803
        %4282 = vmax.xlane.f32.xlu0 %v4281
        %v4283 = vpop.xlane.xlu0 %4282
        %v4284 = vmax.f32 %v3805, %v3807
        %4285 = vmax.xlane.f32.xlu0 %v4284
        %v4286 = vpop.xlane.xlu0 %4285
        %v4287 = vmax.f32 %v3811, %v3813
        %4288 = vmax.xlane.f32.xlu0 %v4287
        %v4289 = vpop.xlane.xlu0 %4288
        %v4290 = vmax.f32 %v3815, %v3817
        %4291 = vmax.xlane.f32.xlu0 %v4290
        %v4292 = vpop.xlane.xlu0 %4291
        %v4293 = vmax.f32 %v3821, %v3823
        %4294 = vmax.xlane.f32.xlu0 %v4293
        %v4295 = vpop.xlane.xlu0 %4294
        %v4296 = vmax.f32 %v3825, %v3827
        %4297 = vmax.xlane.f32.xlu0 %v4296
        %v4298 = vpop.xlane.xlu0 %4297
        %v4299 = vmax.f32 %v3831, %v3833
        %4300 = vmax.xlane.f32.xlu0 %v4299
        %v4301 = vpop.xlane.xlu0 %4300
        %v4302 = vmax.f32 %v3835, %v3837
        %4303 = vmax.xlane.f32.xlu0 %v4302
        %v4304 = vpop.xlane.xlu0 %4303
        %v4305 = vmax.f32 %v3946, %v3948
        %4306 = vmax.xlane.f32.xlu0 %v4305
        %v4307 = vpop.xlane.xlu0 %4306
        %v4308 = vmax.f32 %v3950, %v3952
        %4309 = vmax.xlane.f32.xlu0 %v4308
        %v4310 = vpop.xlane.xlu0 %4309
        %v4311 = vmax.f32 %v3956, %v3958
        %4312 = vmax.xlane.f32.xlu0 %v4311
        %v4313 = vpop.xlane.xlu0 %4312
        %v4314 = vmax.f32 %v3960, %v3962
        %4315 = vmax.xlane.f32.xlu0 %v4314
        %v4316 = vpop.xlane.xlu0 %4315
        %v4317 = vmax.f32 %v3966, %v3968
        %4318 = vmax.xlane.f32.xlu0 %v4317
        %v4319 = vpop.xlane.xlu0 %4318
        %v4320 = vmax.f32 %v3970, %v3972
        %4321 = vmax.xlane.f32.xlu0 %v4320
        %v4322 = vpop.xlane.xlu0 %4321
        %v4323 = vmax.f32 %v3976, %v3978
        %4324 = vmax.xlane.f32.xlu0 %v4323
        %v4325 = vpop.xlane.xlu0 %4324
        %v4326 = vmax.f32 %v3980, %v3982
        %4327 = vmax.xlane.f32.xlu0 %v4326
        %v4328 = vpop.xlane.xlu0 %4327
        %v4329 = vmax.f32 %v3986, %v3988
        %4330 = vmax.xlane.f32.xlu0 %v4329
        %v4331 = vpop.xlane.xlu0 %4330
        %v4332 = vmax.f32 %v3990, %v3992
        %4333 = vmax.xlane.f32.xlu0 %v4332
        %v4334 = vpop.xlane.xlu0 %4333
        %v4335 = vmax.f32 %v3996, %v3998
        %4336 = vmax.xlane.f32.xlu0 %v4335
        %v4337 = vpop.xlane.xlu0 %4336
        %v4338 = vmax.f32 %v4000, %v4002
        %4339 = vmax.xlane.f32.xlu0 %v4338
        %v4340 = vpop.xlane.xlu0 %4339
        %v4341 = vmax.f32 %v4006, %v4008
        %4342 = vmax.xlane.f32.xlu0 %v4341
        %v4343 = vpop.xlane.xlu0 %4342
        %v4344 = vmax.f32 %v4010, %v4012
        %4345 = vmax.xlane.f32.xlu0 %v4344
        %v4346 = vpop.xlane.xlu0 %4345
        %v4347 = vmax.f32 %v4016, %v4018
        %4348 = vmax.xlane.f32.xlu0 %v4347
        %v4349 = vpop.xlane.xlu0 %4348
        %v4350 = vmax.f32 %v4020, %v4022
        %4351 = vmax.xlane.f32.xlu0 %v4350
        %v4352 = vpop.xlane.xlu0 %4351
        %v4353 = vmax.f32 %v4131, %v4133
        %4354 = vmax.xlane.f32.xlu0 %v4353
        %v4355 = vpop.xlane.xlu0 %4354
        %v4356 = vmax.f32 %v4135, %v4137
        %4357 = vmax.xlane.f32.xlu0 %v4356
        %v4358 = vpop.xlane.xlu0 %4357
        %v4359 = vmax.f32 %v4141, %v4143
        %4360 = vmax.xlane.f32.xlu0 %v4359
        %v4361 = vpop.xlane.xlu0 %4360
        %v4362 = vmax.f32 %v4145, %v4147
        %4363 = vmax.xlane.f32.xlu0 %v4362
        %v4364 = vpop.xlane.xlu0 %4363
        %v4365 = vmax.f32 %v4151, %v4153
        %4366 = vmax.xlane.f32.xlu0 %v4365
        %v4367 = vpop.xlane.xlu0 %4366
        %v4368 = vmax.f32 %v4155, %v4157
        %4369 = vmax.xlane.f32.xlu0 %v4368
        %v4370 = vpop.xlane.xlu0 %4369
        %v4371 = vmax.f32 %v4161, %v4163
        %4372 = vmax.xlane.f32.xlu0 %v4371
        %v4373 = vpop.xlane.xlu0 %4372
        %v4374 = vmax.f32 %v4165, %v4167
        %4375 = vmax.xlane.f32.xlu0 %v4374
        %v4376 = vpop.xlane.xlu0 %4375
        %v4377 = vmax.f32 %v4171, %v4173
        %4378 = vmax.xlane.f32.xlu0 %v4377
        %v4379 = vpop.xlane.xlu0 %4378
        %v4380 = vmax.f32 %v4175, %v4177
        %4381 = vmax.xlane.f32.xlu0 %v4380
        %v4382 = vpop.xlane.xlu0 %4381
        %v4383 = vmax.f32 %v4181, %v4183
        %4384 = vmax.xlane.f32.xlu0 %v4383
        %v4385 = vpop.xlane.xlu0 %4384
        %v4386 = vmax.f32 %v4185, %v4187
        %4387 = vmax.xlane.f32.xlu0 %v4386
        %v4388 = vpop.xlane.xlu0 %4387
        %v4389 = vmax.f32 %v4191, %v4193
        %4390 = vmax.xlane.f32.xlu0 %v4389
        %v4391 = vpop.xlane.xlu0 %4390
        %v4392 = vmax.f32 %v4195, %v4197
        %4393 = vmax.xlane.f32.xlu0 %v4392
        %v4394 = vpop.xlane.xlu0 %4393
        %v4395 = vmax.f32 %v4201, %v4203
        %4396 = vmax.xlane.f32.xlu0 %v4395
        %v4397 = vpop.xlane.xlu0 %4396
        %v4398 = vmax.f32 %v4205, %v4207
        %4399 = vmax.xlane.f32.xlu0 %v4398
        %v4400 = vpop.xlane.xlu0 %4399
        %v4401 = vsub.f32 %v3576, %v4211
        %v4402 = vsub.f32 %v3578, %v4211
        %v4403 = vsub.f32 %v3580, %v4214
        %v4404 = vsub.f32 %v3582, %v4214
        %v4405 = vsub.f32 %v3586, %v4217
        %v4406 = vsub.f32 %v3588, %v4217
        %v4407 = vsub.f32 %v3590, %v4220
        %v4408 = vsub.f32 %v3592, %v4220
        %v4409 = vsub.f32 %v3596, %v4223
        %v4410 = vsub.f32 %v3598, %v4223
        %v4411 = vsub.f32 %v3600, %v4226
        %v4412 = vsub.f32 %v3602, %v4226
        %v4413 = vsub.f32 %v3606, %v4229
        %v4414 = vsub.f32 %v3608, %v4229
        %v4415 = vsub.f32 %v3610, %v4232
        %v4416 = vsub.f32 %v3612, %v4232
        %v4417 = vsub.f32 %v3616, %v4235
        %v4418 = vsub.f32 %v3618, %v4235
        %v4419 = vsub.f32 %v3620, %v4238
        %v4420 = vsub.f32 %v3622, %v4238
        %v4421 = vsub.f32 %v3626, %v4241
        %v4422 = vsub.f32 %v3628, %v4241
        %v4423 = vsub.f32 %v3630, %v4244
        %v4424 = vsub.f32 %v3632, %v4244
        %v4425 = vsub.f32 %v3636, %v4247
        %v4426 = vsub.f32 %v3638, %v4247
        %v4427 = vsub.f32 %v3640, %v4250
        %v4428 = vsub.f32 %v3642, %v4250
        %v4429 = vsub.f32 %v3646, %v4253
        %v4430 = vsub.f32 %v3648, %v4253
        %v4431 = vsub.f32 %v3650, %v4256
        %v4432 = vsub.f32 %v3652, %v4256
        %v4433 = vsub.f32 %v3761, %v4259
        %v4434 = vsub.f32 %v3763, %v4259
        %v4435 = vsub.f32 %v3765, %v4262
        %v4436 = vsub.f32 %v3767, %v4262
        %v4437 = vsub.f32 %v3771, %v4265
        %v4438 = vsub.f32 %v3773, %v4265
        %v4439 = vsub.f32 %v3775, %v4268
        %v4440 = vsub.f32 %v3777, %v4268
        %v4441 = vsub.f32 %v3781, %v4271
        %v4442 = vsub.f32 %v3783, %v4271
        %v4443 = vsub.f32 %v3785, %v4274
        %v4444 = vsub.f32 %v3787, %v4274
        %v4445 = vsub.f32 %v3791, %v4277
        %v4446 = vsub.f32 %v3793, %v4277
        %v4447 = vsub.f32 %v3795, %v4280
        %v4448 = vsub.f32 %v3797, %v4280
        %v4449 = vsub.f32 %v3801, %v4283
        %v4450 = vsub.f32 %v3803, %v4283
        %v4451 = vsub.f32 %v3805, %v4286
        %v4452 = vsub.f32 %v3807, %v4286
        %v4453 = vsub.f32 %v3811, %v4289
        %v4454 = vsub.f32 %v3813, %v4289
        %v4455 = vsub.f32 %v3815, %v4292
        %v4456 = vsub.f32 %v3817, %v4292
        %v4457 = vsub.f32 %v3821, %v4295
        %v4458 = vsub.f32 %v3823, %v4295
        %v4459 = vsub.f32 %v3825, %v4298
        %v4460 = vsub.f32 %v3827, %v4298
        %v4461 = vsub.f32 %v3831, %v4301
        %v4462 = vsub.f32 %v3833, %v4301
        %v4463 = vsub.f32 %v3835, %v4304
        %v4464 = vsub.f32 %v3837, %v4304
        %v4465 = vsub.f32 %v3946, %v4307
        %v4466 = vsub.f32 %v3948, %v4307
        %v4467 = vsub.f32 %v3950, %v4310
        %v4468 = vsub.f32 %v3952, %v4310
        %v4469 = vsub.f32 %v3956, %v4313
        %v4470 = vsub.f32 %v3958, %v4313
        %v4471 = vsub.f32 %v3960, %v4316
        %v4472 = vsub.f32 %v3962, %v4316
        %v4473 = vsub.f32 %v3966, %v4319
        %v4474 = vsub.f32 %v3968, %v4319
        %v4475 = vsub.f32 %v3970, %v4322
        %v4476 = vsub.f32 %v3972, %v4322
        %v4477 = vsub.f32 %v3976, %v4325
        %v4478 = vsub.f32 %v3978, %v4325
        %v4479 = vsub.f32 %v3980, %v4328
        %v4480 = vsub.f32 %v3982, %v4328
        %v4481 = vsub.f32 %v3986, %v4331
        %v4482 = vsub.f32 %v3988, %v4331
        %v4483 = vsub.f32 %v3990, %v4334
        %v4484 = vsub.f32 %v3992, %v4334
        %v4485 = vsub.f32 %v3996, %v4337
        %v4486 = vsub.f32 %v3998, %v4337
        %v4487 = vsub.f32 %v4000, %v4340
        %v4488 = vsub.f32 %v4002, %v4340
        %v4489 = vsub.f32 %v4006, %v4343
        %v4490 = vsub.f32 %v4008, %v4343
        %v4491 = vsub.f32 %v4010, %v4346
        %v4492 = vsub.f32 %v4012, %v4346
        %v4493 = vsub.f32 %v4016, %v4349
        %v4494 = vsub.f32 %v4018, %v4349
        %v4495 = vsub.f32 %v4020, %v4352
        %v4496 = vsub.f32 %v4022, %v4352
        %v4497 = vsub.f32 %v4131, %v4355
        %v4498 = vsub.f32 %v4133, %v4355
        %v4499 = vsub.f32 %v4135, %v4358
        %v4500 = vsub.f32 %v4137, %v4358
        %v4501 = vsub.f32 %v4141, %v4361
        %v4502 = vsub.f32 %v4143, %v4361
        %v4503 = vsub.f32 %v4145, %v4364
        %v4504 = vsub.f32 %v4147, %v4364
        %v4505 = vsub.f32 %v4151, %v4367
        %v4506 = vsub.f32 %v4153, %v4367
        %v4507 = vsub.f32 %v4155, %v4370
        %v4508 = vsub.f32 %v4157, %v4370
        %v4509 = vsub.f32 %v4161, %v4373
        %v4510 = vsub.f32 %v4163, %v4373
        %v4511 = vsub.f32 %v4165, %v4376
        %v4512 = vsub.f32 %v4167, %v4376
        %v4513 = vsub.f32 %v4171, %v4379
        %v4514 = vsub.f32 %v4173, %v4379
        %v4515 = vsub.f32 %v4175, %v4382
        %v4516 = vsub.f32 %v4177, %v4382
        %v4517 = vsub.f32 %v4181, %v4385
        %v4518 = vsub.f32 %v4183, %v4385
        %v4519 = vsub.f32 %v4185, %v4388
        %v4520 = vsub.f32 %v4187, %v4388
        %v4521 = vsub.f32 %v4191, %v4391
        %v4522 = vsub.f32 %v4193, %v4391
        %v4523 = vsub.f32 %v4195, %v4394
        %v4524 = vsub.f32 %v4197, %v4394
        %v4525 = vsub.f32 %v4201, %v4397
        %v4526 = vsub.f32 %v4203, %v4397
        %v4527 = vsub.f32 %v4205, %v4400
        %v4528 = vsub.f32 %v4207, %v4400
        %v4529 = vmul.f32 %v4401, 1.442695
        %v4530 = vpow.pop %v4529
        %v4531 = vmul.f32 %v4402, 1.442695
        %v4532 = vpow.pop %v4531
        %v4533 = vmul.f32 %v4403, 1.442695
        %v4534 = vpow.pop %v4533
        %v4535 = vmul.f32 %v4404, 1.442695
        %v4536 = vpow.pop %v4535
        %v4537 = vmul.f32 %v4405, 1.442695
        %v4538 = vpow.pop %v4537
        %v4539 = vmul.f32 %v4406, 1.442695
        %v4540 = vpow.pop %v4539
        %v4541 = vmul.f32 %v4407, 1.442695
        %v4542 = vpow.pop %v4541
        %v4543 = vmul.f32 %v4408, 1.442695
        %v4544 = vpow.pop %v4543
        %v4545 = vmul.f32 %v4409, 1.442695
        %v4546 = vpow.pop %v4545
        %v4547 = vmul.f32 %v4410, 1.442695
        %v4548 = vpow.pop %v4547
        %v4549 = vmul.f32 %v4411, 1.442695
        %v4550 = vpow.pop %v4549
        %v4551 = vmul.f32 %v4412, 1.442695
        %v4552 = vpow.pop %v4551
        %v4553 = vmul.f32 %v4413, 1.442695
        %v4554 = vpow.pop %v4553
        %v4555 = vmul.f32 %v4414, 1.442695
        %v4556 = vpow.pop %v4555
        %v4557 = vmul.f32 %v4415, 1.442695
        %v4558 = vpow.pop %v4557
        %v4559 = vmul.f32 %v4416, 1.442695
        %v4560 = vpow.pop %v4559
        %v4561 = vmul.f32 %v4417, 1.442695
        %v4562 = vpow.pop %v4561
        %v4563 = vmul.f32 %v4418, 1.442695
        %v4564 = vpow.pop %v4563
        %v4565 = vmul.f32 %v4419, 1.442695
        %v4566 = vpow.pop %v4565
        %v4567 = vmul.f32 %v4420, 1.442695
        %v4568 = vpow.pop %v4567
        %v4569 = vmul.f32 %v4421, 1.442695
        %v4570 = vpow.pop %v4569
        %v4571 = vmul.f32 %v4422, 1.442695
        %v4572 = vpow.pop %v4571
        %v4573 = vmul.f32 %v4423, 1.442695
        %v4574 = vpow.pop %v4573
        %v4575 = vmul.f32 %v4424, 1.442695
        %v4576 = vpow.pop %v4575
        %v4577 = vmul.f32 %v4425, 1.442695
        %v4578 = vpow.pop %v4577
        %v4579 = vmul.f32 %v4426, 1.442695
        %v4580 = vpow.pop %v4579
        %v4581 = vmul.f32 %v4427, 1.442695
        %v4582 = vpow.pop %v4581
        %v4583 = vmul.f32 %v4428, 1.442695
        %v4584 = vpow.pop %v4583
        %v4585 = vmul.f32 %v4429, 1.442695
        %v4586 = vpow.pop %v4585
        %v4587 = vmul.f32 %v4430, 1.442695
        %v4588 = vpow.pop %v4587
        %v4589 = vmul.f32 %v4431, 1.442695
        %v4590 = vpow.pop %v4589
        %v4591 = vmul.f32 %v4432, 1.442695
        %v4592 = vpow.pop %v4591
        %v4593 = vmul.f32 %v4433, 1.442695
        %v4594 = vpow.pop %v4593
        %v4595 = vmul.f32 %v4434, 1.442695
        %v4596 = vpow.pop %v4595
        %v4597 = vmul.f32 %v4435, 1.442695
        %v4598 = vpow.pop %v4597
        %v4599 = vmul.f32 %v4436, 1.442695
        %v4600 = vpow.pop %v4599
        %v4601 = vmul.f32 %v4437, 1.442695
        %v4602 = vpow.pop %v4601
        %v4603 = vmul.f32 %v4438, 1.442695
        %v4604 = vpow.pop %v4603
        %v4605 = vmul.f32 %v4439, 1.442695
        %v4606 = vpow.pop %v4605
        %v4607 = vmul.f32 %v4440, 1.442695
        %v4608 = vpow.pop %v4607
        %v4609 = vmul.f32 %v4441, 1.442695
        %v4610 = vpow.pop %v4609
        %v4611 = vmul.f32 %v4442, 1.442695
        %v4612 = vpow.pop %v4611
        %v4613 = vmul.f32 %v4443, 1.442695
        %v4614 = vpow.pop %v4613
        %v4615 = vmul.f32 %v4444, 1.442695
        %v4616 = vpow.pop %v4615
        %v4617 = vmul.f32 %v4445, 1.442695
        %v4618 = vpow.pop %v4617
        %v4619 = vmul.f32 %v4446, 1.442695
        %v4620 = vpow.pop %v4619
        %v4621 = vmul.f32 %v4447, 1.442695
        %v4622 = vpow.pop %v4621
        %v4623 = vmul.f32 %v4448, 1.442695
        %v4624 = vpow.pop %v4623
        %v4625 = vmul.f32 %v4449, 1.442695
        %v4626 = vpow.pop %v4625
        %v4627 = vmul.f32 %v4450, 1.442695
        %v4628 = vpow.pop %v4627
        %v4629 = vmul.f32 %v4451, 1.442695
        %v4630 = vpow.pop %v4629
        %v4631 = vmul.f32 %v4452, 1.442695
        %v4632 = vpow.pop %v4631
        %v4633 = vmul.f32 %v4453, 1.442695
        %v4634 = vpow.pop %v4633
        %v4635 = vmul.f32 %v4454, 1.442695
        %v4636 = vpow.pop %v4635
        %v4637 = vmul.f32 %v4455, 1.442695
        %v4638 = vpow.pop %v4637
        %v4639 = vmul.f32 %v4456, 1.442695
        %v4640 = vpow.pop %v4639
        %v4641 = vmul.f32 %v4457, 1.442695
        %v4642 = vpow.pop %v4641
        %v4643 = vmul.f32 %v4458, 1.442695
        %v4644 = vpow.pop %v4643
        %v4645 = vmul.f32 %v4459, 1.442695
        %v4646 = vpow.pop %v4645
        %v4647 = vmul.f32 %v4460, 1.442695
        %v4648 = vpow.pop %v4647
        %v4649 = vmul.f32 %v4461, 1.442695
        %v4650 = vpow.pop %v4649
        %v4651 = vmul.f32 %v4462, 1.442695
        %v4652 = vpow.pop %v4651
        %v4653 = vmul.f32 %v4463, 1.442695
        %v4654 = vpow.pop %v4653
        %v4655 = vmul.f32 %v4464, 1.442695
        %v4656 = vpow.pop %v4655
        %v4657 = vmul.f32 %v4465, 1.442695
        %v4658 = vpow.pop %v4657
        %v4659 = vmul.f32 %v4466, 1.442695
        %v4660 = vpow.pop %v4659
        %v4661 = vmul.f32 %v4467, 1.442695
        %v4662 = vpow.pop %v4661
        %v4663 = vmul.f32 %v4468, 1.442695
        %v4664 = vpow.pop %v4663
        %v4665 = vmul.f32 %v4469, 1.442695
        %v4666 = vpow.pop %v4665
        %v4667 = vmul.f32 %v4470, 1.442695
        %v4668 = vpow.pop %v4667
        %v4669 = vmul.f32 %v4471, 1.442695
        %v4670 = vpow.pop %v4669
        %v4671 = vmul.f32 %v4472, 1.442695
        %v4672 = vpow.pop %v4671
        %v4673 = vmul.f32 %v4473, 1.442695
        %v4674 = vpow.pop %v4673
        %v4675 = vmul.f32 %v4474, 1.442695
        %v4676 = vpow.pop %v4675
        %v4677 = vmul.f32 %v4475, 1.442695
        %v4678 = vpow.pop %v4677
        %v4679 = vmul.f32 %v4476, 1.442695
        %v4680 = vpow.pop %v4679
        %v4681 = vmul.f32 %v4477, 1.442695
        %v4682 = vpow.pop %v4681
        %v4683 = vmul.f32 %v4478, 1.442695
        %v4684 = vpow.pop %v4683
        %v4685 = vmul.f32 %v4479, 1.442695
        %v4686 = vpow.pop %v4685
        %v4687 = vmul.f32 %v4480, 1.442695
        %v4688 = vpow.pop %v4687
        %v4689 = vmul.f32 %v4481, 1.442695
        %v4690 = vpow.pop %v4689
        %v4691 = vmul.f32 %v4482, 1.442695
        %v4692 = vpow.pop %v4691
        %v4693 = vmul.f32 %v4483, 1.442695
        %v4694 = vpow.pop %v4693
        %v4695 = vmul.f32 %v4484, 1.442695
        %v4696 = vpow.pop %v4695
        %v4697 = vmul.f32 %v4485, 1.442695
        %v4698 = vpow.pop %v4697
        %v4699 = vmul.f32 %v4486, 1.442695
        %v4700 = vpow.pop %v4699
        %v4701 = vmul.f32 %v4487, 1.442695
        %v4702 = vpow.pop %v4701
        %v4703 = vmul.f32 %v4488, 1.442695
        %v4704 = vpow.pop %v4703
        %v4705 = vmul.f32 %v4489, 1.442695
        %v4706 = vpow.pop %v4705
        %v4707 = vmul.f32 %v4490, 1.442695
        %v4708 = vpow.pop %v4707
        %v4709 = vmul.f32 %v4491, 1.442695
        %v4710 = vpow.pop %v4709
        %v4711 = vmul.f32 %v4492, 1.442695
        %v4712 = vpow.pop %v4711
        %v4713 = vmul.f32 %v4493, 1.442695
        %v4714 = vpow.pop %v4713
        %v4715 = vmul.f32 %v4494, 1.442695
        %v4716 = vpow.pop %v4715
        %v4717 = vmul.f32 %v4495, 1.442695
        %v4718 = vpow.pop %v4717
        %v4719 = vmul.f32 %v4496, 1.442695
        %v4720 = vpow.pop %v4719
        %v4721 = vmul.f32 %v4497, 1.442695
        %v4722 = vpow.pop %v4721
        %v4723 = vmul.f32 %v4498, 1.442695
        %v4724 = vpow.pop %v4723
        %v4725 = vmul.f32 %v4499, 1.442695
        %v4726 = vpow.pop %v4725
        %v4727 = vmul.f32 %v4500, 1.442695
        %v4728 = vpow.pop %v4727
        %v4729 = vmul.f32 %v4501, 1.442695
        %v4730 = vpow.pop %v4729
        %v4731 = vmul.f32 %v4502, 1.442695
        %v4732 = vpow.pop %v4731
        %v4733 = vmul.f32 %v4503, 1.442695
        %v4734 = vpow.pop %v4733
        %v4735 = vmul.f32 %v4504, 1.442695
        %v4736 = vpow.pop %v4735
        %v4737 = vmul.f32 %v4505, 1.442695
        %v4738 = vpow.pop %v4737
        %v4739 = vmul.f32 %v4506, 1.442695
        %v4740 = vpow.pop %v4739
        %v4741 = vmul.f32 %v4507, 1.442695
        %v4742 = vpow.pop %v4741
        %v4743 = vmul.f32 %v4508, 1.442695
        %v4744 = vpow.pop %v4743
        %v4745 = vmul.f32 %v4509, 1.442695
        %v4746 = vpow.pop %v4745
        %v4747 = vmul.f32 %v4510, 1.442695
        %v4748 = vpow.pop %v4747
        %v4749 = vmul.f32 %v4511, 1.442695
        %v4750 = vpow.pop %v4749
        %v4751 = vmul.f32 %v4512, 1.442695
        %v4752 = vpow.pop %v4751
        %v4753 = vmul.f32 %v4513, 1.442695
        %v4754 = vpow.pop %v4753
        %v4755 = vmul.f32 %v4514, 1.442695
        %v4756 = vpow.pop %v4755
        %v4757 = vmul.f32 %v4515, 1.442695
        %v4758 = vpow.pop %v4757
        %v4759 = vmul.f32 %v4516, 1.442695
        %v4760 = vpow.pop %v4759
        %v4761 = vmul.f32 %v4517, 1.442695
        %v4762 = vpow.pop %v4761
        %v4763 = vmul.f32 %v4518, 1.442695
        %v4764 = vpow.pop %v4763
        %v4765 = vmul.f32 %v4519, 1.442695
        %v4766 = vpow.pop %v4765
        %v4767 = vmul.f32 %v4520, 1.442695
        %v4768 = vpow.pop %v4767
        %v4769 = vmul.f32 %v4521, 1.442695
        %v4770 = vpow.pop %v4769
        %v4771 = vmul.f32 %v4522, 1.442695
        %v4772 = vpow.pop %v4771
        %v4773 = vmul.f32 %v4523, 1.442695
        %v4774 = vpow.pop %v4773
        %v4775 = vmul.f32 %v4524, 1.442695
        %v4776 = vpow.pop %v4775
        %v4777 = vmul.f32 %v4525, 1.442695
        %v4778 = vpow.pop %v4777
        %v4779 = vmul.f32 %v4526, 1.442695
        %v4780 = vpow.pop %v4779
        %v4781 = vmul.f32 %v4527, 1.442695
        %v4782 = vpow.pop %v4781
        %v4783 = vmul.f32 %v4528, 1.442695
        %v4784 = vpow.pop %v4783
        %v4785 = vadd.f32 %v4530, %v4532
        %4786 = vadd.xlane.f32.xlu0 %v4785
        %v4787 = vpop.xlane.xlu0 %4786
        %v4788 = vadd.f32 %v4534, %v4536
        %4789 = vadd.xlane.f32.xlu0 %v4788
        %v4790 = vpop.xlane.xlu0 %4789
        %v4791 = vadd.f32 %v4538, %v4540
        %4792 = vadd.xlane.f32.xlu0 %v4791
        %v4793 = vpop.xlane.xlu0 %4792
        %v4794 = vadd.f32 %v4542, %v4544
        %4795 = vadd.xlane.f32.xlu0 %v4794
        %v4796 = vpop.xlane.xlu0 %4795
        %v4797 = vadd.f32 %v4546, %v4548
        %4798 = vadd.xlane.f32.xlu0 %v4797
        %v4799 = vpop.xlane.xlu0 %4798
        %v4800 = vadd.f32 %v4550, %v4552
        %4801 = vadd.xlane.f32.xlu0 %v4800
        %v4802 = vpop.xlane.xlu0 %4801
        %v4803 = vadd.f32 %v4554, %v4556
        %4804 = vadd.xlane.f32.xlu0 %v4803
        %v4805 = vpop.xlane.xlu0 %4804
        %v4806 = vadd.f32 %v4558, %v4560
        %4807 = vadd.xlane.f32.xlu0 %v4806
        %v4808 = vpop.xlane.xlu0 %4807
        %v4809 = vadd.f32 %v4562, %v4564
        %4810 = vadd.xlane.f32.xlu0 %v4809
        %v4811 = vpop.xlane.xlu0 %4810
        %v4812 = vadd.f32 %v4566, %v4568
        %4813 = vadd.xlane.f32.xlu0 %v4812
        %v4814 = vpop.xlane.xlu0 %4813
        %v4815 = vadd.f32 %v4570, %v4572
        %4816 = vadd.xlane.f32.xlu0 %v4815
        %v4817 = vpop.xlane.xlu0 %4816
        %v4818 = vadd.f32 %v4574, %v4576
        %4819 = vadd.xlane.f32.xlu0 %v4818
        %v4820 = vpop.xlane.xlu0 %4819
        %v4821 = vadd.f32 %v4578, %v4580
        %4822 = vadd.xlane.f32.xlu0 %v4821
        %v4823 = vpop.xlane.xlu0 %4822
        %v4824 = vadd.f32 %v4582, %v4584
        %4825 = vadd.xlane.f32.xlu0 %v4824
        %v4826 = vpop.xlane.xlu0 %4825
        %v4827 = vadd.f32 %v4586, %v4588
        %4828 = vadd.xlane.f32.xlu0 %v4827
        %v4829 = vpop.xlane.xlu0 %4828
        %v4830 = vadd.f32 %v4590, %v4592
        %4831 = vadd.xlane.f32.xlu0 %v4830
        %v4832 = vpop.xlane.xlu0 %4831
        %v4833 = vadd.f32 %v4594, %v4596
        %4834 = vadd.xlane.f32.xlu0 %v4833
        %v4835 = vpop.xlane.xlu0 %4834
        %v4836 = vadd.f32 %v4598, %v4600
        %4837 = vadd.xlane.f32.xlu0 %v4836
        %v4838 = vpop.xlane.xlu0 %4837
        %v4839 = vadd.f32 %v4602, %v4604
        %4840 = vadd.xlane.f32.xlu0 %v4839
        %v4841 = vpop.xlane.xlu0 %4840
        %v4842 = vadd.f32 %v4606, %v4608
        %4843 = vadd.xlane.f32.xlu0 %v4842
        %v4844 = vpop.xlane.xlu0 %4843
        %v4845 = vadd.f32 %v4610, %v4612
        %4846 = vadd.xlane.f32.xlu0 %v4845
        %v4847 = vpop.xlane.xlu0 %4846
        %v4848 = vadd.f32 %v4614, %v4616
        %4849 = vadd.xlane.f32.xlu0 %v4848
        %v4850 = vpop.xlane.xlu0 %4849
        %v4851 = vadd.f32 %v4618, %v4620
        %4852 = vadd.xlane.f32.xlu0 %v4851
        %v4853 = vpop.xlane.xlu0 %4852
        %v4854 = vadd.f32 %v4622, %v4624
        %4855 = vadd.xlane.f32.xlu0 %v4854
        %v4856 = vpop.xlane.xlu0 %4855
        %v4857 = vadd.f32 %v4626, %v4628
        %4858 = vadd.xlane.f32.xlu0 %v4857
        %v4859 = vpop.xlane.xlu0 %4858
        %v4860 = vadd.f32 %v4630, %v4632
        %4861 = vadd.xlane.f32.xlu0 %v4860
        %v4862 = vpop.xlane.xlu0 %4861
        %v4863 = vadd.f32 %v4634, %v4636
        %4864 = vadd.xlane.f32.xlu0 %v4863
        %v4865 = vpop.xlane.xlu0 %4864
        %v4866 = vadd.f32 %v4638, %v4640
        %4867 = vadd.xlane.f32.xlu0 %v4866
        %v4868 = vpop.xlane.xlu0 %4867
        %v4869 = vadd.f32 %v4642, %v4644
        %4870 = vadd.xlane.f32.xlu0 %v4869
        %v4871 = vpop.xlane.xlu0 %4870
        %v4872 = vadd.f32 %v4646, %v4648
        %4873 = vadd.xlane.f32.xlu0 %v4872
        %v4874 = vpop.xlane.xlu0 %4873
        %v4875 = vadd.f32 %v4650, %v4652
        %4876 = vadd.xlane.f32.xlu0 %v4875
        %v4877 = vpop.xlane.xlu0 %4876
        %v4878 = vadd.f32 %v4654, %v4656
        %4879 = vadd.xlane.f32.xlu0 %v4878
        %v4880 = vpop.xlane.xlu0 %4879
        %v4881 = vadd.f32 %v4658, %v4660
        %4882 = vadd.xlane.f32.xlu0 %v4881
        %v4883 = vpop.xlane.xlu0 %4882
        %v4884 = vadd.f32 %v4662, %v4664
        %4885 = vadd.xlane.f32.xlu0 %v4884
        %v4886 = vpop.xlane.xlu0 %4885
        %v4887 = vadd.f32 %v4666, %v4668
        %4888 = vadd.xlane.f32.xlu0 %v4887
        %v4889 = vpop.xlane.xlu0 %4888
        %v4890 = vadd.f32 %v4670, %v4672
        %4891 = vadd.xlane.f32.xlu0 %v4890
        %v4892 = vpop.xlane.xlu0 %4891
        %v4893 = vadd.f32 %v4674, %v4676
        %4894 = vadd.xlane.f32.xlu0 %v4893
        %v4895 = vpop.xlane.xlu0 %4894
        %v4896 = vadd.f32 %v4678, %v4680
        %4897 = vadd.xlane.f32.xlu0 %v4896
        %v4898 = vpop.xlane.xlu0 %4897
        %v4899 = vadd.f32 %v4682, %v4684
        %4900 = vadd.xlane.f32.xlu0 %v4899
        %v4901 = vpop.xlane.xlu0 %4900
        %v4902 = vadd.f32 %v4686, %v4688
        %4903 = vadd.xlane.f32.xlu0 %v4902
        %v4904 = vpop.xlane.xlu0 %4903
        %v4905 = vadd.f32 %v4690, %v4692
        %4906 = vadd.xlane.f32.xlu0 %v4905
        %v4907 = vpop.xlane.xlu0 %4906
        %v4908 = vadd.f32 %v4694, %v4696
        %4909 = vadd.xlane.f32.xlu0 %v4908
        %v4910 = vpop.xlane.xlu0 %4909
        %v4911 = vadd.f32 %v4698, %v4700
        %4912 = vadd.xlane.f32.xlu0 %v4911
        %v4913 = vpop.xlane.xlu0 %4912
        %v4914 = vadd.f32 %v4702, %v4704
        %4915 = vadd.xlane.f32.xlu0 %v4914
        %v4916 = vpop.xlane.xlu0 %4915
        %v4917 = vadd.f32 %v4706, %v4708
        %4918 = vadd.xlane.f32.xlu0 %v4917
        %v4919 = vpop.xlane.xlu0 %4918
        %v4920 = vadd.f32 %v4710, %v4712
        %4921 = vadd.xlane.f32.xlu0 %v4920
        %v4922 = vpop.xlane.xlu0 %4921
        %v4923 = vadd.f32 %v4714, %v4716
        %4924 = vadd.xlane.f32.xlu0 %v4923
        %v4925 = vpop.xlane.xlu0 %4924
        %v4926 = vadd.f32 %v4718, %v4720
        %4927 = vadd.xlane.f32.xlu0 %v4926
        %v4928 = vpop.xlane.xlu0 %4927
        %v4929 = vadd.f32 %v4722, %v4724
        %4930 = vadd.xlane.f32.xlu0 %v4929
        %v4931 = vpop.xlane.xlu0 %4930
        %v4932 = vadd.f32 %v4726, %v4728
        %4933 = vadd.xlane.f32.xlu0 %v4932
        %v4934 = vpop.xlane.xlu0 %4933
        %v4935 = vadd.f32 %v4730, %v4732
        %4936 = vadd.xlane.f32.xlu0 %v4935
        %v4937 = vpop.xlane.xlu0 %4936
        %v4938 = vadd.f32 %v4734, %v4736
        %4939 = vadd.xlane.f32.xlu0 %v4938
        %v4940 = vpop.xlane.xlu0 %4939
        %v4941 = vadd.f32 %v4738, %v4740
        %4942 = vadd.xlane.f32.xlu0 %v4941
        %v4943 = vpop.xlane.xlu0 %4942
        %v4944 = vadd.f32 %v4742, %v4744
        %4945 = vadd.xlane.f32.xlu0 %v4944
        %v4946 = vpop.xlane.xlu0 %4945
        %v4947 = vadd.f32 %v4746, %v4748
        %4948 = vadd.xlane.f32.xlu0 %v4947
        %v4949 = vpop.xlane.xlu0 %4948
        %v4950 = vadd.f32 %v4750, %v4752
        %4951 = vadd.xlane.f32.xlu0 %v4950
        %v4952 = vpop.xlane.xlu0 %4951
        %v4953 = vadd.f32 %v4754, %v4756
        %4954 = vadd.xlane.f32.xlu0 %v4953
        %v4955 = vpop.xlane.xlu0 %4954
        %v4956 = vadd.f32 %v4758, %v4760
        %4957 = vadd.xlane.f32.xlu0 %v4956
        %v4958 = vpop.xlane.xlu0 %4957
        %v4959 = vadd.f32 %v4762, %v4764
        %4960 = vadd.xlane.f32.xlu0 %v4959
        %v4961 = vpop.xlane.xlu0 %4960
        %v4962 = vadd.f32 %v4766, %v4768
        %4963 = vadd.xlane.f32.xlu0 %v4962
        %v4964 = vpop.xlane.xlu0 %4963
        %v4965 = vadd.f32 %v4770, %v4772
        %4966 = vadd.xlane.f32.xlu0 %v4965
        %v4967 = vpop.xlane.xlu0 %4966
        %v4968 = vadd.f32 %v4774, %v4776
        %4969 = vadd.xlane.f32.xlu0 %v4968
        %v4970 = vpop.xlane.xlu0 %4969
        %v4971 = vadd.f32 %v4778, %v4780
        %4972 = vadd.xlane.f32.xlu0 %v4971
        %v4973 = vpop.xlane.xlu0 %4972
        %v4974 = vadd.f32 %v4782, %v4784
        %4975 = vadd.xlane.f32.xlu0 %v4974
        %v4976 = vpop.xlane.xlu0 %4975
        %v4977 = vrcp.pop %v4787
        %v4978 = vrcp.pop %v4790
        %v4979 = vrcp.pop %v4793
        %v4980 = vrcp.pop %v4796
        %v4981 = vrcp.pop %v4799
        %v4982 = vrcp.pop %v4802
        %v4983 = vrcp.pop %v4805
        %v4984 = vrcp.pop %v4808
        %v4985 = vrcp.pop %v4811
        %v4986 = vrcp.pop %v4814
        %v4987 = vrcp.pop %v4817
        %v4988 = vrcp.pop %v4820
        %v4989 = vrcp.pop %v4823
        %v4990 = vrcp.pop %v4826
        %v4991 = vrcp.pop %v4829
        %v4992 = vrcp.pop %v4832
        %v4993 = vrcp.pop %v4835
        %v4994 = vrcp.pop %v4838
        %v4995 = vrcp.pop %v4841
        %v4996 = vrcp.pop %v4844
        %v4997 = vrcp.pop %v4847
        %v4998 = vrcp.pop %v4850
        %v4999 = vrcp.pop %v4853
        %v5000 = vrcp.pop %v4856
        %v5001 = vrcp.pop %v4859
        %v5002 = vrcp.pop %v4862
        %v5003 = vrcp.pop %v4865
        %v5004 = vrcp.pop %v4868
        %v5005 = vrcp.pop %v4871
        %v5006 = vrcp.pop %v4874
        %v5007 = vrcp.pop %v4877
        %v5008 = vrcp.pop %v4880
        %v5009 = vrcp.pop %v4883
        %v5010 = vrcp.pop %v4886
        %v5011 = vrcp.pop %v4889
        %v5012 = vrcp.pop %v4892
        %v5013 = vrcp.pop %v4895
        %v5014 = vrcp.pop %v4898
        %v5015 = vrcp.pop %v4901
        %v5016 = vrcp.pop %v4904
        %v5017 = vrcp.pop %v4907
        %v5018 = vrcp.pop %v4910
        %v5019 = vrcp.pop %v4913
        %v5020 = vrcp.pop %v4916
        %v5021 = vrcp.pop %v4919
        %v5022 = vrcp.pop %v4922
        %v5023 = vrcp.pop %v4925
        %v5024 = vrcp.pop %v4928
        %v5025 = vrcp.pop %v4931
        %v5026 = vrcp.pop %v4934
        %v5027 = vrcp.pop %v4937
        %v5028 = vrcp.pop %v4940
        %v5029 = vrcp.pop %v4943
        %v5030 = vrcp.pop %v4946
        %v5031 = vrcp.pop %v4949
        %v5032 = vrcp.pop %v4952
        %v5033 = vrcp.pop %v4955
        %v5034 = vrcp.pop %v4958
        %v5035 = vrcp.pop %v4961
        %v5036 = vrcp.pop %v4964
        %v5037 = vrcp.pop %v4967
        %v5038 = vrcp.pop %v4970
        %v5039 = vrcp.pop %v4973
        %v5040 = vrcp.pop %v4976
        %v5041 = vmul.f32 %v4530, %v4977
        %v5042 = vmul.f32 %v4532, %v4977
        %v5043 = vmul.f32 %v4534, %v4978
        %v5044 = vmul.f32 %v4536, %v4978
        %v5045 = vmul.f32 %v4538, %v4979
        %v5046 = vmul.f32 %v4540, %v4979
        %v5047 = vmul.f32 %v4542, %v4980
        %v5048 = vmul.f32 %v4544, %v4980
        %v5049 = vmul.f32 %v4546, %v4981
        %v5050 = vmul.f32 %v4548, %v4981
        %v5051 = vmul.f32 %v4550, %v4982
        %v5052 = vmul.f32 %v4552, %v4982
        %v5053 = vmul.f32 %v4554, %v4983
        %v5054 = vmul.f32 %v4556, %v4983
        %v5055 = vmul.f32 %v4558, %v4984
        %v5056 = vmul.f32 %v4560, %v4984
        %v5057 = vmul.f32 %v4562, %v4985
        %v5058 = vmul.f32 %v4564, %v4985
        %v5059 = vmul.f32 %v4566, %v4986
        %v5060 = vmul.f32 %v4568, %v4986
        %v5061 = vmul.f32 %v4570, %v4987
        %v5062 = vmul.f32 %v4572, %v4987
        %v5063 = vmul.f32 %v4574, %v4988
        %v5064 = vmul.f32 %v4576, %v4988
        %v5065 = vmul.f32 %v4578, %v4989
        %v5066 = vmul.f32 %v4580, %v4989
        %v5067 = vmul.f32 %v4582, %v4990
        %v5068 = vmul.f32 %v4584, %v4990
        %v5069 = vmul.f32 %v4586, %v4991
        %v5070 = vmul.f32 %v4588, %v4991
        %v5071 = vmul.f32 %v4590, %v4992
        %v5072 = vmul.f32 %v4592, %v4992
        %v5073 = vmul.f32 %v4594, %v4993
        %v5074 = vmul.f32 %v4596, %v4993
        %v5075 = vmul.f32 %v4598, %v4994
        %v5076 = vmul.f32 %v4600, %v4994
        %v5077 = vmul.f32 %v4602, %v4995
        %v5078 = vmul.f32 %v4604, %v4995
        %v5079 = vmul.f32 %v4606, %v4996
        %v5080 = vmul.f32 %v4608, %v4996
        %v5081 = vmul.f32 %v4610, %v4997
        %v5082 = vmul.f32 %v4612, %v4997
        %v5083 = vmul.f32 %v4614, %v4998
        %v5084 = vmul.f32 %v4616, %v4998
        %v5085 = vmul.f32 %v4618, %v4999
        %v5086 = vmul.f32 %v4620, %v4999
        %v5087 = vmul.f32 %v4622, %v5000
        %v5088 = vmul.f32 %v4624, %v5000
        %v5089 = vmul.f32 %v4626, %v5001
        %v5090 = vmul.f32 %v4628, %v5001
        %v5091 = vmul.f32 %v4630, %v5002
        %v5092 = vmul.f32 %v4632, %v5002
        %v5093 = vmul.f32 %v4634, %v5003
        %v5094 = vmul.f32 %v4636, %v5003
        %v5095 = vmul.f32 %v4638, %v5004
        %v5096 = vmul.f32 %v4640, %v5004
        %v5097 = vmul.f32 %v4642, %v5005
        %v5098 = vmul.f32 %v4644, %v5005
        %v5099 = vmul.f32 %v4646, %v5006
        %v5100 = vmul.f32 %v4648, %v5006
        %v5101 = vmul.f32 %v4650, %v5007
        %v5102 = vmul.f32 %v4652, %v5007
        %v5103 = vmul.f32 %v4654, %v5008
        %v5104 = vmul.f32 %v4656, %v5008
        %v5105 = vmul.f32 %v4658, %v5009
        %v5106 = vmul.f32 %v4660, %v5009
        %v5107 = vmul.f32 %v4662, %v5010
        %v5108 = vmul.f32 %v4664, %v5010
        %v5109 = vmul.f32 %v4666, %v5011
        %v5110 = vmul.f32 %v4668, %v5011
        %v5111 = vmul.f32 %v4670, %v5012
        %v5112 = vmul.f32 %v4672, %v5012
        %v5113 = vmul.f32 %v4674, %v5013
        %v5114 = vmul.f32 %v4676, %v5013
        %v5115 = vmul.f32 %v4678, %v5014
        %v5116 = vmul.f32 %v4680, %v5014
        %v5117 = vmul.f32 %v4682, %v5015
        %v5118 = vmul.f32 %v4684, %v5015
        %v5119 = vmul.f32 %v4686, %v5016
        %v5120 = vmul.f32 %v4688, %v5016
        %v5121 = vmul.f32 %v4690, %v5017
        %v5122 = vmul.f32 %v4692, %v5017
        %v5123 = vmul.f32 %v4694, %v5018
        %v5124 = vmul.f32 %v4696, %v5018
        %v5125 = vmul.f32 %v4698, %v5019
        %v5126 = vmul.f32 %v4700, %v5019
        %v5127 = vmul.f32 %v4702, %v5020
        %v5128 = vmul.f32 %v4704, %v5020
        %v5129 = vmul.f32 %v4706, %v5021
        %v5130 = vmul.f32 %v4708, %v5021
        %v5131 = vmul.f32 %v4710, %v5022
        %v5132 = vmul.f32 %v4712, %v5022
        %v5133 = vmul.f32 %v4714, %v5023
        %v5134 = vmul.f32 %v4716, %v5023
        %v5135 = vmul.f32 %v4718, %v5024
        %v5136 = vmul.f32 %v4720, %v5024
        %v5137 = vmul.f32 %v4722, %v5025
        %v5138 = vmul.f32 %v4724, %v5025
        %v5139 = vmul.f32 %v4726, %v5026
        %v5140 = vmul.f32 %v4728, %v5026
        %v5141 = vmul.f32 %v4730, %v5027
        %v5142 = vmul.f32 %v4732, %v5027
        %v5143 = vmul.f32 %v4734, %v5028
        %v5144 = vmul.f32 %v4736, %v5028
        %v5145 = vmul.f32 %v4738, %v5029
        %v5146 = vmul.f32 %v4740, %v5029
        %v5147 = vmul.f32 %v4742, %v5030
        %v5148 = vmul.f32 %v4744, %v5030
        %v5149 = vmul.f32 %v4746, %v5031
        %v5150 = vmul.f32 %v4748, %v5031
        %v5151 = vmul.f32 %v4750, %v5032
        %v5152 = vmul.f32 %v4752, %v5032
        %v5153 = vmul.f32 %v4754, %v5033
        %v5154 = vmul.f32 %v4756, %v5033
        %v5155 = vmul.f32 %v4758, %v5034
        %v5156 = vmul.f32 %v4760, %v5034
        %v5157 = vmul.f32 %v4762, %v5035
        %v5158 = vmul.f32 %v4764, %v5035
        %v5159 = vmul.f32 %v4766, %v5036
        %v5160 = vmul.f32 %v4768, %v5036
        %v5161 = vmul.f32 %v4770, %v5037
        %v5162 = vmul.f32 %v4772, %v5037
        %v5163 = vmul.f32 %v4774, %v5038
        %v5164 = vmul.f32 %v4776, %v5038
        %v5165 = vmul.f32 %v4778, %v5039
        %v5166 = vmul.f32 %v4780, %v5039
        %v5167 = vmul.f32 %v4782, %v5040
        %v5168 = vmul.f32 %v4784, %v5040
        %v5169 = vpack.c.bf16 %v5043, %v5041
        %v5170 = vpack.c.bf16 %v5044, %v5042
        %v5171 = vpack.c.bf16 %v5047, %v5045
        %v5172 = vpack.c.bf16 %v5048, %v5046
        %v5173 = vpack.c.bf16 %v5051, %v5049
        %v5174 = vpack.c.bf16 %v5052, %v5050
        %v5175 = vpack.c.bf16 %v5055, %v5053
        %v5176 = vpack.c.bf16 %v5056, %v5054
        %v5177 = vpack.c.bf16 %v5059, %v5057
        %v5178 = vpack.c.bf16 %v5060, %v5058
        %v5179 = vpack.c.bf16 %v5063, %v5061
        %v5180 = vpack.c.bf16 %v5064, %v5062
        %v5181 = vpack.c.bf16 %v5067, %v5065
        %v5182 = vpack.c.bf16 %v5068, %v5066
        %v5183 = vpack.c.bf16 %v5071, %v5069
        %v5184 = vpack.c.bf16 %v5072, %v5070
        %v5185 = vpack.c.bf16 %v5075, %v5073
        %v5186 = vpack.c.bf16 %v5076, %v5074
        %v5187 = vpack.c.bf16 %v5079, %v5077
        %v5188 = vpack.c.bf16 %v5080, %v5078
        %v5189 = vpack.c.bf16 %v5083, %v5081
        %v5190 = vpack.c.bf16 %v5084, %v5082
        %v5191 = vpack.c.bf16 %v5087, %v5085
        %v5192 = vpack.c.bf16 %v5088, %v5086
        %v5193 = vpack.c.bf16 %v5091, %v5089
        %v5194 = vpack.c.bf16 %v5092, %v5090
        %v5195 = vpack.c.bf16 %v5095, %v5093
        %v5196 = vpack.c.bf16 %v5096, %v5094
        %v5197 = vpack.c.bf16 %v5099, %v5097
        %v5198 = vpack.c.bf16 %v5100, %v5098
        %v5199 = vpack.c.bf16 %v5103, %v5101
        %v5200 = vpack.c.bf16 %v5104, %v5102
        %v5201 = vpack.c.bf16 %v5107, %v5105
        %v5202 = vpack.c.bf16 %v5108, %v5106
        %v5203 = vpack.c.bf16 %v5111, %v5109
        %v5204 = vpack.c.bf16 %v5112, %v5110
        %v5205 = vpack.c.bf16 %v5115, %v5113
        %v5206 = vpack.c.bf16 %v5116, %v5114
        %v5207 = vpack.c.bf16 %v5119, %v5117
        %v5208 = vpack.c.bf16 %v5120, %v5118
        %v5209 = vpack.c.bf16 %v5123, %v5121
        %v5210 = vpack.c.bf16 %v5124, %v5122
        %v5211 = vpack.c.bf16 %v5127, %v5125
        %v5212 = vpack.c.bf16 %v5128, %v5126
        %v5213 = vpack.c.bf16 %v5131, %v5129
        %v5214 = vpack.c.bf16 %v5132, %v5130
        %v5215 = vpack.c.bf16 %v5135, %v5133
        %v5216 = vpack.c.bf16 %v5136, %v5134
        %v5217 = vpack.c.bf16 %v5139, %v5137
        %v5218 = vpack.c.bf16 %v5140, %v5138
        %v5219 = vpack.c.bf16 %v5143, %v5141
        %v5220 = vpack.c.bf16 %v5144, %v5142
        %v5221 = vpack.c.bf16 %v5147, %v5145
        %v5222 = vpack.c.bf16 %v5148, %v5146
        %v5223 = vpack.c.bf16 %v5151, %v5149
        %v5224 = vpack.c.bf16 %v5152, %v5150
        %v5225 = vpack.c.bf16 %v5155, %v5153
        %v5226 = vpack.c.bf16 %v5156, %v5154
        %v5227 = vpack.c.bf16 %v5159, %v5157
        %v5228 = vpack.c.bf16 %v5160, %v5158
        %v5229 = vpack.c.bf16 %v5163, %v5161
        %v5230 = vpack.c.bf16 %v5164, %v5162
        %v5231 = vpack.c.bf16 %v5167, %v5165
        %v5232 = vpack.c.bf16 %v5168, %v5166
        %5233 = vmatprep.subr.bf16.mxu0 0
        %5234 = vmatpush1.bf16.msra.mxu0 %v3405
        %5235 = vmatprep.subr.bf16.mxu0 0
        %5236 = vmatpush1.bf16.msra.mxu0 %v3406
        %5237 = vmatprep.subr.bf16.mxu0 0
        %5238 = vmatpush1.bf16.msra.mxu0 %v3407
        %5239 = vmatprep.subr.bf16.mxu0 0
        %5240 = vmatpush1.bf16.msra.mxu0 %v3408
        %5241 = vmatprep.subr.bf16.mxu0 0
        %5242 = vmatpush1.bf16.msra.mxu0 %v3409
        %5243 = vmatprep.subr.bf16.mxu0 0
        %5244 = vmatpush1.bf16.msra.mxu0 %v3410
        %5245 = vmatprep.subr.bf16.mxu0 0
        %5246 = vmatpush1.bf16.msra.mxu0 %v3411
        %5247 = vmatprep.subr.bf16.mxu0 0
        %5248 = vmatpush1.bf16.msra.mxu0 %v3412
        %5249 = vmatprep.subr.bf16.mxu0 0
        %5250 = vmatpush1.bf16.msra.mxu0 %v3413
        %5251 = vmatprep.subr.bf16.mxu0 0
        %5252 = vmatpush1.bf16.msra.mxu0 %v3414
        %5253 = vmatprep.subr.bf16.mxu0 0
        %5254 = vmatpush1.bf16.msra.mxu0 %v3415
        %5255 = vmatprep.subr.bf16.mxu0 0
        %5256 = vmatpush1.bf16.msra.mxu0 %v3416
        %5257 = vmatprep.subr.bf16.mxu0 0
        %5258 = vmatpush1.bf16.msra.mxu0 %v3417
        %5259 = vmatprep.subr.bf16.mxu0 0
        %5260 = vmatpush1.bf16.msra.mxu0 %v3418
        %5261 = vmatprep.subr.bf16.mxu0 0
        %5262 = vmatpush1.bf16.msra.mxu0 %v3419
        %5263 = vmatprep.subr.bf16.mxu0 0
        %5264 = vmatpush1.bf16.msra.mxu0 %v3420
        %5265 = vmatprep.mubr.bf16.mxu0 %v5170
        %5266 = vmatmul.mubr.bf16.gmra.mrb[0].mxu0 %v5169
        %v5267 = vpop.f32.mrb[0].mxu0
        %v5268 = vadd.f32 0.0, %v5267
        %v5269 = vpop.f32.mrb[0].mxu0
        %v5270 = vpop.f32.mrb[0].mxu0
        %v5271 = vadd.f32 0.0, %v5270
        %v5272 = vpop.f32.mrb[0].mxu0
        %5273 = vmatprep.mubr.bf16.mxu0 %v5172
        %5274 = vmatmul.mubr.bf16.gmra.mrb[0].mxu0 %v5171
        %v5275 = vpop.f32.mrb[0].mxu0
        %v5276 = vadd.f32 0.0, %v5275
        %v5277 = vpop.f32.mrb[0].mxu0
        %v5278 = vpop.f32.mrb[0].mxu0
        %v5279 = vadd.f32 0.0, %v5278
        %v5280 = vpop.f32.mrb[0].mxu0
        %5281 = vmatprep.mubr.bf16.mxu0 %v5174
        %5282 = vmatmul.mubr.bf16.gmra.mrb[0].mxu0 %v5173
        %v5283 = vpop.f32.mrb[0].mxu0
        %v5284 = vadd.f32 0.0, %v5283
        %v5285 = vpop.f32.mrb[0].mxu0
        %v5286 = vpop.f32.mrb[0].mxu0
        %v5287 = vadd.f32 0.0, %v5286
        %v5288 = vpop.f32.mrb[0].mxu0
        %5289 = vmatprep.mubr.bf16.mxu0 %v5176
        %5290 = vmatmul.mubr.bf16.gmra.mrb[0].mxu0 %v5175
        %v5291 = vpop.f32.mrb[0].mxu0
        %v5292 = vadd.f32 0.0, %v5291
        %v5293 = vpop.f32.mrb[0].mxu0
        %v5294 = vpop.f32.mrb[0].mxu0
        %v5295 = vadd.f32 0.0, %v5294
        %v5296 = vpop.f32.mrb[0].mxu0
        %5297 = vmatprep.mubr.bf16.mxu0 %v5178
        %5298 = vmatmul.mubr.bf16.gmra.mrb[0].mxu0 %v5177
        %v5299 = vpop.f32.mrb[0].mxu0
        %v5300 = vadd.f32 0.0, %v5299
        %v5301 = vpop.f32.mrb[0].mxu0
        %v5302 = vpop.f32.mrb[0].mxu0
        %v5303 = vadd.f32 0.0, %v5302
        %v5304 = vpop.f32.mrb[0].mxu0
        %5305 = vmatprep.mubr.bf16.mxu0 %v5180
        %5306 = vmatmul.mubr.bf16.gmra.mrb[0].mxu0 %v5179
        %v5307 = vpop.f32.mrb[0].mxu0
        %v5308 = vadd.f32 0.0, %v5307
        %v5309 = vpop.f32.mrb[0].mxu0
        %v5310 = vpop.f32.mrb[0].mxu0
        %v5311 = vadd.f32 0.0, %v5310
        %v5312 = vpop.f32.mrb[0].mxu0
        %5313 = vmatprep.mubr.bf16.mxu0 %v5182
        %5314 = vmatmul.mubr.bf16.gmra.mrb[0].mxu0 %v5181
        %v5315 = vpop.f32.mrb[0].mxu0
        %v5316 = vadd.f32 0.0, %v5315
        %v5317 = vpop.f32.mrb[0].mxu0
        %v5318 = vpop.f32.mrb[0].mxu0
        %v5319 = vadd.f32 0.0, %v5318
        %v5320 = vpop.f32.mrb[0].mxu0
        %5321 = vmatprep.mubr.bf16.mxu0 %v5184
        %5322 = vmatmul.mubr.bf16.gmra.mrb[0].mxu0 %v5183
        %v5323 = vpop.f32.mrb[0].mxu0
        %v5324 = vadd.f32 0.0, %v5323
        %v5325 = vpop.f32.mrb[0].mxu0
        %v5326 = vpop.f32.mrb[0].mxu0
        %v5327 = vadd.f32 0.0, %v5326
        %v5328 = vpop.f32.mrb[0].mxu0
        %5329 = vdwg.mxu0
        %5330 = vmatprep.subr.bf16.mxu0 0
        %5331 = vmatpush1.bf16.msra.mxu0 %v3421
        %5332 = vmatprep.subr.bf16.mxu0 0
        %5333 = vmatpush1.bf16.msra.mxu0 %v3422
        %5334 = vmatprep.subr.bf16.mxu0 0
        %5335 = vmatpush1.bf16.msra.mxu0 %v3423
        %5336 = vmatprep.subr.bf16.mxu0 0
        %5337 = vmatpush1.bf16.msra.mxu0 %v3424
        %5338 = vmatprep.subr.bf16.mxu0 0
        %5339 = vmatpush1.bf16.msra.mxu0 %v3425
        %5340 = vmatprep.subr.bf16.mxu0 0
        %5341 = vmatpush1.bf16.msra.mxu0 %v3426
        %5342 = vmatprep.subr.bf16.mxu0 0
        %5343 = vmatpush1.bf16.msra.mxu0 %v3427
        %5344 = vmatprep.subr.bf16.mxu0 0
        %5345 = vmatpush1.bf16.msra.mxu0 %v3428
        %5346 = vmatprep.subr.bf16.mxu0 0
        %5347 = vmatpush1.bf16.msra.mxu0 %v3429
        %5348 = vmatprep.subr.bf16.mxu0 0
        %5349 = vmatpush1.bf16.msra.mxu0 %v3430
        %5350 = vmatprep.subr.bf16.mxu0 0
        %5351 = vmatpush1.bf16.msra.mxu0 %v3431
        %5352 = vmatprep.subr.bf16.mxu0 0
        %5353 = vmatpush1.bf16.msra.mxu0 %v3432
        %5354 = vmatprep.subr.bf16.mxu0 0
        %5355 = vmatpush1.bf16.msra.mxu0 %v3433
        %5356 = vmatprep.subr.bf16.mxu0 0
        %5357 = vmatpush1.bf16.msra.mxu0 %v3434
        %5358 = vmatprep.subr.bf16.mxu0 0
        %5359 = vmatpush1.bf16.msra.mxu0 %v3435
        %5360 = vmatprep.subr.bf16.mxu0 0
        %5361 = vmatpush1.bf16.msra.mxu0 %v3436
        %5362 = vmatprep.mubr.bf16.mxu0 %v5186
        %5363 = vmatmul.mubr.bf16.gmra.mrb[0].mxu0 %v5185
        %v5364 = vpop.f32.mrb[0].mxu0
        %v5365 = vadd.f32 0.0, %v5364
        %v5366 = vpop.f32.mrb[0].mxu0
        %v5367 = vpop.f32.mrb[0].mxu0
        %v5368 = vadd.f32 0.0, %v5367
        %v5369 = vpop.f32.mrb[0].mxu0
        %5370 = vmatprep.mubr.bf16.mxu0 %v5188
        %5371 = vmatmul.mubr.bf16.gmra.mrb[0].mxu0 %v5187
        %v5372 = vpop.f32.mrb[0].mxu0
        %v5373 = vadd.f32 0.0, %v5372
        %v5374 = vpop.f32.mrb[0].mxu0
        %v5375 = vpop.f32.mrb[0].mxu0
        %v5376 = vadd.f32 0.0, %v5375
        %v5377 = vpop.f32.mrb[0].mxu0
        %5378 = vmatprep.mubr.bf16.mxu0 %v5190
        %5379 = vmatmul.mubr.bf16.gmra.mrb[0].mxu0 %v5189
        %v5380 = vpop.f32.mrb[0].mxu0
        %v5381 = vadd.f32 0.0, %v5380
        %v5382 = vpop.f32.mrb[0].mxu0
        %v5383 = vpop.f32.mrb[0].mxu0
        %v5384 = vadd.f32 0.0, %v5383
        %v5385 = vpop.f32.mrb[0].mxu0
        %5386 = vmatprep.mubr.bf16.mxu0 %v5192
        %5387 = vmatmul.mubr.bf16.gmra.mrb[0].mxu0 %v5191
        %v5388 = vpop.f32.mrb[0].mxu0
        %v5389 = vadd.f32 0.0, %v5388
        %v5390 = vpop.f32.mrb[0].mxu0
        %v5391 = vpop.f32.mrb[0].mxu0
        %v5392 = vadd.f32 0.0, %v5391
        %v5393 = vpop.f32.mrb[0].mxu0
        %5394 = vmatprep.mubr.bf16.mxu0 %v5194
        %5395 = vmatmul.mubr.bf16.gmra.mrb[0].mxu0 %v5193
        %v5396 = vpop.f32.mrb[0].mxu0
        %v5397 = vadd.f32 0.0, %v5396
        %v5398 = vpop.f32.mrb[0].mxu0
        %v5399 = vpop.f32.mrb[0].mxu0
        %v5400 = vadd.f32 0.0, %v5399
        %v5401 = vpop.f32.mrb[0].mxu0
        %5402 = vmatprep.mubr.bf16.mxu0 %v5196
        %5403 = vmatmul.mubr.bf16.gmra.mrb[0].mxu0 %v5195
        %v5404 = vpop.f32.mrb[0].mxu0
        %v5405 = vadd.f32 0.0, %v5404
        %v5406 = vpop.f32.mrb[0].mxu0
        %v5407 = vpop.f32.mrb[0].mxu0
        %v5408 = vadd.f32 0.0, %v5407
        %v5409 = vpop.f32.mrb[0].mxu0
        %5410 = vmatprep.mubr.bf16.mxu0 %v5198
        %5411 = vmatmul.mubr.bf16.gmra.mrb[0].mxu0 %v5197
        %v5412 = vpop.f32.mrb[0].mxu0
        %v5413 = vadd.f32 0.0, %v5412
        %v5414 = vpop.f32.mrb[0].mxu0
        %v5415 = vpop.f32.mrb[0].mxu0
        %v5416 = vadd.f32 0.0, %v5415
        %v5417 = vpop.f32.mrb[0].mxu0
        %5418 = vmatprep.mubr.bf16.mxu0 %v5200
        %5419 = vmatmul.mubr.bf16.gmra.mrb[0].mxu0 %v5199
        %v5420 = vpop.f32.mrb[0].mxu0
        %v5421 = vadd.f32 0.0, %v5420
        %v5422 = vpop.f32.mrb[0].mxu0
        %v5423 = vpop.f32.mrb[0].mxu0
        %v5424 = vadd.f32 0.0, %v5423
        %v5425 = vpop.f32.mrb[0].mxu0
        %5426 = vdwg.mxu0
        %5427 = vmatprep.subr.bf16.mxu0 0
        %5428 = vmatpush1.bf16.msra.mxu0 %v3437
        %5429 = vmatprep.subr.bf16.mxu0 0
        %5430 = vmatpush1.bf16.msra.mxu0 %v3438
        %5431 = vmatprep.subr.bf16.mxu0 0
        %5432 = vmatpush1.bf16.msra.mxu0 %v3439
        %5433 = vmatprep.subr.bf16.mxu0 0
        %5434 = vmatpush1.bf16.msra.mxu0 %v3440
        %5435 = vmatprep.subr.bf16.mxu0 0
        %5436 = vmatpush1.bf16.msra.mxu0 %v3441
        %5437 = vmatprep.subr.bf16.mxu0 0
        %5438 = vmatpush1.bf16.msra.mxu0 %v3442
        %5439 = vmatprep.subr.bf16.mxu0 0
        %5440 = vmatpush1.bf16.msra.mxu0 %v3443
        %5441 = vmatprep.subr.bf16.mxu0 0
        %5442 = vmatpush1.bf16.msra.mxu0 %v3444
        %5443 = vmatprep.subr.bf16.mxu0 0
        %5444 = vmatpush1.bf16.msra.mxu0 %v3445
        %5445 = vmatprep.subr.bf16.mxu0 0
        %5446 = vmatpush1.bf16.msra.mxu0 %v3446
        %5447 = vmatprep.subr.bf16.mxu0 0
        %5448 = vmatpush1.bf16.msra.mxu0 %v3447
        %5449 = vmatprep.subr.bf16.mxu0 0
        %5450 = vmatpush1.bf16.msra.mxu0 %v3448
        %5451 = vmatprep.subr.bf16.mxu0 0
        %5452 = vmatpush1.bf16.msra.mxu0 %v3449
        %5453 = vmatprep.subr.bf16.mxu0 0
        %5454 = vmatpush1.bf16.msra.mxu0 %v3450
        %5455 = vmatprep.subr.bf16.mxu0 0
        %5456 = vmatpush1.bf16.msra.mxu0 %v3451
        %5457 = vmatprep.subr.bf16.mxu0 0
        %5458 = vmatpush1.bf16.msra.mxu0 %v3452
        %5459 = vmatprep.mubr.bf16.mxu0 %v5202
        %5460 = vmatmul.mubr.bf16.gmra.mrb[0].mxu0 %v5201
        %v5461 = vpop.f32.mrb[0].mxu0
        %v5462 = vadd.f32 0.0, %v5461
        %v5463 = vpop.f32.mrb[0].mxu0
        %v5464 = vpop.f32.mrb[0].mxu0
        %v5465 = vadd.f32 0.0, %v5464
        %v5466 = vpop.f32.mrb[0].mxu0
        %5467 = vmatprep.mubr.bf16.mxu0 %v5204
        %5468 = vmatmul.mubr.bf16.gmra.mrb[0].mxu0 %v5203
        %v5469 = vpop.f32.mrb[0].mxu0
        %v5470 = vadd.f32 0.0, %v5469
        %v5471 = vpop.f32.mrb[0].mxu0
        %v5472 = vpop.f32.mrb[0].mxu0
        %v5473 = vadd.f32 0.0, %v5472
        %v5474 = vpop.f32.mrb[0].mxu0
        %5475 = vmatprep.mubr.bf16.mxu0 %v5206
        %5476 = vmatmul.mubr.bf16.gmra.mrb[0].mxu0 %v5205
        %v5477 = vpop.f32.mrb[0].mxu0
        %v5478 = vadd.f32 0.0, %v5477
        %v5479 = vpop.f32.mrb[0].mxu0
        %v5480 = vpop.f32.mrb[0].mxu0
        %v5481 = vadd.f32 0.0, %v5480
        %v5482 = vpop.f32.mrb[0].mxu0
        %5483 = vmatprep.mubr.bf16.mxu0 %v5208
        %5484 = vmatmul.mubr.bf16.gmra.mrb[0].mxu0 %v5207
        %v5485 = vpop.f32.mrb[0].mxu0
        %v5486 = vadd.f32 0.0, %v5485
        %v5487 = vpop.f32.mrb[0].mxu0
        %v5488 = vpop.f32.mrb[0].mxu0
        %v5489 = vadd.f32 0.0, %v5488
        %v5490 = vpop.f32.mrb[0].mxu0
        %5491 = vmatprep.mubr.bf16.mxu0 %v5210
        %5492 = vmatmul.mubr.bf16.gmra.mrb[0].mxu0 %v5209
        %v5493 = vpop.f32.mrb[0].mxu0
        %v5494 = vadd.f32 0.0, %v5493
        %v5495 = vpop.f32.mrb[0].mxu0
        %v5496 = vpop.f32.mrb[0].mxu0
        %v5497 = vadd.f32 0.0, %v5496
        %v5498 = vpop.f32.mrb[0].mxu0
        %5499 = vmatprep.mubr.bf16.mxu0 %v5212
        %5500 = vmatmul.mubr.bf16.gmra.mrb[0].mxu0 %v5211
        %v5501 = vpop.f32.mrb[0].mxu0
        %v5502 = vadd.f32 0.0, %v5501
        %v5503 = vpop.f32.mrb[0].mxu0
        %v5504 = vpop.f32.mrb[0].mxu0
        %v5505 = vadd.f32 0.0, %v5504
        %v5506 = vpop.f32.mrb[0].mxu0
        %5507 = vmatprep.mubr.bf16.mxu0 %v5214
        %5508 = vmatmul.mubr.bf16.gmra.mrb[0].mxu0 %v5213
        %v5509 = vpop.f32.mrb[0].mxu0
        %v5510 = vadd.f32 0.0, %v5509
        %v5511 = vpop.f32.mrb[0].mxu0
        %v5512 = vpop.f32.mrb[0].mxu0
        %v5513 = vadd.f32 0.0, %v5512
        %v5514 = vpop.f32.mrb[0].mxu0
        %5515 = vmatprep.mubr.bf16.mxu0 %v5216
        %5516 = vmatmul.mubr.bf16.gmra.mrb[0].mxu0 %v5215
        %v5517 = vpop.f32.mrb[0].mxu0
        %v5518 = vadd.f32 0.0, %v5517
        %v5519 = vpop.f32.mrb[0].mxu0
        %v5520 = vpop.f32.mrb[0].mxu0
        %v5521 = vadd.f32 0.0, %v5520
        %v5522 = vpop.f32.mrb[0].mxu0
        %5523 = vdwg.mxu0
        %5524 = vmatprep.subr.bf16.mxu0 0
        %5525 = vmatpush1.bf16.msra.mxu0 %v3453
        %5526 = vmatprep.subr.bf16.mxu0 0
        %5527 = vmatpush1.bf16.msra.mxu0 %v3454
        %5528 = vmatprep.subr.bf16.mxu0 0
        %5529 = vmatpush1.bf16.msra.mxu0 %v3455
        %5530 = vmatprep.subr.bf16.mxu0 0
        %5531 = vmatpush1.bf16.msra.mxu0 %v3456
        %5532 = vmatprep.subr.bf16.mxu0 0
        %5533 = vmatpush1.bf16.msra.mxu0 %v3457
        %5534 = vmatprep.subr.bf16.mxu0 0
        %5535 = vmatpush1.bf16.msra.mxu0 %v3458
        %5536 = vmatprep.subr.bf16.mxu0 0
        %5537 = vmatpush1.bf16.msra.mxu0 %v3459
        %5538 = vmatprep.subr.bf16.mxu0 0
        %5539 = vmatpush1.bf16.msra.mxu0 %v3460
        %5540 = vmatprep.subr.bf16.mxu0 0
        %5541 = vmatpush1.bf16.msra.mxu0 %v3461
        %5542 = vmatprep.subr.bf16.mxu0 0
        %5543 = vmatpush1.bf16.msra.mxu0 %v3462
        %5544 = vmatprep.subr.bf16.mxu0 0
        %5545 = vmatpush1.bf16.msra.mxu0 %v3463
        %5546 = vmatprep.subr.bf16.mxu0 0
        %5547 = vmatpush1.bf16.msra.mxu0 %v3464
        %5548 = vmatprep.subr.bf16.mxu0 0
        %5549 = vmatpush1.bf16.msra.mxu0 %v3465
        %5550 = vmatprep.subr.bf16.mxu0 0
        %5551 = vmatpush1.bf16.msra.mxu0 %v3466
        %5552 = vmatprep.subr.bf16.mxu0 0
        %5553 = vmatpush1.bf16.msra.mxu0 %v3467
        %5554 = vmatprep.subr.bf16.mxu0 0
        %5555 = vmatpush1.bf16.msra.mxu0 %v3468
        %5556 = vmatprep.mubr.bf16.mxu0 %v5218
        %5557 = vmatmul.mubr.bf16.gmra.mrb[0].mxu0 %v5217
        %v5558 = vpop.f32.mrb[0].mxu0
        %v5559 = vadd.f32 0.0, %v5558
        %v5560 = vpop.f32.mrb[0].mxu0
        %v5561 = vpop.f32.mrb[0].mxu0
        %v5562 = vadd.f32 0.0, %v5561
        %v5563 = vpop.f32.mrb[0].mxu0
        %5564 = vmatprep.mubr.bf16.mxu0 %v5220
        %5565 = vmatmul.mubr.bf16.gmra.mrb[0].mxu0 %v5219
        %v5566 = vpop.f32.mrb[0].mxu0
        %v5567 = vadd.f32 0.0, %v5566
        %v5568 = vpop.f32.mrb[0].mxu0
        %v5569 = vpop.f32.mrb[0].mxu0
        %v5570 = vadd.f32 0.0, %v5569
        %v5571 = vpop.f32.mrb[0].mxu0
        %5572 = vmatprep.mubr.bf16.mxu0 %v5222
        %5573 = vmatmul.mubr.bf16.gmra.mrb[0].mxu0 %v5221
        %v5574 = vpop.f32.mrb[0].mxu0
        %v5575 = vadd.f32 0.0, %v5574
        %v5576 = vpop.f32.mrb[0].mxu0
        %v5577 = vpop.f32.mrb[0].mxu0
        %v5578 = vadd.f32 0.0, %v5577
        %v5579 = vpop.f32.mrb[0].mxu0
        %5580 = vmatprep.mubr.bf16.mxu0 %v5224
        %5581 = vmatmul.mubr.bf16.gmra.mrb[0].mxu0 %v5223
        %v5582 = vpop.f32.mrb[0].mxu0
        %v5583 = vadd.f32 0.0, %v5582
        %v5584 = vpop.f32.mrb[0].mxu0
        %v5585 = vpop.f32.mrb[0].mxu0
        %v5586 = vadd.f32 0.0, %v5585
        %v5587 = vpop.f32.mrb[0].mxu0
        %5588 = vmatprep.mubr.bf16.mxu0 %v5226
        %5589 = vmatmul.mubr.bf16.gmra.mrb[0].mxu0 %v5225
        %v5590 = vpop.f32.mrb[0].mxu0
        %v5591 = vadd.f32 0.0, %v5590
        %v5592 = vpop.f32.mrb[0].mxu0
        %v5593 = vpop.f32.mrb[0].mxu0
        %v5594 = vadd.f32 0.0, %v5593
        %v5595 = vpop.f32.mrb[0].mxu0
        %5596 = vmatprep.mubr.bf16.mxu0 %v5228
        %5597 = vmatmul.mubr.bf16.gmra.mrb[0].mxu0 %v5227
        %v5598 = vpop.f32.mrb[0].mxu0
        %v5599 = vadd.f32 0.0, %v5598
        %v5600 = vpop.f32.mrb[0].mxu0
        %v5601 = vpop.f32.mrb[0].mxu0
        %v5602 = vadd.f32 0.0, %v5601
        %v5603 = vpop.f32.mrb[0].mxu0
        %5604 = vmatprep.mubr.bf16.mxu0 %v5230
        %5605 = vmatmul.mubr.bf16.gmra.mrb[0].mxu0 %v5229
        %v5606 = vpop.f32.mrb[0].mxu0
        %v5607 = vadd.f32 0.0, %v5606
        %v5608 = vpop.f32.mrb[0].mxu0
        %v5609 = vpop.f32.mrb[0].mxu0
        %v5610 = vadd.f32 0.0, %v5609
        %v5611 = vpop.f32.mrb[0].mxu0
        %5612 = vmatprep.mubr.bf16.mxu0 %v5232
        %5613 = vmatmul.mubr.bf16.gmra.mrb[0].mxu0 %v5231
        %v5614 = vpop.f32.mrb[0].mxu0
        %v5615 = vadd.f32 0.0, %v5614
        %v5616 = vpop.f32.mrb[0].mxu0
        %v5617 = vpop.f32.mrb[0].mxu0
        %v5618 = vadd.f32 0.0, %v5617
        %v5619 = vpop.f32.mrb[0].mxu0
        %5620 = vdwg.mxu0
        %v5621 = vpack.c.bf16 %v5271, %v5268
        %v5622 = vpack.c.bf16 %v5279, %v5276
        %v5623 = vpack.c.bf16 %v5287, %v5284
        %v5624 = vpack.c.bf16 %v5295, %v5292
        %v5625 = vpack.c.bf16 %v5303, %v5300
        %v5626 = vpack.c.bf16 %v5311, %v5308
        %v5627 = vpack.c.bf16 %v5319, %v5316
        %v5628 = vpack.c.bf16 %v5327, %v5324
        %v5629 = vld [vmem:[%s5] sm:$0xf]
        %v5630 = vld [vmem:[%s5 + $0x4] sm:$0xf]
        %v5631 = vld [vmem:[%s5 + $0x8] sm:$0xf]
        %v5632 = vld [vmem:[%s5 + $0xc] sm:$0xf]
        %v5633 = vpack.c.bf16 %v5368, %v5365
        %v5634 = vpack.c.bf16 %v5376, %v5373
        %v5635 = vpack.c.bf16 %v5384, %v5381
        %v5636 = vpack.c.bf16 %v5392, %v5389
        %v5637 = vpack.c.bf16 %v5400, %v5397
        %v5638 = vpack.c.bf16 %v5408, %v5405
        %v5639 = vpack.c.bf16 %v5416, %v5413
        %v5640 = vpack.c.bf16 %v5424, %v5421
        %s5641 = scalar_lea.vmem %s5, 16
        %v5642 = vld [vmem:[%s5641] sm:$0xf]
        %v5643 = vld [vmem:[%s5641 + $0x4] sm:$0xf]
        %v5644 = vld [vmem:[%s5641 + $0x8] sm:$0xf]
        %v5645 = vld [vmem:[%s5641 + $0xc] sm:$0xf]
        %v5650 = vunpack.c.l.b16 %v5642
        %v5651 = vunpack.c.l.b16 %v5643
        %v5652 = vunpack.c.l.b16 %v5644
        %v5653 = vunpack.c.l.b16 %v5645
        %v5654 = vpack.c.b16 %v5651, %v5650
        %v5655 = vpack.c.b16 %v5653, %v5652
        %v5659 = vsel %vm2763, %v5633, 0
        %v5662 = vsel %vm2763, %v5634, 0
        %v5665 = vsel %vm2763, %v5635, 0
        %v5668 = vsel %vm2763, %v5636, 0
        %v5671 = vsel %vm2763, %v5637, 0
        %v5674 = vsel %vm2763, %v5638, 0
        %v5677 = vsel %vm2763, %v5639, 0
        %v5680 = vsel %vm2763, %v5640, 0
        %5682 = vmatprep.subr.bf16.mxu0 0
        %5683 = vmatpush1.bf16.msra.mxu0 %v5654
        %5684 = vmatprep.subr.bf16.mxu0 0
        %5685 = vmatpush1.bf16.msra.mxu0 %v5655
        %5686 = vmatprep.subr.bf16.mxu0 0
        %5687 = vmatpush1.bf16.msra.mxu0 0
        %5688 = vmatprep.subr.bf16.mxu0 0
        %5689 = vmatpush1.bf16.msra.mxu0 0
        %5690 = vmatprep.subr.bf16.mxu0 0
        %5691 = vmatpush1.bf16.msra.mxu0 0
        %5692 = vmatprep.subr.bf16.mxu0 0
        %5693 = vmatpush1.bf16.msra.mxu0 0
        %5694 = vmatprep.subr.bf16.mxu0 0
        %5695 = vmatpush1.bf16.msra.mxu0 0
        %5696 = vmatprep.subr.bf16.mxu0 0
        %5697 = vmatpush1.bf16.msra.mxu0 0
        %5698 = vmatprep.subr.bf16.mxu0 0
        %5699 = vmatpush1.bf16.msra.mxu0 0
        %5700 = vmatprep.subr.bf16.mxu0 0
        %5701 = vmatpush1.bf16.msra.mxu0 0
        %5702 = vmatprep.subr.bf16.mxu0 0
        %5703 = vmatpush1.bf16.msra.mxu0 0
        %5704 = vmatprep.subr.bf16.mxu0 0
        %5705 = vmatpush1.bf16.msra.mxu0 0
        %5706 = vmatprep.subr.bf16.mxu0 0
        %5707 = vmatpush1.bf16.msra.mxu0 0
        %5708 = vmatprep.subr.bf16.mxu0 0
        %5709 = vmatpush1.bf16.msra.mxu0 0
        %5710 = vmatprep.subr.bf16.mxu0 0
        %5711 = vmatpush1.bf16.msra.mxu0 0
        %5712 = vmatprep.subr.bf16.mxu0 0
        %5713 = vmatpush1.bf16.msra.mxu0 0
        %5714 = vmatprep.mubr.bf16.mxu0 0
        %5715 = vmatmul.mubr.bf16.gmra.mrb[0].mxu0 %v5659
        %v5716 = vpop.f32.mrb[0].mxu0
        %v5717 = vadd.f32 0.0, %v5716
        %v5718 = vpop.f32.mrb[0].mxu0
        %v5719 = vpop.f32.mrb[0].mxu0
        %v5720 = vadd.f32 0.0, %v5719
        %v5721 = vpop.f32.mrb[0].mxu0
        %5722 = vmatprep.mubr.bf16.mxu0 0
        %5723 = vmatmul.mubr.bf16.gmra.mrb[0].mxu0 %v5662
        %v5724 = vpop.f32.mrb[0].mxu0
        %v5725 = vadd.f32 0.0, %v5724
        %v5726 = vpop.f32.mrb[0].mxu0
        %v5727 = vpop.f32.mrb[0].mxu0
        %v5728 = vadd.f32 0.0, %v5727
        %v5729 = vpop.f32.mrb[0].mxu0
        %5730 = vmatprep.mubr.bf16.mxu0 0
        %5731 = vmatmul.mubr.bf16.gmra.mrb[0].mxu0 %v5665
        %v5732 = vpop.f32.mrb[0].mxu0
        %v5733 = vadd.f32 0.0, %v5732
        %v5734 = vpop.f32.mrb[0].mxu0
        %v5735 = vpop.f32.mrb[0].mxu0
        %v5736 = vadd.f32 0.0, %v5735
        %v5737 = vpop.f32.mrb[0].mxu0
        %5738 = vmatprep.mubr.bf16.mxu0 0
        %5739 = vmatmul.mubr.bf16.gmra.mrb[0].mxu0 %v5668
        %v5740 = vpop.f32.mrb[0].mxu0
        %v5741 = vadd.f32 0.0, %v5740
        %v5742 = vpop.f32.mrb[0].mxu0
        %v5743 = vpop.f32.mrb[0].mxu0
        %v5744 = vadd.f32 0.0, %v5743
        %v5745 = vpop.f32.mrb[0].mxu0
        %5746 = vmatprep.mubr.bf16.mxu0 0
        %5747 = vmatmul.mubr.bf16.gmra.mrb[0].mxu0 %v5671
        %v5748 = vpop.f32.mrb[0].mxu0
        %v5749 = vadd.f32 0.0, %v5748
        %v5750 = vpop.f32.mrb[0].mxu0
        %v5751 = vpop.f32.mrb[0].mxu0
        %v5752 = vadd.f32 0.0, %v5751
        %v5753 = vpop.f32.mrb[0].mxu0
        %5754 = vmatprep.mubr.bf16.mxu0 0
        %5755 = vmatmul.mubr.bf16.gmra.mrb[0].mxu0 %v5674
        %v5756 = vpop.f32.mrb[0].mxu0
        %v5757 = vadd.f32 0.0, %v5756
        %v5758 = vpop.f32.mrb[0].mxu0
        %v5759 = vpop.f32.mrb[0].mxu0
        %v5760 = vadd.f32 0.0, %v5759
        %v5761 = vpop.f32.mrb[0].mxu0
        %5762 = vmatprep.mubr.bf16.mxu0 0
        %5763 = vmatmul.mubr.bf16.gmra.mrb[0].mxu0 %v5677
        %v5764 = vpop.f32.mrb[0].mxu0
        %v5765 = vadd.f32 0.0, %v5764
        %v5766 = vpop.f32.mrb[0].mxu0
        %v5767 = vpop.f32.mrb[0].mxu0
        %v5768 = vadd.f32 0.0, %v5767
        %v5769 = vpop.f32.mrb[0].mxu0
        %5770 = vmatprep.mubr.bf16.mxu0 0
        %5771 = vmatmul.mubr.bf16.gmra.mrb[0].mxu0 %v5680
        %v5772 = vpop.f32.mrb[0].mxu0
        %v5773 = vadd.f32 0.0, %v5772
        %v5774 = vpop.f32.mrb[0].mxu0
        %v5775 = vpop.f32.mrb[0].mxu0
        %v5776 = vadd.f32 0.0, %v5775
        %v5777 = vpop.f32.mrb[0].mxu0
        %5778 = vdwg.mxu0
        %v5783 = vunpack.c.l.b16 %v5629
        %v5784 = vunpack.c.l.b16 %v5630
        %v5785 = vunpack.c.l.b16 %v5631
        %v5786 = vunpack.c.l.b16 %v5632
        %v5787 = vpack.c.b16 %v5784, %v5783
        %v5788 = vpack.c.b16 %v5786, %v5785
        %v5792 = vsel %vm2763, %v5621, 0
        %v5795 = vsel %vm2763, %v5622, 0
        %v5798 = vsel %vm2763, %v5623, 0
        %v5801 = vsel %vm2763, %v5624, 0
        %v5804 = vsel %vm2763, %v5625, 0
        %v5807 = vsel %vm2763, %v5626, 0
        %v5810 = vsel %vm2763, %v5627, 0
        %v5813 = vsel %vm2763, %v5628, 0
        %5815 = vmatprep.subr.bf16.mxu0 0
        %5816 = vmatpush1.bf16.msra.mxu0 %v5787
        %5817 = vmatprep.subr.bf16.mxu0 0
        %5818 = vmatpush1.bf16.msra.mxu0 %v5788
        %5819 = vmatprep.subr.bf16.mxu0 0
        %5820 = vmatpush1.bf16.msra.mxu0 0
        %5821 = vmatprep.subr.bf16.mxu0 0
        %5822 = vmatpush1.bf16.msra.mxu0 0
        %5823 = vmatprep.subr.bf16.mxu0 0
        %5824 = vmatpush1.bf16.msra.mxu0 0
        %5825 = vmatprep.subr.bf16.mxu0 0
        %5826 = vmatpush1.bf16.msra.mxu0 0
        %5827 = vmatprep.subr.bf16.mxu0 0
        %5828 = vmatpush1.bf16.msra.mxu0 0
        %5829 = vmatprep.subr.bf16.mxu0 0
        %5830 = vmatpush1.bf16.msra.mxu0 0
        %5831 = vmatprep.subr.bf16.mxu0 0
        %5832 = vmatpush1.bf16.msra.mxu0 0
        %5833 = vmatprep.subr.bf16.mxu0 0
        %5834 = vmatpush1.bf16.msra.mxu0 0
        %5835 = vmatprep.subr.bf16.mxu0 0
        %5836 = vmatpush1.bf16.msra.mxu0 0
        %5837 = vmatprep.subr.bf16.mxu0 0
        %5838 = vmatpush1.bf16.msra.mxu0 0
        %5839 = vmatprep.subr.bf16.mxu0 0
        %5840 = vmatpush1.bf16.msra.mxu0 0
        %5841 = vmatprep.subr.bf16.mxu0 0
        %5842 = vmatpush1.bf16.msra.mxu0 0
        %5843 = vmatprep.subr.bf16.mxu0 0
        %5844 = vmatpush1.bf16.msra.mxu0 0
        %5845 = vmatprep.subr.bf16.mxu0 0
        %5846 = vmatpush1.bf16.msra.mxu0 0
        %5847 = vmatprep.mubr.bf16.mxu0 0
        %5848 = vmatmul.mubr.bf16.gmra.mrb[0].mxu0 %v5792
        %v5849 = vpop.f32.mrb[0].mxu0
        %v5850 = vadd.f32 %v5717, %v5849
        %v5851 = vpop.f32.mrb[0].mxu0
        %v5852 = vpop.f32.mrb[0].mxu0
        %v5853 = vadd.f32 %v5720, %v5852
        %v5854 = vpop.f32.mrb[0].mxu0
        %5855 = vmatprep.mubr.bf16.mxu0 0
        %5856 = vmatmul.mubr.bf16.gmra.mrb[0].mxu0 %v5795
        %v5857 = vpop.f32.mrb[0].mxu0
        %v5858 = vadd.f32 %v5725, %v5857
        %v5859 = vpop.f32.mrb[0].mxu0
        %v5860 = vpop.f32.mrb[0].mxu0
        %v5861 = vadd.f32 %v5728, %v5860
        %v5862 = vpop.f32.mrb[0].mxu0
        %5863 = vmatprep.mubr.bf16.mxu0 0
        %5864 = vmatmul.mubr.bf16.gmra.mrb[0].mxu0 %v5798
        %v5865 = vpop.f32.mrb[0].mxu0
        %v5866 = vadd.f32 %v5733, %v5865
        %v5867 = vpop.f32.mrb[0].mxu0
        %v5868 = vpop.f32.mrb[0].mxu0
        %v5869 = vadd.f32 %v5736, %v5868
        %v5870 = vpop.f32.mrb[0].mxu0
        %5871 = vmatprep.mubr.bf16.mxu0 0
        %5872 = vmatmul.mubr.bf16.gmra.mrb[0].mxu0 %v5801
        %v5873 = vpop.f32.mrb[0].mxu0
        %v5874 = vadd.f32 %v5741, %v5873
        %v5875 = vpop.f32.mrb[0].mxu0
        %v5876 = vpop.f32.mrb[0].mxu0
        %v5877 = vadd.f32 %v5744, %v5876
        %v5878 = vpop.f32.mrb[0].mxu0
        %5879 = vmatprep.mubr.bf16.mxu0 0
        %5880 = vmatmul.mubr.bf16.gmra.mrb[0].mxu0 %v5804
        %v5881 = vpop.f32.mrb[0].mxu0
        %v5882 = vadd.f32 %v5749, %v5881
        %v5883 = vpop.f32.mrb[0].mxu0
        %v5884 = vpop.f32.mrb[0].mxu0
        %v5885 = vadd.f32 %v5752, %v5884
        %v5886 = vpop.f32.mrb[0].mxu0
        %5887 = vmatprep.mubr.bf16.mxu0 0
        %5888 = vmatmul.mubr.bf16.gmra.mrb[0].mxu0 %v5807
        %v5889 = vpop.f32.mrb[0].mxu0
        %v5890 = vadd.f32 %v5757, %v5889
        %v5891 = vpop.f32.mrb[0].mxu0
        %v5892 = vpop.f32.mrb[0].mxu0
        %v5893 = vadd.f32 %v5760, %v5892
        %v5894 = vpop.f32.mrb[0].mxu0
        %5895 = vmatprep.mubr.bf16.mxu0 0
        %5896 = vmatmul.mubr.bf16.gmra.mrb[0].mxu0 %v5810
        %v5897 = vpop.f32.mrb[0].mxu0
        %v5898 = vadd.f32 %v5765, %v5897
        %v5899 = vpop.f32.mrb[0].mxu0
        %v5900 = vpop.f32.mrb[0].mxu0
        %v5901 = vadd.f32 %v5768, %v5900
        %v5902 = vpop.f32.mrb[0].mxu0
        %5903 = vmatprep.mubr.bf16.mxu0 0
        %5904 = vmatmul.mubr.bf16.gmra.mrb[0].mxu0 %v5813
        %v5905 = vpop.f32.mrb[0].mxu0
        %v5906 = vadd.f32 %v5773, %v5905
        %v5907 = vpop.f32.mrb[0].mxu0
        %v5908 = vpop.f32.mrb[0].mxu0
        %v5909 = vadd.f32 %v5776, %v5908
        %v5910 = vpop.f32.mrb[0].mxu0
        %5911 = vdwg.mxu0
        %v5912 = vpack.c.bf16 %v5465, %v5462
        %v5913 = vpack.c.bf16 %v5473, %v5470
        %v5914 = vpack.c.bf16 %v5481, %v5478
        %v5915 = vpack.c.bf16 %v5489, %v5486
        %v5916 = vpack.c.bf16 %v5497, %v5494
        %v5917 = vpack.c.bf16 %v5505, %v5502
        %v5918 = vpack.c.bf16 %v5513, %v5510
        %v5919 = vpack.c.bf16 %v5521, %v5518
        %s5920 = scalar_lea.vmem %s5, 32
        %v5921 = vld [vmem:[%s5920] sm:$0xf]
        %v5922 = vld [vmem:[%s5920 + $0x4] sm:$0xf]
        %v5923 = vld [vmem:[%s5920 + $0x8] sm:$0xf]
        %v5924 = vld [vmem:[%s5920 + $0xc] sm:$0xf]
        %v5929 = vunpack.c.l.b16 %v5921
        %v5930 = vunpack.c.l.b16 %v5922
        %v5931 = vunpack.c.l.b16 %v5923
        %v5932 = vunpack.c.l.b16 %v5924
        %v5933 = vpack.c.b16 %v5930, %v5929
        %v5934 = vpack.c.b16 %v5932, %v5931
        %v5938 = vsel %vm2763, %v5912, 0
        %v5941 = vsel %vm2763, %v5913, 0
        %v5944 = vsel %vm2763, %v5914, 0
        %v5947 = vsel %vm2763, %v5915, 0
        %v5950 = vsel %vm2763, %v5916, 0
        %v5953 = vsel %vm2763, %v5917, 0
        %v5956 = vsel %vm2763, %v5918, 0
        %v5959 = vsel %vm2763, %v5919, 0
        %5961 = vmatprep.subr.bf16.mxu0 0
        %5962 = vmatpush1.bf16.msra.mxu0 %v5933
        %5963 = vmatprep.subr.bf16.mxu0 0
        %5964 = vmatpush1.bf16.msra.mxu0 %v5934
        %5965 = vmatprep.subr.bf16.mxu0 0
        %5966 = vmatpush1.bf16.msra.mxu0 0
        %5967 = vmatprep.subr.bf16.mxu0 0
        %5968 = vmatpush1.bf16.msra.mxu0 0
        %5969 = vmatprep.subr.bf16.mxu0 0
        %5970 = vmatpush1.bf16.msra.mxu0 0
        %5971 = vmatprep.subr.bf16.mxu0 0
        %5972 = vmatpush1.bf16.msra.mxu0 0
        %5973 = vmatprep.subr.bf16.mxu0 0
        %5974 = vmatpush1.bf16.msra.mxu0 0
        %5975 = vmatprep.subr.bf16.mxu0 0
        %5976 = vmatpush1.bf16.msra.mxu0 0
        %5977 = vmatprep.subr.bf16.mxu0 0
        %5978 = vmatpush1.bf16.msra.mxu0 0
        %5979 = vmatprep.subr.bf16.mxu0 0
        %5980 = vmatpush1.bf16.msra.mxu0 0
        %5981 = vmatprep.subr.bf16.mxu0 0
        %5982 = vmatpush1.bf16.msra.mxu0 0
        %5983 = vmatprep.subr.bf16.mxu0 0
        %5984 = vmatpush1.bf16.msra.mxu0 0
        %5985 = vmatprep.subr.bf16.mxu0 0
        %5986 = vmatpush1.bf16.msra.mxu0 0
        %5987 = vmatprep.subr.bf16.mxu0 0
        %5988 = vmatpush1.bf16.msra.mxu0 0
        %5989 = vmatprep.subr.bf16.mxu0 0
        %5990 = vmatpush1.bf16.msra.mxu0 0
        %5991 = vmatprep.subr.bf16.mxu0 0
        %5992 = vmatpush1.bf16.msra.mxu0 0
        %5993 = vmatprep.mubr.bf16.mxu0 0
        %5994 = vmatmul.mubr.bf16.gmra.mrb[0].mxu0 %v5938
        %v5995 = vpop.f32.mrb[0].mxu0
        %v5996 = vadd.f32 0.0, %v5995
        %v5997 = vpop.f32.mrb[0].mxu0
        %v5998 = vpop.f32.mrb[0].mxu0
        %v5999 = vadd.f32 0.0, %v5998
        %v6000 = vpop.f32.mrb[0].mxu0
        %6001 = vmatprep.mubr.bf16.mxu0 0
        %6002 = vmatmul.mubr.bf16.gmra.mrb[0].mxu0 %v5941
        %v6003 = vpop.f32.mrb[0].mxu0
        %v6004 = vadd.f32 0.0, %v6003
        %v6005 = vpop.f32.mrb[0].mxu0
        %v6006 = vpop.f32.mrb[0].mxu0
        %v6007 = vadd.f32 0.0, %v6006
        %v6008 = vpop.f32.mrb[0].mxu0
        %6009 = vmatprep.mubr.bf16.mxu0 0
        %6010 = vmatmul.mubr.bf16.gmra.mrb[0].mxu0 %v5944
        %v6011 = vpop.f32.mrb[0].mxu0
        %v6012 = vadd.f32 0.0, %v6011
        %v6013 = vpop.f32.mrb[0].mxu0
        %v6014 = vpop.f32.mrb[0].mxu0
        %v6015 = vadd.f32 0.0, %v6014
        %v6016 = vpop.f32.mrb[0].mxu0
        %6017 = vmatprep.mubr.bf16.mxu0 0
        %6018 = vmatmul.mubr.bf16.gmra.mrb[0].mxu0 %v5947
        %v6019 = vpop.f32.mrb[0].mxu0
        %v6020 = vadd.f32 0.0, %v6019
        %v6021 = vpop.f32.mrb[0].mxu0
        %v6022 = vpop.f32.mrb[0].mxu0
        %v6023 = vadd.f32 0.0, %v6022
        %v6024 = vpop.f32.mrb[0].mxu0
        %6025 = vmatprep.mubr.bf16.mxu0 0
        %6026 = vmatmul.mubr.bf16.gmra.mrb[0].mxu0 %v5950
        %v6027 = vpop.f32.mrb[0].mxu0
        %v6028 = vadd.f32 0.0, %v6027
        %v6029 = vpop.f32.mrb[0].mxu0
        %v6030 = vpop.f32.mrb[0].mxu0
        %v6031 = vadd.f32 0.0, %v6030
        %v6032 = vpop.f32.mrb[0].mxu0
        %6033 = vmatprep.mubr.bf16.mxu0 0
        %6034 = vmatmul.mubr.bf16.gmra.mrb[0].mxu0 %v5953
        %v6035 = vpop.f32.mrb[0].mxu0
        %v6036 = vadd.f32 0.0, %v6035
        %v6037 = vpop.f32.mrb[0].mxu0
        %v6038 = vpop.f32.mrb[0].mxu0
        %v6039 = vadd.f32 0.0, %v6038
        %v6040 = vpop.f32.mrb[0].mxu0
        %6041 = vmatprep.mubr.bf16.mxu0 0
        %6042 = vmatmul.mubr.bf16.gmra.mrb[0].mxu0 %v5956
        %v6043 = vpop.f32.mrb[0].mxu0
        %v6044 = vadd.f32 0.0, %v6043
        %v6045 = vpop.f32.mrb[0].mxu0
        %v6046 = vpop.f32.mrb[0].mxu0
        %v6047 = vadd.f32 0.0, %v6046
        %v6048 = vpop.f32.mrb[0].mxu0
        %6049 = vmatprep.mubr.bf16.mxu0 0
        %6050 = vmatmul.mubr.bf16.gmra.mrb[0].mxu0 %v5959
        %v6051 = vpop.f32.mrb[0].mxu0
        %v6052 = vadd.f32 0.0, %v6051
        %v6053 = vpop.f32.mrb[0].mxu0
        %v6054 = vpop.f32.mrb[0].mxu0
        %v6055 = vadd.f32 0.0, %v6054
        %v6056 = vpop.f32.mrb[0].mxu0
        %6057 = vdwg.mxu0
        %v6058 = vadd.f32 %v5850, %v5996
        %v6059 = vadd.f32 %v5853, %v5999
        %v6060 = vadd.f32 %v5858, %v6004
        %v6061 = vadd.f32 %v5861, %v6007
        %v6062 = vadd.f32 %v5866, %v6012
        %v6063 = vadd.f32 %v5869, %v6015
        %v6064 = vadd.f32 %v5874, %v6020
        %v6065 = vadd.f32 %v5877, %v6023
        %v6066 = vadd.f32 %v5882, %v6028
        %v6067 = vadd.f32 %v5885, %v6031
        %v6068 = vadd.f32 %v5890, %v6036
        %v6069 = vadd.f32 %v5893, %v6039
        %v6070 = vadd.f32 %v5898, %v6044
        %v6071 = vadd.f32 %v5901, %v6047
        %v6072 = vadd.f32 %v5906, %v6052
        %v6073 = vadd.f32 %v5909, %v6055
        %v6074 = vpack.c.bf16 %v5562, %v5559
        %v6075 = vpack.c.bf16 %v5570, %v5567
        %v6076 = vpack.c.bf16 %v5578, %v5575
        %v6077 = vpack.c.bf16 %v5586, %v5583
        %v6078 = vpack.c.bf16 %v5594, %v5591
        %v6079 = vpack.c.bf16 %v5602, %v5599
        %v6080 = vpack.c.bf16 %v5610, %v5607
        %v6081 = vpack.c.bf16 %v5618, %v5615
        %s6082 = scalar_lea.vmem %s5, 48
        %v6083 = vld [vmem:[%s6082] sm:$0xf]
        %v6084 = vld [vmem:[%s6082 + $0x4] sm:$0xf]
        %v6085 = vld [vmem:[%s6082 + $0x8] sm:$0xf]
        %v6086 = vld [vmem:[%s6082 + $0xc] sm:$0xf]
        %v6091 = vunpack.c.l.b16 %v6083
        %v6092 = vunpack.c.l.b16 %v6084
        %v6093 = vunpack.c.l.b16 %v6085
        %v6094 = vunpack.c.l.b16 %v6086
        %v6095 = vpack.c.b16 %v6092, %v6091
        %v6096 = vpack.c.b16 %v6094, %v6093
        %v6100 = vsel %vm2763, %v6074, 0
        %v6103 = vsel %vm2763, %v6075, 0
        %v6106 = vsel %vm2763, %v6076, 0
        %v6109 = vsel %vm2763, %v6077, 0
        %v6112 = vsel %vm2763, %v6078, 0
        %v6115 = vsel %vm2763, %v6079, 0
        %v6118 = vsel %vm2763, %v6080, 0
        %v6121 = vsel %vm2763, %v6081, 0
        %6123 = vmatprep.subr.bf16.mxu0 0
        %6124 = vmatpush1.bf16.msra.mxu0 %v6095
        %6125 = vmatprep.subr.bf16.mxu0 0
        %6126 = vmatpush1.bf16.msra.mxu0 %v6096
        %6127 = vmatprep.subr.bf16.mxu0 0
        %6128 = vmatpush1.bf16.msra.mxu0 0
        %6129 = vmatprep.subr.bf16.mxu0 0
        %6130 = vmatpush1.bf16.msra.mxu0 0
        %6131 = vmatprep.subr.bf16.mxu0 0
        %6132 = vmatpush1.bf16.msra.mxu0 0
        %6133 = vmatprep.subr.bf16.mxu0 0
        %6134 = vmatpush1.bf16.msra.mxu0 0
        %6135 = vmatprep.subr.bf16.mxu0 0
        %6136 = vmatpush1.bf16.msra.mxu0 0
        %6137 = vmatprep.subr.bf16.mxu0 0
        %6138 = vmatpush1.bf16.msra.mxu0 0
        %6139 = vmatprep.subr.bf16.mxu0 0
        %6140 = vmatpush1.bf16.msra.mxu0 0
        %6141 = vmatprep.subr.bf16.mxu0 0
        %6142 = vmatpush1.bf16.msra.mxu0 0
        %6143 = vmatprep.subr.bf16.mxu0 0
        %6144 = vmatpush1.bf16.msra.mxu0 0
        %6145 = vmatprep.subr.bf16.mxu0 0
        %6146 = vmatpush1.bf16.msra.mxu0 0
        %6147 = vmatprep.subr.bf16.mxu0 0
        %6148 = vmatpush1.bf16.msra.mxu0 0
        %6149 = vmatprep.subr.bf16.mxu0 0
        %6150 = vmatpush1.bf16.msra.mxu0 0
        %6151 = vmatprep.subr.bf16.mxu0 0
        %6152 = vmatpush1.bf16.msra.mxu0 0
        %6153 = vmatprep.subr.bf16.mxu0 0
        %6154 = vmatpush1.bf16.msra.mxu0 0
        %6155 = vmatprep.mubr.bf16.mxu0 0
        %6156 = vmatmul.mubr.bf16.gmra.mrb[0].mxu0 %v6100
        %v6157 = vpop.f32.mrb[0].mxu0
        %v6158 = vadd.f32 0.0, %v6157
        %v6159 = vpop.f32.mrb[0].mxu0
        %v6160 = vpop.f32.mrb[0].mxu0
        %v6161 = vadd.f32 0.0, %v6160
        %v6162 = vpop.f32.mrb[0].mxu0
        %6163 = vmatprep.mubr.bf16.mxu0 0
        %6164 = vmatmul.mubr.bf16.gmra.mrb[0].mxu0 %v6103
        %v6165 = vpop.f32.mrb[0].mxu0
        %v6166 = vadd.f32 0.0, %v6165
        %v6167 = vpop.f32.mrb[0].mxu0
        %v6168 = vpop.f32.mrb[0].mxu0
        %v6169 = vadd.f32 0.0, %v6168
        %v6170 = vpop.f32.mrb[0].mxu0
        %6171 = vmatprep.mubr.bf16.mxu0 0
        %6172 = vmatmul.mubr.bf16.gmra.mrb[0].mxu0 %v6106
        %v6173 = vpop.f32.mrb[0].mxu0
        %v6174 = vadd.f32 0.0, %v6173
        %v6175 = vpop.f32.mrb[0].mxu0
        %v6176 = vpop.f32.mrb[0].mxu0
        %v6177 = vadd.f32 0.0, %v6176
        %v6178 = vpop.f32.mrb[0].mxu0
        %6179 = vmatprep.mubr.bf16.mxu0 0
        %6180 = vmatmul.mubr.bf16.gmra.mrb[0].mxu0 %v6109
        %v6181 = vpop.f32.mrb[0].mxu0
        %v6182 = vadd.f32 0.0, %v6181
        %v6183 = vpop.f32.mrb[0].mxu0
        %v6184 = vpop.f32.mrb[0].mxu0
        %v6185 = vadd.f32 0.0, %v6184
        %v6186 = vpop.f32.mrb[0].mxu0
        %6187 = vmatprep.mubr.bf16.mxu0 0
        %6188 = vmatmul.mubr.bf16.gmra.mrb[0].mxu0 %v6112
        %v6189 = vpop.f32.mrb[0].mxu0
        %v6190 = vadd.f32 0.0, %v6189
        %v6191 = vpop.f32.mrb[0].mxu0
        %v6192 = vpop.f32.mrb[0].mxu0
        %v6193 = vadd.f32 0.0, %v6192
        %v6194 = vpop.f32.mrb[0].mxu0
        %6195 = vmatprep.mubr.bf16.mxu0 0
        %6196 = vmatmul.mubr.bf16.gmra.mrb[0].mxu0 %v6115
        %v6197 = vpop.f32.mrb[0].mxu0
        %v6198 = vadd.f32 0.0, %v6197
        %v6199 = vpop.f32.mrb[0].mxu0
        %v6200 = vpop.f32.mrb[0].mxu0
        %v6201 = vadd.f32 0.0, %v6200
        %v6202 = vpop.f32.mrb[0].mxu0
        %6203 = vmatprep.mubr.bf16.mxu0 0
        %6204 = vmatmul.mubr.bf16.gmra.mrb[0].mxu0 %v6118
        %v6205 = vpop.f32.mrb[0].mxu0
        %v6206 = vadd.f32 0.0, %v6205
        %v6207 = vpop.f32.mrb[0].mxu0
        %v6208 = vpop.f32.mrb[0].mxu0
        %v6209 = vadd.f32 0.0, %v6208
        %v6210 = vpop.f32.mrb[0].mxu0
        %6211 = vmatprep.mubr.bf16.mxu0 0
        %6212 = vmatmul.mubr.bf16.gmra.mrb[0].mxu0 %v6121
        %v6213 = vpop.f32.mrb[0].mxu0
        %v6214 = vadd.f32 0.0, %v6213
        %v6215 = vpop.f32.mrb[0].mxu0
        %v6216 = vpop.f32.mrb[0].mxu0
        %v6217 = vadd.f32 0.0, %v6216
        %v6218 = vpop.f32.mrb[0].mxu0
        %6219 = vdwg.mxu0
        %v6220 = vadd.f32 %v6058, %v6158
        %v6221 = vadd.f32 %v6059, %v6161
        %v6222 = vadd.f32 %v6060, %v6166
        %v6223 = vadd.f32 %v6061, %v6169
        %v6224 = vadd.f32 %v6062, %v6174
        %v6225 = vadd.f32 %v6063, %v6177
        %v6226 = vadd.f32 %v6064, %v6182
        %v6227 = vadd.f32 %v6065, %v6185
        %v6228 = vadd.f32 %v6066, %v6190
        %v6229 = vadd.f32 %v6067, %v6193
        %v6230 = vadd.f32 %v6068, %v6198
        %v6231 = vadd.f32 %v6069, %v6201
        %v6232 = vadd.f32 %v6070, %v6206
        %v6233 = vadd.f32 %v6071, %v6209
        %v6234 = vadd.f32 %v6072, %v6214
        %v6235 = vadd.f32 %v6073, %v6217
        %v6236 = vld [vmem:[%s6] sm:$0x1]
        %v6238 = vlaneseq
        %v6239 = vshrl.u32 %v6238, 7
        %v6240 = vsub.s32 0, %v6239
        %v6241 = vrot.slane %v6236, %v6240
        %v6243 = vadd.f32 %v6220, %v6241
        %v6244 = vadd.f32 %v6221, %v6241
        %v6245 = vadd.f32 %v6222, %v6241
        %v6246 = vadd.f32 %v6223, %v6241
        %v6247 = vadd.f32 %v6224, %v6241
        %v6248 = vadd.f32 %v6225, %v6241
        %v6249 = vadd.f32 %v6226, %v6241
        %v6250 = vadd.f32 %v6227, %v6241
        %v6251 = vadd.f32 %v6228, %v6241
        %v6252 = vadd.f32 %v6229, %v6241
        %v6253 = vadd.f32 %v6230, %v6241
        %v6254 = vadd.f32 %v6231, %v6241
        %v6255 = vadd.f32 %v6232, %v6241
        %v6256 = vadd.f32 %v6233, %v6241
        %v6257 = vadd.f32 %v6234, %v6241
        %v6258 = vadd.f32 %v6235, %v6241
        %6259 = vst [vmem:[%s311] sm:$0xff] %v6243
        %6260 = vst [vmem:[%s311 + $0x8] sm:$0xff] %v6244
        %6261 = vst [vmem:[%s311 + $0x10] sm:$0xff] %v6245
        %6262 = vst [vmem:[%s311 + $0x18] sm:$0xff] %v6246
        %6263 = vst [vmem:[%s311 + $0x20] sm:$0xff] %v6247
        %6264 = vst [vmem:[%s311 + $0x28] sm:$0xff] %v6248
        %6265 = vst [vmem:[%s311 + $0x30] sm:$0xff] %v6249
        %6266 = vst [vmem:[%s311 + $0x38] sm:$0xff] %v6250
        %6267 = vst [vmem:[%s311 + $0x40] sm:$0xff] %v6251
        %6268 = vst [vmem:[%s311 + $0x48] sm:$0xff] %v6252
        %6269 = vst [vmem:[%s311 + $0x50] sm:$0xff] %v6253
        %6270 = vst [vmem:[%s311 + $0x58] sm:$0xff] %v6254
        %6271 = vst [vmem:[%s311 + $0x60] sm:$0xff] %v6255
        %6272 = vst [vmem:[%s311 + $0x68] sm:$0xff] %v6256
        %6273 = vst [vmem:[%s311 + $0x70] sm:$0xff] %v6257
        %6274 = vst [vmem:[%s311 + $0x78] sm:$0xff] %v6258
        %s6275 = sand.u32 %s202, 1
        %s6276 = scalar_lea.sflag [#allocation6], %s6275
        %s6277 = sand.u32 %s202, 1
        %s6278 = smul.addr %s6277, 128
        %s6279 = scalar_lea.vmem [#allocation5], %s6278
        // Predicated region
        $region53: #{tpu_custom_call.1} parent=47 // pred_check
          %p6280 = pneg %p212
        $region54: #{tpu_custom_call.1} parent=47 // pred_check_branch
          %6282 = sbr.rel (%p6280) target = $region56
        $region55: #{tpu_custom_call.1} parent=47 // pred_region
          %s6283 = smul.u32 16, %s26
          %s6285 = ssub.s32 2048, 2048
          %6286 = vsyncadd %s6276, %s6285
          %s6287 = smul.addr %s25, 32
          %s6288 = sadd.s32 %s6283, %s6287
          %s6289 = smul.addr %s6288, 128
          %s6290 = scalar_lea.hbm %s7, %s6289
          %s6291 = sshll.u32 %s6279, 4
          %s6292 = int_to_ptr.vmem [resolvable:$true] %s6291
          %6297 = dma.vmem_to_hbm [thread:$0]  %s6292, 2048, %s6290, %s6276, 128, 128, 8
        $region56: #{tpu_custom_call.1} parent=47 // pred_fallthru
          _
      $region48: #{tpu_custom_call.1} parent=5 // pred_fallthru
        _
      %p6298 = scmp.le.s32.totalorder 2, %s16
      // Predicated region
      $region57: #{tpu_custom_call.1} parent=5 // pred_check
        %p6299 = pneg %p6298
      $region58: #{tpu_custom_call.1} parent=5 // pred_check_branch
        %6301 = sbr.rel (%p6299) target = $region60
      $region59: #{tpu_custom_call.1} parent=5 // pred_region
        %s6302 = ssub.s32 %s16, 2
        // Predicated region
        $region61: #{tpu_custom_call.1} parent=59 // pred_check
          %p6303 = pneg %p218
        $region62: #{tpu_custom_call.1} parent=59 // pred_check_branch
          %6305 = sbr.rel (%p6303) target = $region64
        $region63: #{tpu_custom_call.1} parent=59 // pred_region
          %s6306 = sand.u32 %s203, 1
          %s6307 = scalar_lea.sflag [#allocation6], %s6306
          %s6308 = sand.u32 %s203, 1
          %s6309 = smul.addr %s6308, 128
          %s6310 = scalar_lea.vmem [#allocation5], %s6309
          %6311 = dma.done %s6307, 2048
        $region64: #{tpu_custom_call.1} parent=59 // pred_fallthru
          _
      $region60: #{tpu_custom_call.1} parent=5 // pred_fallthru
        _
    $region6: #{tpu_custom_call.1} parent=1 // loop_footer
      %s20 = sadd.s32 1, %s16
    $region7: #{tpu_custom_call.1} parent=1 // loop_footer_branch
      %15 = sbr.rel target = $region3
    $region8: #{tpu_custom_call.1} parent=1 // loop_exit
      _
    %6312 = vsyncpa [#allocation6], 1
    %s6313 = scalar_lea.sflag [#allocation6], 1
    %6314 = vsyncpa %s6313, 1

</llo_original>
